<compile_context>
chip_gen: v7x
topology: tpu7x:2x2x1
jax: 0.10.0
libtpu: 0.0.40
codegen_flags: <defaults>
</compile_context>

<pallas_src>
import functools
import math

import jax
import jax.numpy as jnp
from jax.experimental import pallas as pl
from jax.experimental.pallas import tpu as pltpu


# ----------------------------------------------------------------------------------
# Hardware-aware sizing helpers
# ----------------------------------------------------------------------------------

@functools.lru_cache(maxsize=1)
def _vmem_limit_bytes():
    """Generation-aware scoped-VMEM limit: ~48 MiB on v7x (64 MiB/TC), ~96 MiB on
    v5e/v6e (128 MiB).  Conservative 64 MiB fallback if the query is unavailable."""
    cap = 64 * 1024 * 1024
    try:
        info = pltpu.get_tpu_info()
        cap = int(getattr(info, "vmem_capacity_bytes", cap) or cap)
    except Exception:
        pass
    return max(32 * 1024 * 1024, min(int(cap * 0.75), cap - 16 * 1024 * 1024))


def _auto_tile_n(N, T, H, dff, num_heads, vmem_limit):
    """Row tile in units of whole attention groups (T rows each).  Budgets ALL per-step
    live intermediates plus the single-buffered resident weights."""
    rows = T
    per_group = (
        2 * 2 * rows * H * 2            # bf16 in/out activation tiles, double-buffered
        + rows * 3 * H * (4 + 2)        # qkv f32 + q/k/v bf16 casts
        + 3 * rows * H * 2              # head-major q/k/v copies (bf16)
        + num_heads * T * T * (4 + 2)   # attention scores f32 + probs bf16
        + rows * H * (4 + 4 + 4 + 2)    # ctx f32, h1 f32, layer-out f32, head-merge bf16
        + rows * dff * (4 + 2)          # FFN intermediate f32 + bf16 cast
    )
    weight_bytes = ((3 * H * H + H * H + 2 * H * dff) * 2      # bf16 matmul weights
                    + (dff + 9 * H) * 4)                       # f32 biases + LN params
    budget = int(vmem_limit * 0.6) - weight_bytes              # margin for compiler scratch
    tile_n = max(1, min(N, budget // max(1, per_group)))

    # Keep >= 4 grid steps when possible: lets the "parallel" axis split across v7x's
    # two TensorCores and keeps the DMA pipeline warm (per-step overhead ~0.35 us).
    desired_steps = 4 if N >= 4 else max(1, N)
    tile_n = max(1, min(tile_n, -(-N // desired_steps)))

    # Sublane-dense row blocks: tile_n * T should be a multiple of 8 (or span all rows).
    g8 = 8 // math.gcd(8, T)
    if (tile_n * T) % 8 != 0:
        if tile_n >= g8:
            tile_n = (tile_n // g8) * g8
        elif g8 <= N:
            tile_n = g8
        else:
            tile_n = N                  # full-extent block is always a legal block shape

    # v5e: align matmul M (= tile_n*T) to 512 to fill the 4x128x128 MXU; harmless on
    # v6e/v7x.  Only applied when it does not collapse the tile.
    g512 = 512 // math.gcd(512, T)
    if tile_n * T >= 1024 and tile_n >= g512:
        tile_n = (tile_n // g512) * g512
    return max(1, tile_n)


def _resident_spec(arr):
    """Whole-array block, constant index_map, single-buffered: weights stay resident in
    VMEM across all grid steps without the default 2x double-buffer allocation."""
    nd = arr.ndim
    kwargs = {}
    if hasattr(pl, "Buffered"):
        kwargs["pipeline_mode"] = pl.Buffered(buffer_count=1)
    return pl.BlockSpec(arr.shape, lambda i, _nd=nd: (0,) * _nd, **kwargs)


# ----------------------------------------------------------------------------------
# Encoder layer kernel
# ----------------------------------------------------------------------------------

def _layernorm(x, g, b, eps=1e-5):
    mu = jnp.mean(x, axis=-1, keepdims=True)
    xc = x - mu
    var = jnp.mean(xc * xc, axis=-1, keepdims=True)
    return xc * jax.lax.rsqrt(var + eps) * g + b


def encoder_layer_kernel(tile_n, T, num_heads,
                         x_ref, wqkv_ref, bqkv_ref, wo_ref, bo_ref,
                         g1_ref, b1_ref, w1_ref, bf1_ref, w2_ref, bf2_ref,
                         g2_ref, b2_ref, o_ref):
    rows, H = x_ref.shape               # rows = tile_n * T
    nh = num_heads
    dh = H // nh
    scale = 1.0 / math.sqrt(dh)

    xb = x_ref[...]                     # (rows, H) bf16 activations
    x32 = xb.astype(jnp.float32)

    # Fused QKV projection: one MXU matmul with output width 3H, f32 accumulation.
    qkv = jnp.dot(xb, wqkv_ref[...], preferred_element_type=jnp.float32) + bqkv_ref[...]
    # Fold the 1/sqrt(dh) softmax scale into q during the f32 -> bf16 cast.
    q = (qkv[:, 0 * H:1 * H] * scale).astype(jnp.bfloat16)
    k = qkv[:, 1 * H:2 * H].astype(jnp.bfloat16)
    v = qkv[:, 2 * H:3 * H].astype(jnp.bfloat16)

    # Head split: lane slice + major-axis concat -> head-major (nh*tile_n, T, dh).
    # Score/context matmuls and the softmax are then batched over (head, group):
    # no per-head MXU push/drain, single softmax block.
    def split_heads(t2d):
        t3 = t2d.reshape(tile_n, T, H)
        return jnp.concatenate(
            [t3[:, :, h * dh:(h + 1) * dh] for h in range(nh)], axis=0)

    qh, kh, vh = split_heads(q), split_heads(k), split_heads(v)

    s = jnp.einsum('bqd,bkd->bqk', qh, kh, preferred_element_type=jnp.float32)
    s = s - jnp.max(s, axis=-1, keepdims=True)
    p = jnp.exp(s)
    p = p * pl.reciprocal(jnp.sum(p, axis=-1, keepdims=True), approx=True)   # EUP slot
    ctx = jnp.einsum('bqk,bkd->bqd', p.astype(jnp.bfloat16), vh,
                     preferred_element_type=jnp.float32)        # (nh*tile_n, T, dh)

    # Head merge back to (rows, H) with torch's head-concat lane order.
    attn = jnp.concatenate(
        [ctx[h * tile_n:(h + 1) * tile_n] for h in range(nh)], axis=-1).reshape(rows, H)
    attn = jnp.dot(attn.astype(jnp.bfloat16), wo_ref[...],
                   preferred_element_type=jnp.float32) + bo_ref[...]

    # Residual + post-norm (dropout = identity), f32 statistics.
    h1 = _layernorm(x32 + attn, g1_ref[...], b1_ref[...])

    # FFN: linear -> ReLU -> linear (bias add + ReLU fused into one expression).
    ff = jnp.maximum(
        jnp.dot(h1.astype(jnp.bfloat16), w1_ref[...],
                preferred_element_type=jnp.float32) + bf1_ref[...], 0.0)
    ff = jnp.dot(ff.astype(jnp.bfloat16), w2_ref[...],
                 preferred_element_type=jnp.float32) + bf2_ref[...]

    # bf16 inter-layer activations: halves HBM traffic between layers.
    o_ref[...] = _layernorm(h1 + ff, g2_ref[...], b2_ref[...]).astype(o_ref.dtype)


def encoder_layer(x2d, layer_params, num_heads, T, tile_n, vmem_limit):
    rows, H = x2d.shape
    N = rows // T                       # number of attention groups
    (wqkv, bqkv, wo, bo, g1, b1, w1, bf1, w2, bf2, g2, b2) = layer_params
    dff = w1.shape[1]
    if tile_n is None:
        tile_n = _auto_tile_n(N, T, H, dff, num_heads, vmem_limit)
    tile_n = max(1, min(tile_n, N))

    act_spec = pl.BlockSpec((tile_n * T, H), lambda i: (i, 0))
    weights = (wqkv, bqkv, wo, bo, g1, b1, w1, bf1, w2, bf2, g2, b2)

    return pl.pallas_call(
        functools.partial(encoder_layer_kernel, tile_n, T, num_heads),
        out_shape=jax.ShapeDtypeStruct((rows, H), jnp.bfloat16),
        grid=(pl.cdiv(N, tile_n),),
        in_specs=[act_spec] + [_resident_spec(w) for w in weights],
        out_specs=act_spec,
        compiler_params=pltpu.CompilerParams(
            dimension_semantics=("parallel",),
            vmem_limit_bytes=vmem_limit),
    )(x2d, *weights)


# ----------------------------------------------------------------------------------
# Blocked mean-pool + final fc kernel (reduction over the seq axis, both branches)
# ----------------------------------------------------------------------------------

def pool_fc_kernel(chunk, B, S, x_ref, wfc_ref, bfc_ref, o_ref, acc_ref):
    c = pl.program_id(0)

    @pl.when(c == 0)
    def _init():
        acc_ref[...] = jnp.zeros_like(acc_ref)

    H = x_ref.shape[-1]
    x = x_ref[...].astype(jnp.float32)                       # (2, chunk*B, H)
    acc_ref[...] += jnp.sum(x.reshape(2, chunk, B, H), axis=1).reshape(2 * B, H)

    @pl.when(c == pl.num_programs(0) - 1)
    def _finalize():
        m = acc_ref[...] * (1.0 / S)                         # mean over the seq axis
        o_ref[...] = jnp.dot(m.astype(jnp.bfloat16), wfc_ref[...],
                             preferred_element_type=jnp.float32) + bfc_ref[...]


def _pool_chunk(S, B, H, budget_bytes=8 * 1024 * 1024):
    """Largest divisor of S whose (2, chunk*B, H) bf16 block (double-buffered) fits the
    budget, keeps >= 2 reduction steps when possible, and is sublane-aligned."""
    cap = max(1, budget_bytes // max(1, 2 * B * H * 2 * 2))
    if S >= 2:
        cap = min(cap, max(1, S // 2))
    best = S                            # full-extent block is always legal
    for d in range(1, S):
        if S % d == 0 and d <= cap and (d * B) % 8 == 0:
            best = d
    return best


def pool_fc(x2d, S, B, fc_w_bf16, fc_b, vmem_limit):
    H = x2d.shape[-1]
    x3 = x2d.reshape(2, S * B, H)       # branch-major view of the same buffer
    chunk = _pool_chunk(S, B, H)
    nchunk = S // chunk

    return pl.pallas_call(
        functools.partial(pool_fc_kernel, chunk, B, S),
        out_shape=jax.ShapeDtypeStruct((2 * B, H), jnp.float32),
        grid=(nchunk,),
        in_specs=[pl.BlockSpec((2, chunk * B, H), lambda c: (0, c, 0)),
                  _resident_spec(fc_w_bf16),
                  _resident_spec(fc_b)],
        out_specs=pl.BlockSpec((2 * B, H), lambda c: (0, 0)),
        scratch_shapes=[pltpu.VMEM((2 * B, H), jnp.float32)],
        compiler_params=pltpu.CompilerParams(
            dimension_semantics=("arbitrary",),
            vmem_limit_bytes=vmem_limit),
    )(x3, fc_w_bf16, fc_b)


# ----------------------------------------------------------------------------------
# Full forward (two shared-weight branches)
# ----------------------------------------------------------------------------------

def siamese_forward(params, num_heads, input1, input2, tile_n=None):
    emb = params['embedding']
    B, S = input1.shape
    H = emb.shape[1]
    vmem_limit = _vmem_limit_bytes()

    # Embedding gather (XLA glue outside the kernels).
    e1 = jnp.take(emb, input1, axis=0).astype(jnp.bfloat16)     # (B, S, H)
    e2 = jnp.take(emb, input2, axis=0).astype(jnp.bfloat16)

    # Kernel layout: attention groups = original seq positions (faithful to the
    # batch_first=False usage), attended axis T = original batch axis.  Both Siamese
    # branches are independent along the group axis -> concatenate and run the encoder
    # ONCE.  Keep the activation 2-D (groups*T, H) so row blocks stay sublane-dense.
    x = jnp.concatenate([jnp.transpose(e1, (1, 0, 2)),
                         jnp.transpose(e2, (1, 0, 2))], axis=0)  # (2S, B, H) bf16
    x = x.reshape(2 * S * B, H)

    # Params are kept f32 (single rounding if loading trained weights); matmul weights
    # are cast to bf16 once here at the kernel boundary.
    for lp in params['layers']:
        (wqkv, bqkv, wo, bo, g1, b1, w1, bf1, w2, bf2, g2, b2) = lp
        lp_bf = (wqkv.astype(jnp.bfloat16), bqkv, wo.astype(jnp.bfloat16), bo,
                 g1, b1, w1.astype(jnp.bfloat16), bf1,
                 w2.astype(jnp.bfloat16), bf2, g2, b2)
        x = encoder_layer(x, lp_bf, num_heads, B, tile_n, vmem_limit)

    out = pool_fc(x, S, B, params['fc_w'].astype(jnp.bfloat16), params['fc_b'],
                  vmem_limit)                                    # (2B, H) f32
    return out[:B], out[B:]


# ----------------------------------------------------------------------------------
# Parameter init (f32 master weights, torch-style uniform init)
# ----------------------------------------------------------------------------------

def _linear_init(key, fan_in, fan_out):
    kw, kb = jax.random.split(key)
    bound = 1.0 / math.sqrt(fan_in)
    # Stored already transposed: (fan_in, fan_out) so y = x @ W + b.
    w = jax.random.uniform(kw, (fan_in, fan_out), jnp.float32, -bound, bound)
    b = jax.random.uniform(kb, (1, fan_out), jnp.float32, -bound, bound)
    return w, b


def init_params(key, input_dim, hidden_dim, num_layers, dim_feedforward=2048):
    keys = jax.random.split(key, 2 + num_layers)
    emb = jax.random.normal(keys[0], (input_dim, hidden_dim), jnp.float32)
    layers = []
    for i in range(num_layers):
        lk = jax.random.split(keys[1 + i], 4)
        wqkv, bqkv = _linear_init(lk[0], hidden_dim, 3 * hidden_dim)   # fused QKV
        wo, bo = _linear_init(lk[1], hidden_dim, hidden_dim)
        w1, bf1 = _linear_init(lk[2], hidden_dim, dim_feedforward)
        w2, bf2 = _linear_init(lk[3], dim_feedforward, hidden_dim)
        g1 = jnp.ones((1, hidden_dim), jnp.float32)
        b1 = jnp.zeros((1, hidden_dim), jnp.float32)
        g2 = jnp.ones((1, hidden_dim), jnp.float32)
        b2 = jnp.zeros((1, hidden_dim), jnp.float32)
        layers.append((wqkv, bqkv, wo, bo, g1, b1, w1, bf1, w2, bf2, g2, b2))
    fc_w, fc_b = _linear_init(keys[-1], hidden_dim, hidden_dim)
    return {'embedding': emb, 'layers': layers, 'fc_w': fc_w, 'fc_b': fc_b}


if __name__ == "__main__":
    key = jax.random.PRNGKey(0)
    B, S = 2, 8
    input_dim, hidden_dim, num_layers, num_heads = 64, 32, 2, 4
    assert hidden_dim % num_heads == 0

    pkey, k1, k2 = jax.random.split(key, 3)
    params = init_params(pkey, input_dim, hidden_dim, num_layers)
    input1 = jax.random.randint(k1, (B, S), 0, input_dim, dtype=jnp.int32)
    input2 = jax.random.randint(k2, (B, S), 0, input_dim, dtype=jnp.int32)

    # Auto tiling: N = 2S = 16 groups -> 4 grid steps for the encoder layers, and the
    # pooling kernel runs a 2-step blocked reduction (exercises init/finalize paths).
    fwd = jax.jit(functools.partial(siamese_forward, params, num_heads))
    out1, out2 = fwd(input1, input2)
    jax.block_until_ready((out1, out2))

    assert out1.shape == (B, hidden_dim) and out2.shape == (B, hidden_dim)
    assert out1.dtype == jnp.float32 and out2.dtype == jnp.float32
    assert bool(jnp.all(jnp.isfinite(out1))) and bool(jnp.all(jnp.isfinite(out2)))
    print("KERNEL_OK")
</pallas_src>

<mosaic_0001>
module attributes {stable_mosaic.version = 11 : i64} {
  func.func @encoder_layer_kernel(%arg0: i32, %arg1: memref<8x32xbf16, #tpu.memory_space<vmem>>, %arg2: memref<32x96xbf16, #tpu.memory_space<vmem>>, %arg3: memref<1x96xf32, #tpu.memory_space<vmem>>, %arg4: memref<32x32xbf16, #tpu.memory_space<vmem>>, %arg5: memref<1x32xf32, #tpu.memory_space<vmem>>, %arg6: memref<1x32xf32, #tpu.memory_space<vmem>>, %arg7: memref<1x32xf32, #tpu.memory_space<vmem>>, %arg8: memref<32x2048xbf16, #tpu.memory_space<vmem>>, %arg9: memref<1x2048xf32, #tpu.memory_space<vmem>>, %arg10: memref<2048x32xbf16, #tpu.memory_space<vmem>>, %arg11: memref<1x32xf32, #tpu.memory_space<vmem>>, %arg12: memref<1x32xf32, #tpu.memory_space<vmem>>, %arg13: memref<1x32xf32, #tpu.memory_space<vmem>>, %arg14: memref<8x32xbf16, #tpu.memory_space<vmem>>) attributes {dimension_semantics = [#tpu.dimension_semantics<parallel>], iteration_bounds = array<i64: 4>, scalar_prefetch = 0 : i64, scratch_operands = 0 : i64, tpu.core_type = #tpu.core_type<tc>, window_params = [{transform_indices = @transform_0, window_bounds = array<i64: 8, 32>}, {pipeline_mode = #tpu.pipeline_mode<synchronous>, transform_indices = @transform_1, window_bounds = array<i64: 32, 96>}, {pipeline_mode = #tpu.pipeline_mode<synchronous>, transform_indices = @transform_2, window_bounds = array<i64: 1, 96>}, {pipeline_mode = #tpu.pipeline_mode<synchronous>, transform_indices = @transform_3, window_bounds = array<i64: 32, 32>}, {pipeline_mode = #tpu.pipeline_mode<synchronous>, transform_indices = @transform_4, window_bounds = array<i64: 1, 32>}, {pipeline_mode = #tpu.pipeline_mode<synchronous>, transform_indices = @transform_5, window_bounds = array<i64: 1, 32>}, {pipeline_mode = #tpu.pipeline_mode<synchronous>, transform_indices = @transform_6, window_bounds = array<i64: 1, 32>}, {pipeline_mode = #tpu.pipeline_mode<synchronous>, transform_indices = @transform_7, window_bounds = array<i64: 32, 2048>}, {pipeline_mode = #tpu.pipeline_mode<synchronous>, transform_indices = @transform_8, window_bounds = array<i64: 1, 2048>}, {pipeline_mode = #tpu.pipeline_mode<synchronous>, transform_indices = @transform_9, window_bounds = array<i64: 2048, 32>}, {pipeline_mode = #tpu.pipeline_mode<synchronous>, transform_indices = @transform_10, window_bounds = array<i64: 1, 32>}, {pipeline_mode = #tpu.pipeline_mode<synchronous>, transform_indices = @transform_11, window_bounds = array<i64: 1, 32>}, {pipeline_mode = #tpu.pipeline_mode<synchronous>, transform_indices = @transform_12, window_bounds = array<i64: 1, 32>}, {transform_indices = @transform_13, window_bounds = array<i64: 8, 32>}]} {
    %c0 = arith.constant 0 : index
    %c0_0 = arith.constant 0 : index
    %0 = vector.load %arg1[%c0, %c0_0] : memref<8x32xbf16, #tpu.memory_space<vmem>>, vector<8x32xbf16>
    %1 = arith.extf %0 : vector<8x32xbf16> to vector<8x32xf32>
    %c0_1 = arith.constant 0 : index
    %c0_2 = arith.constant 0 : index
    %2 = vector.load %arg2[%c0_1, %c0_2] : memref<32x96xbf16, #tpu.memory_space<vmem>>, vector<32x96xbf16>
    %cst = arith.constant dense<0.000000e+00> : vector<8x96xf32>
    %3 = tpu.matmul %0, %2, %cst {dimension_numbers = #tpu.dot_dimension_numbers<[1], [0], [0], [1], [0, 0, 1, 1], [], []>} : vector<8x32xbf16>, vector<32x96xbf16>, vector<8x96xf32> -> vector<8x96xf32>
    %c0_3 = arith.constant 0 : index
    %c0_4 = arith.constant 0 : index
    %4 = vector.load %arg3[%c0_3, %c0_4] : memref<1x96xf32, #tpu.memory_space<vmem>>, vector<1x96xf32>
    %5 = vector.broadcast %4 : vector<1x96xf32> to vector<8x96xf32>
    %6 = arith.addf %3, %5 : vector<8x96xf32>
    %7 = vector.extract_strided_slice %6 {offsets = [0, 0], sizes = [8, 32], strides = [1, 1]} : vector<8x96xf32> to vector<8x32xf32>
    %cst_5 = arith.constant 0.353553385 : f32
    %8 = vector.broadcast %cst_5 : f32 to vector<8x32xf32>
    %9 = arith.mulf %7, %8 : vector<8x32xf32>
    %10 = arith.truncf %9 : vector<8x32xf32> to vector<8x32xbf16>
    %11 = vector.extract_strided_slice %6 {offsets = [0, 32], sizes = [8, 32], strides = [1, 1]} : vector<8x96xf32> to vector<8x32xf32>
    %12 = arith.truncf %11 : vector<8x32xf32> to vector<8x32xbf16>
    %13 = vector.extract_strided_slice %6 {offsets = [0, 64], sizes = [8, 32], strides = [1, 1]} : vector<8x96xf32> to vector<8x32xf32>
    %14 = arith.truncf %13 : vector<8x32xf32> to vector<8x32xbf16>
    %15 = vector.shape_cast %10 : vector<8x32xbf16> to vector<4x2x32xbf16>
    %16 = vector.extract_strided_slice %15 {offsets = [0, 0, 0], sizes = [4, 2, 8], strides = [1, 1, 1]} : vector<4x2x32xbf16> to vector<4x2x8xbf16>
    %17 = vector.extract_strided_slice %15 {offsets = [0, 0, 8], sizes = [4, 2, 8], strides = [1, 1, 1]} : vector<4x2x32xbf16> to vector<4x2x8xbf16>
    %18 = vector.extract_strided_slice %15 {offsets = [0, 0, 16], sizes = [4, 2, 8], strides = [1, 1, 1]} : vector<4x2x32xbf16> to vector<4x2x8xbf16>
    %19 = vector.extract_strided_slice %15 {offsets = [0, 0, 24], sizes = [4, 2, 8], strides = [1, 1, 1]} : vector<4x2x32xbf16> to vector<4x2x8xbf16>
    %20 = tpu.concatenate %16, %17, %18, %19 in 0 : vector<4x2x8xbf16>, vector<4x2x8xbf16>, vector<4x2x8xbf16>, vector<4x2x8xbf16> -> vector<16x2x8xbf16>
    %21 = vector.shape_cast %12 : vector<8x32xbf16> to vector<4x2x32xbf16>
    %22 = vector.extract_strided_slice %21 {offsets = [0, 0, 0], sizes = [4, 2, 8], strides = [1, 1, 1]} : vector<4x2x32xbf16> to vector<4x2x8xbf16>
    %23 = vector.extract_strided_slice %21 {offsets = [0, 0, 8], sizes = [4, 2, 8], strides = [1, 1, 1]} : vector<4x2x32xbf16> to vector<4x2x8xbf16>
    %24 = vector.extract_strided_slice %21 {offsets = [0, 0, 16], sizes = [4, 2, 8], strides = [1, 1, 1]} : vector<4x2x32xbf16> to vector<4x2x8xbf16>
    %25 = vector.extract_strided_slice %21 {offsets = [0, 0, 24], sizes = [4, 2, 8], strides = [1, 1, 1]} : vector<4x2x32xbf16> to vector<4x2x8xbf16>
    %26 = tpu.concatenate %22, %23, %24, %25 in 0 : vector<4x2x8xbf16>, vector<4x2x8xbf16>, vector<4x2x8xbf16>, vector<4x2x8xbf16> -> vector<16x2x8xbf16>
    %27 = vector.shape_cast %14 : vector<8x32xbf16> to vector<4x2x32xbf16>
    %28 = vector.extract_strided_slice %27 {offsets = [0, 0, 0], sizes = [4, 2, 8], strides = [1, 1, 1]} : vector<4x2x32xbf16> to vector<4x2x8xbf16>
    %29 = vector.extract_strided_slice %27 {offsets = [0, 0, 8], sizes = [4, 2, 8], strides = [1, 1, 1]} : vector<4x2x32xbf16> to vector<4x2x8xbf16>
    %30 = vector.extract_strided_slice %27 {offsets = [0, 0, 16], sizes = [4, 2, 8], strides = [1, 1, 1]} : vector<4x2x32xbf16> to vector<4x2x8xbf16>
    %31 = vector.extract_strided_slice %27 {offsets = [0, 0, 24], sizes = [4, 2, 8], strides = [1, 1, 1]} : vector<4x2x32xbf16> to vector<4x2x8xbf16>
    %32 = tpu.concatenate %28, %29, %30, %31 in 0 : vector<4x2x8xbf16>, vector<4x2x8xbf16>, vector<4x2x8xbf16>, vector<4x2x8xbf16> -> vector<16x2x8xbf16>
    "tpu.trace_start"() <{level = 10 : i32, message = "bqd,bkd->bqk"}> : () -> ()
    %cst_6 = arith.constant dense<0.000000e+00> : vector<16x2x2xf32>
    %33 = tpu.matmul %20, %26, %cst_6 {dimension_numbers = #tpu.dot_dimension_numbers<[2], [2], [1], [1], [0, 0, 0, 1, 1, 1], [0], [0]>} : vector<16x2x8xbf16>, vector<16x2x8xbf16>, vector<16x2x2xf32> -> vector<16x2x2xf32>
    "tpu.trace_stop"() : () -> ()
    %cst_7 = arith.constant dense<0xFF800000> : vector<16x2xf32>
    %34 = vector.multi_reduction <maximumf>, %33, %cst_7 [2] : vector<16x2x2xf32> to vector<16x2xf32>
    %35 = vector.shape_cast %34 : vector<16x2xf32> to vector<16x2x1xf32>
    %36 = vector.broadcast %35 : vector<16x2x1xf32> to vector<16x2x2xf32>
    %37 = arith.subf %33, %36 : vector<16x2x2xf32>
    %38 = math.exp %37 : vector<16x2x2xf32>
    %cst_8 = arith.constant dense<0.000000e+00> : vector<16x2xf32>
    %39 = vector.multi_reduction <add>, %38, %cst_8 [2] : vector<16x2x2xf32> to vector<16x2xf32>
    %40 = vector.shape_cast %39 : vector<16x2xf32> to vector<16x2x1xf32>
    %41 = tpu.reciprocal %40 {approx = true} : vector<16x2x1xf32> -> vector<16x2x1xf32>
    %42 = vector.broadcast %41 : vector<16x2x1xf32> to vector<16x2x2xf32>
    %43 = arith.mulf %38, %42 : vector<16x2x2xf32>
    %44 = arith.truncf %43 : vector<16x2x2xf32> to vector<16x2x2xbf16>
    "tpu.trace_start"() <{level = 10 : i32, message = "bqk,bkd->bqd"}> : () -> ()
    %cst_9 = arith.constant dense<0.000000e+00> : vector<16x2x8xf32>
    %45 = tpu.matmul %44, %32, %cst_9 {dimension_numbers = #tpu.dot_dimension_numbers<[2], [1], [1], [2], [0, 0, 0, 1, 1, 2], [0], [0]>} : vector<16x2x2xbf16>, vector<16x2x8xbf16>, vector<16x2x8xf32> -> vector<16x2x8xf32>
    "tpu.trace_stop"() : () -> ()
    %46 = vector.extract_strided_slice %45 {offsets = [0, 0, 0], sizes = [4, 2, 8], strides = [1, 1, 1]} : vector<16x2x8xf32> to vector<4x2x8xf32>
    %47 = vector.extract_strided_slice %45 {offsets = [4, 0, 0], sizes = [4, 2, 8], strides = [1, 1, 1]} : vector<16x2x8xf32> to vector<4x2x8xf32>
    %48 = vector.extract_strided_slice %45 {offsets = [8, 0, 0], sizes = [4, 2, 8], strides = [1, 1, 1]} : vector<16x2x8xf32> to vector<4x2x8xf32>
    %49 = vector.extract_strided_slice %45 {offsets = [12, 0, 0], sizes = [4, 2, 8], strides = [1, 1, 1]} : vector<16x2x8xf32> to vector<4x2x8xf32>
    %50 = tpu.concatenate %46, %47, %48, %49 in 2 : vector<4x2x8xf32>, vector<4x2x8xf32>, vector<4x2x8xf32>, vector<4x2x8xf32> -> vector<4x2x32xf32>
    %51 = vector.shape_cast %50 : vector<4x2x32xf32> to vector<8x32xf32>
    %52 = arith.truncf %51 : vector<8x32xf32> to vector<8x32xbf16>
    %c0_10 = arith.constant 0 : index
    %c0_11 = arith.constant 0 : index
    %53 = vector.load %arg4[%c0_10, %c0_11] : memref<32x32xbf16, #tpu.memory_space<vmem>>, vector<32x32xbf16>
    %cst_12 = arith.constant dense<0.000000e+00> : vector<8x32xf32>
    %54 = tpu.matmul %52, %53, %cst_12 {dimension_numbers = #tpu.dot_dimension_numbers<[1], [0], [0], [1], [0, 0, 1, 1], [], []>} : vector<8x32xbf16>, vector<32x32xbf16>, vector<8x32xf32> -> vector<8x32xf32>
    %c0_13 = arith.constant 0 : index
    %c0_14 = arith.constant 0 : index
    %55 = vector.load %arg5[%c0_13, %c0_14] : memref<1x32xf32, #tpu.memory_space<vmem>>, vector<1x32xf32>
    %56 = vector.broadcast %55 : vector<1x32xf32> to vector<8x32xf32>
    %57 = arith.addf %54, %56 : vector<8x32xf32>
    %58 = arith.addf %1, %57 : vector<8x32xf32>
    %c0_15 = arith.constant 0 : index
    %c0_16 = arith.constant 0 : index
    %59 = vector.load %arg6[%c0_15, %c0_16] : memref<1x32xf32, #tpu.memory_space<vmem>>, vector<1x32xf32>
    %c0_17 = arith.constant 0 : index
    %c0_18 = arith.constant 0 : index
    %60 = vector.load %arg7[%c0_17, %c0_18] : memref<1x32xf32, #tpu.memory_space<vmem>>, vector<1x32xf32>
    %cst_19 = arith.constant dense<0.000000e+00> : vector<8xf32>
    %61 = vector.multi_reduction <add>, %58, %cst_19 [1] : vector<8x32xf32> to vector<8xf32>
    %62 = vector.shape_cast %61 : vector<8xf32> to vector<8x1xf32>
    %cst_20 = arith.constant 3.200000e+01 : f32
    %63 = vector.broadcast %cst_20 : f32 to vector<8x1xf32>
    %64 = arith.divf %62, %63 : vector<8x1xf32>
    %65 = vector.broadcast %64 : vector<8x1xf32> to vector<8x32xf32>
    %66 = arith.subf %58, %65 : vector<8x32xf32>
    %67 = arith.mulf %66, %66 : vector<8x32xf32>
    %cst_21 = arith.constant dense<0.000000e+00> : vector<8xf32>
    %68 = vector.multi_reduction <add>, %67, %cst_21 [1] : vector<8x32xf32> to vector<8xf32>
    %69 = vector.shape_cast %68 : vector<8xf32> to vector<8x1xf32>
    %cst_22 = arith.constant 3.200000e+01 : f32
    %70 = vector.broadcast %cst_22 : f32 to vector<8x1xf32>
    %71 = arith.divf %69, %70 : vector<8x1xf32>
    %cst_23 = arith.constant 9.99999974E-6 : f32
    %72 = vector.broadcast %cst_23 : f32 to vector<8x1xf32>
    %73 = arith.addf %71, %72 : vector<8x1xf32>
    %74 = math.rsqrt %73 : vector<8x1xf32>
    %75 = vector.broadcast %74 : vector<8x1xf32> to vector<8x32xf32>
    %76 = arith.mulf %66, %75 : vector<8x32xf32>
    %77 = vector.broadcast %59 : vector<1x32xf32> to vector<8x32xf32>
    %78 = arith.mulf %76, %77 : vector<8x32xf32>
    %79 = vector.broadcast %60 : vector<1x32xf32> to vector<8x32xf32>
    %80 = arith.addf %78, %79 : vector<8x32xf32>
    %81 = arith.truncf %80 : vector<8x32xf32> to vector<8x32xbf16>
    %c0_24 = arith.constant 0 : index
    %c0_25 = arith.constant 0 : index
    %82 = vector.load %arg8[%c0_24, %c0_25] : memref<32x2048xbf16, #tpu.memory_space<vmem>>, vector<32x2048xbf16>
    %cst_26 = arith.constant dense<0.000000e+00> : vector<8x2048xf32>
    %83 = tpu.matmul %81, %82, %cst_26 {dimension_numbers = #tpu.dot_dimension_numbers<[1], [0], [0], [1], [0, 0, 1, 1], [], []>} : vector<8x32xbf16>, vector<32x2048xbf16>, vector<8x2048xf32> -> vector<8x2048xf32>
    %c0_27 = arith.constant 0 : index
    %c0_28 = arith.constant 0 : index
    %84 = vector.load %arg9[%c0_27, %c0_28] : memref<1x2048xf32, #tpu.memory_space<vmem>>, vector<1x2048xf32>
    %85 = vector.broadcast %84 : vector<1x2048xf32> to vector<8x2048xf32>
    %86 = arith.addf %83, %85 : vector<8x2048xf32>
    %cst_29 = arith.constant 0.000000e+00 : f32
    %87 = vector.broadcast %cst_29 : f32 to vector<8x2048xf32>
    %88 = arith.maximumf %86, %87 : vector<8x2048xf32>
    %89 = arith.truncf %88 : vector<8x2048xf32> to vector<8x2048xbf16>
    %c0_30 = arith.constant 0 : index
    %c0_31 = arith.constant 0 : index
    %90 = vector.load %arg10[%c0_30, %c0_31] : memref<2048x32xbf16, #tpu.memory_space<vmem>>, vector<2048x32xbf16>
    %cst_32 = arith.constant dense<0.000000e+00> : vector<8x32xf32>
    %91 = tpu.matmul %89, %90, %cst_32 {dimension_numbers = #tpu.dot_dimension_numbers<[1], [0], [0], [1], [0, 0, 1, 1], [], []>} : vector<8x2048xbf16>, vector<2048x32xbf16>, vector<8x32xf32> -> vector<8x32xf32>
    %c0_33 = arith.constant 0 : index
    %c0_34 = arith.constant 0 : index
    %92 = vector.load %arg11[%c0_33, %c0_34] : memref<1x32xf32, #tpu.memory_space<vmem>>, vector<1x32xf32>
    %93 = vector.broadcast %92 : vector<1x32xf32> to vector<8x32xf32>
    %94 = arith.addf %91, %93 : vector<8x32xf32>
    %95 = arith.addf %80, %94 : vector<8x32xf32>
    %c0_35 = arith.constant 0 : index
    %c0_36 = arith.constant 0 : index
    %96 = vector.load %arg12[%c0_35, %c0_36] : memref<1x32xf32, #tpu.memory_space<vmem>>, vector<1x32xf32>
    %c0_37 = arith.constant 0 : index
    %c0_38 = arith.constant 0 : index
    %97 = vector.load %arg13[%c0_37, %c0_38] : memref<1x32xf32, #tpu.memory_space<vmem>>, vector<1x32xf32>
    %cst_39 = arith.constant dense<0.000000e+00> : vector<8xf32>
    %98 = vector.multi_reduction <add>, %95, %cst_39 [1] : vector<8x32xf32> to vector<8xf32>
    %99 = vector.shape_cast %98 : vector<8xf32> to vector<8x1xf32>
    %cst_40 = arith.constant 3.200000e+01 : f32
    %100 = vector.broadcast %cst_40 : f32 to vector<8x1xf32>
    %101 = arith.divf %99, %100 : vector<8x1xf32>
    %102 = vector.broadcast %101 : vector<8x1xf32> to vector<8x32xf32>
    %103 = arith.subf %95, %102 : vector<8x32xf32>
    %104 = arith.mulf %103, %103 : vector<8x32xf32>
    %cst_41 = arith.constant dense<0.000000e+00> : vector<8xf32>
    %105 = vector.multi_reduction <add>, %104, %cst_41 [1] : vector<8x32xf32> to vector<8xf32>
    %106 = vector.shape_cast %105 : vector<8xf32> to vector<8x1xf32>
    %cst_42 = arith.constant 3.200000e+01 : f32
    %107 = vector.broadcast %cst_42 : f32 to vector<8x1xf32>
    %108 = arith.divf %106, %107 : vector<8x1xf32>
    %cst_43 = arith.constant 9.99999974E-6 : f32
    %109 = vector.broadcast %cst_43 : f32 to vector<8x1xf32>
    %110 = arith.addf %108, %109 : vector<8x1xf32>
    %111 = math.rsqrt %110 : vector<8x1xf32>
    %112 = vector.broadcast %111 : vector<8x1xf32> to vector<8x32xf32>
    %113 = arith.mulf %103, %112 : vector<8x32xf32>
    %114 = vector.broadcast %96 : vector<1x32xf32> to vector<8x32xf32>
    %115 = arith.mulf %113, %114 : vector<8x32xf32>
    %116 = vector.broadcast %97 : vector<1x32xf32> to vector<8x32xf32>
    %117 = arith.addf %115, %116 : vector<8x32xf32>
    %118 = arith.truncf %117 : vector<8x32xf32> to vector<8x32xbf16>
    %c0_44 = arith.constant 0 : index
    %c0_45 = arith.constant 0 : index
    %119 = vector.load %arg14[%c0_44, %c0_45] : memref<8x32xbf16, #tpu.memory_space<vmem>>, vector<8x32xbf16>
    tpu.vector_store %arg14[%c0_44, %c0_45], %118 {strides = array<i32>} : memref<8x32xbf16, #tpu.memory_space<vmem>>, vector<8x32xbf16>,
    return
  }
  func.func @transform_0(%arg0: i32) -> (i32, i32) {
    %c0_i32 = arith.constant 0 : i32
    %c0_i32_0 = arith.constant 0 : i32
    return %arg0, %c0_i32 : i32, i32
  }
  func.func @transform_1(%arg0: i32) -> (i32, i32) {
    %c0_i32 = arith.constant 0 : i32
    %c0_i32_0 = arith.constant 0 : i32
    %c0_i32_1 = arith.constant 0 : i32
    return %c0_i32, %c0_i32_0 : i32, i32
  }
  func.func @transform_2(%arg0: i32) -> (i32, i32) {
    %c0_i32 = arith.constant 0 : i32
    %c0_i32_0 = arith.constant 0 : i32
    %c0_i32_1 = arith.constant 0 : i32
    return %c0_i32, %c0_i32_0 : i32, i32
  }
  func.func @transform_3(%arg0: i32) -> (i32, i32) {
    %c0_i32 = arith.constant 0 : i32
    %c0_i32_0 = arith.constant 0 : i32
    %c0_i32_1 = arith.constant 0 : i32
    return %c0_i32, %c0_i32_0 : i32, i32
  }
  func.func @transform_4(%arg0: i32) -> (i32, i32) {
    %c0_i32 = arith.constant 0 : i32
    %c0_i32_0 = arith.constant 0 : i32
    %c0_i32_1 = arith.constant 0 : i32
    return %c0_i32, %c0_i32_0 : i32, i32
  }
  func.func @transform_5(%arg0: i32) -> (i32, i32) {
    %c0_i32 = arith.constant 0 : i32
    %c0_i32_0 = arith.constant 0 : i32
    %c0_i32_1 = arith.constant 0 : i32
    return %c0_i32, %c0_i32_0 : i32, i32
  }
  func.func @transform_6(%arg0: i32) -> (i32, i32) {
    %c0_i32 = arith.constant 0 : i32
    %c0_i32_0 = arith.constant 0 : i32
    %c0_i32_1 = arith.constant 0 : i32
    return %c0_i32, %c0_i32_0 : i32, i32
  }
  func.func @transform_7(%arg0: i32) -> (i32, i32) {
    %c0_i32 = arith.constant 0 : i32
    %c0_i32_0 = arith.constant 0 : i32
    %c0_i32_1 = arith.constant 0 : i32
    return %c0_i32, %c0_i32_0 : i32, i32
  }
  func.func @transform_8(%arg0: i32) -> (i32, i32) {
    %c0_i32 = arith.constant 0 : i32
    %c0_i32_0 = arith.constant 0 : i32
    %c0_i32_1 = arith.constant 0 : i32
    return %c0_i32, %c0_i32_0 : i32, i32
  }
  func.func @transform_9(%arg0: i32) -> (i32, i32) {
    %c0_i32 = arith.constant 0 : i32
    %c0_i32_0 = arith.constant 0 : i32
    %c0_i32_1 = arith.constant 0 : i32
    return %c0_i32, %c0_i32_0 : i32, i32
  }
  func.func @transform_10(%arg0: i32) -> (i32, i32) {
    %c0_i32 = arith.constant 0 : i32
    %c0_i32_0 = arith.constant 0 : i32
    %c0_i32_1 = arith.constant 0 : i32
    return %c0_i32, %c0_i32_0 : i32, i32
  }
  func.func @transform_11(%arg0: i32) -> (i32, i32) {
    %c0_i32 = arith.constant 0 : i32
    %c0_i32_0 = arith.constant 0 : i32
    %c0_i32_1 = arith.constant 0 : i32
    return %c0_i32, %c0_i32_0 : i32, i32
  }
  func.func @transform_12(%arg0: i32) -> (i32, i32) {
    %c0_i32 = arith.constant 0 : i32
    %c0_i32_0 = arith.constant 0 : i32
    %c0_i32_1 = arith.constant 0 : i32
    return %c0_i32, %c0_i32_0 : i32, i32
  }
  func.func @transform_13(%arg0: i32) -> (i32, i32) {
    %c0_i32 = arith.constant 0 : i32
    %c0_i32_0 = arith.constant 0 : i32
    return %arg0, %c0_i32 : i32, i32
  }
}

module attributes {stable_mosaic.version = 11 : i64} {
  func.func @pool_fc_kernel(%arg0: i32, %arg1: memref<2x8x32xbf16, #tpu.memory_space<vmem>>, %arg2: memref<32x32xbf16, #tpu.memory_space<vmem>>, %arg3: memref<1x32xf32, #tpu.memory_space<vmem>>, %arg4: memref<4x32xf32, #tpu.memory_space<vmem>>, %arg5: memref<4x32xf32, #tpu.memory_space<vmem>>) attributes {dimension_semantics = [#tpu.dimension_semantics<arbitrary>], iteration_bounds = array<i64: 2>, scalar_prefetch = 0 : i64, scratch_operands = 1 : i64, tpu.core_type = #tpu.core_type<tc>, window_params = [{transform_indices = @transform_0, window_bounds = array<i64: 2, 8, 32>}, {pipeline_mode = #tpu.pipeline_mode<synchronous>, transform_indices = @transform_1, window_bounds = array<i64: 32, 32>}, {pipeline_mode = #tpu.pipeline_mode<synchronous>, transform_indices = @transform_2, window_bounds = array<i64: 1, 32>}, {pipeline_mode = #tpu.pipeline_mode<synchronous>, transform_indices = @transform_3, window_bounds = array<i64: 4, 32>}]} {
    %c0_i32 = arith.constant 0 : i32
    %0 = arith.cmpi eq, %arg0, %c0_i32 : i32
    %1 = arith.extui %0 : i1 to i32
    %c0_i32_0 = arith.constant 0 : i32
    %2 = arith.cmpi ne, %1, %c0_i32_0 : i32
    scf.if %2 {
      %cst_8 = arith.constant 0.000000e+00 : f32
      %14 = vector.broadcast %cst_8 : f32 to vector<4x32xf32>
      %c0_9 = arith.constant 0 : index
      %c0_10 = arith.constant 0 : index
      %15 = vector.load %arg5[%c0_9, %c0_10] : memref<4x32xf32, #tpu.memory_space<vmem>>, vector<4x32xf32>
      tpu.vector_store %arg5[%c0_9, %c0_10], %14 {strides = array<i32>} : memref<4x32xf32, #tpu.memory_space<vmem>>, vector<4x32xf32>,
    } else {
    }
    %c0 = arith.constant 0 : index
    %c0_1 = arith.constant 0 : index
    %c0_2 = arith.constant 0 : index
    %3 = vector.load %arg1[%c0, %c0_1, %c0_2] : memref<2x8x32xbf16, #tpu.memory_space<vmem>>, vector<2x8x32xbf16>
    %4 = arith.extf %3 : vector<2x8x32xbf16> to vector<2x8x32xf32>
    %c0_3 = arith.constant 0 : index
    %c0_4 = arith.constant 0 : index
    %5 = vector.load %arg5[%c0_3, %c0_4] : memref<4x32xf32, #tpu.memory_space<vmem>>, vector<4x32xf32>
    %6 = vector.shape_cast %4 : vector<2x8x32xf32> to vector<2x4x2x32xf32>
    %cst = arith.constant dense<0.000000e+00> : vector<2x2x32xf32>
    %7 = vector.multi_reduction <add>, %6, %cst [1] : vector<2x4x2x32xf32> to vector<2x2x32xf32>
    %8 = vector.shape_cast %7 : vector<2x2x32xf32> to vector<4x32xf32>
    %9 = arith.addf %5, %8 : vector<4x32xf32>
    %c0_5 = arith.constant 0 : index
    %c0_6 = arith.constant 0 : index
    %10 = vector.load %arg5[%c0_5, %c0_6] : memref<4x32xf32, #tpu.memory_space<vmem>>, vector<4x32xf32>
    tpu.vector_store %arg5[%c0_5, %c0_6], %9 {strides = array<i32>} : memref<4x32xf32, #tpu.memory_space<vmem>>, vector<4x32xf32>,
    %c1_i32 = arith.constant 1 : i32
    %11 = arith.cmpi eq, %arg0, %c1_i32 : i32
    %12 = arith.extui %11 : i1 to i32
    %c0_i32_7 = arith.constant 0 : i32
    %13 = arith.cmpi ne, %12, %c0_i32_7 : i32
    scf.if %13 {
      %c0_8 = arith.constant 0 : index
      %c0_9 = arith.constant 0 : index
      %14 = vector.load %arg5[%c0_8, %c0_9] : memref<4x32xf32, #tpu.memory_space<vmem>>, vector<4x32xf32>
      %cst_10 = arith.constant 1.250000e-01 : f32
      %15 = vector.broadcast %cst_10 : f32 to vector<4x32xf32>
      %16 = arith.mulf %14, %15 : vector<4x32xf32>
      %17 = arith.truncf %16 : vector<4x32xf32> to vector<4x32xbf16>
      %c0_11 = arith.constant 0 : index
      %c0_12 = arith.constant 0 : index
      %18 = vector.load %arg2[%c0_11, %c0_12] : memref<32x32xbf16, #tpu.memory_space<vmem>>, vector<32x32xbf16>
      %cst_13 = arith.constant dense<0.000000e+00> : vector<4x32xf32>
      %19 = tpu.matmul %17, %18, %cst_13 {dimension_numbers = #tpu.dot_dimension_numbers<[1], [0], [0], [1], [0, 0, 1, 1], [], []>} : vector<4x32xbf16>, vector<32x32xbf16>, vector<4x32xf32> -> vector<4x32xf32>
      %c0_14 = arith.constant 0 : index
      %c0_15 = arith.constant 0 : index
      %20 = vector.load %arg3[%c0_14, %c0_15] : memref<1x32xf32, #tpu.memory_space<vmem>>, vector<1x32xf32>
      %21 = vector.broadcast %20 : vector<1x32xf32> to vector<4x32xf32>
      %22 = arith.addf %19, %21 : vector<4x32xf32>
      %c0_16 = arith.constant 0 : index
      %c0_17 = arith.constant 0 : index
      %23 = vector.load %arg4[%c0_16, %c0_17] : memref<4x32xf32, #tpu.memory_space<vmem>>, vector<4x32xf32>
      tpu.vector_store %arg4[%c0_16, %c0_17], %22 {strides = array<i32>} : memref<4x32xf32, #tpu.memory_space<vmem>>, vector<4x32xf32>,
    } else {
    }
    return
  }
  func.func @transform_0(%arg0: i32) -> (i32, i32, i32) {
    %c0_i32 = arith.constant 0 : i32
    %c0_i32_0 = arith.constant 0 : i32
    %c0_i32_1 = arith.constant 0 : i32
    return %c0_i32, %arg0, %c0_i32_0 : i32, i32, i32
  }
  func.func @transform_1(%arg0: i32) -> (i32, i32) {
    %c0_i32 = arith.constant 0 : i32
    %c0_i32_0 = arith.constant 0 : i32
    %c0_i32_1 = arith.constant 0 : i32
    return %c0_i32, %c0_i32_0 : i32, i32
  }
  func.func @transform_2(%arg0: i32) -> (i32, i32) {
    %c0_i32 = arith.constant 0 : i32
    %c0_i32_0 = arith.constant 0 : i32
    %c0_i32_1 = arith.constant 0 : i32
    return %c0_i32, %c0_i32_0 : i32, i32
  }
  func.func @transform_3(%arg0: i32) -> (i32, i32) {
    %c0_i32 = arith.constant 0 : i32
    %c0_i32_0 = arith.constant 0 : i32
    %c0_i32_1 = arith.constant 0 : i32
    return %c0_i32, %c0_i32_0 : i32, i32
  }
}

module attributes {stable_mosaic.version = 11 : i64} {
  func.func @encoder_layer_kernel(%arg0: i32, %arg1: memref<8x32xbf16, #tpu.memory_space<vmem>>, %arg2: memref<32x96xbf16, #tpu.memory_space<vmem>>, %arg3: memref<1x96xf32, #tpu.memory_space<vmem>>, %arg4: memref<32x32xbf16, #tpu.memory_space<vmem>>, %arg5: memref<1x32xf32, #tpu.memory_space<vmem>>, %arg6: memref<1x32xf32, #tpu.memory_space<vmem>>, %arg7: memref<1x32xf32, #tpu.memory_space<vmem>>, %arg8: memref<32x2048xbf16, #tpu.memory_space<vmem>>, %arg9: memref<1x2048xf32, #tpu.memory_space<vmem>>, %arg10: memref<2048x32xbf16, #tpu.memory_space<vmem>>, %arg11: memref<1x32xf32, #tpu.memory_space<vmem>>, %arg12: memref<1x32xf32, #tpu.memory_space<vmem>>, %arg13: memref<1x32xf32, #tpu.memory_space<vmem>>, %arg14: memref<8x32xbf16, #tpu.memory_space<vmem>>) attributes {dimension_semantics = [#tpu.dimension_semantics<parallel>], iteration_bounds = array<i64: 4>, scalar_prefetch = 0 : i64, scratch_operands = 0 : i64, tpu.core_type = #tpu.core_type<tc>, window_params = [{transform_indices = @transform_0, window_bounds = array<i64: 8, 32>}, {pipeline_mode = #tpu.pipeline_mode<synchronous>, transform_indices = @transform_1, window_bounds = array<i64: 32, 96>}, {pipeline_mode = #tpu.pipeline_mode<synchronous>, transform_indices = @transform_2, window_bounds = array<i64: 1, 96>}, {pipeline_mode = #tpu.pipeline_mode<synchronous>, transform_indices = @transform_3, window_bounds = array<i64: 32, 32>}, {pipeline_mode = #tpu.pipeline_mode<synchronous>, transform_indices = @transform_4, window_bounds = array<i64: 1, 32>}, {pipeline_mode = #tpu.pipeline_mode<synchronous>, transform_indices = @transform_5, window_bounds = array<i64: 1, 32>}, {pipeline_mode = #tpu.pipeline_mode<synchronous>, transform_indices = @transform_6, window_bounds = array<i64: 1, 32>}, {pipeline_mode = #tpu.pipeline_mode<synchronous>, transform_indices = @transform_7, window_bounds = array<i64: 32, 2048>}, {pipeline_mode = #tpu.pipeline_mode<synchronous>, transform_indices = @transform_8, window_bounds = array<i64: 1, 2048>}, {pipeline_mode = #tpu.pipeline_mode<synchronous>, transform_indices = @transform_9, window_bounds = array<i64: 2048, 32>}, {pipeline_mode = #tpu.pipeline_mode<synchronous>, transform_indices = @transform_10, window_bounds = array<i64: 1, 32>}, {pipeline_mode = #tpu.pipeline_mode<synchronous>, transform_indices = @transform_11, window_bounds = array<i64: 1, 32>}, {pipeline_mode = #tpu.pipeline_mode<synchronous>, transform_indices = @transform_12, window_bounds = array<i64: 1, 32>}, {transform_indices = @transform_13, window_bounds = array<i64: 8, 32>}]} {
    %c0 = arith.constant 0 : index
    %c0_0 = arith.constant 0 : index
    %0 = vector.load %arg1[%c0, %c0_0] : memref<8x32xbf16, #tpu.memory_space<vmem>>, vector<8x32xbf16>
    %1 = arith.extf %0 : vector<8x32xbf16> to vector<8x32xf32>
    %c0_1 = arith.constant 0 : index
    %c0_2 = arith.constant 0 : index
    %2 = vector.load %arg2[%c0_1, %c0_2] : memref<32x96xbf16, #tpu.memory_space<vmem>>, vector<32x96xbf16>
    %cst = arith.constant dense<0.000000e+00> : vector<8x96xf32>
    %3 = tpu.matmul %0, %2, %cst {dimension_numbers = #tpu.dot_dimension_numbers<[1], [0], [0], [1], [0, 0, 1, 1], [], []>} : vector<8x32xbf16>, vector<32x96xbf16>, vector<8x96xf32> -> vector<8x96xf32>
    %c0_3 = arith.constant 0 : index
    %c0_4 = arith.constant 0 : index
    %4 = vector.load %arg3[%c0_3, %c0_4] : memref<1x96xf32, #tpu.memory_space<vmem>>, vector<1x96xf32>
    %5 = vector.broadcast %4 : vector<1x96xf32> to vector<8x96xf32>
    %6 = arith.addf %3, %5 : vector<8x96xf32>
    %7 = vector.extract_strided_slice %6 {offsets = [0, 0], sizes = [8, 32], strides = [1, 1]} : vector<8x96xf32> to vector<8x32xf32>
    %cst_5 = arith.constant 0.353553385 : f32
    %8 = vector.broadcast %cst_5 : f32 to vector<8x32xf32>
    %9 = arith.mulf %7, %8 : vector<8x32xf32>
    %10 = arith.truncf %9 : vector<8x32xf32> to vector<8x32xbf16>
    %11 = vector.extract_strided_slice %6 {offsets = [0, 32], sizes = [8, 32], strides = [1, 1]} : vector<8x96xf32> to vector<8x32xf32>
    %12 = arith.truncf %11 : vector<8x32xf32> to vector<8x32xbf16>
    %13 = vector.extract_strided_slice %6 {offsets = [0, 64], sizes = [8, 32], strides = [1, 1]} : vector<8x96xf32> to vector<8x32xf32>
    %14 = arith.truncf %13 : vector<8x32xf32> to vector<8x32xbf16>
    %15 = vector.shape_cast %10 : vector<8x32xbf16> to vector<4x2x32xbf16>
    %16 = vector.extract_strided_slice %15 {offsets = [0, 0, 0], sizes = [4, 2, 8], strides = [1, 1, 1]} : vector<4x2x32xbf16> to vector<4x2x8xbf16>
    %17 = vector.extract_strided_slice %15 {offsets = [0, 0, 8], sizes = [4, 2, 8], strides = [1, 1, 1]} : vector<4x2x32xbf16> to vector<4x2x8xbf16>
    %18 = vector.extract_strided_slice %15 {offsets = [0, 0, 16], sizes = [4, 2, 8], strides = [1, 1, 1]} : vector<4x2x32xbf16> to vector<4x2x8xbf16>
    %19 = vector.extract_strided_slice %15 {offsets = [0, 0, 24], sizes = [4, 2, 8], strides = [1, 1, 1]} : vector<4x2x32xbf16> to vector<4x2x8xbf16>
    %20 = tpu.concatenate %16, %17, %18, %19 in 0 : vector<4x2x8xbf16>, vector<4x2x8xbf16>, vector<4x2x8xbf16>, vector<4x2x8xbf16> -> vector<16x2x8xbf16>
    %21 = vector.shape_cast %12 : vector<8x32xbf16> to vector<4x2x32xbf16>
    %22 = vector.extract_strided_slice %21 {offsets = [0, 0, 0], sizes = [4, 2, 8], strides = [1, 1, 1]} : vector<4x2x32xbf16> to vector<4x2x8xbf16>
    %23 = vector.extract_strided_slice %21 {offsets = [0, 0, 8], sizes = [4, 2, 8], strides = [1, 1, 1]} : vector<4x2x32xbf16> to vector<4x2x8xbf16>
    %24 = vector.extract_strided_slice %21 {offsets = [0, 0, 16], sizes = [4, 2, 8], strides = [1, 1, 1]} : vector<4x2x32xbf16> to vector<4x2x8xbf16>
    %25 = vector.extract_strided_slice %21 {offsets = [0, 0, 24], sizes = [4, 2, 8], strides = [1, 1, 1]} : vector<4x2x32xbf16> to vector<4x2x8xbf16>
    %26 = tpu.concatenate %22, %23, %24, %25 in 0 : vector<4x2x8xbf16>, vector<4x2x8xbf16>, vector<4x2x8xbf16>, vector<4x2x8xbf16> -> vector<16x2x8xbf16>
    %27 = vector.shape_cast %14 : vector<8x32xbf16> to vector<4x2x32xbf16>
    %28 = vector.extract_strided_slice %27 {offsets = [0, 0, 0], sizes = [4, 2, 8], strides = [1, 1, 1]} : vector<4x2x32xbf16> to vector<4x2x8xbf16>
    %29 = vector.extract_strided_slice %27 {offsets = [0, 0, 8], sizes = [4, 2, 8], strides = [1, 1, 1]} : vector<4x2x32xbf16> to vector<4x2x8xbf16>
    %30 = vector.extract_strided_slice %27 {offsets = [0, 0, 16], sizes = [4, 2, 8], strides = [1, 1, 1]} : vector<4x2x32xbf16> to vector<4x2x8xbf16>
    %31 = vector.extract_strided_slice %27 {offsets = [0, 0, 24], sizes = [4, 2, 8], strides = [1, 1, 1]} : vector<4x2x32xbf16> to vector<4x2x8xbf16>
    %32 = tpu.concatenate %28, %29, %30, %31 in 0 : vector<4x2x8xbf16>, vector<4x2x8xbf16>, vector<4x2x8xbf16>, vector<4x2x8xbf16> -> vector<16x2x8xbf16>
    "tpu.trace_start"() <{level = 10 : i32, message = "bqd,bkd->bqk"}> : () -> ()
    %cst_6 = arith.constant dense<0.000000e+00> : vector<16x2x2xf32>
    %33 = tpu.matmul %20, %26, %cst_6 {dimension_numbers = #tpu.dot_dimension_numbers<[2], [2], [1], [1], [0, 0, 0, 1, 1, 1], [0], [0]>} : vector<16x2x8xbf16>, vector<16x2x8xbf16>, vector<16x2x2xf32> -> vector<16x2x2xf32>
    "tpu.trace_stop"() : () -> ()
    %cst_7 = arith.constant dense<0xFF800000> : vector<16x2xf32>
    %34 = vector.multi_reduction <maximumf>, %33, %cst_7 [2] : vector<16x2x2xf32> to vector<16x2xf32>
    %35 = vector.shape_cast %34 : vector<16x2xf32> to vector<16x2x1xf32>
    %36 = vector.broadcast %35 : vector<16x2x1xf32> to vector<16x2x2xf32>
    %37 = arith.subf %33, %36 : vector<16x2x2xf32>
    %38 = math.exp %37 : vector<16x2x2xf32>
    %cst_8 = arith.constant dense<0.000000e+00> : vector<16x2xf32>
    %39 = vector.multi_reduction <add>, %38, %cst_8 [2] : vector<16x2x2xf32> to vector<16x2xf32>
    %40 = vector.shape_cast %39 : vector<16x2xf32> to vector<16x2x1xf32>
    %41 = tpu.reciprocal %40 {approx = true} : vector<16x2x1xf32> -> vector<16x2x1xf32>
    %42 = vector.broadcast %41 : vector<16x2x1xf32> to vector<16x2x2xf32>
    %43 = arith.mulf %38, %42 : vector<16x2x2xf32>
    %44 = arith.truncf %43 : vector<16x2x2xf32> to vector<16x2x2xbf16>
    "tpu.trace_start"() <{level = 10 : i32, message = "bqk,bkd->bqd"}> : () -> ()
    %cst_9 = arith.constant dense<0.000000e+00> : vector<16x2x8xf32>
    %45 = tpu.matmul %44, %32, %cst_9 {dimension_numbers = #tpu.dot_dimension_numbers<[2], [1], [1], [2], [0, 0, 0, 1, 1, 2], [0], [0]>} : vector<16x2x2xbf16>, vector<16x2x8xbf16>, vector<16x2x8xf32> -> vector<16x2x8xf32>
    "tpu.trace_stop"() : () -> ()
    %46 = vector.extract_strided_slice %45 {offsets = [0, 0, 0], sizes = [4, 2, 8], strides = [1, 1, 1]} : vector<16x2x8xf32> to vector<4x2x8xf32>
    %47 = vector.extract_strided_slice %45 {offsets = [4, 0, 0], sizes = [4, 2, 8], strides = [1, 1, 1]} : vector<16x2x8xf32> to vector<4x2x8xf32>
    %48 = vector.extract_strided_slice %45 {offsets = [8, 0, 0], sizes = [4, 2, 8], strides = [1, 1, 1]} : vector<16x2x8xf32> to vector<4x2x8xf32>
    %49 = vector.extract_strided_slice %45 {offsets = [12, 0, 0], sizes = [4, 2, 8], strides = [1, 1, 1]} : vector<16x2x8xf32> to vector<4x2x8xf32>
    %50 = tpu.concatenate %46, %47, %48, %49 in 2 : vector<4x2x8xf32>, vector<4x2x8xf32>, vector<4x2x8xf32>, vector<4x2x8xf32> -> vector<4x2x32xf32>
    %51 = vector.shape_cast %50 : vector<4x2x32xf32> to vector<8x32xf32>
    %52 = arith.truncf %51 : vector<8x32xf32> to vector<8x32xbf16>
    %c0_10 = arith.constant 0 : index
    %c0_11 = arith.constant 0 : index
    %53 = vector.load %arg4[%c0_10, %c0_11] : memref<32x32xbf16, #tpu.memory_space<vmem>>, vector<32x32xbf16>
    %cst_12 = arith.constant dense<0.000000e+00> : vector<8x32xf32>
    %54 = tpu.matmul %52, %53, %cst_12 {dimension_numbers = #tpu.dot_dimension_numbers<[1], [0], [0], [1], [0, 0, 1, 1], [], []>} : vector<8x32xbf16>, vector<32x32xbf16>, vector<8x32xf32> -> vector<8x32xf32>
    %c0_13 = arith.constant 0 : index
    %c0_14 = arith.constant 0 : index
    %55 = vector.load %arg5[%c0_13, %c0_14] : memref<1x32xf32, #tpu.memory_space<vmem>>, vector<1x32xf32>
    %56 = vector.broadcast %55 : vector<1x32xf32> to vector<8x32xf32>
    %57 = arith.addf %54, %56 : vector<8x32xf32>
    %58 = arith.addf %1, %57 : vector<8x32xf32>
    %c0_15 = arith.constant 0 : index
    %c0_16 = arith.constant 0 : index
    %59 = vector.load %arg6[%c0_15, %c0_16] : memref<1x32xf32, #tpu.memory_space<vmem>>, vector<1x32xf32>
    %c0_17 = arith.constant 0 : index
    %c0_18 = arith.constant 0 : index
    %60 = vector.load %arg7[%c0_17, %c0_18] : memref<1x32xf32, #tpu.memory_space<vmem>>, vector<1x32xf32>
    %cst_19 = arith.constant dense<0.000000e+00> : vector<8xf32>
    %61 = vector.multi_reduction <add>, %58, %cst_19 [1] : vector<8x32xf32> to vector<8xf32>
    %62 = vector.shape_cast %61 : vector<8xf32> to vector<8x1xf32>
    %cst_20 = arith.constant 3.200000e+01 : f32
    %63 = vector.broadcast %cst_20 : f32 to vector<8x1xf32>
    %64 = arith.divf %62, %63 : vector<8x1xf32>
    %65 = vector.broadcast %64 : vector<8x1xf32> to vector<8x32xf32>
    %66 = arith.subf %58, %65 : vector<8x32xf32>
    %67 = arith.mulf %66, %66 : vector<8x32xf32>
    %cst_21 = arith.constant dense<0.000000e+00> : vector<8xf32>
    %68 = vector.multi_reduction <add>, %67, %cst_21 [1] : vector<8x32xf32> to vector<8xf32>
    %69 = vector.shape_cast %68 : vector<8xf32> to vector<8x1xf32>
    %cst_22 = arith.constant 3.200000e+01 : f32
    %70 = vector.broadcast %cst_22 : f32 to vector<8x1xf32>
    %71 = arith.divf %69, %70 : vector<8x1xf32>
    %cst_23 = arith.constant 9.99999974E-6 : f32
    %72 = vector.broadcast %cst_23 : f32 to vector<8x1xf32>
    %73 = arith.addf %71, %72 : vector<8x1xf32>
    %74 = math.rsqrt %73 : vector<8x1xf32>
    %75 = vector.broadcast %74 : vector<8x1xf32> to vector<8x32xf32>
    %76 = arith.mulf %66, %75 : vector<8x32xf32>
    %77 = vector.broadcast %59 : vector<1x32xf32> to vector<8x32xf32>
    %78 = arith.mulf %76, %77 : vector<8x32xf32>
    %79 = vector.broadcast %60 : vector<1x32xf32> to vector<8x32xf32>
    %80 = arith.addf %78, %79 : vector<8x32xf32>
    %81 = arith.truncf %80 : vector<8x32xf32> to vector<8x32xbf16>
    %c0_24 = arith.constant 0 : index
    %c0_25 = arith.constant 0 : index
    %82 = vector.load %arg8[%c0_24, %c0_25] : memref<32x2048xbf16, #tpu.memory_space<vmem>>, vector<32x2048xbf16>
    %cst_26 = arith.constant dense<0.000000e+00> : vector<8x2048xf32>
    %83 = tpu.matmul %81, %82, %cst_26 {dimension_numbers = #tpu.dot_dimension_numbers<[1], [0], [0], [1], [0, 0, 1, 1], [], []>} : vector<8x32xbf16>, vector<32x2048xbf16>, vector<8x2048xf32> -> vector<8x2048xf32>
    %c0_27 = arith.constant 0 : index
    %c0_28 = arith.constant 0 : index
    %84 = vector.load %arg9[%c0_27, %c0_28] : memref<1x2048xf32, #tpu.memory_space<vmem>>, vector<1x2048xf32>
    %85 = vector.broadcast %84 : vector<1x2048xf32> to vector<8x2048xf32>
    %86 = arith.addf %83, %85 : vector<8x2048xf32>
    %cst_29 = arith.constant 0.000000e+00 : f32
    %87 = vector.broadcast %cst_29 : f32 to vector<8x2048xf32>
    %88 = arith.maximumf %86, %87 : vector<8x2048xf32>
    %89 = arith.truncf %88 : vector<8x2048xf32> to vector<8x2048xbf16>
    %c0_30 = arith.constant 0 : index
    %c0_31 = arith.constant 0 : index
    %90 = vector.load %arg10[%c0_30, %c0_31] : memref<2048x32xbf16, #tpu.memory_space<vmem>>, vector<2048x32xbf16>
    %cst_32 = arith.constant dense<0.000000e+00> : vector<8x32xf32>
    %91 = tpu.matmul %89, %90, %cst_32 {dimension_numbers = #tpu.dot_dimension_numbers<[1], [0], [0], [1], [0, 0, 1, 1], [], []>} : vector<8x2048xbf16>, vector<2048x32xbf16>, vector<8x32xf32> -> vector<8x32xf32>
    %c0_33 = arith.constant 0 : index
    %c0_34 = arith.constant 0 : index
    %92 = vector.load %arg11[%c0_33, %c0_34] : memref<1x32xf32, #tpu.memory_space<vmem>>, vector<1x32xf32>
    %93 = vector.broadcast %92 : vector<1x32xf32> to vector<8x32xf32>
    %94 = arith.addf %91, %93 : vector<8x32xf32>
    %95 = arith.addf %80, %94 : vector<8x32xf32>
    %c0_35 = arith.constant 0 : index
    %c0_36 = arith.constant 0 : index
    %96 = vector.load %arg12[%c0_35, %c0_36] : memref<1x32xf32, #tpu.memory_space<vmem>>, vector<1x32xf32>
    %c0_37 = arith.constant 0 : index
    %c0_38 = arith.constant 0 : index
    %97 = vector.load %arg13[%c0_37, %c0_38] : memref<1x32xf32, #tpu.memory_space<vmem>>, vector<1x32xf32>
    %cst_39 = arith.constant dense<0.000000e+00> : vector<8xf32>
    %98 = vector.multi_reduction <add>, %95, %cst_39 [1] : vector<8x32xf32> to vector<8xf32>
    %99 = vector.shape_cast %98 : vector<8xf32> to vector<8x1xf32>
    %cst_40 = arith.constant 3.200000e+01 : f32
    %100 = vector.broadcast %cst_40 : f32 to vector<8x1xf32>
    %101 = arith.divf %99, %100 : vector<8x1xf32>
    %102 = vector.broadcast %101 : vector<8x1xf32> to vector<8x32xf32>
    %103 = arith.subf %95, %102 : vector<8x32xf32>
    %104 = arith.mulf %103, %103 : vector<8x32xf32>
    %cst_41 = arith.constant dense<0.000000e+00> : vector<8xf32>
    %105 = vector.multi_reduction <add>, %104, %cst_41 [1] : vector<8x32xf32> to vector<8xf32>
    %106 = vector.shape_cast %105 : vector<8xf32> to vector<8x1xf32>
    %cst_42 = arith.constant 3.200000e+01 : f32
    %107 = vector.broadcast %cst_42 : f32 to vector<8x1xf32>
    %108 = arith.divf %106, %107 : vector<8x1xf32>
    %cst_43 = arith.constant 9.99999974E-6 : f32
    %109 = vector.broadcast %cst_43 : f32 to vector<8x1xf32>
    %110 = arith.addf %108, %109 : vector<8x1xf32>
    %111 = math.rsqrt %110 : vector<8x1xf32>
    %112 = vector.broadcast %111 : vector<8x1xf32> to vector<8x32xf32>
    %113 = arith.mulf %103, %112 : vector<8x32xf32>
    %114 = vector.broadcast %96 : vector<1x32xf32> to vector<8x32xf32>
    %115 = arith.mulf %113, %114 : vector<8x32xf32>
    %116 = vector.broadcast %97 : vector<1x32xf32> to vector<8x32xf32>
    %117 = arith.addf %115, %116 : vector<8x32xf32>
    %118 = arith.truncf %117 : vector<8x32xf32> to vector<8x32xbf16>
    %c0_44 = arith.constant 0 : index
    %c0_45 = arith.constant 0 : index
    %119 = vector.load %arg14[%c0_44, %c0_45] : memref<8x32xbf16, #tpu.memory_space<vmem>>, vector<8x32xbf16>
    tpu.vector_store %arg14[%c0_44, %c0_45], %118 {strides = array<i32>} : memref<8x32xbf16, #tpu.memory_space<vmem>>, vector<8x32xbf16>,
    return
  }
  func.func @transform_0(%arg0: i32) -> (i32, i32) {
    %c0_i32 = arith.constant 0 : i32
    %c0_i32_0 = arith.constant 0 : i32
    return %arg0, %c0_i32 : i32, i32
  }
  func.func @transform_1(%arg0: i32) -> (i32, i32) {
    %c0_i32 = arith.constant 0 : i32
    %c0_i32_0 = arith.constant 0 : i32
    %c0_i32_1 = arith.constant 0 : i32
    return %c0_i32, %c0_i32_0 : i32, i32
  }
  func.func @transform_2(%arg0: i32) -> (i32, i32) {
    %c0_i32 = arith.constant 0 : i32
    %c0_i32_0 = arith.constant 0 : i32
    %c0_i32_1 = arith.constant 0 : i32
    return %c0_i32, %c0_i32_0 : i32, i32
  }
  func.func @transform_3(%arg0: i32) -> (i32, i32) {
    %c0_i32 = arith.constant 0 : i32
    %c0_i32_0 = arith.constant 0 : i32
    %c0_i32_1 = arith.constant 0 : i32
    return %c0_i32, %c0_i32_0 : i32, i32
  }
  func.func @transform_4(%arg0: i32) -> (i32, i32) {
    %c0_i32 = arith.constant 0 : i32
    %c0_i32_0 = arith.constant 0 : i32
    %c0_i32_1 = arith.constant 0 : i32
    return %c0_i32, %c0_i32_0 : i32, i32
  }
  func.func @transform_5(%arg0: i32) -> (i32, i32) {
    %c0_i32 = arith.constant 0 : i32
    %c0_i32_0 = arith.constant 0 : i32
    %c0_i32_1 = arith.constant 0 : i32
    return %c0_i32, %c0_i32_0 : i32, i32
  }
  func.func @transform_6(%arg0: i32) -> (i32, i32) {
    %c0_i32 = arith.constant 0 : i32
    %c0_i32_0 = arith.constant 0 : i32
    %c0_i32_1 = arith.constant 0 : i32
    return %c0_i32, %c0_i32_0 : i32, i32
  }
  func.func @transform_7(%arg0: i32) -> (i32, i32) {
    %c0_i32 = arith.constant 0 : i32
    %c0_i32_0 = arith.constant 0 : i32
    %c0_i32_1 = arith.constant 0 : i32
    return %c0_i32, %c0_i32_0 : i32, i32
  }
  func.func @transform_8(%arg0: i32) -> (i32, i32) {
    %c0_i32 = arith.constant 0 : i32
    %c0_i32_0 = arith.constant 0 : i32
    %c0_i32_1 = arith.constant 0 : i32
    return %c0_i32, %c0_i32_0 : i32, i32
  }
  func.func @transform_9(%arg0: i32) -> (i32, i32) {
    %c0_i32 = arith.constant 0 : i32
    %c0_i32_0 = arith.constant 0 : i32
    %c0_i32_1 = arith.constant 0 : i32
    return %c0_i32, %c0_i32_0 : i32, i32
  }
  func.func @transform_10(%arg0: i32) -> (i32, i32) {
    %c0_i32 = arith.constant 0 : i32
    %c0_i32_0 = arith.constant 0 : i32
    %c0_i32_1 = arith.constant 0 : i32
    return %c0_i32, %c0_i32_0 : i32, i32
  }
  func.func @transform_11(%arg0: i32) -> (i32, i32) {
    %c0_i32 = arith.constant 0 : i32
    %c0_i32_0 = arith.constant 0 : i32
    %c0_i32_1 = arith.constant 0 : i32
    return %c0_i32, %c0_i32_0 : i32, i32
  }
  func.func @transform_12(%arg0: i32) -> (i32, i32) {
    %c0_i32 = arith.constant 0 : i32
    %c0_i32_0 = arith.constant 0 : i32
    %c0_i32_1 = arith.constant 0 : i32
    return %c0_i32, %c0_i32_0 : i32, i32
  }
  func.func @transform_13(%arg0: i32) -> (i32, i32) {
    %c0_i32 = arith.constant 0 : i32
    %c0_i32_0 = arith.constant 0 : i32
    return %arg0, %c0_i32 : i32, i32
  }
}

</mosaic_0001>

<llo_original>
// kernel: siamese_forward.5
$region0: #{siamese_forward.5}
  #allocation0 [shape = 'u32[]', space=smem, size = 0x4, offset = 0x4, fixed_abs, tag = 'smem constant byte address 0x4 - core index']
  #allocation1 [shape = 'u32[144,128]{1,0:T(1,128)}', space=vmem, size = 0x12000, scoped, tag = 'internal scratch']
  #allocation2 [shape = 'f32[4,32]{1,0:T(4,128)}', space=vmem, size = 0x800, scoped, tag = 'scratch operand']
  %s0 = inlined_call_operand.vmem [shape: bf16[2,16,32], index: 0, kind: input, shape index: {}]
  %s1 = inlined_call_operand.vmem [shape: bf16[32,32], index: 1, kind: input, shape index: {}]
  %s2 = inlined_call_operand.vmem [shape: f32[1,32], index: 2, kind: input, shape index: {}]
  %s3 = inlined_call_operand.vmem [shape: f32[4,32], index: 3, kind: output, shape index: {}]
  %s4 = sld [smem:[#allocation0]]
  $region94: #{siamese_forward.5} parent=0
    _
  %s6 = ssub.s32 1, %s4
  %s7 = scalar_select 0, %s6, %s4
  $region1: #{siamese_forward.5} parent=0
    #allocation3 [shape = 'u8[8192]{0}', space=vmem, size = 0x2000, scoped, tag = 'input window, operand 0']
    loop: start=0, step=1, limit=4
    $region2: #{siamese_forward.5} parent=1 // loop_pre_header
      _
    $region3: #{siamese_forward.5} parent=1 // loop_header
      %s9 = sphi 0, %s13
      %p10 = scmp.ge.s32.totalorder %s9, 4
      %s19 = sphi 0, %s21
      %s22 = sphi 0, %s19
      %s23 = sphi 0, %s22
      %s39 = sphi 0, %s23
      %s43 = sphi 0, %s43
      %s45 = sphi 0, %s43
      %s46 = sphi 0, %s45
      %s60 = sphi 0, %s46
      %s64 = sphi 0, %s64
      %s66 = sphi 0, %s64
      %s67 = sphi 0, %s66
      %s81 = sphi 0, %s67
      %s85 = sphi 0, %s85
      %s87 = sphi 0, %s85
      %s88 = sphi 0, %s87
      %s102 = sphi 0, %s88
    $region4: #{siamese_forward.5} parent=1 // loop_header_branch
      %12 = sbr.rel (%p10) target = $region8
    $region5: #{siamese_forward.5} parent=1 // loop_body
      %s14 = ssub.s32 %s9, 1
      %s15 = ssub.s32 %s9, 2
      %s16 = sadd.s32 %s9, 1
      %s17 = ssub.s32 %s9, %s16
      %p18 = scmp.eq.s32.totalorder %s17, 0
      %s20 = sadd.s32 %s19, 1
      %s21 = scalar_select %p18, %s19, %s20
      %p24 = pneg %p18
      %p25 = scmp.eq.s32.totalorder %s9, 1
      %p26 = por %p24, %p25
      %p27 = scmp.ne.s32.totalorder %s19, %s22
      %p28 = scmp.eq.s32.totalorder %s9, 0
      %p29 = por %p27, %p28
      %p30 = scmp.ne.s32.totalorder %s19, %s22
      %p31 = scmp.eq.s32.totalorder %s14, 1
      %p32 = por %p30, %p31
      %p33 = scmp.ne.s32.totalorder %s22, %s23
      %p34 = scmp.eq.s32.totalorder %s14, 0
      %p35 = por %p33, %p34
      %p36 = scmp.ne.s32.totalorder %s22, %s23
      %p37 = scmp.eq.s32.totalorder %s15, 1
      %p38 = por %p36, %p37
      %p40 = scmp.ne.s32.totalorder %s23, %s39
      %p41 = scmp.eq.s32.totalorder %s15, 0
      %p42 = por %p40, %p41
      %s44 = sadd.s32 %s43, 1
      %p47 = scmp.eq.s32.totalorder %s9, 1
      %p48 = scmp.ne.s32.totalorder %s43, %s45
      %p49 = scmp.eq.s32.totalorder %s9, 0
      %p50 = por %p48, %p49
      %p51 = scmp.ne.s32.totalorder %s43, %s45
      %p52 = scmp.eq.s32.totalorder %s14, 1
      %p53 = por %p51, %p52
      %p54 = scmp.ne.s32.totalorder %s45, %s46
      %p55 = scmp.eq.s32.totalorder %s14, 0
      %p56 = por %p54, %p55
      %p57 = scmp.ne.s32.totalorder %s45, %s46
      %p58 = scmp.eq.s32.totalorder %s15, 1
      %p59 = por %p57, %p58
      %p61 = scmp.ne.s32.totalorder %s46, %s60
      %p62 = scmp.eq.s32.totalorder %s15, 0
      %p63 = por %p61, %p62
      %s65 = sadd.s32 %s64, 1
      %p68 = scmp.eq.s32.totalorder %s9, 1
      %p69 = scmp.ne.s32.totalorder %s64, %s66
      %p70 = scmp.eq.s32.totalorder %s9, 0
      %p71 = por %p69, %p70
      %p72 = scmp.ne.s32.totalorder %s64, %s66
      %p73 = scmp.eq.s32.totalorder %s14, 1
      %p74 = por %p72, %p73
      %p75 = scmp.ne.s32.totalorder %s66, %s67
      %p76 = scmp.eq.s32.totalorder %s14, 0
      %p77 = por %p75, %p76
      %p78 = scmp.ne.s32.totalorder %s66, %s67
      %p79 = scmp.eq.s32.totalorder %s15, 1
      %p80 = por %p78, %p79
      %p82 = scmp.ne.s32.totalorder %s67, %s81
      %p83 = scmp.eq.s32.totalorder %s15, 0
      %p84 = por %p82, %p83
      %s86 = sadd.s32 %s85, 1
      %p89 = scmp.eq.s32.totalorder %s9, 1
      %p90 = scmp.ne.s32.totalorder %s85, %s87
      %p91 = scmp.eq.s32.totalorder %s9, 0
      %p92 = por %p90, %p91
      %p93 = scmp.ne.s32.totalorder %s85, %s87
      %p94 = scmp.eq.s32.totalorder %s14, 1
      %p95 = por %p93, %p94
      %p96 = scmp.ne.s32.totalorder %s87, %s88
      %p97 = scmp.eq.s32.totalorder %s14, 0
      %p98 = por %p96, %p97
      %p99 = scmp.ne.s32.totalorder %s87, %s88
      %p100 = scmp.eq.s32.totalorder %s15, 1
      %p101 = por %p99, %p100
      %p103 = scmp.ne.s32.totalorder %s88, %s102
      %p104 = scmp.eq.s32.totalorder %s15, 0
      %p105 = por %p103, %p104
      %p106 = scmp.le.s32.totalorder 1, %s9
      %p107 = scmp.lt.s32.totalorder %s9, 3
      %p108 = pnand %p106, %p107
      %p109 = pneg %p108
      // Predicated region
      $region9: #{siamese_forward.5} parent=5 // pred_check
        _
      $region10: #{siamese_forward.5} parent=5 // pred_check_branch
        %111 = sbr.rel (%p108) target = $region12
      $region11: #{siamese_forward.5} parent=5 // pred_region
        %s112 = ssub.s32 %s9, 1
        // Predicated region
        $region13: #{siamese_forward.5} parent=11 // pred_check
          %p113 = pneg %p56
        $region14: #{siamese_forward.5} parent=11 // pred_check_branch
          %115 = sbr.rel (%p113) target = $region16
        $region15: #{siamese_forward.5} parent=11 // pred_region
          _
        $region16: #{siamese_forward.5} parent=11 // pred_fallthru
          _
        // Predicated region
        $region17: #{siamese_forward.5} parent=11 // pred_check
          %p116 = pneg %p77
        $region18: #{siamese_forward.5} parent=11 // pred_check_branch
          %118 = sbr.rel (%p116) target = $region20
        $region19: #{siamese_forward.5} parent=11 // pred_region
          _
        $region20: #{siamese_forward.5} parent=11 // pred_fallthru
          _
      $region12: #{siamese_forward.5} parent=5 // pred_fallthru
        _
      %p119 = scmp.lt.s32.totalorder %s9, 2
      // Predicated region
      $region21: #{siamese_forward.5} parent=5 // pred_check
        %p120 = pneg %p119
      $region22: #{siamese_forward.5} parent=5 // pred_check_branch
        %122 = sbr.rel (%p120) target = $region24
      $region23: #{siamese_forward.5} parent=5 // pred_region
        // Predicated region
        $region25: #{siamese_forward.5} parent=23 // pred_check
          %p123 = pneg %p29
        $region26: #{siamese_forward.5} parent=23 // pred_check_branch
          %125 = sbr.rel (%p123) target = $region28
        $region27: #{siamese_forward.5} parent=23 // pred_region
          %s126 = sand.u32 %s19, 1
          %s127 = sand.u32 %s19, 1
          %s128 = smul.addr %s127, 8
          %s129 = scalar_lea.vmem [#allocation3], %s128
          %s130 = smul.addr %s9, 4
          %s131 = scalar_lea.vmem %s0, %s130
          // Predicated region
          $region29: #{siamese_forward.5} parent=27 // pred_check
            _
          $region30: #{siamese_forward.5} parent=27 // pred_check_branch
            %133 = sbr.rel (0) target = $region32
          $region31: #{siamese_forward.5} parent=27 // pred_region
            // Predicated region
            $region33: #{siamese_forward.5} parent=31 // pred_check
              _
            $region34: #{siamese_forward.5} parent=31 // pred_check_branch
              %135 = sbr.rel target = $region36
            $region35: #{siamese_forward.5} parent=31 // pred_region
              // Predicated region
              $region48: #{siamese_forward.5} parent=35 // pred_check
                _
              $region49: #{siamese_forward.5} parent=35 // pred_check_branch
                %152 = sbr.rel (0) target = $region51
              $region50: #{siamese_forward.5} parent=35 // pred_region
                loop: start=0, step=1, limit=1
                $region52: #{siamese_forward.5} parent=50 // loop_pre_header
                  _
                $region53: #{siamese_forward.5} parent=50 // loop_header
                  %s154 = sphi 0, %s158
                  %p155 = scmp.ge.s32.totalorder %s154, 1
                  %s159 = sphi %s131, %s131
                  %s160 = sphi %s129, %s129
                $region54: #{siamese_forward.5} parent=50 // loop_header_branch
                  %157 = sbr.rel (%p155) target = $region58
                $region55: #{siamese_forward.5} parent=50 // loop_body
                  _
                $region56: #{siamese_forward.5} parent=50 // loop_footer
                  %s158 = sadd.s32 1, %s154
                $region57: #{siamese_forward.5} parent=50 // loop_footer_branch
                  %153 = sbr.rel target = $region53
                $region58: #{siamese_forward.5} parent=50 // loop_exit
                  _
                loop: start=0, step=1, limit=1
                $region59: #{siamese_forward.5} parent=50 // loop_pre_header
                  _
                $region60: #{siamese_forward.5} parent=50 // loop_header
                  %s163 = sphi 0, %s167
                  %p164 = scmp.ge.s32.totalorder %s163, 1
                  %s168 = sphi %s131, %s131
                  %s169 = sphi %s129, %s129
                $region61: #{siamese_forward.5} parent=50 // loop_header_branch
                  %166 = sbr.rel (%p164) target = $region65
                $region62: #{siamese_forward.5} parent=50 // loop_body
                  %v170 = vld [vmem:[%s168] sm:$0xf]
                  %171 = vst [vmem:[%s169] sm:$0xf] %v170
                  %v172 = vld [vmem:[%s168 + $0x8] sm:$0xf]
                  %173 = vst [vmem:[%s169 + $0x4] sm:$0xf] %v172
                $region63: #{siamese_forward.5} parent=50 // loop_footer
                  %s167 = sadd.s32 1, %s163
                $region64: #{siamese_forward.5} parent=50 // loop_footer_branch
                  %162 = sbr.rel target = $region60
                $region65: #{siamese_forward.5} parent=50 // loop_exit
                  _
              $region51: #{siamese_forward.5} parent=35 // pred_fallthru
                _
            $region36: #{siamese_forward.5} parent=31 // pred_fallthru
              _
            // Predicated region
            $region37: #{siamese_forward.5} parent=31 // pred_check
              _
            $region38: #{siamese_forward.5} parent=31 // pred_check_branch
              %137 = sbr.rel (0) target = $region40
            $region39: #{siamese_forward.5} parent=31 // pred_region
              loop: start=0, step=1, limit=1
              $region41: #{siamese_forward.5} parent=39 // loop_pre_header
                _
              $region42: #{siamese_forward.5} parent=39 // loop_header
                %s140 = sphi 0, %s144
                %p141 = scmp.ge.s32.totalorder %s140, 1
                %s145 = sphi %s131, %s131
                %s146 = sphi %s129, %s129
              $region43: #{siamese_forward.5} parent=39 // loop_header_branch
                %143 = sbr.rel (%p141) target = $region47
              $region44: #{siamese_forward.5} parent=39 // loop_body
                %v147 = vld [vmem:[%s145] sm:$0xf]
                %148 = vst [vmem:[%s146] sm:$0xf] %v147
                %v149 = vld [vmem:[%s145 + $0x8] sm:$0xf]
                %150 = vst [vmem:[%s146 + $0x4] sm:$0xf] %v149
              $region45: #{siamese_forward.5} parent=39 // loop_footer
                %s144 = sadd.s32 1, %s140
              $region46: #{siamese_forward.5} parent=39 // loop_footer_branch
                %139 = sbr.rel target = $region42
              $region47: #{siamese_forward.5} parent=39 // loop_exit
                _
            $region40: #{siamese_forward.5} parent=31 // pred_fallthru
              _
          $region32: #{siamese_forward.5} parent=27 // pred_fallthru
            _
          %174 = vnop
        $region28: #{siamese_forward.5} parent=23 // pred_fallthru
          _
      $region24: #{siamese_forward.5} parent=5 // pred_fallthru
        _
      %p175 = scmp.le.s32.totalorder 1, %s9
      %p176 = scmp.lt.s32.totalorder %s9, 3
      %p177 = pnand %p175, %p176
      %p178 = pneg %p177
      // Predicated region
      $region66: #{siamese_forward.5} parent=5 // pred_check
        _
      $region67: #{siamese_forward.5} parent=5 // pred_check_branch
        %180 = sbr.rel (%p177) target = $region69
      $region68: #{siamese_forward.5} parent=5 // pred_region
        %s181 = ssub.s32 %s9, 1
        %s182 = sand.u32 %s22, 1
        %s183 = sand.u32 %s22, 1
        %s184 = smul.addr %s183, 8
        %s185 = scalar_lea.vmem [#allocation3], %s184
        // Predicated region
        $region70: #{siamese_forward.5} parent=68 // pred_check
          %p186 = pneg %p35
        $region71: #{siamese_forward.5} parent=68 // pred_check_branch
          %188 = sbr.rel (%p186) target = $region73
        $region72: #{siamese_forward.5} parent=68 // pred_region
          _
        $region73: #{siamese_forward.5} parent=68 // pred_fallthru
          _
        %s189 = sand.u32 %s22, 1
        %s190 = sand.u32 %s22, 1
        %s191 = smul.addr %s190, 8
        %s192 = scalar_lea.vmem [#allocation3], %s191
        %p193 = pneg %p35
        %p194 = pneg %p32
        %p195 = pneg %p56
        %p196 = pneg %p53
        %p197 = pneg %p77
        %p198 = pneg %p74
        %p199 = pneg %p98
        %p200 = pneg %p95
        %p202 = scmp.eq.s32.totalorder %s14, 0
        // Predicated region
        $region74: #{siamese_forward.5} parent=68 // pred_check
          %p203 = pneg %p202
        $region75: #{siamese_forward.5} parent=68 // pred_check_branch
          %205 = sbr.rel (%p203) target = $region77
        $region76: #{siamese_forward.5} parent=68 // pred_region
          %vm206 = vcmask 257024
          %207 = vst.msk [vmem:[#allocation2] sm:$0xf] %vm206, 0.0
        $region77: #{siamese_forward.5} parent=68 // pred_fallthru
          _
        %v208 = vld [vmem:[%s185] sm:$0xf]
        %v209 = vld [vmem:[%s185 + $0x4] sm:$0xf]
        %v210 = vunpack.c.l.bf16 %v208
        %v211 = vunpack.c.l.bf16 %v209
        %v212 = vld [vmem:[#allocation2] sm:$0xf]
        %v215 = vcombine.high %v210, %v210
        %v217 = vunpack.c.l.s4 1983009808
        %v218 = vunpack.c.0.s8 %v217
        %v219 = vlaneseq
        %v220 = vshrl.u32 %v219, 7
        %v221 = vsub.s32 %v218, %v220
        %v222 = vrot.slane %v210, %v221
        %v224 = vunpack.c.l.s4 1983009808
        %v225 = vunpack.c.0.s8 %v224
        %v226 = vlaneseq
        %v227 = vshrl.u32 %v226, 7
        %v228 = vsub.s32 %v225, %v227
        %v229 = vrot.slane %v215, %v228
        %v230 = vcombine.high %v222, %v222
        %v231 = vcombine.high %v229, %v229
        %v232 = vcombine.high %v211, %v211
        %v234 = vunpack.c.l.s4 1983009808
        %v235 = vunpack.c.0.s8 %v234
        %v236 = vlaneseq
        %v237 = vshrl.u32 %v236, 7
        %v238 = vsub.s32 %v235, %v237
        %v239 = vrot.slane %v211, %v238
        %v241 = vunpack.c.l.s4 1983009808
        %v242 = vunpack.c.0.s8 %v241
        %v243 = vlaneseq
        %v244 = vshrl.u32 %v243, 7
        %v245 = vsub.s32 %v242, %v244
        %v246 = vrot.slane %v232, %v245
        %v247 = vcombine.high %v239, %v239
        %v248 = vcombine.high %v246, %v246
        %vm257 = vcmask 254976
        %v258 = vsel %vm257, %v222, 0.0
        %v259 = vsel %vm257, %v230, 0.0
        %v260 = vadd.f32 %v258, %v259
        %v261 = vsel %vm257, %v229, 0.0
        %v262 = vadd.f32 %v260, %v261
        %v263 = vsel %vm257, %v231, 0.0
        %v264 = vadd.f32 %v262, %v263
        %v265 = vsel %vm257, %v239, 0.0
        %v266 = vsel %vm257, %v247, 0.0
        %v267 = vadd.f32 %v265, %v266
        %v268 = vsel %vm257, %v246, 0.0
        %v269 = vadd.f32 %v267, %v268
        %v270 = vsel %vm257, %v248, 0.0
        %v271 = vadd.f32 %v269, %v270
        %v274 = vcombine.low %v264, %v271
        %v276 = vunpack.c.l.s4 1983009808
        %v277 = vunpack.c.0.s8 %v276
        %v278 = vlaneseq
        %v279 = vshrl.u32 %v278, 7
        %v280 = vsub.s32 %v277, %v279
        %v281 = vrot.slane %v274, %v280
        %v283 = vadd.f32 %v212, %v281
        %vm284 = vcmask 257024
        %285 = vst.msk [vmem:[#allocation2] sm:$0xf] %vm284, %v283
        %p286 = scmp.eq.s32.totalorder %s14, 1
        // Predicated region
        $region78: #{siamese_forward.5} parent=68 // pred_check
          %p287 = pneg %p286
        $region79: #{siamese_forward.5} parent=68 // pred_check_branch
          %289 = sbr.rel (%p287) target = $region81
        $region80: #{siamese_forward.5} parent=68 // pred_region
          %v290 = vld [vmem:[#allocation2] sm:$0xf]
          %v291 = vmul.f32 %v290, 0.125
          %v292 = vpack.c.bf16 %v291, %v291
          %v293 = vld [vmem:[%s1] sm:$0xf]
          %v294 = vld [vmem:[%s1 + $0x4] sm:$0xf]
          %v295 = vld [vmem:[%s1 + $0x8] sm:$0xf]
          %v296 = vld [vmem:[%s1 + $0xc] sm:$0xf]
          %v297 = vld [vmem:[%s2] sm:$0x1]
          %v299 = vlaneseq
          %v300 = vshrl.u32 %v299, 7
          %v301 = vsub.s32 0, %v300
          %v302 = vrot.slane %v297, %v301
          %v308 = vunpack.c.l.b16 %v293
          %v309 = vunpack.c.l.b16 %v294
          %v310 = vunpack.c.l.b16 %v295
          %v311 = vunpack.c.l.b16 %v296
          %v312 = vpack.c.b16 %v309, %v308
          %v313 = vpack.c.b16 %v311, %v310
          %vm316 = vcmask 261120
          %v318 = vsel %vm316, %v292, 0
          %320 = vmatprep.subr.bf16.mxu0 0
          %321 = vmatpush1.bf16.msra.mxu0 %v312
          %322 = vmatprep.subr.bf16.mxu0 0
          %323 = vmatpush1.bf16.msra.mxu0 %v313
          %324 = vmatprep.subr.bf16.mxu0 0
          %325 = vmatpush1.bf16.msra.mxu0 0
          %326 = vmatprep.subr.bf16.mxu0 0
          %327 = vmatpush1.bf16.msra.mxu0 0
          %328 = vmatprep.subr.bf16.mxu0 0
          %329 = vmatpush1.bf16.msra.mxu0 0
          %330 = vmatprep.subr.bf16.mxu0 0
          %331 = vmatpush1.bf16.msra.mxu0 0
          %332 = vmatprep.subr.bf16.mxu0 0
          %333 = vmatpush1.bf16.msra.mxu0 0
          %334 = vmatprep.subr.bf16.mxu0 0
          %335 = vmatpush1.bf16.msra.mxu0 0
          %336 = vmatprep.subr.bf16.mxu0 0
          %337 = vmatpush1.bf16.msra.mxu0 0
          %338 = vmatprep.subr.bf16.mxu0 0
          %339 = vmatpush1.bf16.msra.mxu0 0
          %340 = vmatprep.subr.bf16.mxu0 0
          %341 = vmatpush1.bf16.msra.mxu0 0
          %342 = vmatprep.subr.bf16.mxu0 0
          %343 = vmatpush1.bf16.msra.mxu0 0
          %344 = vmatprep.subr.bf16.mxu0 0
          %345 = vmatpush1.bf16.msra.mxu0 0
          %346 = vmatprep.subr.bf16.mxu0 0
          %347 = vmatpush1.bf16.msra.mxu0 0
          %348 = vmatprep.subr.bf16.mxu0 0
          %349 = vmatpush1.bf16.msra.mxu0 0
          %350 = vmatprep.subr.bf16.mxu0 0
          %351 = vmatpush1.bf16.msra.mxu0 0
          %352 = vmatprep.mubr.bf16.mxu0 0
          %353 = vmatmul.mubr.bf16.gmra.mrb[0].mxu0 %v318
          %v354 = vpop.f32.mrb[0].mxu0
          %v355 = vadd.f32 %v302, %v354
          %v356 = vpop.f32.mrb[0].mxu0
          %v357 = vpop.f32.mrb[0].mxu0
          %v358 = vpop.f32.mrb[0].mxu0
          %359 = vdwg.mxu0
          %360 = vst.msk [vmem:[%s3] sm:$0xf] %vm284, %v355
        $region81: #{siamese_forward.5} parent=68 // pred_fallthru
          _
        // Predicated region
        $region82: #{siamese_forward.5} parent=68 // pred_check
          %p361 = pneg %p95
        $region83: #{siamese_forward.5} parent=68 // pred_check_branch
          %363 = sbr.rel (%p361) target = $region85
        $region84: #{siamese_forward.5} parent=68 // pred_region
          _
        $region85: #{siamese_forward.5} parent=68 // pred_fallthru
          _
        // Predicated region
        $region86: #{siamese_forward.5} parent=68 // pred_check
          %p364 = pneg %p95
        $region87: #{siamese_forward.5} parent=68 // pred_check_branch
          %366 = sbr.rel (%p364) target = $region89
        $region88: #{siamese_forward.5} parent=68 // pred_region
          _
        $region89: #{siamese_forward.5} parent=68 // pred_fallthru
          _
      $region69: #{siamese_forward.5} parent=5 // pred_fallthru
        _
      %p367 = scmp.le.s32.totalorder 2, %s9
      // Predicated region
      $region90: #{siamese_forward.5} parent=5 // pred_check
        %p368 = pneg %p367
      $region91: #{siamese_forward.5} parent=5 // pred_check_branch
        %370 = sbr.rel (%p368) target = $region93
      $region92: #{siamese_forward.5} parent=5 // pred_region
        %s371 = ssub.s32 %s9, 2
      $region93: #{siamese_forward.5} parent=5 // pred_fallthru
        _
    $region6: #{siamese_forward.5} parent=1 // loop_footer
      %s13 = sadd.s32 1, %s9
    $region7: #{siamese_forward.5} parent=1 // loop_footer_branch
      %8 = sbr.rel target = $region3
    $region8: #{siamese_forward.5} parent=1 // loop_exit
      _

// kernel: siamese_forward.4
$region0: #{siamese_forward.4}
  #allocation0 [shape = 'u32[]', space=smem, size = 0x4, offset = 0x4, fixed_abs, tag = 'smem constant byte address 0x4 - core index']
  #allocation1 [shape = 'u32[144,128]{1,0:T(1,128)}', space=vmem, size = 0x12000, scoped, tag = 'internal scratch']
  %s0 = inlined_call_operand.vmem [shape: bf16[32,32], index: 0, kind: input, shape index: {}]
  %s1 = inlined_call_operand.vmem [shape: bf16[32,96], index: 1, kind: input, shape index: {}]
  %s2 = inlined_call_operand.vmem [shape: f32[1,96], index: 2, kind: input, shape index: {}]
  %s3 = inlined_call_operand.vmem [shape: bf16[32,32], index: 3, kind: input, shape index: {}]
  %s4 = inlined_call_operand.vmem [shape: f32[1,32], index: 4, kind: input, shape index: {}]
  %s5 = inlined_call_operand.vmem [shape: f32[1,32], index: 5, kind: input, shape index: {}, may-alias: {5,11}]
  %s6 = inlined_call_operand.vmem [shape: f32[1,32], index: 6, kind: input, shape index: {}, may-alias: {6,12}]
  %s7 = inlined_call_operand.vmem [shape: bf16[32,2048], index: 7, kind: input, shape index: {}]
  %s8 = inlined_call_operand.vmem [shape: f32[1,2048], index: 8, kind: input, shape index: {}]
  %s9 = inlined_call_operand.vmem [shape: bf16[2048,32], index: 9, kind: input, shape index: {}]
  %s10 = inlined_call_operand.vmem [shape: f32[1,32], index: 10, kind: input, shape index: {}]
  %s11 = inlined_call_operand.vmem [shape: f32[1,32], index: 11, kind: input, shape index: {}, may-alias: {5,11}]
  %s12 = inlined_call_operand.vmem [shape: f32[1,32], index: 12, kind: input, shape index: {}, may-alias: {6,12}]
  %s13 = inlined_call_operand.vmem [shape: bf16[32,32], index: 13, kind: output, shape index: {}]
  %s14 = sld [smem:[#allocation0]]
  $region85: #{siamese_forward.4} parent=0
    _
  %s16 = ssub.s32 1, %s14
  %s17 = scalar_select 0, %s16, %s14
  loop: start=0, step=1, limit=6
  $region2: #{siamese_forward.4} parent=0 // loop_pre_header
    _
  $region3: #{siamese_forward.4} parent=0 // loop_header
    %s19 = sphi 0, %s23
    %p20 = scmp.ge.s32.totalorder %s19, 6
    %s29 = sphi 0, %s31
    %s32 = sphi 0, %s29
    %s33 = sphi 0, %s32
    %s49 = sphi 0, %s33
    %s53 = sphi 0, %s53
    %s55 = sphi 0, %s53
    %s56 = sphi 0, %s55
    %s70 = sphi 0, %s56
    %s74 = sphi 0, %s74
    %s76 = sphi 0, %s74
    %s77 = sphi 0, %s76
    %s91 = sphi 0, %s77
    %s95 = sphi 0, %s95
    %s97 = sphi 0, %s95
    %s98 = sphi 0, %s97
    %s112 = sphi 0, %s98
    %s116 = sphi 0, %s116
    %s118 = sphi 0, %s116
    %s119 = sphi 0, %s118
    %s133 = sphi 0, %s119
    %s137 = sphi 0, %s137
    %s139 = sphi 0, %s137
    %s140 = sphi 0, %s139
    %s154 = sphi 0, %s140
    %s158 = sphi 0, %s158
    %s160 = sphi 0, %s158
    %s161 = sphi 0, %s160
    %s175 = sphi 0, %s161
    %s179 = sphi 0, %s179
    %s181 = sphi 0, %s179
    %s182 = sphi 0, %s181
    %s196 = sphi 0, %s182
    %s200 = sphi 0, %s200
    %s202 = sphi 0, %s200
    %s203 = sphi 0, %s202
    %s217 = sphi 0, %s203
    %s221 = sphi 0, %s221
    %s223 = sphi 0, %s221
    %s224 = sphi 0, %s223
    %s238 = sphi 0, %s224
    %s242 = sphi 0, %s242
    %s244 = sphi 0, %s242
    %s245 = sphi 0, %s244
    %s259 = sphi 0, %s245
    %s263 = sphi 0, %s263
    %s265 = sphi 0, %s263
    %s266 = sphi 0, %s265
    %s280 = sphi 0, %s266
    %s284 = sphi 0, %s284
    %s286 = sphi 0, %s284
    %s287 = sphi 0, %s286
    %s301 = sphi 0, %s287
    %s307 = sphi 0, %s309
    %s310 = sphi 0, %s307
    %s311 = sphi 0, %s310
    %s327 = sphi 0, %s311
  $region4: #{siamese_forward.4} parent=0 // loop_header_branch
    %22 = sbr.rel (%p20) target = $region8
  $region5: #{siamese_forward.4} parent=0 // loop_body
    %s24 = ssub.s32 %s19, 1
    %s25 = ssub.s32 %s19, 2
    %s26 = sadd.s32 %s19, 1
    %s27 = ssub.s32 %s19, %s26
    %p28 = scmp.eq.s32.totalorder %s27, 0
    %s30 = sadd.s32 %s29, 1
    %s31 = scalar_select %p28, %s29, %s30
    %p34 = pneg %p28
    %p35 = scmp.eq.s32.totalorder %s19, 3
    %p36 = por %p34, %p35
    %p37 = scmp.ne.s32.totalorder %s29, %s32
    %p38 = scmp.eq.s32.totalorder %s19, 0
    %p39 = por %p37, %p38
    %p40 = scmp.ne.s32.totalorder %s29, %s32
    %p41 = scmp.eq.s32.totalorder %s24, 3
    %p42 = por %p40, %p41
    %p43 = scmp.ne.s32.totalorder %s32, %s33
    %p44 = scmp.eq.s32.totalorder %s24, 0
    %p45 = por %p43, %p44
    %p46 = scmp.ne.s32.totalorder %s32, %s33
    %p47 = scmp.eq.s32.totalorder %s25, 3
    %p48 = por %p46, %p47
    %p50 = scmp.ne.s32.totalorder %s33, %s49
    %p51 = scmp.eq.s32.totalorder %s25, 0
    %p52 = por %p50, %p51
    %s54 = sadd.s32 %s53, 1
    %p57 = scmp.eq.s32.totalorder %s19, 3
    %p58 = scmp.ne.s32.totalorder %s53, %s55
    %p59 = scmp.eq.s32.totalorder %s19, 0
    %p60 = por %p58, %p59
    %p61 = scmp.ne.s32.totalorder %s53, %s55
    %p62 = scmp.eq.s32.totalorder %s24, 3
    %p63 = por %p61, %p62
    %p64 = scmp.ne.s32.totalorder %s55, %s56
    %p65 = scmp.eq.s32.totalorder %s24, 0
    %p66 = por %p64, %p65
    %p67 = scmp.ne.s32.totalorder %s55, %s56
    %p68 = scmp.eq.s32.totalorder %s25, 3
    %p69 = por %p67, %p68
    %p71 = scmp.ne.s32.totalorder %s56, %s70
    %p72 = scmp.eq.s32.totalorder %s25, 0
    %p73 = por %p71, %p72
    %s75 = sadd.s32 %s74, 1
    %p78 = scmp.eq.s32.totalorder %s19, 3
    %p79 = scmp.ne.s32.totalorder %s74, %s76
    %p80 = scmp.eq.s32.totalorder %s19, 0
    %p81 = por %p79, %p80
    %p82 = scmp.ne.s32.totalorder %s74, %s76
    %p83 = scmp.eq.s32.totalorder %s24, 3
    %p84 = por %p82, %p83
    %p85 = scmp.ne.s32.totalorder %s76, %s77
    %p86 = scmp.eq.s32.totalorder %s24, 0
    %p87 = por %p85, %p86
    %p88 = scmp.ne.s32.totalorder %s76, %s77
    %p89 = scmp.eq.s32.totalorder %s25, 3
    %p90 = por %p88, %p89
    %p92 = scmp.ne.s32.totalorder %s77, %s91
    %p93 = scmp.eq.s32.totalorder %s25, 0
    %p94 = por %p92, %p93
    %s96 = sadd.s32 %s95, 1
    %p99 = scmp.eq.s32.totalorder %s19, 3
    %p100 = scmp.ne.s32.totalorder %s95, %s97
    %p101 = scmp.eq.s32.totalorder %s19, 0
    %p102 = por %p100, %p101
    %p103 = scmp.ne.s32.totalorder %s95, %s97
    %p104 = scmp.eq.s32.totalorder %s24, 3
    %p105 = por %p103, %p104
    %p106 = scmp.ne.s32.totalorder %s97, %s98
    %p107 = scmp.eq.s32.totalorder %s24, 0
    %p108 = por %p106, %p107
    %p109 = scmp.ne.s32.totalorder %s97, %s98
    %p110 = scmp.eq.s32.totalorder %s25, 3
    %p111 = por %p109, %p110
    %p113 = scmp.ne.s32.totalorder %s98, %s112
    %p114 = scmp.eq.s32.totalorder %s25, 0
    %p115 = por %p113, %p114
    %s117 = sadd.s32 %s116, 1
    %p120 = scmp.eq.s32.totalorder %s19, 3
    %p121 = scmp.ne.s32.totalorder %s116, %s118
    %p122 = scmp.eq.s32.totalorder %s19, 0
    %p123 = por %p121, %p122
    %p124 = scmp.ne.s32.totalorder %s116, %s118
    %p125 = scmp.eq.s32.totalorder %s24, 3
    %p126 = por %p124, %p125
    %p127 = scmp.ne.s32.totalorder %s118, %s119
    %p128 = scmp.eq.s32.totalorder %s24, 0
    %p129 = por %p127, %p128
    %p130 = scmp.ne.s32.totalorder %s118, %s119
    %p131 = scmp.eq.s32.totalorder %s25, 3
    %p132 = por %p130, %p131
    %p134 = scmp.ne.s32.totalorder %s119, %s133
    %p135 = scmp.eq.s32.totalorder %s25, 0
    %p136 = por %p134, %p135
    %s138 = sadd.s32 %s137, 1
    %p141 = scmp.eq.s32.totalorder %s19, 3
    %p142 = scmp.ne.s32.totalorder %s137, %s139
    %p143 = scmp.eq.s32.totalorder %s19, 0
    %p144 = por %p142, %p143
    %p145 = scmp.ne.s32.totalorder %s137, %s139
    %p146 = scmp.eq.s32.totalorder %s24, 3
    %p147 = por %p145, %p146
    %p148 = scmp.ne.s32.totalorder %s139, %s140
    %p149 = scmp.eq.s32.totalorder %s24, 0
    %p150 = por %p148, %p149
    %p151 = scmp.ne.s32.totalorder %s139, %s140
    %p152 = scmp.eq.s32.totalorder %s25, 3
    %p153 = por %p151, %p152
    %p155 = scmp.ne.s32.totalorder %s140, %s154
    %p156 = scmp.eq.s32.totalorder %s25, 0
    %p157 = por %p155, %p156
    %s159 = sadd.s32 %s158, 1
    %p162 = scmp.eq.s32.totalorder %s19, 3
    %p163 = scmp.ne.s32.totalorder %s158, %s160
    %p164 = scmp.eq.s32.totalorder %s19, 0
    %p165 = por %p163, %p164
    %p166 = scmp.ne.s32.totalorder %s158, %s160
    %p167 = scmp.eq.s32.totalorder %s24, 3
    %p168 = por %p166, %p167
    %p169 = scmp.ne.s32.totalorder %s160, %s161
    %p170 = scmp.eq.s32.totalorder %s24, 0
    %p171 = por %p169, %p170
    %p172 = scmp.ne.s32.totalorder %s160, %s161
    %p173 = scmp.eq.s32.totalorder %s25, 3
    %p174 = por %p172, %p173
    %p176 = scmp.ne.s32.totalorder %s161, %s175
    %p177 = scmp.eq.s32.totalorder %s25, 0
    %p178 = por %p176, %p177
    %s180 = sadd.s32 %s179, 1
    %p183 = scmp.eq.s32.totalorder %s19, 3
    %p184 = scmp.ne.s32.totalorder %s179, %s181
    %p185 = scmp.eq.s32.totalorder %s19, 0
    %p186 = por %p184, %p185
    %p187 = scmp.ne.s32.totalorder %s179, %s181
    %p188 = scmp.eq.s32.totalorder %s24, 3
    %p189 = por %p187, %p188
    %p190 = scmp.ne.s32.totalorder %s181, %s182
    %p191 = scmp.eq.s32.totalorder %s24, 0
    %p192 = por %p190, %p191
    %p193 = scmp.ne.s32.totalorder %s181, %s182
    %p194 = scmp.eq.s32.totalorder %s25, 3
    %p195 = por %p193, %p194
    %p197 = scmp.ne.s32.totalorder %s182, %s196
    %p198 = scmp.eq.s32.totalorder %s25, 0
    %p199 = por %p197, %p198
    %s201 = sadd.s32 %s200, 1
    %p204 = scmp.eq.s32.totalorder %s19, 3
    %p205 = scmp.ne.s32.totalorder %s200, %s202
    %p206 = scmp.eq.s32.totalorder %s19, 0
    %p207 = por %p205, %p206
    %p208 = scmp.ne.s32.totalorder %s200, %s202
    %p209 = scmp.eq.s32.totalorder %s24, 3
    %p210 = por %p208, %p209
    %p211 = scmp.ne.s32.totalorder %s202, %s203
    %p212 = scmp.eq.s32.totalorder %s24, 0
    %p213 = por %p211, %p212
    %p214 = scmp.ne.s32.totalorder %s202, %s203
    %p215 = scmp.eq.s32.totalorder %s25, 3
    %p216 = por %p214, %p215
    %p218 = scmp.ne.s32.totalorder %s203, %s217
    %p219 = scmp.eq.s32.totalorder %s25, 0
    %p220 = por %p218, %p219
    %s222 = sadd.s32 %s221, 1
    %p225 = scmp.eq.s32.totalorder %s19, 3
    %p226 = scmp.ne.s32.totalorder %s221, %s223
    %p227 = scmp.eq.s32.totalorder %s19, 0
    %p228 = por %p226, %p227
    %p229 = scmp.ne.s32.totalorder %s221, %s223
    %p230 = scmp.eq.s32.totalorder %s24, 3
    %p231 = por %p229, %p230
    %p232 = scmp.ne.s32.totalorder %s223, %s224
    %p233 = scmp.eq.s32.totalorder %s24, 0
    %p234 = por %p232, %p233
    %p235 = scmp.ne.s32.totalorder %s223, %s224
    %p236 = scmp.eq.s32.totalorder %s25, 3
    %p237 = por %p235, %p236
    %p239 = scmp.ne.s32.totalorder %s224, %s238
    %p240 = scmp.eq.s32.totalorder %s25, 0
    %p241 = por %p239, %p240
    %s243 = sadd.s32 %s242, 1
    %p246 = scmp.eq.s32.totalorder %s19, 3
    %p247 = scmp.ne.s32.totalorder %s242, %s244
    %p248 = scmp.eq.s32.totalorder %s19, 0
    %p249 = por %p247, %p248
    %p250 = scmp.ne.s32.totalorder %s242, %s244
    %p251 = scmp.eq.s32.totalorder %s24, 3
    %p252 = por %p250, %p251
    %p253 = scmp.ne.s32.totalorder %s244, %s245
    %p254 = scmp.eq.s32.totalorder %s24, 0
    %p255 = por %p253, %p254
    %p256 = scmp.ne.s32.totalorder %s244, %s245
    %p257 = scmp.eq.s32.totalorder %s25, 3
    %p258 = por %p256, %p257
    %p260 = scmp.ne.s32.totalorder %s245, %s259
    %p261 = scmp.eq.s32.totalorder %s25, 0
    %p262 = por %p260, %p261
    %s264 = sadd.s32 %s263, 1
    %p267 = scmp.eq.s32.totalorder %s19, 3
    %p268 = scmp.ne.s32.totalorder %s263, %s265
    %p269 = scmp.eq.s32.totalorder %s19, 0
    %p270 = por %p268, %p269
    %p271 = scmp.ne.s32.totalorder %s263, %s265
    %p272 = scmp.eq.s32.totalorder %s24, 3
    %p273 = por %p271, %p272
    %p274 = scmp.ne.s32.totalorder %s265, %s266
    %p275 = scmp.eq.s32.totalorder %s24, 0
    %p276 = por %p274, %p275
    %p277 = scmp.ne.s32.totalorder %s265, %s266
    %p278 = scmp.eq.s32.totalorder %s25, 3
    %p279 = por %p277, %p278
    %p281 = scmp.ne.s32.totalorder %s266, %s280
    %p282 = scmp.eq.s32.totalorder %s25, 0
    %p283 = por %p281, %p282
    %s285 = sadd.s32 %s284, 1
    %p288 = scmp.eq.s32.totalorder %s19, 3
    %p289 = scmp.ne.s32.totalorder %s284, %s286
    %p290 = scmp.eq.s32.totalorder %s19, 0
    %p291 = por %p289, %p290
    %p292 = scmp.ne.s32.totalorder %s284, %s286
    %p293 = scmp.eq.s32.totalorder %s24, 3
    %p294 = por %p292, %p293
    %p295 = scmp.ne.s32.totalorder %s286, %s287
    %p296 = scmp.eq.s32.totalorder %s24, 0
    %p297 = por %p295, %p296
    %p298 = scmp.ne.s32.totalorder %s286, %s287
    %p299 = scmp.eq.s32.totalorder %s25, 3
    %p300 = por %p298, %p299
    %p302 = scmp.ne.s32.totalorder %s287, %s301
    %p303 = scmp.eq.s32.totalorder %s25, 0
    %p304 = por %p302, %p303
    %s305 = ssub.s32 %s19, %s26
    %p306 = scmp.eq.s32.totalorder %s305, 0
    %s308 = sadd.s32 %s307, 1
    %s309 = scalar_select %p306, %s307, %s308
    %p312 = pneg %p306
    %p313 = scmp.eq.s32.totalorder %s19, 3
    %p314 = por %p312, %p313
    %p315 = scmp.ne.s32.totalorder %s307, %s310
    %p316 = scmp.eq.s32.totalorder %s19, 0
    %p317 = por %p315, %p316
    %p318 = scmp.ne.s32.totalorder %s307, %s310
    %p319 = scmp.eq.s32.totalorder %s24, 3
    %p320 = por %p318, %p319
    %p321 = scmp.ne.s32.totalorder %s310, %s311
    %p322 = scmp.eq.s32.totalorder %s24, 0
    %p323 = por %p321, %p322
    %p324 = scmp.ne.s32.totalorder %s310, %s311
    %p325 = scmp.eq.s32.totalorder %s25, 3
    %p326 = por %p324, %p325
    %p328 = scmp.ne.s32.totalorder %s311, %s327
    %p329 = scmp.eq.s32.totalorder %s25, 0
    %p330 = por %p328, %p329
    %p331 = scmp.le.s32.totalorder 1, %s19
    %p332 = scmp.lt.s32.totalorder %s19, 5
    %p333 = pnand %p331, %p332
    %p334 = pneg %p333
    // Predicated region
    $region9: #{siamese_forward.4} parent=5 // pred_check
      _
    $region10: #{siamese_forward.4} parent=5 // pred_check_branch
      %336 = sbr.rel (%p333) target = $region12
    $region11: #{siamese_forward.4} parent=5 // pred_region
      %s337 = ssub.s32 %s19, 1
      // Predicated region
      $region13: #{siamese_forward.4} parent=11 // pred_check
        %p338 = pneg %p66
      $region14: #{siamese_forward.4} parent=11 // pred_check_branch
        %340 = sbr.rel (%p338) target = $region16
      $region15: #{siamese_forward.4} parent=11 // pred_region
        _
      $region16: #{siamese_forward.4} parent=11 // pred_fallthru
        _
      // Predicated region
      $region17: #{siamese_forward.4} parent=11 // pred_check
        %p341 = pneg %p87
      $region18: #{siamese_forward.4} parent=11 // pred_check_branch
        %343 = sbr.rel (%p341) target = $region20
      $region19: #{siamese_forward.4} parent=11 // pred_region
        _
      $region20: #{siamese_forward.4} parent=11 // pred_fallthru
        _
      // Predicated region
      $region21: #{siamese_forward.4} parent=11 // pred_check
        %p344 = pneg %p108
      $region22: #{siamese_forward.4} parent=11 // pred_check_branch
        %346 = sbr.rel (%p344) target = $region24
      $region23: #{siamese_forward.4} parent=11 // pred_region
        _
      $region24: #{siamese_forward.4} parent=11 // pred_fallthru
        _
      // Predicated region
      $region25: #{siamese_forward.4} parent=11 // pred_check
        %p347 = pneg %p129
      $region26: #{siamese_forward.4} parent=11 // pred_check_branch
        %349 = sbr.rel (%p347) target = $region28
      $region27: #{siamese_forward.4} parent=11 // pred_region
        _
      $region28: #{siamese_forward.4} parent=11 // pred_fallthru
        _
      // Predicated region
      $region29: #{siamese_forward.4} parent=11 // pred_check
        %p350 = pneg %p150
      $region30: #{siamese_forward.4} parent=11 // pred_check_branch
        %352 = sbr.rel (%p350) target = $region32
      $region31: #{siamese_forward.4} parent=11 // pred_region
        _
      $region32: #{siamese_forward.4} parent=11 // pred_fallthru
        _
      // Predicated region
      $region33: #{siamese_forward.4} parent=11 // pred_check
        %p353 = pneg %p171
      $region34: #{siamese_forward.4} parent=11 // pred_check_branch
        %355 = sbr.rel (%p353) target = $region36
      $region35: #{siamese_forward.4} parent=11 // pred_region
        _
      $region36: #{siamese_forward.4} parent=11 // pred_fallthru
        _
      // Predicated region
      $region37: #{siamese_forward.4} parent=11 // pred_check
        %p356 = pneg %p192
      $region38: #{siamese_forward.4} parent=11 // pred_check_branch
        %358 = sbr.rel (%p356) target = $region40
      $region39: #{siamese_forward.4} parent=11 // pred_region
        _
      $region40: #{siamese_forward.4} parent=11 // pred_fallthru
        _
      // Predicated region
      $region41: #{siamese_forward.4} parent=11 // pred_check
        %p359 = pneg %p213
      $region42: #{siamese_forward.4} parent=11 // pred_check_branch
        %361 = sbr.rel (%p359) target = $region44
      $region43: #{siamese_forward.4} parent=11 // pred_region
        _
      $region44: #{siamese_forward.4} parent=11 // pred_fallthru
        _
      // Predicated region
      $region45: #{siamese_forward.4} parent=11 // pred_check
        %p362 = pneg %p234
      $region46: #{siamese_forward.4} parent=11 // pred_check_branch
        %364 = sbr.rel (%p362) target = $region48
      $region47: #{siamese_forward.4} parent=11 // pred_region
        _
      $region48: #{siamese_forward.4} parent=11 // pred_fallthru
        _
      // Predicated region
      $region49: #{siamese_forward.4} parent=11 // pred_check
        %p365 = pneg %p255
      $region50: #{siamese_forward.4} parent=11 // pred_check_branch
        %367 = sbr.rel (%p365) target = $region52
      $region51: #{siamese_forward.4} parent=11 // pred_region
        _
      $region52: #{siamese_forward.4} parent=11 // pred_fallthru
        _
      // Predicated region
      $region53: #{siamese_forward.4} parent=11 // pred_check
        %p368 = pneg %p276
      $region54: #{siamese_forward.4} parent=11 // pred_check_branch
        %370 = sbr.rel (%p368) target = $region56
      $region55: #{siamese_forward.4} parent=11 // pred_region
        _
      $region56: #{siamese_forward.4} parent=11 // pred_fallthru
        _
      // Predicated region
      $region57: #{siamese_forward.4} parent=11 // pred_check
        %p371 = pneg %p297
      $region58: #{siamese_forward.4} parent=11 // pred_check_branch
        %373 = sbr.rel (%p371) target = $region60
      $region59: #{siamese_forward.4} parent=11 // pred_region
        _
      $region60: #{siamese_forward.4} parent=11 // pred_fallthru
        _
    $region12: #{siamese_forward.4} parent=5 // pred_fallthru
      _
    %p374 = scmp.lt.s32.totalorder %s19, 4
    // Predicated region
    $region61: #{siamese_forward.4} parent=5 // pred_check
      %p375 = pneg %p374
    $region62: #{siamese_forward.4} parent=5 // pred_check_branch
      %377 = sbr.rel (%p375) target = $region64
    $region63: #{siamese_forward.4} parent=5 // pred_region
      // Predicated region
      $region65: #{siamese_forward.4} parent=63 // pred_check
        %p378 = pneg %p39
      $region66: #{siamese_forward.4} parent=63 // pred_check_branch
        %380 = sbr.rel (%p378) target = $region68
      $region67: #{siamese_forward.4} parent=63 // pred_region
        %p381 = scmp.lt.s32.totalorder %s19, 3
        %s382 = scalar_select %p381, %s19, 3
        %s383 = smul.addr %s382, 4
        %s384 = scalar_lea.vmem %s0, %s383
      $region68: #{siamese_forward.4} parent=63 // pred_fallthru
        _
    $region64: #{siamese_forward.4} parent=5 // pred_fallthru
      _
    %p385 = scmp.le.s32.totalorder 1, %s19
    %p386 = scmp.lt.s32.totalorder %s19, 5
    %p387 = pnand %p385, %p386
    %p388 = pneg %p387
    // Predicated region
    $region69: #{siamese_forward.4} parent=5 // pred_check
      _
    $region70: #{siamese_forward.4} parent=5 // pred_check_branch
      %390 = sbr.rel (%p387) target = $region72
    $region71: #{siamese_forward.4} parent=5 // pred_region
      %s391 = ssub.s32 %s19, 1
      %p392 = scmp.lt.s32.totalorder %s24, 3
      %s393 = scalar_select %p392, %s24, 3
      %s394 = smul.addr %s393, 4
      %s395 = scalar_lea.vmem %s0, %s394
      %p396 = pneg %p45
      %p397 = pneg %p42
      %p398 = pneg %p66
      %p399 = pneg %p63
      %p400 = pneg %p87
      %p401 = pneg %p84
      %p402 = pneg %p108
      %p403 = pneg %p105
      %p404 = pneg %p129
      %p405 = pneg %p126
      %p406 = pneg %p150
      %p407 = pneg %p147
      %p408 = pneg %p171
      %p409 = pneg %p168
      %p410 = pneg %p192
      %p411 = pneg %p189
      %p412 = pneg %p213
      %p413 = pneg %p210
      %p414 = pneg %p234
      %p415 = pneg %p231
      %p416 = pneg %p255
      %p417 = pneg %p252
      %p418 = pneg %p276
      %p419 = pneg %p273
      %p420 = pneg %p297
      %p421 = pneg %p294
      %p422 = pneg %p323
      %p423 = pneg %p320
      %p424 = scmp.lt.s32.totalorder %s24, 3
      %s425 = scalar_select %p424, %s24, 3
      %s426 = smul.addr %s425, 4
      %s427 = scalar_lea.vmem %s13, %s426
      %p428 = scmp.lt.s32.totalorder %s24, 3
      %s429 = scalar_select %p428, %s24, 3
      %s430 = smul.addr %s429, 4
      %s431 = scalar_lea.vmem %s0, %s430
      %p432 = scmp.lt.s32.totalorder %s24, 3
      %s433 = scalar_select %p432, %s24, 3
      %s434 = smul.addr %s433, 4
      %s435 = scalar_lea.vmem %s13, %s434
      %v437 = vld [vmem:[%s431] sm:$0xf]
      %v438 = vunpack.c.l.bf16 %v437
      %v439 = vld [vmem:[%s1] sm:$0xf]
      %v440 = vld [vmem:[%s1 + $0x4] sm:$0xf]
      %v441 = vld [vmem:[%s1 + $0x8] sm:$0xf]
      %v442 = vld [vmem:[%s1 + $0xc] sm:$0xf]
      %v443 = vld [vmem:[%s2] sm:$0x1]
      %v445 = vlaneseq
      %v446 = vshrl.u32 %v445, 7
      %v447 = vsub.s32 0, %v446
      %v448 = vrot.slane %v443, %v447
      %v454 = vunpack.c.l.b16 %v439
      %v455 = vunpack.c.l.b16 %v440
      %v456 = vunpack.c.l.b16 %v441
      %v457 = vunpack.c.l.b16 %v442
      %v458 = vpack.c.b16 %v455, %v454
      %v459 = vpack.c.b16 %v457, %v456
      %vm462 = vcmask 261120
      %v464 = vsel %vm462, %v437, 0
      %466 = vmatprep.subr.bf16.mxu0 0
      %467 = vmatpush1.bf16.msra.mxu0 %v458
      %468 = vmatprep.subr.bf16.mxu0 0
      %469 = vmatpush1.bf16.msra.mxu0 %v459
      %470 = vmatprep.subr.bf16.mxu0 0
      %471 = vmatpush1.bf16.msra.mxu0 0
      %472 = vmatprep.subr.bf16.mxu0 0
      %473 = vmatpush1.bf16.msra.mxu0 0
      %474 = vmatprep.subr.bf16.mxu0 0
      %475 = vmatpush1.bf16.msra.mxu0 0
      %476 = vmatprep.subr.bf16.mxu0 0
      %477 = vmatpush1.bf16.msra.mxu0 0
      %478 = vmatprep.subr.bf16.mxu0 0
      %479 = vmatpush1.bf16.msra.mxu0 0
      %480 = vmatprep.subr.bf16.mxu0 0
      %481 = vmatpush1.bf16.msra.mxu0 0
      %482 = vmatprep.subr.bf16.mxu0 0
      %483 = vmatpush1.bf16.msra.mxu0 0
      %484 = vmatprep.subr.bf16.mxu0 0
      %485 = vmatpush1.bf16.msra.mxu0 0
      %486 = vmatprep.subr.bf16.mxu0 0
      %487 = vmatpush1.bf16.msra.mxu0 0
      %488 = vmatprep.subr.bf16.mxu0 0
      %489 = vmatpush1.bf16.msra.mxu0 0
      %490 = vmatprep.subr.bf16.mxu0 0
      %491 = vmatpush1.bf16.msra.mxu0 0
      %492 = vmatprep.subr.bf16.mxu0 0
      %493 = vmatpush1.bf16.msra.mxu0 0
      %494 = vmatprep.subr.bf16.mxu0 0
      %495 = vmatpush1.bf16.msra.mxu0 0
      %496 = vmatprep.subr.bf16.mxu0 0
      %497 = vmatpush1.bf16.msra.mxu0 0
      %498 = vmatprep.mubr.bf16.mxu0 0
      %499 = vmatmul.mubr.bf16.gmra.mrb[0].mxu0 %v464
      %v500 = vpop.f32.mrb[0].mxu0
      %v501 = vadd.f32 %v448, %v500
      %v502 = vpop.f32.mrb[0].mxu0
      %v503 = vpop.f32.mrb[0].mxu0
      %v504 = vpop.f32.mrb[0].mxu0
      %505 = vdwg.mxu0
      %v506 = vmul.f32 %v501, 0.35355338
      %v507 = vpack.c.bf16 %v506, %v506
      %v508 = vpack.c.bf16 %v501, %v501
      %v511 = vunpack.c.l.s4 1966171168
      %v512 = vunpack.c.0.s8 %v511
      %v513 = vlaneseq
      %v514 = vshrl.u32 %v513, 7
      %v515 = vsub.s32 %v512, %v514
      %v516 = vrot.slane %v507, %v515
      %v517 = vcombine.high %v516, %v516
      %v519 = vunpack.c.l.s4 1966171168
      %v520 = vunpack.c.0.s8 %v519
      %v521 = vlaneseq
      %v522 = vshrl.u32 %v521, 7
      %v523 = vsub.s32 %v520, %v522
      %v524 = vrot.slane %v516, %v523
      %v526 = vunpack.c.l.s4 1966171168
      %v527 = vunpack.c.0.s8 %v526
      %v528 = vlaneseq
      %v529 = vshrl.u32 %v528, 7
      %v530 = vsub.s32 %v527, %v529
      %v531 = vrot.slane %v517, %v530
      %v532 = vcombine.high %v524, %v524
      %v533 = vcombine.high %v531, %v531
      %534 = vrot.lane.b32.xlu0 %v524, 120
      %v535 = vpop.permute.xlu0 %534
      %536 = vrot.lane.b32.xlu0 %v531, 120
      %v537 = vpop.permute.xlu0 %536
      %538 = vrot.lane.b32.xlu0 %v532, 120
      %v539 = vpop.permute.xlu0 %538
      %540 = vrot.lane.b32.xlu0 %v533, 120
      %v541 = vpop.permute.xlu0 %540
      %542 = vrot.lane.b32.xlu0 %v524, 112
      %v543 = vpop.permute.xlu0 %542
      %544 = vrot.lane.b32.xlu0 %v531, 112
      %v545 = vpop.permute.xlu0 %544
      %546 = vrot.lane.b32.xlu0 %v532, 112
      %v547 = vpop.permute.xlu0 %546
      %548 = vrot.lane.b32.xlu0 %v533, 112
      %v549 = vpop.permute.xlu0 %548
      %550 = vrot.lane.b32.xlu0 %v524, 104
      %v551 = vpop.permute.xlu0 %550
      %552 = vrot.lane.b32.xlu0 %v531, 104
      %v553 = vpop.permute.xlu0 %552
      %554 = vrot.lane.b32.xlu0 %v532, 104
      %v555 = vpop.permute.xlu0 %554
      %556 = vrot.lane.b32.xlu0 %v533, 104
      %v557 = vpop.permute.xlu0 %556
      %v560 = vunpack.c.l.s4 1966171168
      %v561 = vunpack.c.0.s8 %v560
      %v562 = vlaneseq
      %v563 = vshrl.u32 %v562, 7
      %v564 = vsub.s32 %v561, %v563
      %v565 = vrot.slane %v508, %v564
      %v566 = vcombine.high %v565, %v565
      %v568 = vunpack.c.l.s4 1966171168
      %v569 = vunpack.c.0.s8 %v568
      %v570 = vlaneseq
      %v571 = vshrl.u32 %v570, 7
      %v572 = vsub.s32 %v569, %v571
      %v573 = vrot.slane %v565, %v572
      %v575 = vunpack.c.l.s4 1966171168
      %v576 = vunpack.c.0.s8 %v575
      %v577 = vlaneseq
      %v578 = vshrl.u32 %v577, 7
      %v579 = vsub.s32 %v576, %v578
      %v580 = vrot.slane %v566, %v579
      %v581 = vcombine.high %v573, %v573
      %v582 = vcombine.high %v580, %v580
      %583 = vrot.lane.b32.xlu0 %v573, 120
      %v584 = vpop.permute.xlu0 %583
      %585 = vrot.lane.b32.xlu0 %v580, 120
      %v586 = vpop.permute.xlu0 %585
      %587 = vrot.lane.b32.xlu0 %v581, 120
      %v588 = vpop.permute.xlu0 %587
      %589 = vrot.lane.b32.xlu0 %v582, 120
      %v590 = vpop.permute.xlu0 %589
      %591 = vrot.lane.b32.xlu0 %v573, 112
      %v592 = vpop.permute.xlu0 %591
      %593 = vrot.lane.b32.xlu0 %v580, 112
      %v594 = vpop.permute.xlu0 %593
      %595 = vrot.lane.b32.xlu0 %v581, 112
      %v596 = vpop.permute.xlu0 %595
      %597 = vrot.lane.b32.xlu0 %v582, 112
      %v598 = vpop.permute.xlu0 %597
      %599 = vrot.lane.b32.xlu0 %v573, 104
      %v600 = vpop.permute.xlu0 %599
      %601 = vrot.lane.b32.xlu0 %v580, 104
      %v602 = vpop.permute.xlu0 %601
      %603 = vrot.lane.b32.xlu0 %v581, 104
      %v604 = vpop.permute.xlu0 %603
      %605 = vrot.lane.b32.xlu0 %v582, 104
      %v606 = vpop.permute.xlu0 %605
      %v608 = vunpack.c.l.s4 1966171168
      %v609 = vunpack.c.0.s8 %v608
      %v610 = vlaneseq
      %v611 = vshrl.u32 %v610, 7
      %v612 = vsub.s32 %v609, %v611
      %v613 = vrot.slane %v573, %v612
      %v615 = vunpack.c.l.s4 1966171168
      %v616 = vunpack.c.0.s8 %v615
      %v617 = vlaneseq
      %v618 = vshrl.u32 %v617, 7
      %v619 = vsub.s32 %v616, %v618
      %v620 = vrot.slane %v613, %v619
      %621 = vrot.lane.b32.xlu0 %v620, 96
      %v622 = vpop.permute.xlu0 %621
      %vm623 = vcmask 64512
      %v625 = vsel %vm623, %v524, 0
      %v628 = vsel %vm623, %v622, 0
      %630 = vmatprep.subr.bf16.mxu0 0
      %631 = vmatpush1.bf16.xpose.msra.mxu0 %v628
      %632 = vmatprep.subr.bf16.mxu0 0
      %633 = vmatpush1.bf16.xpose.msra.mxu0 0
      %634 = vmatprep.subr.bf16.mxu0 0
      %635 = vmatpush1.bf16.xpose.msra.mxu0 0
      %636 = vmatprep.subr.bf16.mxu0 0
      %637 = vmatpush1.bf16.xpose.msra.mxu0 0
      %638 = vmatprep.subr.bf16.mxu0 0
      %639 = vmatpush1.bf16.xpose.msra.mxu0 0
      %640 = vmatprep.subr.bf16.mxu0 0
      %641 = vmatpush1.bf16.xpose.msra.mxu0 0
      %642 = vmatprep.subr.bf16.mxu0 0
      %643 = vmatpush1.bf16.xpose.msra.mxu0 0
      %644 = vmatprep.subr.bf16.mxu0 0
      %645 = vmatpush1.bf16.xpose.msra.mxu0 0
      %646 = vmatprep.subr.bf16.mxu0 0
      %647 = vmatpush1.bf16.xpose.msra.mxu0 0
      %648 = vmatprep.subr.bf16.mxu0 0
      %649 = vmatpush1.bf16.xpose.msra.mxu0 0
      %650 = vmatprep.subr.bf16.mxu0 0
      %651 = vmatpush1.bf16.xpose.msra.mxu0 0
      %652 = vmatprep.subr.bf16.mxu0 0
      %653 = vmatpush1.bf16.xpose.msra.mxu0 0
      %654 = vmatprep.subr.bf16.mxu0 0
      %655 = vmatpush1.bf16.xpose.msra.mxu0 0
      %656 = vmatprep.subr.bf16.mxu0 0
      %657 = vmatpush1.bf16.xpose.msra.mxu0 0
      %658 = vmatprep.subr.bf16.mxu0 0
      %659 = vmatpush1.bf16.xpose.msra.mxu0 0
      %660 = vmatprep.subr.bf16.mxu0 0
      %661 = vmatpush1.bf16.xpose.msra.mxu0 0
      %662 = vmatprep.mubr.bf16.mxu0 0
      %663 = vmatmul.mubr.bf16.gmra.mrb[0].mxu0 %v625
      %v664 = vpop.f32.mrb[0].mxu0
      %v665 = vadd.f32 0.0, %v664
      %v666 = vpop.f32.mrb[0].mxu0
      %v667 = vpop.f32.mrb[0].mxu0
      %v668 = vpop.f32.mrb[0].mxu0
      %669 = vdwg.mxu0
      %v671 = vunpack.c.l.s4 1966171168
      %v672 = vunpack.c.0.s8 %v671
      %v673 = vlaneseq
      %v674 = vshrl.u32 %v673, 7
      %v675 = vsub.s32 %v672, %v674
      %v676 = vrot.slane %v580, %v675
      %v678 = vunpack.c.l.s4 1966171168
      %v679 = vunpack.c.0.s8 %v678
      %v680 = vlaneseq
      %v681 = vshrl.u32 %v680, 7
      %v682 = vsub.s32 %v679, %v681
      %v683 = vrot.slane %v676, %v682
      %684 = vrot.lane.b32.xlu0 %v683, 96
      %v685 = vpop.permute.xlu0 %684
      %v687 = vsel %vm623, %v531, 0
      %v690 = vsel %vm623, %v685, 0
      %692 = vmatprep.subr.bf16.mxu0 0
      %693 = vmatpush1.bf16.xpose.msra.mxu0 %v690
      %694 = vmatprep.subr.bf16.mxu0 0
      %695 = vmatpush1.bf16.xpose.msra.mxu0 0
      %696 = vmatprep.subr.bf16.mxu0 0
      %697 = vmatpush1.bf16.xpose.msra.mxu0 0
      %698 = vmatprep.subr.bf16.mxu0 0
      %699 = vmatpush1.bf16.xpose.msra.mxu0 0
      %700 = vmatprep.subr.bf16.mxu0 0
      %701 = vmatpush1.bf16.xpose.msra.mxu0 0
      %702 = vmatprep.subr.bf16.mxu0 0
      %703 = vmatpush1.bf16.xpose.msra.mxu0 0
      %704 = vmatprep.subr.bf16.mxu0 0
      %705 = vmatpush1.bf16.xpose.msra.mxu0 0
      %706 = vmatprep.subr.bf16.mxu0 0
      %707 = vmatpush1.bf16.xpose.msra.mxu0 0
      %708 = vmatprep.subr.bf16.mxu0 0
      %709 = vmatpush1.bf16.xpose.msra.mxu0 0
      %710 = vmatprep.subr.bf16.mxu0 0
      %711 = vmatpush1.bf16.xpose.msra.mxu0 0
      %712 = vmatprep.subr.bf16.mxu0 0
      %713 = vmatpush1.bf16.xpose.msra.mxu0 0
      %714 = vmatprep.subr.bf16.mxu0 0
      %715 = vmatpush1.bf16.xpose.msra.mxu0 0
      %716 = vmatprep.subr.bf16.mxu0 0
      %717 = vmatpush1.bf16.xpose.msra.mxu0 0
      %718 = vmatprep.subr.bf16.mxu0 0
      %719 = vmatpush1.bf16.xpose.msra.mxu0 0
      %720 = vmatprep.subr.bf16.mxu0 0
      %721 = vmatpush1.bf16.xpose.msra.mxu0 0
      %722 = vmatprep.subr.bf16.mxu0 0
      %723 = vmatpush1.bf16.xpose.msra.mxu0 0
      %724 = vmatprep.mubr.bf16.mxu0 0
      %725 = vmatmul.mubr.bf16.gmra.mrb[0].mxu0 %v687
      %v726 = vpop.f32.mrb[0].mxu0
      %v727 = vadd.f32 0.0, %v726
      %v728 = vpop.f32.mrb[0].mxu0
      %v729 = vpop.f32.mrb[0].mxu0
      %v730 = vpop.f32.mrb[0].mxu0
      %731 = vdwg.mxu0
      %v733 = vunpack.c.l.s4 1966171168
      %v734 = vunpack.c.0.s8 %v733
      %v735 = vlaneseq
      %v736 = vshrl.u32 %v735, 7
      %v737 = vsub.s32 %v734, %v736
      %v738 = vrot.slane %v581, %v737
      %v740 = vunpack.c.l.s4 1966171168
      %v741 = vunpack.c.0.s8 %v740
      %v742 = vlaneseq
      %v743 = vshrl.u32 %v742, 7
      %v744 = vsub.s32 %v741, %v743
      %v745 = vrot.slane %v738, %v744
      %746 = vrot.lane.b32.xlu0 %v745, 96
      %v747 = vpop.permute.xlu0 %746
      %v749 = vsel %vm623, %v532, 0
      %v752 = vsel %vm623, %v747, 0
      %754 = vmatprep.subr.bf16.mxu0 0
      %755 = vmatpush1.bf16.xpose.msra.mxu0 %v752
      %756 = vmatprep.subr.bf16.mxu0 0
      %757 = vmatpush1.bf16.xpose.msra.mxu0 0
      %758 = vmatprep.subr.bf16.mxu0 0
      %759 = vmatpush1.bf16.xpose.msra.mxu0 0
      %760 = vmatprep.subr.bf16.mxu0 0
      %761 = vmatpush1.bf16.xpose.msra.mxu0 0
      %762 = vmatprep.subr.bf16.mxu0 0
      %763 = vmatpush1.bf16.xpose.msra.mxu0 0
      %764 = vmatprep.subr.bf16.mxu0 0
      %765 = vmatpush1.bf16.xpose.msra.mxu0 0
      %766 = vmatprep.subr.bf16.mxu0 0
      %767 = vmatpush1.bf16.xpose.msra.mxu0 0
      %768 = vmatprep.subr.bf16.mxu0 0
      %769 = vmatpush1.bf16.xpose.msra.mxu0 0
      %770 = vmatprep.subr.bf16.mxu0 0
      %771 = vmatpush1.bf16.xpose.msra.mxu0 0
      %772 = vmatprep.subr.bf16.mxu0 0
      %773 = vmatpush1.bf16.xpose.msra.mxu0 0
      %774 = vmatprep.subr.bf16.mxu0 0
      %775 = vmatpush1.bf16.xpose.msra.mxu0 0
      %776 = vmatprep.subr.bf16.mxu0 0
      %777 = vmatpush1.bf16.xpose.msra.mxu0 0
      %778 = vmatprep.subr.bf16.mxu0 0
      %779 = vmatpush1.bf16.xpose.msra.mxu0 0
      %780 = vmatprep.subr.bf16.mxu0 0
      %781 = vmatpush1.bf16.xpose.msra.mxu0 0
      %782 = vmatprep.subr.bf16.mxu0 0
      %783 = vmatpush1.bf16.xpose.msra.mxu0 0
      %784 = vmatprep.subr.bf16.mxu0 0
      %785 = vmatpush1.bf16.xpose.msra.mxu0 0
      %786 = vmatprep.mubr.bf16.mxu0 0
      %787 = vmatmul.mubr.bf16.gmra.mrb[0].mxu0 %v749
      %v788 = vpop.f32.mrb[0].mxu0
      %v789 = vadd.f32 0.0, %v788
      %v790 = vpop.f32.mrb[0].mxu0
      %v791 = vpop.f32.mrb[0].mxu0
      %v792 = vpop.f32.mrb[0].mxu0
      %793 = vdwg.mxu0
      %v795 = vunpack.c.l.s4 1966171168
      %v796 = vunpack.c.0.s8 %v795
      %v797 = vlaneseq
      %v798 = vshrl.u32 %v797, 7
      %v799 = vsub.s32 %v796, %v798
      %v800 = vrot.slane %v582, %v799
      %v802 = vunpack.c.l.s4 1966171168
      %v803 = vunpack.c.0.s8 %v802
      %v804 = vlaneseq
      %v805 = vshrl.u32 %v804, 7
      %v806 = vsub.s32 %v803, %v805
      %v807 = vrot.slane %v800, %v806
      %808 = vrot.lane.b32.xlu0 %v807, 96
      %v809 = vpop.permute.xlu0 %808
      %v811 = vsel %vm623, %v533, 0
      %v814 = vsel %vm623, %v809, 0
      %816 = vmatprep.subr.bf16.mxu0 0
      %817 = vmatpush1.bf16.xpose.msra.mxu0 %v814
      %818 = vmatprep.subr.bf16.mxu0 0
      %819 = vmatpush1.bf16.xpose.msra.mxu0 0
      %820 = vmatprep.subr.bf16.mxu0 0
      %821 = vmatpush1.bf16.xpose.msra.mxu0 0
      %822 = vmatprep.subr.bf16.mxu0 0
      %823 = vmatpush1.bf16.xpose.msra.mxu0 0
      %824 = vmatprep.subr.bf16.mxu0 0
      %825 = vmatpush1.bf16.xpose.msra.mxu0 0
      %826 = vmatprep.subr.bf16.mxu0 0
      %827 = vmatpush1.bf16.xpose.msra.mxu0 0
      %828 = vmatprep.subr.bf16.mxu0 0
      %829 = vmatpush1.bf16.xpose.msra.mxu0 0
      %830 = vmatprep.subr.bf16.mxu0 0
      %831 = vmatpush1.bf16.xpose.msra.mxu0 0
      %832 = vmatprep.subr.bf16.mxu0 0
      %833 = vmatpush1.bf16.xpose.msra.mxu0 0
      %834 = vmatprep.subr.bf16.mxu0 0
      %835 = vmatpush1.bf16.xpose.msra.mxu0 0
      %836 = vmatprep.subr.bf16.mxu0 0
      %837 = vmatpush1.bf16.xpose.msra.mxu0 0
      %838 = vmatprep.subr.bf16.mxu0 0
      %839 = vmatpush1.bf16.xpose.msra.mxu0 0
      %840 = vmatprep.subr.bf16.mxu0 0
      %841 = vmatpush1.bf16.xpose.msra.mxu0 0
      %842 = vmatprep.subr.bf16.mxu0 0
      %843 = vmatpush1.bf16.xpose.msra.mxu0 0
      %844 = vmatprep.subr.bf16.mxu0 0
      %845 = vmatpush1.bf16.xpose.msra.mxu0 0
      %846 = vmatprep.subr.bf16.mxu0 0
      %847 = vmatpush1.bf16.xpose.msra.mxu0 0
      %848 = vmatprep.mubr.bf16.mxu0 0
      %849 = vmatmul.mubr.bf16.gmra.mrb[0].mxu0 %v811
      %v850 = vpop.f32.mrb[0].mxu0
      %v851 = vadd.f32 0.0, %v850
      %v852 = vpop.f32.mrb[0].mxu0
      %v853 = vpop.f32.mrb[0].mxu0
      %v854 = vpop.f32.mrb[0].mxu0
      %855 = vdwg.mxu0
      %v857 = vunpack.c.l.s4 1966171168
      %v858 = vunpack.c.0.s8 %v857
      %v859 = vlaneseq
      %v860 = vshrl.u32 %v859, 7
      %v861 = vsub.s32 %v858, %v860
      %v862 = vrot.slane %v584, %v861
      %v864 = vunpack.c.l.s4 1966171168
      %v865 = vunpack.c.0.s8 %v864
      %v866 = vlaneseq
      %v867 = vshrl.u32 %v866, 7
      %v868 = vsub.s32 %v865, %v867
      %v869 = vrot.slane %v862, %v868
      %870 = vrot.lane.b32.xlu0 %v869, 96
      %v871 = vpop.permute.xlu0 %870
      %v873 = vsel %vm623, %v535, 0
      %v876 = vsel %vm623, %v871, 0
      %878 = vmatprep.subr.bf16.mxu0 0
      %879 = vmatpush1.bf16.xpose.msra.mxu0 %v876
      %880 = vmatprep.subr.bf16.mxu0 0
      %881 = vmatpush1.bf16.xpose.msra.mxu0 0
      %882 = vmatprep.subr.bf16.mxu0 0
      %883 = vmatpush1.bf16.xpose.msra.mxu0 0
      %884 = vmatprep.subr.bf16.mxu0 0
      %885 = vmatpush1.bf16.xpose.msra.mxu0 0
      %886 = vmatprep.subr.bf16.mxu0 0
      %887 = vmatpush1.bf16.xpose.msra.mxu0 0
      %888 = vmatprep.subr.bf16.mxu0 0
      %889 = vmatpush1.bf16.xpose.msra.mxu0 0
      %890 = vmatprep.subr.bf16.mxu0 0
      %891 = vmatpush1.bf16.xpose.msra.mxu0 0
      %892 = vmatprep.subr.bf16.mxu0 0
      %893 = vmatpush1.bf16.xpose.msra.mxu0 0
      %894 = vmatprep.subr.bf16.mxu0 0
      %895 = vmatpush1.bf16.xpose.msra.mxu0 0
      %896 = vmatprep.subr.bf16.mxu0 0
      %897 = vmatpush1.bf16.xpose.msra.mxu0 0
      %898 = vmatprep.subr.bf16.mxu0 0
      %899 = vmatpush1.bf16.xpose.msra.mxu0 0
      %900 = vmatprep.subr.bf16.mxu0 0
      %901 = vmatpush1.bf16.xpose.msra.mxu0 0
      %902 = vmatprep.subr.bf16.mxu0 0
      %903 = vmatpush1.bf16.xpose.msra.mxu0 0
      %904 = vmatprep.subr.bf16.mxu0 0
      %905 = vmatpush1.bf16.xpose.msra.mxu0 0
      %906 = vmatprep.subr.bf16.mxu0 0
      %907 = vmatpush1.bf16.xpose.msra.mxu0 0
      %908 = vmatprep.subr.bf16.mxu0 0
      %909 = vmatpush1.bf16.xpose.msra.mxu0 0
      %910 = vmatprep.mubr.bf16.mxu0 0
      %911 = vmatmul.mubr.bf16.gmra.mrb[0].mxu0 %v873
      %v912 = vpop.f32.mrb[0].mxu0
      %v913 = vadd.f32 0.0, %v912
      %v914 = vpop.f32.mrb[0].mxu0
      %v915 = vpop.f32.mrb[0].mxu0
      %v916 = vpop.f32.mrb[0].mxu0
      %917 = vdwg.mxu0
      %v919 = vunpack.c.l.s4 1966171168
      %v920 = vunpack.c.0.s8 %v919
      %v921 = vlaneseq
      %v922 = vshrl.u32 %v921, 7
      %v923 = vsub.s32 %v920, %v922
      %v924 = vrot.slane %v586, %v923
      %v926 = vunpack.c.l.s4 1966171168
      %v927 = vunpack.c.0.s8 %v926
      %v928 = vlaneseq
      %v929 = vshrl.u32 %v928, 7
      %v930 = vsub.s32 %v927, %v929
      %v931 = vrot.slane %v924, %v930
      %932 = vrot.lane.b32.xlu0 %v931, 96
      %v933 = vpop.permute.xlu0 %932
      %v935 = vsel %vm623, %v537, 0
      %v938 = vsel %vm623, %v933, 0
      %940 = vmatprep.subr.bf16.mxu0 0
      %941 = vmatpush1.bf16.xpose.msra.mxu0 %v938
      %942 = vmatprep.subr.bf16.mxu0 0
      %943 = vmatpush1.bf16.xpose.msra.mxu0 0
      %944 = vmatprep.subr.bf16.mxu0 0
      %945 = vmatpush1.bf16.xpose.msra.mxu0 0
      %946 = vmatprep.subr.bf16.mxu0 0
      %947 = vmatpush1.bf16.xpose.msra.mxu0 0
      %948 = vmatprep.subr.bf16.mxu0 0
      %949 = vmatpush1.bf16.xpose.msra.mxu0 0
      %950 = vmatprep.subr.bf16.mxu0 0
      %951 = vmatpush1.bf16.xpose.msra.mxu0 0
      %952 = vmatprep.subr.bf16.mxu0 0
      %953 = vmatpush1.bf16.xpose.msra.mxu0 0
      %954 = vmatprep.subr.bf16.mxu0 0
      %955 = vmatpush1.bf16.xpose.msra.mxu0 0
      %956 = vmatprep.subr.bf16.mxu0 0
      %957 = vmatpush1.bf16.xpose.msra.mxu0 0
      %958 = vmatprep.subr.bf16.mxu0 0
      %959 = vmatpush1.bf16.xpose.msra.mxu0 0
      %960 = vmatprep.subr.bf16.mxu0 0
      %961 = vmatpush1.bf16.xpose.msra.mxu0 0
      %962 = vmatprep.subr.bf16.mxu0 0
      %963 = vmatpush1.bf16.xpose.msra.mxu0 0
      %964 = vmatprep.subr.bf16.mxu0 0
      %965 = vmatpush1.bf16.xpose.msra.mxu0 0
      %966 = vmatprep.subr.bf16.mxu0 0
      %967 = vmatpush1.bf16.xpose.msra.mxu0 0
      %968 = vmatprep.subr.bf16.mxu0 0
      %969 = vmatpush1.bf16.xpose.msra.mxu0 0
      %970 = vmatprep.subr.bf16.mxu0 0
      %971 = vmatpush1.bf16.xpose.msra.mxu0 0
      %972 = vmatprep.mubr.bf16.mxu0 0
      %973 = vmatmul.mubr.bf16.gmra.mrb[0].mxu0 %v935
      %v974 = vpop.f32.mrb[0].mxu0
      %v975 = vadd.f32 0.0, %v974
      %v976 = vpop.f32.mrb[0].mxu0
      %v977 = vpop.f32.mrb[0].mxu0
      %v978 = vpop.f32.mrb[0].mxu0
      %979 = vdwg.mxu0
      %v981 = vunpack.c.l.s4 1966171168
      %v982 = vunpack.c.0.s8 %v981
      %v983 = vlaneseq
      %v984 = vshrl.u32 %v983, 7
      %v985 = vsub.s32 %v982, %v984
      %v986 = vrot.slane %v588, %v985
      %v988 = vunpack.c.l.s4 1966171168
      %v989 = vunpack.c.0.s8 %v988
      %v990 = vlaneseq
      %v991 = vshrl.u32 %v990, 7
      %v992 = vsub.s32 %v989, %v991
      %v993 = vrot.slane %v986, %v992
      %994 = vrot.lane.b32.xlu0 %v993, 96
      %v995 = vpop.permute.xlu0 %994
      %v997 = vsel %vm623, %v539, 0
      %v1000 = vsel %vm623, %v995, 0
      %1002 = vmatprep.subr.bf16.mxu0 0
      %1003 = vmatpush1.bf16.xpose.msra.mxu0 %v1000
      %1004 = vmatprep.subr.bf16.mxu0 0
      %1005 = vmatpush1.bf16.xpose.msra.mxu0 0
      %1006 = vmatprep.subr.bf16.mxu0 0
      %1007 = vmatpush1.bf16.xpose.msra.mxu0 0
      %1008 = vmatprep.subr.bf16.mxu0 0
      %1009 = vmatpush1.bf16.xpose.msra.mxu0 0
      %1010 = vmatprep.subr.bf16.mxu0 0
      %1011 = vmatpush1.bf16.xpose.msra.mxu0 0
      %1012 = vmatprep.subr.bf16.mxu0 0
      %1013 = vmatpush1.bf16.xpose.msra.mxu0 0
      %1014 = vmatprep.subr.bf16.mxu0 0
      %1015 = vmatpush1.bf16.xpose.msra.mxu0 0
      %1016 = vmatprep.subr.bf16.mxu0 0
      %1017 = vmatpush1.bf16.xpose.msra.mxu0 0
      %1018 = vmatprep.subr.bf16.mxu0 0
      %1019 = vmatpush1.bf16.xpose.msra.mxu0 0
      %1020 = vmatprep.subr.bf16.mxu0 0
      %1021 = vmatpush1.bf16.xpose.msra.mxu0 0
      %1022 = vmatprep.subr.bf16.mxu0 0
      %1023 = vmatpush1.bf16.xpose.msra.mxu0 0
      %1024 = vmatprep.subr.bf16.mxu0 0
      %1025 = vmatpush1.bf16.xpose.msra.mxu0 0
      %1026 = vmatprep.subr.bf16.mxu0 0
      %1027 = vmatpush1.bf16.xpose.msra.mxu0 0
      %1028 = vmatprep.subr.bf16.mxu0 0
      %1029 = vmatpush1.bf16.xpose.msra.mxu0 0
      %1030 = vmatprep.subr.bf16.mxu0 0
      %1031 = vmatpush1.bf16.xpose.msra.mxu0 0
      %1032 = vmatprep.subr.bf16.mxu0 0
      %1033 = vmatpush1.bf16.xpose.msra.mxu0 0
      %1034 = vmatprep.mubr.bf16.mxu0 0
      %1035 = vmatmul.mubr.bf16.gmra.mrb[0].mxu0 %v997
      %v1036 = vpop.f32.mrb[0].mxu0
      %v1037 = vadd.f32 0.0, %v1036
      %v1038 = vpop.f32.mrb[0].mxu0
      %v1039 = vpop.f32.mrb[0].mxu0
      %v1040 = vpop.f32.mrb[0].mxu0
      %1041 = vdwg.mxu0
      %v1043 = vunpack.c.l.s4 1966171168
      %v1044 = vunpack.c.0.s8 %v1043
      %v1045 = vlaneseq
      %v1046 = vshrl.u32 %v1045, 7
      %v1047 = vsub.s32 %v1044, %v1046
      %v1048 = vrot.slane %v590, %v1047
      %v1050 = vunpack.c.l.s4 1966171168
      %v1051 = vunpack.c.0.s8 %v1050
      %v1052 = vlaneseq
      %v1053 = vshrl.u32 %v1052, 7
      %v1054 = vsub.s32 %v1051, %v1053
      %v1055 = vrot.slane %v1048, %v1054
      %1056 = vrot.lane.b32.xlu0 %v1055, 96
      %v1057 = vpop.permute.xlu0 %1056
      %v1059 = vsel %vm623, %v541, 0
      %v1062 = vsel %vm623, %v1057, 0
      %1064 = vmatprep.subr.bf16.mxu0 0
      %1065 = vmatpush1.bf16.xpose.msra.mxu0 %v1062
      %1066 = vmatprep.subr.bf16.mxu0 0
      %1067 = vmatpush1.bf16.xpose.msra.mxu0 0
      %1068 = vmatprep.subr.bf16.mxu0 0
      %1069 = vmatpush1.bf16.xpose.msra.mxu0 0
      %1070 = vmatprep.subr.bf16.mxu0 0
      %1071 = vmatpush1.bf16.xpose.msra.mxu0 0
      %1072 = vmatprep.subr.bf16.mxu0 0
      %1073 = vmatpush1.bf16.xpose.msra.mxu0 0
      %1074 = vmatprep.subr.bf16.mxu0 0
      %1075 = vmatpush1.bf16.xpose.msra.mxu0 0
      %1076 = vmatprep.subr.bf16.mxu0 0
      %1077 = vmatpush1.bf16.xpose.msra.mxu0 0
      %1078 = vmatprep.subr.bf16.mxu0 0
      %1079 = vmatpush1.bf16.xpose.msra.mxu0 0
      %1080 = vmatprep.subr.bf16.mxu0 0
      %1081 = vmatpush1.bf16.xpose.msra.mxu0 0
      %1082 = vmatprep.subr.bf16.mxu0 0
      %1083 = vmatpush1.bf16.xpose.msra.mxu0 0
      %1084 = vmatprep.subr.bf16.mxu0 0
      %1085 = vmatpush1.bf16.xpose.msra.mxu0 0
      %1086 = vmatprep.subr.bf16.mxu0 0
      %1087 = vmatpush1.bf16.xpose.msra.mxu0 0
      %1088 = vmatprep.subr.bf16.mxu0 0
      %1089 = vmatpush1.bf16.xpose.msra.mxu0 0
      %1090 = vmatprep.subr.bf16.mxu0 0
      %1091 = vmatpush1.bf16.xpose.msra.mxu0 0
      %1092 = vmatprep.subr.bf16.mxu0 0
      %1093 = vmatpush1.bf16.xpose.msra.mxu0 0
      %1094 = vmatprep.subr.bf16.mxu0 0
      %1095 = vmatpush1.bf16.xpose.msra.mxu0 0
      %1096 = vmatprep.mubr.bf16.mxu0 0
      %1097 = vmatmul.mubr.bf16.gmra.mrb[0].mxu0 %v1059
      %v1098 = vpop.f32.mrb[0].mxu0
      %v1099 = vadd.f32 0.0, %v1098
      %v1100 = vpop.f32.mrb[0].mxu0
      %v1101 = vpop.f32.mrb[0].mxu0
      %v1102 = vpop.f32.mrb[0].mxu0
      %1103 = vdwg.mxu0
      %v1105 = vunpack.c.l.s4 1966171168
      %v1106 = vunpack.c.0.s8 %v1105
      %v1107 = vlaneseq
      %v1108 = vshrl.u32 %v1107, 7
      %v1109 = vsub.s32 %v1106, %v1108
      %v1110 = vrot.slane %v592, %v1109
      %v1112 = vunpack.c.l.s4 1966171168
      %v1113 = vunpack.c.0.s8 %v1112
      %v1114 = vlaneseq
      %v1115 = vshrl.u32 %v1114, 7
      %v1116 = vsub.s32 %v1113, %v1115
      %v1117 = vrot.slane %v1110, %v1116
      %1118 = vrot.lane.b32.xlu0 %v1117, 96
      %v1119 = vpop.permute.xlu0 %1118
      %v1121 = vsel %vm623, %v543, 0
      %v1124 = vsel %vm623, %v1119, 0
      %1126 = vmatprep.subr.bf16.mxu0 0
      %1127 = vmatpush1.bf16.xpose.msra.mxu0 %v1124
      %1128 = vmatprep.subr.bf16.mxu0 0
      %1129 = vmatpush1.bf16.xpose.msra.mxu0 0
      %1130 = vmatprep.subr.bf16.mxu0 0
      %1131 = vmatpush1.bf16.xpose.msra.mxu0 0
      %1132 = vmatprep.subr.bf16.mxu0 0
      %1133 = vmatpush1.bf16.xpose.msra.mxu0 0
      %1134 = vmatprep.subr.bf16.mxu0 0
      %1135 = vmatpush1.bf16.xpose.msra.mxu0 0
      %1136 = vmatprep.subr.bf16.mxu0 0
      %1137 = vmatpush1.bf16.xpose.msra.mxu0 0
      %1138 = vmatprep.subr.bf16.mxu0 0
      %1139 = vmatpush1.bf16.xpose.msra.mxu0 0
      %1140 = vmatprep.subr.bf16.mxu0 0
      %1141 = vmatpush1.bf16.xpose.msra.mxu0 0
      %1142 = vmatprep.subr.bf16.mxu0 0
      %1143 = vmatpush1.bf16.xpose.msra.mxu0 0
      %1144 = vmatprep.subr.bf16.mxu0 0
      %1145 = vmatpush1.bf16.xpose.msra.mxu0 0
      %1146 = vmatprep.subr.bf16.mxu0 0
      %1147 = vmatpush1.bf16.xpose.msra.mxu0 0
      %1148 = vmatprep.subr.bf16.mxu0 0
      %1149 = vmatpush1.bf16.xpose.msra.mxu0 0
      %1150 = vmatprep.subr.bf16.mxu0 0
      %1151 = vmatpush1.bf16.xpose.msra.mxu0 0
      %1152 = vmatprep.subr.bf16.mxu0 0
      %1153 = vmatpush1.bf16.xpose.msra.mxu0 0
      %1154 = vmatprep.subr.bf16.mxu0 0
      %1155 = vmatpush1.bf16.xpose.msra.mxu0 0
      %1156 = vmatprep.subr.bf16.mxu0 0
      %1157 = vmatpush1.bf16.xpose.msra.mxu0 0
      %1158 = vmatprep.mubr.bf16.mxu0 0
      %1159 = vmatmul.mubr.bf16.gmra.mrb[0].mxu0 %v1121
      %v1160 = vpop.f32.mrb[0].mxu0
      %v1161 = vadd.f32 0.0, %v1160
      %v1162 = vpop.f32.mrb[0].mxu0
      %v1163 = vpop.f32.mrb[0].mxu0
      %v1164 = vpop.f32.mrb[0].mxu0
      %1165 = vdwg.mxu0
      %v1167 = vunpack.c.l.s4 1966171168
      %v1168 = vunpack.c.0.s8 %v1167
      %v1169 = vlaneseq
      %v1170 = vshrl.u32 %v1169, 7
      %v1171 = vsub.s32 %v1168, %v1170
      %v1172 = vrot.slane %v594, %v1171
      %v1174 = vunpack.c.l.s4 1966171168
      %v1175 = vunpack.c.0.s8 %v1174
      %v1176 = vlaneseq
      %v1177 = vshrl.u32 %v1176, 7
      %v1178 = vsub.s32 %v1175, %v1177
      %v1179 = vrot.slane %v1172, %v1178
      %1180 = vrot.lane.b32.xlu0 %v1179, 96
      %v1181 = vpop.permute.xlu0 %1180
      %v1183 = vsel %vm623, %v545, 0
      %v1186 = vsel %vm623, %v1181, 0
      %1188 = vmatprep.subr.bf16.mxu0 0
      %1189 = vmatpush1.bf16.xpose.msra.mxu0 %v1186
      %1190 = vmatprep.subr.bf16.mxu0 0
      %1191 = vmatpush1.bf16.xpose.msra.mxu0 0
      %1192 = vmatprep.subr.bf16.mxu0 0
      %1193 = vmatpush1.bf16.xpose.msra.mxu0 0
      %1194 = vmatprep.subr.bf16.mxu0 0
      %1195 = vmatpush1.bf16.xpose.msra.mxu0 0
      %1196 = vmatprep.subr.bf16.mxu0 0
      %1197 = vmatpush1.bf16.xpose.msra.mxu0 0
      %1198 = vmatprep.subr.bf16.mxu0 0
      %1199 = vmatpush1.bf16.xpose.msra.mxu0 0
      %1200 = vmatprep.subr.bf16.mxu0 0
      %1201 = vmatpush1.bf16.xpose.msra.mxu0 0
      %1202 = vmatprep.subr.bf16.mxu0 0
      %1203 = vmatpush1.bf16.xpose.msra.mxu0 0
      %1204 = vmatprep.subr.bf16.mxu0 0
      %1205 = vmatpush1.bf16.xpose.msra.mxu0 0
      %1206 = vmatprep.subr.bf16.mxu0 0
      %1207 = vmatpush1.bf16.xpose.msra.mxu0 0
      %1208 = vmatprep.subr.bf16.mxu0 0
      %1209 = vmatpush1.bf16.xpose.msra.mxu0 0
      %1210 = vmatprep.subr.bf16.mxu0 0
      %1211 = vmatpush1.bf16.xpose.msra.mxu0 0
      %1212 = vmatprep.subr.bf16.mxu0 0
      %1213 = vmatpush1.bf16.xpose.msra.mxu0 0
      %1214 = vmatprep.subr.bf16.mxu0 0
      %1215 = vmatpush1.bf16.xpose.msra.mxu0 0
      %1216 = vmatprep.subr.bf16.mxu0 0
      %1217 = vmatpush1.bf16.xpose.msra.mxu0 0
      %1218 = vmatprep.subr.bf16.mxu0 0
      %1219 = vmatpush1.bf16.xpose.msra.mxu0 0
      %1220 = vmatprep.mubr.bf16.mxu0 0
      %1221 = vmatmul.mubr.bf16.gmra.mrb[0].mxu0 %v1183
      %v1222 = vpop.f32.mrb[0].mxu0
      %v1223 = vadd.f32 0.0, %v1222
      %v1224 = vpop.f32.mrb[0].mxu0
      %v1225 = vpop.f32.mrb[0].mxu0
      %v1226 = vpop.f32.mrb[0].mxu0
      %1227 = vdwg.mxu0
      %v1229 = vunpack.c.l.s4 1966171168
      %v1230 = vunpack.c.0.s8 %v1229
      %v1231 = vlaneseq
      %v1232 = vshrl.u32 %v1231, 7
      %v1233 = vsub.s32 %v1230, %v1232
      %v1234 = vrot.slane %v596, %v1233
      %v1236 = vunpack.c.l.s4 1966171168
      %v1237 = vunpack.c.0.s8 %v1236
      %v1238 = vlaneseq
      %v1239 = vshrl.u32 %v1238, 7
      %v1240 = vsub.s32 %v1237, %v1239
      %v1241 = vrot.slane %v1234, %v1240
      %1242 = vrot.lane.b32.xlu0 %v1241, 96
      %v1243 = vpop.permute.xlu0 %1242
      %v1245 = vsel %vm623, %v547, 0
      %v1248 = vsel %vm623, %v1243, 0
      %1250 = vmatprep.subr.bf16.mxu0 0
      %1251 = vmatpush1.bf16.xpose.msra.mxu0 %v1248
      %1252 = vmatprep.subr.bf16.mxu0 0
      %1253 = vmatpush1.bf16.xpose.msra.mxu0 0
      %1254 = vmatprep.subr.bf16.mxu0 0
      %1255 = vmatpush1.bf16.xpose.msra.mxu0 0
      %1256 = vmatprep.subr.bf16.mxu0 0
      %1257 = vmatpush1.bf16.xpose.msra.mxu0 0
      %1258 = vmatprep.subr.bf16.mxu0 0
      %1259 = vmatpush1.bf16.xpose.msra.mxu0 0
      %1260 = vmatprep.subr.bf16.mxu0 0
      %1261 = vmatpush1.bf16.xpose.msra.mxu0 0
      %1262 = vmatprep.subr.bf16.mxu0 0
      %1263 = vmatpush1.bf16.xpose.msra.mxu0 0
      %1264 = vmatprep.subr.bf16.mxu0 0
      %1265 = vmatpush1.bf16.xpose.msra.mxu0 0
      %1266 = vmatprep.subr.bf16.mxu0 0
      %1267 = vmatpush1.bf16.xpose.msra.mxu0 0
      %1268 = vmatprep.subr.bf16.mxu0 0
      %1269 = vmatpush1.bf16.xpose.msra.mxu0 0
      %1270 = vmatprep.subr.bf16.mxu0 0
      %1271 = vmatpush1.bf16.xpose.msra.mxu0 0
      %1272 = vmatprep.subr.bf16.mxu0 0
      %1273 = vmatpush1.bf16.xpose.msra.mxu0 0
      %1274 = vmatprep.subr.bf16.mxu0 0
      %1275 = vmatpush1.bf16.xpose.msra.mxu0 0
      %1276 = vmatprep.subr.bf16.mxu0 0
      %1277 = vmatpush1.bf16.xpose.msra.mxu0 0
      %1278 = vmatprep.subr.bf16.mxu0 0
      %1279 = vmatpush1.bf16.xpose.msra.mxu0 0
      %1280 = vmatprep.subr.bf16.mxu0 0
      %1281 = vmatpush1.bf16.xpose.msra.mxu0 0
      %1282 = vmatprep.mubr.bf16.mxu0 0
      %1283 = vmatmul.mubr.bf16.gmra.mrb[0].mxu0 %v1245
      %v1284 = vpop.f32.mrb[0].mxu0
      %v1285 = vadd.f32 0.0, %v1284
      %v1286 = vpop.f32.mrb[0].mxu0
      %v1287 = vpop.f32.mrb[0].mxu0
      %v1288 = vpop.f32.mrb[0].mxu0
      %1289 = vdwg.mxu0
      %v1291 = vunpack.c.l.s4 1966171168
      %v1292 = vunpack.c.0.s8 %v1291
      %v1293 = vlaneseq
      %v1294 = vshrl.u32 %v1293, 7
      %v1295 = vsub.s32 %v1292, %v1294
      %v1296 = vrot.slane %v598, %v1295
      %v1298 = vunpack.c.l.s4 1966171168
      %v1299 = vunpack.c.0.s8 %v1298
      %v1300 = vlaneseq
      %v1301 = vshrl.u32 %v1300, 7
      %v1302 = vsub.s32 %v1299, %v1301
      %v1303 = vrot.slane %v1296, %v1302
      %1304 = vrot.lane.b32.xlu0 %v1303, 96
      %v1305 = vpop.permute.xlu0 %1304
      %v1307 = vsel %vm623, %v549, 0
      %v1310 = vsel %vm623, %v1305, 0
      %1312 = vmatprep.subr.bf16.mxu0 0
      %1313 = vmatpush1.bf16.xpose.msra.mxu0 %v1310
      %1314 = vmatprep.subr.bf16.mxu0 0
      %1315 = vmatpush1.bf16.xpose.msra.mxu0 0
      %1316 = vmatprep.subr.bf16.mxu0 0
      %1317 = vmatpush1.bf16.xpose.msra.mxu0 0
      %1318 = vmatprep.subr.bf16.mxu0 0
      %1319 = vmatpush1.bf16.xpose.msra.mxu0 0
      %1320 = vmatprep.subr.bf16.mxu0 0
      %1321 = vmatpush1.bf16.xpose.msra.mxu0 0
      %1322 = vmatprep.subr.bf16.mxu0 0
      %1323 = vmatpush1.bf16.xpose.msra.mxu0 0
      %1324 = vmatprep.subr.bf16.mxu0 0
      %1325 = vmatpush1.bf16.xpose.msra.mxu0 0
      %1326 = vmatprep.subr.bf16.mxu0 0
      %1327 = vmatpush1.bf16.xpose.msra.mxu0 0
      %1328 = vmatprep.subr.bf16.mxu0 0
      %1329 = vmatpush1.bf16.xpose.msra.mxu0 0
      %1330 = vmatprep.subr.bf16.mxu0 0
      %1331 = vmatpush1.bf16.xpose.msra.mxu0 0
      %1332 = vmatprep.subr.bf16.mxu0 0
      %1333 = vmatpush1.bf16.xpose.msra.mxu0 0
      %1334 = vmatprep.subr.bf16.mxu0 0
      %1335 = vmatpush1.bf16.xpose.msra.mxu0 0
      %1336 = vmatprep.subr.bf16.mxu0 0
      %1337 = vmatpush1.bf16.xpose.msra.mxu0 0
      %1338 = vmatprep.subr.bf16.mxu0 0
      %1339 = vmatpush1.bf16.xpose.msra.mxu0 0
      %1340 = vmatprep.subr.bf16.mxu0 0
      %1341 = vmatpush1.bf16.xpose.msra.mxu0 0
      %1342 = vmatprep.subr.bf16.mxu0 0
      %1343 = vmatpush1.bf16.xpose.msra.mxu0 0
      %1344 = vmatprep.mubr.bf16.mxu0 0
      %1345 = vmatmul.mubr.bf16.gmra.mrb[0].mxu0 %v1307
      %v1346 = vpop.f32.mrb[0].mxu0
      %v1347 = vadd.f32 0.0, %v1346
      %v1348 = vpop.f32.mrb[0].mxu0
      %v1349 = vpop.f32.mrb[0].mxu0
      %v1350 = vpop.f32.mrb[0].mxu0
      %1351 = vdwg.mxu0
      %v1353 = vunpack.c.l.s4 1966171168
      %v1354 = vunpack.c.0.s8 %v1353
      %v1355 = vlaneseq
      %v1356 = vshrl.u32 %v1355, 7
      %v1357 = vsub.s32 %v1354, %v1356
      %v1358 = vrot.slane %v600, %v1357
      %v1360 = vunpack.c.l.s4 1966171168
      %v1361 = vunpack.c.0.s8 %v1360
      %v1362 = vlaneseq
      %v1363 = vshrl.u32 %v1362, 7
      %v1364 = vsub.s32 %v1361, %v1363
      %v1365 = vrot.slane %v1358, %v1364
      %1366 = vrot.lane.b32.xlu0 %v1365, 96
      %v1367 = vpop.permute.xlu0 %1366
      %v1369 = vsel %vm623, %v551, 0
      %v1372 = vsel %vm623, %v1367, 0
      %1374 = vmatprep.subr.bf16.mxu0 0
      %1375 = vmatpush1.bf16.xpose.msra.mxu0 %v1372
      %1376 = vmatprep.subr.bf16.mxu0 0
      %1377 = vmatpush1.bf16.xpose.msra.mxu0 0
      %1378 = vmatprep.subr.bf16.mxu0 0
      %1379 = vmatpush1.bf16.xpose.msra.mxu0 0
      %1380 = vmatprep.subr.bf16.mxu0 0
      %1381 = vmatpush1.bf16.xpose.msra.mxu0 0
      %1382 = vmatprep.subr.bf16.mxu0 0
      %1383 = vmatpush1.bf16.xpose.msra.mxu0 0
      %1384 = vmatprep.subr.bf16.mxu0 0
      %1385 = vmatpush1.bf16.xpose.msra.mxu0 0
      %1386 = vmatprep.subr.bf16.mxu0 0
      %1387 = vmatpush1.bf16.xpose.msra.mxu0 0
      %1388 = vmatprep.subr.bf16.mxu0 0
      %1389 = vmatpush1.bf16.xpose.msra.mxu0 0
      %1390 = vmatprep.subr.bf16.mxu0 0
      %1391 = vmatpush1.bf16.xpose.msra.mxu0 0
      %1392 = vmatprep.subr.bf16.mxu0 0
      %1393 = vmatpush1.bf16.xpose.msra.mxu0 0
      %1394 = vmatprep.subr.bf16.mxu0 0
      %1395 = vmatpush1.bf16.xpose.msra.mxu0 0
      %1396 = vmatprep.subr.bf16.mxu0 0
      %1397 = vmatpush1.bf16.xpose.msra.mxu0 0
      %1398 = vmatprep.subr.bf16.mxu0 0
      %1399 = vmatpush1.bf16.xpose.msra.mxu0 0
      %1400 = vmatprep.subr.bf16.mxu0 0
      %1401 = vmatpush1.bf16.xpose.msra.mxu0 0
      %1402 = vmatprep.subr.bf16.mxu0 0
      %1403 = vmatpush1.bf16.xpose.msra.mxu0 0
      %1404 = vmatprep.subr.bf16.mxu0 0
      %1405 = vmatpush1.bf16.xpose.msra.mxu0 0
      %1406 = vmatprep.mubr.bf16.mxu0 0
      %1407 = vmatmul.mubr.bf16.gmra.mrb[0].mxu0 %v1369
      %v1408 = vpop.f32.mrb[0].mxu0
      %v1409 = vadd.f32 0.0, %v1408
      %v1410 = vpop.f32.mrb[0].mxu0
      %v1411 = vpop.f32.mrb[0].mxu0
      %v1412 = vpop.f32.mrb[0].mxu0
      %1413 = vdwg.mxu0
      %v1415 = vunpack.c.l.s4 1966171168
      %v1416 = vunpack.c.0.s8 %v1415
      %v1417 = vlaneseq
      %v1418 = vshrl.u32 %v1417, 7
      %v1419 = vsub.s32 %v1416, %v1418
      %v1420 = vrot.slane %v602, %v1419
      %v1422 = vunpack.c.l.s4 1966171168
      %v1423 = vunpack.c.0.s8 %v1422
      %v1424 = vlaneseq
      %v1425 = vshrl.u32 %v1424, 7
      %v1426 = vsub.s32 %v1423, %v1425
      %v1427 = vrot.slane %v1420, %v1426
      %1428 = vrot.lane.b32.xlu0 %v1427, 96
      %v1429 = vpop.permute.xlu0 %1428
      %v1431 = vsel %vm623, %v553, 0
      %v1434 = vsel %vm623, %v1429, 0
      %1436 = vmatprep.subr.bf16.mxu0 0
      %1437 = vmatpush1.bf16.xpose.msra.mxu0 %v1434
      %1438 = vmatprep.subr.bf16.mxu0 0
      %1439 = vmatpush1.bf16.xpose.msra.mxu0 0
      %1440 = vmatprep.subr.bf16.mxu0 0
      %1441 = vmatpush1.bf16.xpose.msra.mxu0 0
      %1442 = vmatprep.subr.bf16.mxu0 0
      %1443 = vmatpush1.bf16.xpose.msra.mxu0 0
      %1444 = vmatprep.subr.bf16.mxu0 0
      %1445 = vmatpush1.bf16.xpose.msra.mxu0 0
      %1446 = vmatprep.subr.bf16.mxu0 0
      %1447 = vmatpush1.bf16.xpose.msra.mxu0 0
      %1448 = vmatprep.subr.bf16.mxu0 0
      %1449 = vmatpush1.bf16.xpose.msra.mxu0 0
      %1450 = vmatprep.subr.bf16.mxu0 0
      %1451 = vmatpush1.bf16.xpose.msra.mxu0 0
      %1452 = vmatprep.subr.bf16.mxu0 0
      %1453 = vmatpush1.bf16.xpose.msra.mxu0 0
      %1454 = vmatprep.subr.bf16.mxu0 0
      %1455 = vmatpush1.bf16.xpose.msra.mxu0 0
      %1456 = vmatprep.subr.bf16.mxu0 0
      %1457 = vmatpush1.bf16.xpose.msra.mxu0 0
      %1458 = vmatprep.subr.bf16.mxu0 0
      %1459 = vmatpush1.bf16.xpose.msra.mxu0 0
      %1460 = vmatprep.subr.bf16.mxu0 0
      %1461 = vmatpush1.bf16.xpose.msra.mxu0 0
      %1462 = vmatprep.subr.bf16.mxu0 0
      %1463 = vmatpush1.bf16.xpose.msra.mxu0 0
      %1464 = vmatprep.subr.bf16.mxu0 0
      %1465 = vmatpush1.bf16.xpose.msra.mxu0 0
      %1466 = vmatprep.subr.bf16.mxu0 0
      %1467 = vmatpush1.bf16.xpose.msra.mxu0 0
      %1468 = vmatprep.mubr.bf16.mxu0 0
      %1469 = vmatmul.mubr.bf16.gmra.mrb[0].mxu0 %v1431
      %v1470 = vpop.f32.mrb[0].mxu0
      %v1471 = vadd.f32 0.0, %v1470
      %v1472 = vpop.f32.mrb[0].mxu0
      %v1473 = vpop.f32.mrb[0].mxu0
      %v1474 = vpop.f32.mrb[0].mxu0
      %1475 = vdwg.mxu0
      %v1477 = vunpack.c.l.s4 1966171168
      %v1478 = vunpack.c.0.s8 %v1477
      %v1479 = vlaneseq
      %v1480 = vshrl.u32 %v1479, 7
      %v1481 = vsub.s32 %v1478, %v1480
      %v1482 = vrot.slane %v604, %v1481
      %v1484 = vunpack.c.l.s4 1966171168
      %v1485 = vunpack.c.0.s8 %v1484
      %v1486 = vlaneseq
      %v1487 = vshrl.u32 %v1486, 7
      %v1488 = vsub.s32 %v1485, %v1487
      %v1489 = vrot.slane %v1482, %v1488
      %1490 = vrot.lane.b32.xlu0 %v1489, 96
      %v1491 = vpop.permute.xlu0 %1490
      %v1493 = vsel %vm623, %v555, 0
      %v1496 = vsel %vm623, %v1491, 0
      %1498 = vmatprep.subr.bf16.mxu0 0
      %1499 = vmatpush1.bf16.xpose.msra.mxu0 %v1496
      %1500 = vmatprep.subr.bf16.mxu0 0
      %1501 = vmatpush1.bf16.xpose.msra.mxu0 0
      %1502 = vmatprep.subr.bf16.mxu0 0
      %1503 = vmatpush1.bf16.xpose.msra.mxu0 0
      %1504 = vmatprep.subr.bf16.mxu0 0
      %1505 = vmatpush1.bf16.xpose.msra.mxu0 0
      %1506 = vmatprep.subr.bf16.mxu0 0
      %1507 = vmatpush1.bf16.xpose.msra.mxu0 0
      %1508 = vmatprep.subr.bf16.mxu0 0
      %1509 = vmatpush1.bf16.xpose.msra.mxu0 0
      %1510 = vmatprep.subr.bf16.mxu0 0
      %1511 = vmatpush1.bf16.xpose.msra.mxu0 0
      %1512 = vmatprep.subr.bf16.mxu0 0
      %1513 = vmatpush1.bf16.xpose.msra.mxu0 0
      %1514 = vmatprep.subr.bf16.mxu0 0
      %1515 = vmatpush1.bf16.xpose.msra.mxu0 0
      %1516 = vmatprep.subr.bf16.mxu0 0
      %1517 = vmatpush1.bf16.xpose.msra.mxu0 0
      %1518 = vmatprep.subr.bf16.mxu0 0
      %1519 = vmatpush1.bf16.xpose.msra.mxu0 0
      %1520 = vmatprep.subr.bf16.mxu0 0
      %1521 = vmatpush1.bf16.xpose.msra.mxu0 0
      %1522 = vmatprep.subr.bf16.mxu0 0
      %1523 = vmatpush1.bf16.xpose.msra.mxu0 0
      %1524 = vmatprep.subr.bf16.mxu0 0
      %1525 = vmatpush1.bf16.xpose.msra.mxu0 0
      %1526 = vmatprep.subr.bf16.mxu0 0
      %1527 = vmatpush1.bf16.xpose.msra.mxu0 0
      %1528 = vmatprep.subr.bf16.mxu0 0
      %1529 = vmatpush1.bf16.xpose.msra.mxu0 0
      %1530 = vmatprep.mubr.bf16.mxu0 0
      %1531 = vmatmul.mubr.bf16.gmra.mrb[0].mxu0 %v1493
      %v1532 = vpop.f32.mrb[0].mxu0
      %v1533 = vadd.f32 0.0, %v1532
      %v1534 = vpop.f32.mrb[0].mxu0
      %v1535 = vpop.f32.mrb[0].mxu0
      %v1536 = vpop.f32.mrb[0].mxu0
      %1537 = vdwg.mxu0
      %v1539 = vunpack.c.l.s4 1966171168
      %v1540 = vunpack.c.0.s8 %v1539
      %v1541 = vlaneseq
      %v1542 = vshrl.u32 %v1541, 7
      %v1543 = vsub.s32 %v1540, %v1542
      %v1544 = vrot.slane %v606, %v1543
      %v1546 = vunpack.c.l.s4 1966171168
      %v1547 = vunpack.c.0.s8 %v1546
      %v1548 = vlaneseq
      %v1549 = vshrl.u32 %v1548, 7
      %v1550 = vsub.s32 %v1547, %v1549
      %v1551 = vrot.slane %v1544, %v1550
      %1552 = vrot.lane.b32.xlu0 %v1551, 96
      %v1553 = vpop.permute.xlu0 %1552
      %v1555 = vsel %vm623, %v557, 0
      %v1558 = vsel %vm623, %v1553, 0
      %1560 = vmatprep.subr.bf16.mxu0 0
      %1561 = vmatpush1.bf16.xpose.msra.mxu0 %v1558
      %1562 = vmatprep.subr.bf16.mxu0 0
      %1563 = vmatpush1.bf16.xpose.msra.mxu0 0
      %1564 = vmatprep.subr.bf16.mxu0 0
      %1565 = vmatpush1.bf16.xpose.msra.mxu0 0
      %1566 = vmatprep.subr.bf16.mxu0 0
      %1567 = vmatpush1.bf16.xpose.msra.mxu0 0
      %1568 = vmatprep.subr.bf16.mxu0 0
      %1569 = vmatpush1.bf16.xpose.msra.mxu0 0
      %1570 = vmatprep.subr.bf16.mxu0 0
      %1571 = vmatpush1.bf16.xpose.msra.mxu0 0
      %1572 = vmatprep.subr.bf16.mxu0 0
      %1573 = vmatpush1.bf16.xpose.msra.mxu0 0
      %1574 = vmatprep.subr.bf16.mxu0 0
      %1575 = vmatpush1.bf16.xpose.msra.mxu0 0
      %1576 = vmatprep.subr.bf16.mxu0 0
      %1577 = vmatpush1.bf16.xpose.msra.mxu0 0
      %1578 = vmatprep.subr.bf16.mxu0 0
      %1579 = vmatpush1.bf16.xpose.msra.mxu0 0
      %1580 = vmatprep.subr.bf16.mxu0 0
      %1581 = vmatpush1.bf16.xpose.msra.mxu0 0
      %1582 = vmatprep.subr.bf16.mxu0 0
      %1583 = vmatpush1.bf16.xpose.msra.mxu0 0
      %1584 = vmatprep.subr.bf16.mxu0 0
      %1585 = vmatpush1.bf16.xpose.msra.mxu0 0
      %1586 = vmatprep.subr.bf16.mxu0 0
      %1587 = vmatpush1.bf16.xpose.msra.mxu0 0
      %1588 = vmatprep.subr.bf16.mxu0 0
      %1589 = vmatpush1.bf16.xpose.msra.mxu0 0
      %1590 = vmatprep.subr.bf16.mxu0 0
      %1591 = vmatpush1.bf16.xpose.msra.mxu0 0
      %1592 = vmatprep.mubr.bf16.mxu0 0
      %1593 = vmatmul.mubr.bf16.gmra.mrb[0].mxu0 %v1555
      %v1594 = vpop.f32.mrb[0].mxu0
      %v1595 = vadd.f32 0.0, %v1594
      %v1596 = vpop.f32.mrb[0].mxu0
      %v1597 = vpop.f32.mrb[0].mxu0
      %v1598 = vpop.f32.mrb[0].mxu0
      %1599 = vdwg.mxu0
      %vm1600 = vcmask 9216
      %v1601 = vsel %vm1600, %v665, -inf
      %1602 = vmax.xlane.f32.xlu0 %v1601
      %v1603 = vpop.xlane.xlu0 %1602
      %v1604 = vsel %vm1600, %v727, -inf
      %1605 = vmax.xlane.f32.xlu0 %v1604
      %v1606 = vpop.xlane.xlu0 %1605
      %v1607 = vsel %vm1600, %v789, -inf
      %1608 = vmax.xlane.f32.xlu0 %v1607
      %v1609 = vpop.xlane.xlu0 %1608
      %v1610 = vsel %vm1600, %v851, -inf
      %1611 = vmax.xlane.f32.xlu0 %v1610
      %v1612 = vpop.xlane.xlu0 %1611
      %v1613 = vsel %vm1600, %v913, -inf
      %1614 = vmax.xlane.f32.xlu0 %v1613
      %v1615 = vpop.xlane.xlu0 %1614
      %v1616 = vsel %vm1600, %v975, -inf
      %1617 = vmax.xlane.f32.xlu0 %v1616
      %v1618 = vpop.xlane.xlu0 %1617
      %v1619 = vsel %vm1600, %v1037, -inf
      %1620 = vmax.xlane.f32.xlu0 %v1619
      %v1621 = vpop.xlane.xlu0 %1620
      %v1622 = vsel %vm1600, %v1099, -inf
      %1623 = vmax.xlane.f32.xlu0 %v1622
      %v1624 = vpop.xlane.xlu0 %1623
      %v1625 = vsel %vm1600, %v1161, -inf
      %1626 = vmax.xlane.f32.xlu0 %v1625
      %v1627 = vpop.xlane.xlu0 %1626
      %v1628 = vsel %vm1600, %v1223, -inf
      %1629 = vmax.xlane.f32.xlu0 %v1628
      %v1630 = vpop.xlane.xlu0 %1629
      %v1631 = vsel %vm1600, %v1285, -inf
      %1632 = vmax.xlane.f32.xlu0 %v1631
      %v1633 = vpop.xlane.xlu0 %1632
      %v1634 = vsel %vm1600, %v1347, -inf
      %1635 = vmax.xlane.f32.xlu0 %v1634
      %v1636 = vpop.xlane.xlu0 %1635
      %v1637 = vsel %vm1600, %v1409, -inf
      %1638 = vmax.xlane.f32.xlu0 %v1637
      %v1639 = vpop.xlane.xlu0 %1638
      %v1640 = vsel %vm1600, %v1471, -inf
      %1641 = vmax.xlane.f32.xlu0 %v1640
      %v1642 = vpop.xlane.xlu0 %1641
      %v1643 = vsel %vm1600, %v1533, -inf
      %1644 = vmax.xlane.f32.xlu0 %v1643
      %v1645 = vpop.xlane.xlu0 %1644
      %v1646 = vsel %vm1600, %v1595, -inf
      %1647 = vmax.xlane.f32.xlu0 %v1646
      %v1648 = vpop.xlane.xlu0 %1647
      %v1649 = vsub.f32 %v665, %v1603
      %v1650 = vsub.f32 %v727, %v1606
      %v1651 = vsub.f32 %v789, %v1609
      %v1652 = vsub.f32 %v851, %v1612
      %v1653 = vsub.f32 %v913, %v1615
      %v1654 = vsub.f32 %v975, %v1618
      %v1655 = vsub.f32 %v1037, %v1621
      %v1656 = vsub.f32 %v1099, %v1624
      %v1657 = vsub.f32 %v1161, %v1627
      %v1658 = vsub.f32 %v1223, %v1630
      %v1659 = vsub.f32 %v1285, %v1633
      %v1660 = vsub.f32 %v1347, %v1636
      %v1661 = vsub.f32 %v1409, %v1639
      %v1662 = vsub.f32 %v1471, %v1642
      %v1663 = vsub.f32 %v1533, %v1645
      %v1664 = vsub.f32 %v1595, %v1648
      %v1665 = vmul.f32 %v1649, 1.442695
      %v1666 = vpow.pop %v1665
      %v1667 = vmul.f32 %v1650, 1.442695
      %v1668 = vpow.pop %v1667
      %v1669 = vmul.f32 %v1651, 1.442695
      %v1670 = vpow.pop %v1669
      %v1671 = vmul.f32 %v1652, 1.442695
      %v1672 = vpow.pop %v1671
      %v1673 = vmul.f32 %v1653, 1.442695
      %v1674 = vpow.pop %v1673
      %v1675 = vmul.f32 %v1654, 1.442695
      %v1676 = vpow.pop %v1675
      %v1677 = vmul.f32 %v1655, 1.442695
      %v1678 = vpow.pop %v1677
      %v1679 = vmul.f32 %v1656, 1.442695
      %v1680 = vpow.pop %v1679
      %v1681 = vmul.f32 %v1657, 1.442695
      %v1682 = vpow.pop %v1681
      %v1683 = vmul.f32 %v1658, 1.442695
      %v1684 = vpow.pop %v1683
      %v1685 = vmul.f32 %v1659, 1.442695
      %v1686 = vpow.pop %v1685
      %v1687 = vmul.f32 %v1660, 1.442695
      %v1688 = vpow.pop %v1687
      %v1689 = vmul.f32 %v1661, 1.442695
      %v1690 = vpow.pop %v1689
      %v1691 = vmul.f32 %v1662, 1.442695
      %v1692 = vpow.pop %v1691
      %v1693 = vmul.f32 %v1663, 1.442695
      %v1694 = vpow.pop %v1693
      %v1695 = vmul.f32 %v1664, 1.442695
      %v1696 = vpow.pop %v1695
      %v1697 = vsel %vm1600, %v1666, 0.0
      %1698 = vadd.xlane.f32.xlu0 %v1697
      %v1699 = vpop.xlane.xlu0 %1698
      %v1700 = vsel %vm1600, %v1668, 0.0
      %1701 = vadd.xlane.f32.xlu0 %v1700
      %v1702 = vpop.xlane.xlu0 %1701
      %v1703 = vsel %vm1600, %v1670, 0.0
      %1704 = vadd.xlane.f32.xlu0 %v1703
      %v1705 = vpop.xlane.xlu0 %1704
      %v1706 = vsel %vm1600, %v1672, 0.0
      %1707 = vadd.xlane.f32.xlu0 %v1706
      %v1708 = vpop.xlane.xlu0 %1707
      %v1709 = vsel %vm1600, %v1674, 0.0
      %1710 = vadd.xlane.f32.xlu0 %v1709
      %v1711 = vpop.xlane.xlu0 %1710
      %v1712 = vsel %vm1600, %v1676, 0.0
      %1713 = vadd.xlane.f32.xlu0 %v1712
      %v1714 = vpop.xlane.xlu0 %1713
      %v1715 = vsel %vm1600, %v1678, 0.0
      %1716 = vadd.xlane.f32.xlu0 %v1715
      %v1717 = vpop.xlane.xlu0 %1716
      %v1718 = vsel %vm1600, %v1680, 0.0
      %1719 = vadd.xlane.f32.xlu0 %v1718
      %v1720 = vpop.xlane.xlu0 %1719
      %v1721 = vsel %vm1600, %v1682, 0.0
      %1722 = vadd.xlane.f32.xlu0 %v1721
      %v1723 = vpop.xlane.xlu0 %1722
      %v1724 = vsel %vm1600, %v1684, 0.0
      %1725 = vadd.xlane.f32.xlu0 %v1724
      %v1726 = vpop.xlane.xlu0 %1725
      %v1727 = vsel %vm1600, %v1686, 0.0
      %1728 = vadd.xlane.f32.xlu0 %v1727
      %v1729 = vpop.xlane.xlu0 %1728
      %v1730 = vsel %vm1600, %v1688, 0.0
      %1731 = vadd.xlane.f32.xlu0 %v1730
      %v1732 = vpop.xlane.xlu0 %1731
      %v1733 = vsel %vm1600, %v1690, 0.0
      %1734 = vadd.xlane.f32.xlu0 %v1733
      %v1735 = vpop.xlane.xlu0 %1734
      %v1736 = vsel %vm1600, %v1692, 0.0
      %1737 = vadd.xlane.f32.xlu0 %v1736
      %v1738 = vpop.xlane.xlu0 %1737
      %v1739 = vsel %vm1600, %v1694, 0.0
      %1740 = vadd.xlane.f32.xlu0 %v1739
      %v1741 = vpop.xlane.xlu0 %1740
      %v1742 = vsel %vm1600, %v1696, 0.0
      %1743 = vadd.xlane.f32.xlu0 %v1742
      %v1744 = vpop.xlane.xlu0 %1743
      %v1745 = vrcp.pop %v1699
      %v1746 = vrcp.pop %v1702
      %v1747 = vrcp.pop %v1705
      %v1748 = vrcp.pop %v1708
      %v1749 = vrcp.pop %v1711
      %v1750 = vrcp.pop %v1714
      %v1751 = vrcp.pop %v1717
      %v1752 = vrcp.pop %v1720
      %v1753 = vrcp.pop %v1723
      %v1754 = vrcp.pop %v1726
      %v1755 = vrcp.pop %v1729
      %v1756 = vrcp.pop %v1732
      %v1757 = vrcp.pop %v1735
      %v1758 = vrcp.pop %v1738
      %v1759 = vrcp.pop %v1741
      %v1760 = vrcp.pop %v1744
      %v1761 = vmul.f32 %v1666, %v1745
      %v1762 = vmul.f32 %v1668, %v1746
      %v1763 = vmul.f32 %v1670, %v1747
      %v1764 = vmul.f32 %v1672, %v1748
      %v1765 = vmul.f32 %v1674, %v1749
      %v1766 = vmul.f32 %v1676, %v1750
      %v1767 = vmul.f32 %v1678, %v1751
      %v1768 = vmul.f32 %v1680, %v1752
      %v1769 = vmul.f32 %v1682, %v1753
      %v1770 = vmul.f32 %v1684, %v1754
      %v1771 = vmul.f32 %v1686, %v1755
      %v1772 = vmul.f32 %v1688, %v1756
      %v1773 = vmul.f32 %v1690, %v1757
      %v1774 = vmul.f32 %v1692, %v1758
      %v1775 = vmul.f32 %v1694, %v1759
      %v1776 = vmul.f32 %v1696, %v1760
      %v1777 = vpack.c.bf16 %v1761, %v1761
      %v1778 = vpack.c.bf16 %v1762, %v1762
      %v1779 = vpack.c.bf16 %v1763, %v1763
      %v1780 = vpack.c.bf16 %v1764, %v1764
      %v1781 = vpack.c.bf16 %v1765, %v1765
      %v1782 = vpack.c.bf16 %v1766, %v1766
      %v1783 = vpack.c.bf16 %v1767, %v1767
      %v1784 = vpack.c.bf16 %v1768, %v1768
      %v1785 = vpack.c.bf16 %v1769, %v1769
      %v1786 = vpack.c.bf16 %v1770, %v1770
      %v1787 = vpack.c.bf16 %v1771, %v1771
      %v1788 = vpack.c.bf16 %v1772, %v1772
      %v1789 = vpack.c.bf16 %v1773, %v1773
      %v1790 = vpack.c.bf16 %v1774, %v1774
      %v1791 = vpack.c.bf16 %v1775, %v1775
      %v1792 = vpack.c.bf16 %v1776, %v1776
      %1793 = vrot.lane.b32.xlu0 %v620, 64
      %v1794 = vpop.permute.xlu0 %1793
      %vm1795 = vcmask 15360
      %v1797 = vsel %vm1795, %v1777, 0
      %vm1799 = vcmask 1040384
      %v1801 = vsel %vm1799, %v1794, 0
      %1803 = vmatprep.subr.bf16.mxu0 0
      %1804 = vmatpush1.bf16.msra.mxu0 %v1801
      %1805 = vmatprep.subr.bf16.mxu0 0
      %1806 = vmatpush1.bf16.msra.mxu0 0
      %1807 = vmatprep.subr.bf16.mxu0 0
      %1808 = vmatpush1.bf16.msra.mxu0 0
      %1809 = vmatprep.subr.bf16.mxu0 0
      %1810 = vmatpush1.bf16.msra.mxu0 0
      %1811 = vmatprep.subr.bf16.mxu0 0
      %1812 = vmatpush1.bf16.msra.mxu0 0
      %1813 = vmatprep.subr.bf16.mxu0 0
      %1814 = vmatpush1.bf16.msra.mxu0 0
      %1815 = vmatprep.subr.bf16.mxu0 0
      %1816 = vmatpush1.bf16.msra.mxu0 0
      %1817 = vmatprep.subr.bf16.mxu0 0
      %1818 = vmatpush1.bf16.msra.mxu0 0
      %1819 = vmatprep.subr.bf16.mxu0 0
      %1820 = vmatpush1.bf16.msra.mxu0 0
      %1821 = vmatprep.subr.bf16.mxu0 0
      %1822 = vmatpush1.bf16.msra.mxu0 0
      %1823 = vmatprep.subr.bf16.mxu0 0
      %1824 = vmatpush1.bf16.msra.mxu0 0
      %1825 = vmatprep.subr.bf16.mxu0 0
      %1826 = vmatpush1.bf16.msra.mxu0 0
      %1827 = vmatprep.subr.bf16.mxu0 0
      %1828 = vmatpush1.bf16.msra.mxu0 0
      %1829 = vmatprep.subr.bf16.mxu0 0
      %1830 = vmatpush1.bf16.msra.mxu0 0
      %1831 = vmatprep.subr.bf16.mxu0 0
      %1832 = vmatpush1.bf16.msra.mxu0 0
      %1833 = vmatprep.subr.bf16.mxu0 0
      %1834 = vmatpush1.bf16.msra.mxu0 0
      %1835 = vmatprep.mubr.bf16.mxu0 0
      %1836 = vmatmul.mubr.bf16.gmra.mrb[0].mxu0 %v1797
      %v1837 = vpop.f32.mrb[0].mxu0
      %v1838 = vadd.f32 0.0, %v1837
      %v1839 = vpop.f32.mrb[0].mxu0
      %v1840 = vpop.f32.mrb[0].mxu0
      %v1841 = vpop.f32.mrb[0].mxu0
      %1842 = vdwg.mxu0
      %1843 = vrot.lane.b32.xlu0 %v683, 64
      %v1844 = vpop.permute.xlu0 %1843
      %v1846 = vsel %vm1795, %v1778, 0
      %v1849 = vsel %vm1799, %v1844, 0
      %1851 = vmatprep.subr.bf16.mxu0 0
      %1852 = vmatpush1.bf16.msra.mxu0 %v1849
      %1853 = vmatprep.subr.bf16.mxu0 0
      %1854 = vmatpush1.bf16.msra.mxu0 0
      %1855 = vmatprep.subr.bf16.mxu0 0
      %1856 = vmatpush1.bf16.msra.mxu0 0
      %1857 = vmatprep.subr.bf16.mxu0 0
      %1858 = vmatpush1.bf16.msra.mxu0 0
      %1859 = vmatprep.subr.bf16.mxu0 0
      %1860 = vmatpush1.bf16.msra.mxu0 0
      %1861 = vmatprep.subr.bf16.mxu0 0
      %1862 = vmatpush1.bf16.msra.mxu0 0
      %1863 = vmatprep.subr.bf16.mxu0 0
      %1864 = vmatpush1.bf16.msra.mxu0 0
      %1865 = vmatprep.subr.bf16.mxu0 0
      %1866 = vmatpush1.bf16.msra.mxu0 0
      %1867 = vmatprep.subr.bf16.mxu0 0
      %1868 = vmatpush1.bf16.msra.mxu0 0
      %1869 = vmatprep.subr.bf16.mxu0 0
      %1870 = vmatpush1.bf16.msra.mxu0 0
      %1871 = vmatprep.subr.bf16.mxu0 0
      %1872 = vmatpush1.bf16.msra.mxu0 0
      %1873 = vmatprep.subr.bf16.mxu0 0
      %1874 = vmatpush1.bf16.msra.mxu0 0
      %1875 = vmatprep.subr.bf16.mxu0 0
      %1876 = vmatpush1.bf16.msra.mxu0 0
      %1877 = vmatprep.subr.bf16.mxu0 0
      %1878 = vmatpush1.bf16.msra.mxu0 0
      %1879 = vmatprep.subr.bf16.mxu0 0
      %1880 = vmatpush1.bf16.msra.mxu0 0
      %1881 = vmatprep.subr.bf16.mxu0 0
      %1882 = vmatpush1.bf16.msra.mxu0 0
      %1883 = vmatprep.mubr.bf16.mxu0 0
      %1884 = vmatmul.mubr.bf16.gmra.mrb[0].mxu0 %v1846
      %v1885 = vpop.f32.mrb[0].mxu0
      %v1886 = vadd.f32 0.0, %v1885
      %v1887 = vpop.f32.mrb[0].mxu0
      %v1888 = vpop.f32.mrb[0].mxu0
      %v1889 = vpop.f32.mrb[0].mxu0
      %1890 = vdwg.mxu0
      %1891 = vrot.lane.b32.xlu0 %v745, 64
      %v1892 = vpop.permute.xlu0 %1891
      %v1894 = vsel %vm1795, %v1779, 0
      %v1897 = vsel %vm1799, %v1892, 0
      %1899 = vmatprep.subr.bf16.mxu0 0
      %1900 = vmatpush1.bf16.msra.mxu0 %v1897
      %1901 = vmatprep.subr.bf16.mxu0 0
      %1902 = vmatpush1.bf16.msra.mxu0 0
      %1903 = vmatprep.subr.bf16.mxu0 0
      %1904 = vmatpush1.bf16.msra.mxu0 0
      %1905 = vmatprep.subr.bf16.mxu0 0
      %1906 = vmatpush1.bf16.msra.mxu0 0
      %1907 = vmatprep.subr.bf16.mxu0 0
      %1908 = vmatpush1.bf16.msra.mxu0 0
      %1909 = vmatprep.subr.bf16.mxu0 0
      %1910 = vmatpush1.bf16.msra.mxu0 0
      %1911 = vmatprep.subr.bf16.mxu0 0
      %1912 = vmatpush1.bf16.msra.mxu0 0
      %1913 = vmatprep.subr.bf16.mxu0 0
      %1914 = vmatpush1.bf16.msra.mxu0 0
      %1915 = vmatprep.subr.bf16.mxu0 0
      %1916 = vmatpush1.bf16.msra.mxu0 0
      %1917 = vmatprep.subr.bf16.mxu0 0
      %1918 = vmatpush1.bf16.msra.mxu0 0
      %1919 = vmatprep.subr.bf16.mxu0 0
      %1920 = vmatpush1.bf16.msra.mxu0 0
      %1921 = vmatprep.subr.bf16.mxu0 0
      %1922 = vmatpush1.bf16.msra.mxu0 0
      %1923 = vmatprep.subr.bf16.mxu0 0
      %1924 = vmatpush1.bf16.msra.mxu0 0
      %1925 = vmatprep.subr.bf16.mxu0 0
      %1926 = vmatpush1.bf16.msra.mxu0 0
      %1927 = vmatprep.subr.bf16.mxu0 0
      %1928 = vmatpush1.bf16.msra.mxu0 0
      %1929 = vmatprep.subr.bf16.mxu0 0
      %1930 = vmatpush1.bf16.msra.mxu0 0
      %1931 = vmatprep.mubr.bf16.mxu0 0
      %1932 = vmatmul.mubr.bf16.gmra.mrb[0].mxu0 %v1894
      %v1933 = vpop.f32.mrb[0].mxu0
      %v1934 = vadd.f32 0.0, %v1933
      %v1935 = vpop.f32.mrb[0].mxu0
      %v1936 = vpop.f32.mrb[0].mxu0
      %v1937 = vpop.f32.mrb[0].mxu0
      %1938 = vdwg.mxu0
      %1939 = vrot.lane.b32.xlu0 %v807, 64
      %v1940 = vpop.permute.xlu0 %1939
      %v1942 = vsel %vm1795, %v1780, 0
      %v1945 = vsel %vm1799, %v1940, 0
      %1947 = vmatprep.subr.bf16.mxu0 0
      %1948 = vmatpush1.bf16.msra.mxu0 %v1945
      %1949 = vmatprep.subr.bf16.mxu0 0
      %1950 = vmatpush1.bf16.msra.mxu0 0
      %1951 = vmatprep.subr.bf16.mxu0 0
      %1952 = vmatpush1.bf16.msra.mxu0 0
      %1953 = vmatprep.subr.bf16.mxu0 0
      %1954 = vmatpush1.bf16.msra.mxu0 0
      %1955 = vmatprep.subr.bf16.mxu0 0
      %1956 = vmatpush1.bf16.msra.mxu0 0
      %1957 = vmatprep.subr.bf16.mxu0 0
      %1958 = vmatpush1.bf16.msra.mxu0 0
      %1959 = vmatprep.subr.bf16.mxu0 0
      %1960 = vmatpush1.bf16.msra.mxu0 0
      %1961 = vmatprep.subr.bf16.mxu0 0
      %1962 = vmatpush1.bf16.msra.mxu0 0
      %1963 = vmatprep.subr.bf16.mxu0 0
      %1964 = vmatpush1.bf16.msra.mxu0 0
      %1965 = vmatprep.subr.bf16.mxu0 0
      %1966 = vmatpush1.bf16.msra.mxu0 0
      %1967 = vmatprep.subr.bf16.mxu0 0
      %1968 = vmatpush1.bf16.msra.mxu0 0
      %1969 = vmatprep.subr.bf16.mxu0 0
      %1970 = vmatpush1.bf16.msra.mxu0 0
      %1971 = vmatprep.subr.bf16.mxu0 0
      %1972 = vmatpush1.bf16.msra.mxu0 0
      %1973 = vmatprep.subr.bf16.mxu0 0
      %1974 = vmatpush1.bf16.msra.mxu0 0
      %1975 = vmatprep.subr.bf16.mxu0 0
      %1976 = vmatpush1.bf16.msra.mxu0 0
      %1977 = vmatprep.subr.bf16.mxu0 0
      %1978 = vmatpush1.bf16.msra.mxu0 0
      %1979 = vmatprep.mubr.bf16.mxu0 0
      %1980 = vmatmul.mubr.bf16.gmra.mrb[0].mxu0 %v1942
      %v1981 = vpop.f32.mrb[0].mxu0
      %v1982 = vadd.f32 0.0, %v1981
      %v1983 = vpop.f32.mrb[0].mxu0
      %v1984 = vpop.f32.mrb[0].mxu0
      %v1985 = vpop.f32.mrb[0].mxu0
      %1986 = vdwg.mxu0
      %1987 = vrot.lane.b32.xlu0 %v869, 64
      %v1988 = vpop.permute.xlu0 %1987
      %v1990 = vsel %vm1795, %v1781, 0
      %v1993 = vsel %vm1799, %v1988, 0
      %1995 = vmatprep.subr.bf16.mxu0 0
      %1996 = vmatpush1.bf16.msra.mxu0 %v1993
      %1997 = vmatprep.subr.bf16.mxu0 0
      %1998 = vmatpush1.bf16.msra.mxu0 0
      %1999 = vmatprep.subr.bf16.mxu0 0
      %2000 = vmatpush1.bf16.msra.mxu0 0
      %2001 = vmatprep.subr.bf16.mxu0 0
      %2002 = vmatpush1.bf16.msra.mxu0 0
      %2003 = vmatprep.subr.bf16.mxu0 0
      %2004 = vmatpush1.bf16.msra.mxu0 0
      %2005 = vmatprep.subr.bf16.mxu0 0
      %2006 = vmatpush1.bf16.msra.mxu0 0
      %2007 = vmatprep.subr.bf16.mxu0 0
      %2008 = vmatpush1.bf16.msra.mxu0 0
      %2009 = vmatprep.subr.bf16.mxu0 0
      %2010 = vmatpush1.bf16.msra.mxu0 0
      %2011 = vmatprep.subr.bf16.mxu0 0
      %2012 = vmatpush1.bf16.msra.mxu0 0
      %2013 = vmatprep.subr.bf16.mxu0 0
      %2014 = vmatpush1.bf16.msra.mxu0 0
      %2015 = vmatprep.subr.bf16.mxu0 0
      %2016 = vmatpush1.bf16.msra.mxu0 0
      %2017 = vmatprep.subr.bf16.mxu0 0
      %2018 = vmatpush1.bf16.msra.mxu0 0
      %2019 = vmatprep.subr.bf16.mxu0 0
      %2020 = vmatpush1.bf16.msra.mxu0 0
      %2021 = vmatprep.subr.bf16.mxu0 0
      %2022 = vmatpush1.bf16.msra.mxu0 0
      %2023 = vmatprep.subr.bf16.mxu0 0
      %2024 = vmatpush1.bf16.msra.mxu0 0
      %2025 = vmatprep.subr.bf16.mxu0 0
      %2026 = vmatpush1.bf16.msra.mxu0 0
      %2027 = vmatprep.mubr.bf16.mxu0 0
      %2028 = vmatmul.mubr.bf16.gmra.mrb[0].mxu0 %v1990
      %v2029 = vpop.f32.mrb[0].mxu0
      %v2030 = vadd.f32 0.0, %v2029
      %v2031 = vpop.f32.mrb[0].mxu0
      %v2032 = vpop.f32.mrb[0].mxu0
      %v2033 = vpop.f32.mrb[0].mxu0
      %2034 = vdwg.mxu0
      %2035 = vrot.lane.b32.xlu0 %v931, 64
      %v2036 = vpop.permute.xlu0 %2035
      %v2038 = vsel %vm1795, %v1782, 0
      %v2041 = vsel %vm1799, %v2036, 0
      %2043 = vmatprep.subr.bf16.mxu0 0
      %2044 = vmatpush1.bf16.msra.mxu0 %v2041
      %2045 = vmatprep.subr.bf16.mxu0 0
      %2046 = vmatpush1.bf16.msra.mxu0 0
      %2047 = vmatprep.subr.bf16.mxu0 0
      %2048 = vmatpush1.bf16.msra.mxu0 0
      %2049 = vmatprep.subr.bf16.mxu0 0
      %2050 = vmatpush1.bf16.msra.mxu0 0
      %2051 = vmatprep.subr.bf16.mxu0 0
      %2052 = vmatpush1.bf16.msra.mxu0 0
      %2053 = vmatprep.subr.bf16.mxu0 0
      %2054 = vmatpush1.bf16.msra.mxu0 0
      %2055 = vmatprep.subr.bf16.mxu0 0
      %2056 = vmatpush1.bf16.msra.mxu0 0
      %2057 = vmatprep.subr.bf16.mxu0 0
      %2058 = vmatpush1.bf16.msra.mxu0 0
      %2059 = vmatprep.subr.bf16.mxu0 0
      %2060 = vmatpush1.bf16.msra.mxu0 0
      %2061 = vmatprep.subr.bf16.mxu0 0
      %2062 = vmatpush1.bf16.msra.mxu0 0
      %2063 = vmatprep.subr.bf16.mxu0 0
      %2064 = vmatpush1.bf16.msra.mxu0 0
      %2065 = vmatprep.subr.bf16.mxu0 0
      %2066 = vmatpush1.bf16.msra.mxu0 0
      %2067 = vmatprep.subr.bf16.mxu0 0
      %2068 = vmatpush1.bf16.msra.mxu0 0
      %2069 = vmatprep.subr.bf16.mxu0 0
      %2070 = vmatpush1.bf16.msra.mxu0 0
      %2071 = vmatprep.subr.bf16.mxu0 0
      %2072 = vmatpush1.bf16.msra.mxu0 0
      %2073 = vmatprep.subr.bf16.mxu0 0
      %2074 = vmatpush1.bf16.msra.mxu0 0
      %2075 = vmatprep.mubr.bf16.mxu0 0
      %2076 = vmatmul.mubr.bf16.gmra.mrb[0].mxu0 %v2038
      %v2077 = vpop.f32.mrb[0].mxu0
      %v2078 = vadd.f32 0.0, %v2077
      %v2079 = vpop.f32.mrb[0].mxu0
      %v2080 = vpop.f32.mrb[0].mxu0
      %v2081 = vpop.f32.mrb[0].mxu0
      %2082 = vdwg.mxu0
      %2083 = vrot.lane.b32.xlu0 %v993, 64
      %v2084 = vpop.permute.xlu0 %2083
      %v2086 = vsel %vm1795, %v1783, 0
      %v2089 = vsel %vm1799, %v2084, 0
      %2091 = vmatprep.subr.bf16.mxu0 0
      %2092 = vmatpush1.bf16.msra.mxu0 %v2089
      %2093 = vmatprep.subr.bf16.mxu0 0
      %2094 = vmatpush1.bf16.msra.mxu0 0
      %2095 = vmatprep.subr.bf16.mxu0 0
      %2096 = vmatpush1.bf16.msra.mxu0 0
      %2097 = vmatprep.subr.bf16.mxu0 0
      %2098 = vmatpush1.bf16.msra.mxu0 0
      %2099 = vmatprep.subr.bf16.mxu0 0
      %2100 = vmatpush1.bf16.msra.mxu0 0
      %2101 = vmatprep.subr.bf16.mxu0 0
      %2102 = vmatpush1.bf16.msra.mxu0 0
      %2103 = vmatprep.subr.bf16.mxu0 0
      %2104 = vmatpush1.bf16.msra.mxu0 0
      %2105 = vmatprep.subr.bf16.mxu0 0
      %2106 = vmatpush1.bf16.msra.mxu0 0
      %2107 = vmatprep.subr.bf16.mxu0 0
      %2108 = vmatpush1.bf16.msra.mxu0 0
      %2109 = vmatprep.subr.bf16.mxu0 0
      %2110 = vmatpush1.bf16.msra.mxu0 0
      %2111 = vmatprep.subr.bf16.mxu0 0
      %2112 = vmatpush1.bf16.msra.mxu0 0
      %2113 = vmatprep.subr.bf16.mxu0 0
      %2114 = vmatpush1.bf16.msra.mxu0 0
      %2115 = vmatprep.subr.bf16.mxu0 0
      %2116 = vmatpush1.bf16.msra.mxu0 0
      %2117 = vmatprep.subr.bf16.mxu0 0
      %2118 = vmatpush1.bf16.msra.mxu0 0
      %2119 = vmatprep.subr.bf16.mxu0 0
      %2120 = vmatpush1.bf16.msra.mxu0 0
      %2121 = vmatprep.subr.bf16.mxu0 0
      %2122 = vmatpush1.bf16.msra.mxu0 0
      %2123 = vmatprep.mubr.bf16.mxu0 0
      %2124 = vmatmul.mubr.bf16.gmra.mrb[0].mxu0 %v2086
      %v2125 = vpop.f32.mrb[0].mxu0
      %v2126 = vadd.f32 0.0, %v2125
      %v2127 = vpop.f32.mrb[0].mxu0
      %v2128 = vpop.f32.mrb[0].mxu0
      %v2129 = vpop.f32.mrb[0].mxu0
      %2130 = vdwg.mxu0
      %2131 = vrot.lane.b32.xlu0 %v1055, 64
      %v2132 = vpop.permute.xlu0 %2131
      %v2134 = vsel %vm1795, %v1784, 0
      %v2137 = vsel %vm1799, %v2132, 0
      %2139 = vmatprep.subr.bf16.mxu0 0
      %2140 = vmatpush1.bf16.msra.mxu0 %v2137
      %2141 = vmatprep.subr.bf16.mxu0 0
      %2142 = vmatpush1.bf16.msra.mxu0 0
      %2143 = vmatprep.subr.bf16.mxu0 0
      %2144 = vmatpush1.bf16.msra.mxu0 0
      %2145 = vmatprep.subr.bf16.mxu0 0
      %2146 = vmatpush1.bf16.msra.mxu0 0
      %2147 = vmatprep.subr.bf16.mxu0 0
      %2148 = vmatpush1.bf16.msra.mxu0 0
      %2149 = vmatprep.subr.bf16.mxu0 0
      %2150 = vmatpush1.bf16.msra.mxu0 0
      %2151 = vmatprep.subr.bf16.mxu0 0
      %2152 = vmatpush1.bf16.msra.mxu0 0
      %2153 = vmatprep.subr.bf16.mxu0 0
      %2154 = vmatpush1.bf16.msra.mxu0 0
      %2155 = vmatprep.subr.bf16.mxu0 0
      %2156 = vmatpush1.bf16.msra.mxu0 0
      %2157 = vmatprep.subr.bf16.mxu0 0
      %2158 = vmatpush1.bf16.msra.mxu0 0
      %2159 = vmatprep.subr.bf16.mxu0 0
      %2160 = vmatpush1.bf16.msra.mxu0 0
      %2161 = vmatprep.subr.bf16.mxu0 0
      %2162 = vmatpush1.bf16.msra.mxu0 0
      %2163 = vmatprep.subr.bf16.mxu0 0
      %2164 = vmatpush1.bf16.msra.mxu0 0
      %2165 = vmatprep.subr.bf16.mxu0 0
      %2166 = vmatpush1.bf16.msra.mxu0 0
      %2167 = vmatprep.subr.bf16.mxu0 0
      %2168 = vmatpush1.bf16.msra.mxu0 0
      %2169 = vmatprep.subr.bf16.mxu0 0
      %2170 = vmatpush1.bf16.msra.mxu0 0
      %2171 = vmatprep.mubr.bf16.mxu0 0
      %2172 = vmatmul.mubr.bf16.gmra.mrb[0].mxu0 %v2134
      %v2173 = vpop.f32.mrb[0].mxu0
      %v2174 = vadd.f32 0.0, %v2173
      %v2175 = vpop.f32.mrb[0].mxu0
      %v2176 = vpop.f32.mrb[0].mxu0
      %v2177 = vpop.f32.mrb[0].mxu0
      %2178 = vdwg.mxu0
      %2179 = vrot.lane.b32.xlu0 %v1117, 64
      %v2180 = vpop.permute.xlu0 %2179
      %v2182 = vsel %vm1795, %v1785, 0
      %v2185 = vsel %vm1799, %v2180, 0
      %2187 = vmatprep.subr.bf16.mxu0 0
      %2188 = vmatpush1.bf16.msra.mxu0 %v2185
      %2189 = vmatprep.subr.bf16.mxu0 0
      %2190 = vmatpush1.bf16.msra.mxu0 0
      %2191 = vmatprep.subr.bf16.mxu0 0
      %2192 = vmatpush1.bf16.msra.mxu0 0
      %2193 = vmatprep.subr.bf16.mxu0 0
      %2194 = vmatpush1.bf16.msra.mxu0 0
      %2195 = vmatprep.subr.bf16.mxu0 0
      %2196 = vmatpush1.bf16.msra.mxu0 0
      %2197 = vmatprep.subr.bf16.mxu0 0
      %2198 = vmatpush1.bf16.msra.mxu0 0
      %2199 = vmatprep.subr.bf16.mxu0 0
      %2200 = vmatpush1.bf16.msra.mxu0 0
      %2201 = vmatprep.subr.bf16.mxu0 0
      %2202 = vmatpush1.bf16.msra.mxu0 0
      %2203 = vmatprep.subr.bf16.mxu0 0
      %2204 = vmatpush1.bf16.msra.mxu0 0
      %2205 = vmatprep.subr.bf16.mxu0 0
      %2206 = vmatpush1.bf16.msra.mxu0 0
      %2207 = vmatprep.subr.bf16.mxu0 0
      %2208 = vmatpush1.bf16.msra.mxu0 0
      %2209 = vmatprep.subr.bf16.mxu0 0
      %2210 = vmatpush1.bf16.msra.mxu0 0
      %2211 = vmatprep.subr.bf16.mxu0 0
      %2212 = vmatpush1.bf16.msra.mxu0 0
      %2213 = vmatprep.subr.bf16.mxu0 0
      %2214 = vmatpush1.bf16.msra.mxu0 0
      %2215 = vmatprep.subr.bf16.mxu0 0
      %2216 = vmatpush1.bf16.msra.mxu0 0
      %2217 = vmatprep.subr.bf16.mxu0 0
      %2218 = vmatpush1.bf16.msra.mxu0 0
      %2219 = vmatprep.mubr.bf16.mxu0 0
      %2220 = vmatmul.mubr.bf16.gmra.mrb[0].mxu0 %v2182
      %v2221 = vpop.f32.mrb[0].mxu0
      %v2222 = vadd.f32 0.0, %v2221
      %v2223 = vpop.f32.mrb[0].mxu0
      %v2224 = vpop.f32.mrb[0].mxu0
      %v2225 = vpop.f32.mrb[0].mxu0
      %2226 = vdwg.mxu0
      %2227 = vrot.lane.b32.xlu0 %v1179, 64
      %v2228 = vpop.permute.xlu0 %2227
      %v2230 = vsel %vm1795, %v1786, 0
      %v2233 = vsel %vm1799, %v2228, 0
      %2235 = vmatprep.subr.bf16.mxu0 0
      %2236 = vmatpush1.bf16.msra.mxu0 %v2233
      %2237 = vmatprep.subr.bf16.mxu0 0
      %2238 = vmatpush1.bf16.msra.mxu0 0
      %2239 = vmatprep.subr.bf16.mxu0 0
      %2240 = vmatpush1.bf16.msra.mxu0 0
      %2241 = vmatprep.subr.bf16.mxu0 0
      %2242 = vmatpush1.bf16.msra.mxu0 0
      %2243 = vmatprep.subr.bf16.mxu0 0
      %2244 = vmatpush1.bf16.msra.mxu0 0
      %2245 = vmatprep.subr.bf16.mxu0 0
      %2246 = vmatpush1.bf16.msra.mxu0 0
      %2247 = vmatprep.subr.bf16.mxu0 0
      %2248 = vmatpush1.bf16.msra.mxu0 0
      %2249 = vmatprep.subr.bf16.mxu0 0
      %2250 = vmatpush1.bf16.msra.mxu0 0
      %2251 = vmatprep.subr.bf16.mxu0 0
      %2252 = vmatpush1.bf16.msra.mxu0 0
      %2253 = vmatprep.subr.bf16.mxu0 0
      %2254 = vmatpush1.bf16.msra.mxu0 0
      %2255 = vmatprep.subr.bf16.mxu0 0
      %2256 = vmatpush1.bf16.msra.mxu0 0
      %2257 = vmatprep.subr.bf16.mxu0 0
      %2258 = vmatpush1.bf16.msra.mxu0 0
      %2259 = vmatprep.subr.bf16.mxu0 0
      %2260 = vmatpush1.bf16.msra.mxu0 0
      %2261 = vmatprep.subr.bf16.mxu0 0
      %2262 = vmatpush1.bf16.msra.mxu0 0
      %2263 = vmatprep.subr.bf16.mxu0 0
      %2264 = vmatpush1.bf16.msra.mxu0 0
      %2265 = vmatprep.subr.bf16.mxu0 0
      %2266 = vmatpush1.bf16.msra.mxu0 0
      %2267 = vmatprep.mubr.bf16.mxu0 0
      %2268 = vmatmul.mubr.bf16.gmra.mrb[0].mxu0 %v2230
      %v2269 = vpop.f32.mrb[0].mxu0
      %v2270 = vadd.f32 0.0, %v2269
      %v2271 = vpop.f32.mrb[0].mxu0
      %v2272 = vpop.f32.mrb[0].mxu0
      %v2273 = vpop.f32.mrb[0].mxu0
      %2274 = vdwg.mxu0
      %2275 = vrot.lane.b32.xlu0 %v1241, 64
      %v2276 = vpop.permute.xlu0 %2275
      %v2278 = vsel %vm1795, %v1787, 0
      %v2281 = vsel %vm1799, %v2276, 0
      %2283 = vmatprep.subr.bf16.mxu0 0
      %2284 = vmatpush1.bf16.msra.mxu0 %v2281
      %2285 = vmatprep.subr.bf16.mxu0 0
      %2286 = vmatpush1.bf16.msra.mxu0 0
      %2287 = vmatprep.subr.bf16.mxu0 0
      %2288 = vmatpush1.bf16.msra.mxu0 0
      %2289 = vmatprep.subr.bf16.mxu0 0
      %2290 = vmatpush1.bf16.msra.mxu0 0
      %2291 = vmatprep.subr.bf16.mxu0 0
      %2292 = vmatpush1.bf16.msra.mxu0 0
      %2293 = vmatprep.subr.bf16.mxu0 0
      %2294 = vmatpush1.bf16.msra.mxu0 0
      %2295 = vmatprep.subr.bf16.mxu0 0
      %2296 = vmatpush1.bf16.msra.mxu0 0
      %2297 = vmatprep.subr.bf16.mxu0 0
      %2298 = vmatpush1.bf16.msra.mxu0 0
      %2299 = vmatprep.subr.bf16.mxu0 0
      %2300 = vmatpush1.bf16.msra.mxu0 0
      %2301 = vmatprep.subr.bf16.mxu0 0
      %2302 = vmatpush1.bf16.msra.mxu0 0
      %2303 = vmatprep.subr.bf16.mxu0 0
      %2304 = vmatpush1.bf16.msra.mxu0 0
      %2305 = vmatprep.subr.bf16.mxu0 0
      %2306 = vmatpush1.bf16.msra.mxu0 0
      %2307 = vmatprep.subr.bf16.mxu0 0
      %2308 = vmatpush1.bf16.msra.mxu0 0
      %2309 = vmatprep.subr.bf16.mxu0 0
      %2310 = vmatpush1.bf16.msra.mxu0 0
      %2311 = vmatprep.subr.bf16.mxu0 0
      %2312 = vmatpush1.bf16.msra.mxu0 0
      %2313 = vmatprep.subr.bf16.mxu0 0
      %2314 = vmatpush1.bf16.msra.mxu0 0
      %2315 = vmatprep.mubr.bf16.mxu0 0
      %2316 = vmatmul.mubr.bf16.gmra.mrb[0].mxu0 %v2278
      %v2317 = vpop.f32.mrb[0].mxu0
      %v2318 = vadd.f32 0.0, %v2317
      %v2319 = vpop.f32.mrb[0].mxu0
      %v2320 = vpop.f32.mrb[0].mxu0
      %v2321 = vpop.f32.mrb[0].mxu0
      %2322 = vdwg.mxu0
      %2323 = vrot.lane.b32.xlu0 %v1303, 64
      %v2324 = vpop.permute.xlu0 %2323
      %v2326 = vsel %vm1795, %v1788, 0
      %v2329 = vsel %vm1799, %v2324, 0
      %2331 = vmatprep.subr.bf16.mxu0 0
      %2332 = vmatpush1.bf16.msra.mxu0 %v2329
      %2333 = vmatprep.subr.bf16.mxu0 0
      %2334 = vmatpush1.bf16.msra.mxu0 0
      %2335 = vmatprep.subr.bf16.mxu0 0
      %2336 = vmatpush1.bf16.msra.mxu0 0
      %2337 = vmatprep.subr.bf16.mxu0 0
      %2338 = vmatpush1.bf16.msra.mxu0 0
      %2339 = vmatprep.subr.bf16.mxu0 0
      %2340 = vmatpush1.bf16.msra.mxu0 0
      %2341 = vmatprep.subr.bf16.mxu0 0
      %2342 = vmatpush1.bf16.msra.mxu0 0
      %2343 = vmatprep.subr.bf16.mxu0 0
      %2344 = vmatpush1.bf16.msra.mxu0 0
      %2345 = vmatprep.subr.bf16.mxu0 0
      %2346 = vmatpush1.bf16.msra.mxu0 0
      %2347 = vmatprep.subr.bf16.mxu0 0
      %2348 = vmatpush1.bf16.msra.mxu0 0
      %2349 = vmatprep.subr.bf16.mxu0 0
      %2350 = vmatpush1.bf16.msra.mxu0 0
      %2351 = vmatprep.subr.bf16.mxu0 0
      %2352 = vmatpush1.bf16.msra.mxu0 0
      %2353 = vmatprep.subr.bf16.mxu0 0
      %2354 = vmatpush1.bf16.msra.mxu0 0
      %2355 = vmatprep.subr.bf16.mxu0 0
      %2356 = vmatpush1.bf16.msra.mxu0 0
      %2357 = vmatprep.subr.bf16.mxu0 0
      %2358 = vmatpush1.bf16.msra.mxu0 0
      %2359 = vmatprep.subr.bf16.mxu0 0
      %2360 = vmatpush1.bf16.msra.mxu0 0
      %2361 = vmatprep.subr.bf16.mxu0 0
      %2362 = vmatpush1.bf16.msra.mxu0 0
      %2363 = vmatprep.mubr.bf16.mxu0 0
      %2364 = vmatmul.mubr.bf16.gmra.mrb[0].mxu0 %v2326
      %v2365 = vpop.f32.mrb[0].mxu0
      %v2366 = vadd.f32 0.0, %v2365
      %v2367 = vpop.f32.mrb[0].mxu0
      %v2368 = vpop.f32.mrb[0].mxu0
      %v2369 = vpop.f32.mrb[0].mxu0
      %2370 = vdwg.mxu0
      %2371 = vrot.lane.b32.xlu0 %v1365, 64
      %v2372 = vpop.permute.xlu0 %2371
      %v2374 = vsel %vm1795, %v1789, 0
      %v2377 = vsel %vm1799, %v2372, 0
      %2379 = vmatprep.subr.bf16.mxu0 0
      %2380 = vmatpush1.bf16.msra.mxu0 %v2377
      %2381 = vmatprep.subr.bf16.mxu0 0
      %2382 = vmatpush1.bf16.msra.mxu0 0
      %2383 = vmatprep.subr.bf16.mxu0 0
      %2384 = vmatpush1.bf16.msra.mxu0 0
      %2385 = vmatprep.subr.bf16.mxu0 0
      %2386 = vmatpush1.bf16.msra.mxu0 0
      %2387 = vmatprep.subr.bf16.mxu0 0
      %2388 = vmatpush1.bf16.msra.mxu0 0
      %2389 = vmatprep.subr.bf16.mxu0 0
      %2390 = vmatpush1.bf16.msra.mxu0 0
      %2391 = vmatprep.subr.bf16.mxu0 0
      %2392 = vmatpush1.bf16.msra.mxu0 0
      %2393 = vmatprep.subr.bf16.mxu0 0
      %2394 = vmatpush1.bf16.msra.mxu0 0
      %2395 = vmatprep.subr.bf16.mxu0 0
      %2396 = vmatpush1.bf16.msra.mxu0 0
      %2397 = vmatprep.subr.bf16.mxu0 0
      %2398 = vmatpush1.bf16.msra.mxu0 0
      %2399 = vmatprep.subr.bf16.mxu0 0
      %2400 = vmatpush1.bf16.msra.mxu0 0
      %2401 = vmatprep.subr.bf16.mxu0 0
      %2402 = vmatpush1.bf16.msra.mxu0 0
      %2403 = vmatprep.subr.bf16.mxu0 0
      %2404 = vmatpush1.bf16.msra.mxu0 0
      %2405 = vmatprep.subr.bf16.mxu0 0
      %2406 = vmatpush1.bf16.msra.mxu0 0
      %2407 = vmatprep.subr.bf16.mxu0 0
      %2408 = vmatpush1.bf16.msra.mxu0 0
      %2409 = vmatprep.subr.bf16.mxu0 0
      %2410 = vmatpush1.bf16.msra.mxu0 0
      %2411 = vmatprep.mubr.bf16.mxu0 0
      %2412 = vmatmul.mubr.bf16.gmra.mrb[0].mxu0 %v2374
      %v2413 = vpop.f32.mrb[0].mxu0
      %v2414 = vadd.f32 0.0, %v2413
      %v2415 = vpop.f32.mrb[0].mxu0
      %v2416 = vpop.f32.mrb[0].mxu0
      %v2417 = vpop.f32.mrb[0].mxu0
      %2418 = vdwg.mxu0
      %2419 = vrot.lane.b32.xlu0 %v1427, 64
      %v2420 = vpop.permute.xlu0 %2419
      %v2422 = vsel %vm1795, %v1790, 0
      %v2425 = vsel %vm1799, %v2420, 0
      %2427 = vmatprep.subr.bf16.mxu0 0
      %2428 = vmatpush1.bf16.msra.mxu0 %v2425
      %2429 = vmatprep.subr.bf16.mxu0 0
      %2430 = vmatpush1.bf16.msra.mxu0 0
      %2431 = vmatprep.subr.bf16.mxu0 0
      %2432 = vmatpush1.bf16.msra.mxu0 0
      %2433 = vmatprep.subr.bf16.mxu0 0
      %2434 = vmatpush1.bf16.msra.mxu0 0
      %2435 = vmatprep.subr.bf16.mxu0 0
      %2436 = vmatpush1.bf16.msra.mxu0 0
      %2437 = vmatprep.subr.bf16.mxu0 0
      %2438 = vmatpush1.bf16.msra.mxu0 0
      %2439 = vmatprep.subr.bf16.mxu0 0
      %2440 = vmatpush1.bf16.msra.mxu0 0
      %2441 = vmatprep.subr.bf16.mxu0 0
      %2442 = vmatpush1.bf16.msra.mxu0 0
      %2443 = vmatprep.subr.bf16.mxu0 0
      %2444 = vmatpush1.bf16.msra.mxu0 0
      %2445 = vmatprep.subr.bf16.mxu0 0
      %2446 = vmatpush1.bf16.msra.mxu0 0
      %2447 = vmatprep.subr.bf16.mxu0 0
      %2448 = vmatpush1.bf16.msra.mxu0 0
      %2449 = vmatprep.subr.bf16.mxu0 0
      %2450 = vmatpush1.bf16.msra.mxu0 0
      %2451 = vmatprep.subr.bf16.mxu0 0
      %2452 = vmatpush1.bf16.msra.mxu0 0
      %2453 = vmatprep.subr.bf16.mxu0 0
      %2454 = vmatpush1.bf16.msra.mxu0 0
      %2455 = vmatprep.subr.bf16.mxu0 0
      %2456 = vmatpush1.bf16.msra.mxu0 0
      %2457 = vmatprep.subr.bf16.mxu0 0
      %2458 = vmatpush1.bf16.msra.mxu0 0
      %2459 = vmatprep.mubr.bf16.mxu0 0
      %2460 = vmatmul.mubr.bf16.gmra.mrb[0].mxu0 %v2422
      %v2461 = vpop.f32.mrb[0].mxu0
      %v2462 = vadd.f32 0.0, %v2461
      %v2463 = vpop.f32.mrb[0].mxu0
      %v2464 = vpop.f32.mrb[0].mxu0
      %v2465 = vpop.f32.mrb[0].mxu0
      %2466 = vdwg.mxu0
      %2467 = vrot.lane.b32.xlu0 %v1489, 64
      %v2468 = vpop.permute.xlu0 %2467
      %v2470 = vsel %vm1795, %v1791, 0
      %v2473 = vsel %vm1799, %v2468, 0
      %2475 = vmatprep.subr.bf16.mxu0 0
      %2476 = vmatpush1.bf16.msra.mxu0 %v2473
      %2477 = vmatprep.subr.bf16.mxu0 0
      %2478 = vmatpush1.bf16.msra.mxu0 0
      %2479 = vmatprep.subr.bf16.mxu0 0
      %2480 = vmatpush1.bf16.msra.mxu0 0
      %2481 = vmatprep.subr.bf16.mxu0 0
      %2482 = vmatpush1.bf16.msra.mxu0 0
      %2483 = vmatprep.subr.bf16.mxu0 0
      %2484 = vmatpush1.bf16.msra.mxu0 0
      %2485 = vmatprep.subr.bf16.mxu0 0
      %2486 = vmatpush1.bf16.msra.mxu0 0
      %2487 = vmatprep.subr.bf16.mxu0 0
      %2488 = vmatpush1.bf16.msra.mxu0 0
      %2489 = vmatprep.subr.bf16.mxu0 0
      %2490 = vmatpush1.bf16.msra.mxu0 0
      %2491 = vmatprep.subr.bf16.mxu0 0
      %2492 = vmatpush1.bf16.msra.mxu0 0
      %2493 = vmatprep.subr.bf16.mxu0 0
      %2494 = vmatpush1.bf16.msra.mxu0 0
      %2495 = vmatprep.subr.bf16.mxu0 0
      %2496 = vmatpush1.bf16.msra.mxu0 0
      %2497 = vmatprep.subr.bf16.mxu0 0
      %2498 = vmatpush1.bf16.msra.mxu0 0
      %2499 = vmatprep.subr.bf16.mxu0 0
      %2500 = vmatpush1.bf16.msra.mxu0 0
      %2501 = vmatprep.subr.bf16.mxu0 0
      %2502 = vmatpush1.bf16.msra.mxu0 0
      %2503 = vmatprep.subr.bf16.mxu0 0
      %2504 = vmatpush1.bf16.msra.mxu0 0
      %2505 = vmatprep.subr.bf16.mxu0 0
      %2506 = vmatpush1.bf16.msra.mxu0 0
      %2507 = vmatprep.mubr.bf16.mxu0 0
      %2508 = vmatmul.mubr.bf16.gmra.mrb[0].mxu0 %v2470
      %v2509 = vpop.f32.mrb[0].mxu0
      %v2510 = vadd.f32 0.0, %v2509
      %v2511 = vpop.f32.mrb[0].mxu0
      %v2512 = vpop.f32.mrb[0].mxu0
      %v2513 = vpop.f32.mrb[0].mxu0
      %2514 = vdwg.mxu0
      %2515 = vrot.lane.b32.xlu0 %v1551, 64
      %v2516 = vpop.permute.xlu0 %2515
      %v2518 = vsel %vm1795, %v1792, 0
      %v2521 = vsel %vm1799, %v2516, 0
      %2523 = vmatprep.subr.bf16.mxu0 0
      %2524 = vmatpush1.bf16.msra.mxu0 %v2521
      %2525 = vmatprep.subr.bf16.mxu0 0
      %2526 = vmatpush1.bf16.msra.mxu0 0
      %2527 = vmatprep.subr.bf16.mxu0 0
      %2528 = vmatpush1.bf16.msra.mxu0 0
      %2529 = vmatprep.subr.bf16.mxu0 0
      %2530 = vmatpush1.bf16.msra.mxu0 0
      %2531 = vmatprep.subr.bf16.mxu0 0
      %2532 = vmatpush1.bf16.msra.mxu0 0
      %2533 = vmatprep.subr.bf16.mxu0 0
      %2534 = vmatpush1.bf16.msra.mxu0 0
      %2535 = vmatprep.subr.bf16.mxu0 0
      %2536 = vmatpush1.bf16.msra.mxu0 0
      %2537 = vmatprep.subr.bf16.mxu0 0
      %2538 = vmatpush1.bf16.msra.mxu0 0
      %2539 = vmatprep.subr.bf16.mxu0 0
      %2540 = vmatpush1.bf16.msra.mxu0 0
      %2541 = vmatprep.subr.bf16.mxu0 0
      %2542 = vmatpush1.bf16.msra.mxu0 0
      %2543 = vmatprep.subr.bf16.mxu0 0
      %2544 = vmatpush1.bf16.msra.mxu0 0
      %2545 = vmatprep.subr.bf16.mxu0 0
      %2546 = vmatpush1.bf16.msra.mxu0 0
      %2547 = vmatprep.subr.bf16.mxu0 0
      %2548 = vmatpush1.bf16.msra.mxu0 0
      %2549 = vmatprep.subr.bf16.mxu0 0
      %2550 = vmatpush1.bf16.msra.mxu0 0
      %2551 = vmatprep.subr.bf16.mxu0 0
      %2552 = vmatpush1.bf16.msra.mxu0 0
      %2553 = vmatprep.subr.bf16.mxu0 0
      %2554 = vmatpush1.bf16.msra.mxu0 0
      %2555 = vmatprep.mubr.bf16.mxu0 0
      %2556 = vmatmul.mubr.bf16.gmra.mrb[0].mxu0 %v2518
      %v2557 = vpop.f32.mrb[0].mxu0
      %v2558 = vadd.f32 0.0, %v2557
      %v2559 = vpop.f32.mrb[0].mxu0
      %v2560 = vpop.f32.mrb[0].mxu0
      %v2561 = vpop.f32.mrb[0].mxu0
      %2562 = vdwg.mxu0
      %2567 = vrot.lane.b32.xlu0 %v2030, 8
      %v2568 = vpop.permute.xlu0 %2567
      %2569 = vrot.lane.b32.xlu0 %v2078, 8
      %v2570 = vpop.permute.xlu0 %2569
      %2571 = vrot.lane.b32.xlu0 %v2126, 8
      %v2572 = vpop.permute.xlu0 %2571
      %2573 = vrot.lane.b32.xlu0 %v2174, 8
      %v2574 = vpop.permute.xlu0 %2573
      %2583 = vrot.lane.b32.xlu0 %v2222, 16
      %v2584 = vpop.permute.xlu0 %2583
      %2585 = vrot.lane.b32.xlu0 %v2270, 16
      %v2586 = vpop.permute.xlu0 %2585
      %2587 = vrot.lane.b32.xlu0 %v2318, 16
      %v2588 = vpop.permute.xlu0 %2587
      %2589 = vrot.lane.b32.xlu0 %v2366, 16
      %v2590 = vpop.permute.xlu0 %2589
      %2599 = vrot.lane.b32.xlu0 %v2414, 24
      %v2600 = vpop.permute.xlu0 %2599
      %2601 = vrot.lane.b32.xlu0 %v2462, 24
      %v2602 = vpop.permute.xlu0 %2601
      %2603 = vrot.lane.b32.xlu0 %v2510, 24
      %v2604 = vpop.permute.xlu0 %2603
      %2605 = vrot.lane.b32.xlu0 %v2558, 24
      %v2606 = vpop.permute.xlu0 %2605
      %v2611 = vsel %vm623, %v1838, %v2568
      %v2612 = vsel %vm623, %v1886, %v2570
      %v2613 = vsel %vm623, %v1934, %v2572
      %v2614 = vsel %vm623, %v1982, %v2574
      %vm2615 = vcmask 130048
      %v2616 = vsel %vm2615, %v2611, %v2584
      %v2617 = vsel %vm2615, %v2612, %v2586
      %v2618 = vsel %vm2615, %v2613, %v2588
      %v2619 = vsel %vm2615, %v2614, %v2590
      %vm2620 = vcmask 195584
      %v2621 = vsel %vm2620, %v2616, %v2600
      %v2622 = vsel %vm2620, %v2617, %v2602
      %v2623 = vsel %vm2620, %v2618, %v2604
      %v2624 = vsel %vm2620, %v2619, %v2606
      %v2629 = vcombine.low %v2621, %v2622
      %v2630 = vcombine.low %v2623, %v2624
      %v2632 = vunpack.c.l.s4 1983009808
      %v2633 = vunpack.c.0.s8 %v2632
      %v2634 = vlaneseq
      %v2635 = vshrl.u32 %v2634, 7
      %v2636 = vsub.s32 %v2633, %v2635
      %v2637 = vrot.slane %v2629, %v2636
      %v2639 = vunpack.c.l.s4 1983009808
      %v2640 = vunpack.c.0.s8 %v2639
      %v2641 = vlaneseq
      %v2642 = vshrl.u32 %v2641, 7
      %v2643 = vsub.s32 %v2640, %v2642
      %v2644 = vrot.slane %v2630, %v2643
      %v2645 = vcombine.low %v2637, %v2644
      %v2647 = vpack.c.bf16 %v2645, %v2645
      %v2648 = vld [vmem:[%s3] sm:$0xf]
      %v2649 = vld [vmem:[%s3 + $0x4] sm:$0xf]
      %v2650 = vld [vmem:[%s3 + $0x8] sm:$0xf]
      %v2651 = vld [vmem:[%s3 + $0xc] sm:$0xf]
      %v2652 = vld [vmem:[%s4] sm:$0x1]
      %v2654 = vlaneseq
      %v2655 = vshrl.u32 %v2654, 7
      %v2656 = vsub.s32 0, %v2655
      %v2657 = vrot.slane %v2652, %v2656
      %v2663 = vunpack.c.l.b16 %v2648
      %v2664 = vunpack.c.l.b16 %v2649
      %v2665 = vunpack.c.l.b16 %v2650
      %v2666 = vunpack.c.l.b16 %v2651
      %v2667 = vpack.c.b16 %v2664, %v2663
      %v2668 = vpack.c.b16 %v2666, %v2665
      %v2672 = vsel %vm462, %v2647, 0
      %2674 = vmatprep.subr.bf16.mxu0 0
      %2675 = vmatpush1.bf16.msra.mxu0 %v2667
      %2676 = vmatprep.subr.bf16.mxu0 0
      %2677 = vmatpush1.bf16.msra.mxu0 %v2668
      %2678 = vmatprep.subr.bf16.mxu0 0
      %2679 = vmatpush1.bf16.msra.mxu0 0
      %2680 = vmatprep.subr.bf16.mxu0 0
      %2681 = vmatpush1.bf16.msra.mxu0 0
      %2682 = vmatprep.subr.bf16.mxu0 0
      %2683 = vmatpush1.bf16.msra.mxu0 0
      %2684 = vmatprep.subr.bf16.mxu0 0
      %2685 = vmatpush1.bf16.msra.mxu0 0
      %2686 = vmatprep.subr.bf16.mxu0 0
      %2687 = vmatpush1.bf16.msra.mxu0 0
      %2688 = vmatprep.subr.bf16.mxu0 0
      %2689 = vmatpush1.bf16.msra.mxu0 0
      %2690 = vmatprep.subr.bf16.mxu0 0
      %2691 = vmatpush1.bf16.msra.mxu0 0
      %2692 = vmatprep.subr.bf16.mxu0 0
      %2693 = vmatpush1.bf16.msra.mxu0 0
      %2694 = vmatprep.subr.bf16.mxu0 0
      %2695 = vmatpush1.bf16.msra.mxu0 0
      %2696 = vmatprep.subr.bf16.mxu0 0
      %2697 = vmatpush1.bf16.msra.mxu0 0
      %2698 = vmatprep.subr.bf16.mxu0 0
      %2699 = vmatpush1.bf16.msra.mxu0 0
      %2700 = vmatprep.subr.bf16.mxu0 0
      %2701 = vmatpush1.bf16.msra.mxu0 0
      %2702 = vmatprep.subr.bf16.mxu0 0
      %2703 = vmatpush1.bf16.msra.mxu0 0
      %2704 = vmatprep.subr.bf16.mxu0 0
      %2705 = vmatpush1.bf16.msra.mxu0 0
      %2706 = vmatprep.mubr.bf16.mxu0 0
      %2707 = vmatmul.mubr.bf16.gmra.mrb[0].mxu0 %v2672
      %v2708 = vpop.f32.mrb[0].mxu0
      %v2709 = vadd.f32 %v2657, %v2708
      %v2710 = vpop.f32.mrb[0].mxu0
      %v2711 = vpop.f32.mrb[0].mxu0
      %v2712 = vpop.f32.mrb[0].mxu0
      %2713 = vdwg.mxu0
      %v2714 = vadd.f32 %v438, %v2709
      %v2715 = vld [vmem:[%s5] sm:$0x1]
      %v2716 = vld [vmem:[%s6] sm:$0x1]
      %v2717 = vsel %vm462, %v2714, 0.0
      %2718 = vadd.xlane.f32.xlu0 %v2717
      %v2719 = vpop.xlane.xlu0 %2718
      %v2720 = vrcp.pop 32.0
      %v2721 = vmul.f32 %v2719, %v2720
      %v2722 = vsub.f32 %v2714, %v2721
      %v2723 = vmul.f32 %v2722, %v2722
      %v2724 = vsel %vm462, %v2723, 0.0
      %2725 = vadd.xlane.f32.xlu0 %v2724
      %v2726 = vpop.xlane.xlu0 %2725
      %v2727 = vmul.f32 %v2726, %v2720
      %v2728 = vadd.f32 %v2727, 1e-05
      %v2729 = vrsqrt.pop %v2728
      %v2730 = vmul.f32 %v2722, %v2729
      %v2732 = vlaneseq
      %v2733 = vshrl.u32 %v2732, 7
      %v2734 = vsub.s32 0, %v2733
      %v2735 = vrot.slane %v2715, %v2734
      %v2737 = vmul.f32 %v2730, %v2735
      %v2739 = vlaneseq
      %v2740 = vshrl.u32 %v2739, 7
      %v2741 = vsub.s32 0, %v2740
      %v2742 = vrot.slane %v2716, %v2741
      %v2744 = vadd.f32 %v2737, %v2742
      %v2745 = vpack.c.bf16 %v2744, %v2744
      %v2746 = vld [vmem:[%s7] sm:$0xff]
      %v2747 = vld [vmem:[%s7 + $0x8] sm:$0xff]
      %v2748 = vld [vmem:[%s7 + $0x10] sm:$0xff]
      %v2749 = vld [vmem:[%s7 + $0x18] sm:$0xff]
      %v2750 = vld [vmem:[%s7 + $0x20] sm:$0xff]
      %v2751 = vld [vmem:[%s7 + $0x28] sm:$0xff]
      %v2752 = vld [vmem:[%s7 + $0x30] sm:$0xff]
      %v2753 = vld [vmem:[%s7 + $0x38] sm:$0xff]
      %v2754 = vld [vmem:[%s7 + $0x40] sm:$0xff]
      %v2755 = vld [vmem:[%s7 + $0x48] sm:$0xff]
      %v2756 = vld [vmem:[%s7 + $0x50] sm:$0xff]
      %v2757 = vld [vmem:[%s7 + $0x58] sm:$0xff]
      %v2758 = vld [vmem:[%s7 + $0x60] sm:$0xff]
      %v2759 = vld [vmem:[%s7 + $0x68] sm:$0xff]
      %v2760 = vld [vmem:[%s7 + $0x70] sm:$0xff]
      %v2761 = vld [vmem:[%s7 + $0x78] sm:$0xff]
      %v2762 = vld [vmem:[%s7 + $0x80] sm:$0xff]
      %v2763 = vld [vmem:[%s7 + $0x88] sm:$0xff]
      %v2764 = vld [vmem:[%s7 + $0x90] sm:$0xff]
      %v2765 = vld [vmem:[%s7 + $0x98] sm:$0xff]
      %v2766 = vld [vmem:[%s7 + $0xa0] sm:$0xff]
      %v2767 = vld [vmem:[%s7 + $0xa8] sm:$0xff]
      %v2768 = vld [vmem:[%s7 + $0xb0] sm:$0xff]
      %v2769 = vld [vmem:[%s7 + $0xb8] sm:$0xff]
      %v2770 = vld [vmem:[%s7 + $0xc0] sm:$0xff]
      %v2771 = vld [vmem:[%s7 + $0xc8] sm:$0xff]
      %v2772 = vld [vmem:[%s7 + $0xd0] sm:$0xff]
      %v2773 = vld [vmem:[%s7 + $0xd8] sm:$0xff]
      %v2774 = vld [vmem:[%s7 + $0xe0] sm:$0xff]
      %v2775 = vld [vmem:[%s7 + $0xe8] sm:$0xff]
      %v2776 = vld [vmem:[%s7 + $0xf0] sm:$0xff]
      %v2777 = vld [vmem:[%s7 + $0xf8] sm:$0xff]
      %v2778 = vld [vmem:[%s8] sm:$0xff]
      %v2779 = vld [vmem:[%s8 + $0x8] sm:$0xff]
      %v2782 = vlaneseq
      %v2783 = vshrl.u32 %v2782, 7
      %v2784 = vsub.s32 0, %v2783
      %v2785 = vrot.slane %v2778, %v2784
      %v2786 = vlaneseq
      %v2787 = vshrl.u32 %v2786, 7
      %v2788 = vsub.s32 1, %v2787
      %v2789 = vrot.slane %v2778, %v2788
      %v2790 = vlaneseq
      %v2791 = vshrl.u32 %v2790, 7
      %v2792 = vsub.s32 2, %v2791
      %v2793 = vrot.slane %v2778, %v2792
      %v2794 = vlaneseq
      %v2795 = vshrl.u32 %v2794, 7
      %v2796 = vsub.s32 3, %v2795
      %v2797 = vrot.slane %v2778, %v2796
      %v2798 = vlaneseq
      %v2799 = vshrl.u32 %v2798, 7
      %v2800 = vsub.s32 4, %v2799
      %v2801 = vrot.slane %v2778, %v2800
      %v2802 = vlaneseq
      %v2803 = vshrl.u32 %v2802, 7
      %v2804 = vsub.s32 5, %v2803
      %v2805 = vrot.slane %v2778, %v2804
      %v2806 = vlaneseq
      %v2807 = vshrl.u32 %v2806, 7
      %v2808 = vsub.s32 6, %v2807
      %v2809 = vrot.slane %v2778, %v2808
      %v2810 = vlaneseq
      %v2811 = vshrl.u32 %v2810, 7
      %v2812 = vsub.s32 7, %v2811
      %v2813 = vrot.slane %v2778, %v2812
      %v2814 = vlaneseq
      %v2815 = vshrl.u32 %v2814, 7
      %v2816 = vsub.s32 0, %v2815
      %v2817 = vrot.slane %v2779, %v2816
      %v2818 = vlaneseq
      %v2819 = vshrl.u32 %v2818, 7
      %v2820 = vsub.s32 1, %v2819
      %v2821 = vrot.slane %v2779, %v2820
      %v2822 = vlaneseq
      %v2823 = vshrl.u32 %v2822, 7
      %v2824 = vsub.s32 2, %v2823
      %v2825 = vrot.slane %v2779, %v2824
      %v2826 = vlaneseq
      %v2827 = vshrl.u32 %v2826, 7
      %v2828 = vsub.s32 3, %v2827
      %v2829 = vrot.slane %v2779, %v2828
      %v2830 = vlaneseq
      %v2831 = vshrl.u32 %v2830, 7
      %v2832 = vsub.s32 4, %v2831
      %v2833 = vrot.slane %v2779, %v2832
      %v2834 = vlaneseq
      %v2835 = vshrl.u32 %v2834, 7
      %v2836 = vsub.s32 5, %v2835
      %v2837 = vrot.slane %v2779, %v2836
      %v2838 = vlaneseq
      %v2839 = vshrl.u32 %v2838, 7
      %v2840 = vsub.s32 6, %v2839
      %v2841 = vrot.slane %v2779, %v2840
      %v2842 = vlaneseq
      %v2843 = vshrl.u32 %v2842, 7
      %v2844 = vsub.s32 7, %v2843
      %v2845 = vrot.slane %v2779, %v2844
      %v2894 = vunpack.c.l.b16 %v2746
      %v2895 = vunpack.c.h.b16 %v2746
      %v2896 = vunpack.c.l.b16 %v2747
      %v2897 = vunpack.c.h.b16 %v2747
      %v2898 = vunpack.c.l.b16 %v2748
      %v2899 = vunpack.c.h.b16 %v2748
      %v2900 = vunpack.c.l.b16 %v2749
      %v2901 = vunpack.c.h.b16 %v2749
      %v2902 = vunpack.c.l.b16 %v2750
      %v2903 = vunpack.c.h.b16 %v2750
      %v2904 = vunpack.c.l.b16 %v2751
      %v2905 = vunpack.c.h.b16 %v2751
      %v2906 = vunpack.c.l.b16 %v2752
      %v2907 = vunpack.c.h.b16 %v2752
      %v2908 = vunpack.c.l.b16 %v2753
      %v2909 = vunpack.c.h.b16 %v2753
      %v2910 = vunpack.c.l.b16 %v2754
      %v2911 = vunpack.c.h.b16 %v2754
      %v2912 = vunpack.c.l.b16 %v2755
      %v2913 = vunpack.c.h.b16 %v2755
      %v2914 = vunpack.c.l.b16 %v2756
      %v2915 = vunpack.c.h.b16 %v2756
      %v2916 = vunpack.c.l.b16 %v2757
      %v2917 = vunpack.c.h.b16 %v2757
      %v2918 = vunpack.c.l.b16 %v2758
      %v2919 = vunpack.c.h.b16 %v2758
      %v2920 = vunpack.c.l.b16 %v2759
      %v2921 = vunpack.c.h.b16 %v2759
      %v2922 = vunpack.c.l.b16 %v2760
      %v2923 = vunpack.c.h.b16 %v2760
      %v2924 = vunpack.c.l.b16 %v2761
      %v2925 = vunpack.c.h.b16 %v2761
      %v2926 = vunpack.c.l.b16 %v2762
      %v2927 = vunpack.c.h.b16 %v2762
      %v2928 = vunpack.c.l.b16 %v2763
      %v2929 = vunpack.c.h.b16 %v2763
      %v2930 = vunpack.c.l.b16 %v2764
      %v2931 = vunpack.c.h.b16 %v2764
      %v2932 = vunpack.c.l.b16 %v2765
      %v2933 = vunpack.c.h.b16 %v2765
      %v2934 = vunpack.c.l.b16 %v2766
      %v2935 = vunpack.c.h.b16 %v2766
      %v2936 = vunpack.c.l.b16 %v2767
      %v2937 = vunpack.c.h.b16 %v2767
      %v2938 = vunpack.c.l.b16 %v2768
      %v2939 = vunpack.c.h.b16 %v2768
      %v2940 = vunpack.c.l.b16 %v2769
      %v2941 = vunpack.c.h.b16 %v2769
      %v2942 = vunpack.c.l.b16 %v2770
      %v2943 = vunpack.c.h.b16 %v2770
      %v2944 = vunpack.c.l.b16 %v2771
      %v2945 = vunpack.c.h.b16 %v2771
      %v2946 = vunpack.c.l.b16 %v2772
      %v2947 = vunpack.c.h.b16 %v2772
      %v2948 = vunpack.c.l.b16 %v2773
      %v2949 = vunpack.c.h.b16 %v2773
      %v2950 = vunpack.c.l.b16 %v2774
      %v2951 = vunpack.c.h.b16 %v2774
      %v2952 = vunpack.c.l.b16 %v2775
      %v2953 = vunpack.c.h.b16 %v2775
      %v2954 = vunpack.c.l.b16 %v2776
      %v2955 = vunpack.c.h.b16 %v2776
      %v2956 = vunpack.c.l.b16 %v2777
      %v2957 = vunpack.c.h.b16 %v2777
      %v2958 = vpack.c.b16 %v2910, %v2894
      %v2959 = vpack.c.b16 %v2911, %v2895
      %v2960 = vpack.c.b16 %v2912, %v2896
      %v2961 = vpack.c.b16 %v2913, %v2897
      %v2962 = vpack.c.b16 %v2914, %v2898
      %v2963 = vpack.c.b16 %v2915, %v2899
      %v2964 = vpack.c.b16 %v2916, %v2900
      %v2965 = vpack.c.b16 %v2917, %v2901
      %v2966 = vpack.c.b16 %v2918, %v2902
      %v2967 = vpack.c.b16 %v2919, %v2903
      %v2968 = vpack.c.b16 %v2920, %v2904
      %v2969 = vpack.c.b16 %v2921, %v2905
      %v2970 = vpack.c.b16 %v2922, %v2906
      %v2971 = vpack.c.b16 %v2923, %v2907
      %v2972 = vpack.c.b16 %v2924, %v2908
      %v2973 = vpack.c.b16 %v2925, %v2909
      %v2974 = vpack.c.b16 %v2942, %v2926
      %v2975 = vpack.c.b16 %v2943, %v2927
      %v2976 = vpack.c.b16 %v2944, %v2928
      %v2977 = vpack.c.b16 %v2945, %v2929
      %v2978 = vpack.c.b16 %v2946, %v2930
      %v2979 = vpack.c.b16 %v2947, %v2931
      %v2980 = vpack.c.b16 %v2948, %v2932
      %v2981 = vpack.c.b16 %v2949, %v2933
      %v2982 = vpack.c.b16 %v2950, %v2934
      %v2983 = vpack.c.b16 %v2951, %v2935
      %v2984 = vpack.c.b16 %v2952, %v2936
      %v2985 = vpack.c.b16 %v2953, %v2937
      %v2986 = vpack.c.b16 %v2954, %v2938
      %v2987 = vpack.c.b16 %v2955, %v2939
      %v2988 = vpack.c.b16 %v2956, %v2940
      %v2989 = vpack.c.b16 %v2957, %v2941
      %v3023 = vsel %vm462, %v2745, 0
      %3025 = vmatprep.subr.bf16.mxu0 %v2959
      %3026 = vmatpush1.bf16.msra.mxu0 %v2958
      %3027 = vmatprep.subr.bf16.mxu0 %v2975
      %3028 = vmatpush1.bf16.msra.mxu0 %v2974
      %3029 = vmatprep.subr.bf16.mxu0 0
      %3030 = vmatpush1.bf16.msra.mxu0 0
      %3031 = vmatprep.subr.bf16.mxu0 0
      %3032 = vmatpush1.bf16.msra.mxu0 0
      %3033 = vmatprep.subr.bf16.mxu0 0
      %3034 = vmatpush1.bf16.msra.mxu0 0
      %3035 = vmatprep.subr.bf16.mxu0 0
      %3036 = vmatpush1.bf16.msra.mxu0 0
      %3037 = vmatprep.subr.bf16.mxu0 0
      %3038 = vmatpush1.bf16.msra.mxu0 0
      %3039 = vmatprep.subr.bf16.mxu0 0
      %3040 = vmatpush1.bf16.msra.mxu0 0
      %3041 = vmatprep.subr.bf16.mxu0 0
      %3042 = vmatpush1.bf16.msra.mxu0 0
      %3043 = vmatprep.subr.bf16.mxu0 0
      %3044 = vmatpush1.bf16.msra.mxu0 0
      %3045 = vmatprep.subr.bf16.mxu0 0
      %3046 = vmatpush1.bf16.msra.mxu0 0
      %3047 = vmatprep.subr.bf16.mxu0 0
      %3048 = vmatpush1.bf16.msra.mxu0 0
      %3049 = vmatprep.subr.bf16.mxu0 0
      %3050 = vmatpush1.bf16.msra.mxu0 0
      %3051 = vmatprep.subr.bf16.mxu0 0
      %3052 = vmatpush1.bf16.msra.mxu0 0
      %3053 = vmatprep.subr.bf16.mxu0 0
      %3054 = vmatpush1.bf16.msra.mxu0 0
      %3055 = vmatprep.subr.bf16.mxu0 0
      %3056 = vmatpush1.bf16.msra.mxu0 0
      %3057 = vmatprep.mubr.bf16.mxu0 0
      %3058 = vmatmul.mubr.bf16.gmra.mrb[0].mxu0 %v3023
      %v3059 = vpop.f32.mrb[0].mxu0
      %v3060 = vadd.f32 %v2785, %v3059
      %v3061 = vpop.f32.mrb[0].mxu0
      %v3062 = vadd.f32 %v2789, %v3061
      %v3063 = vpop.f32.mrb[0].mxu0
      %v3064 = vpop.f32.mrb[0].mxu0
      %3065 = vdwg.mxu0
      %3066 = vmatprep.subr.bf16.mxu0 %v2961
      %3067 = vmatpush1.bf16.msra.mxu0 %v2960
      %3068 = vmatprep.subr.bf16.mxu0 %v2977
      %3069 = vmatpush1.bf16.msra.mxu0 %v2976
      %3070 = vmatprep.subr.bf16.mxu0 0
      %3071 = vmatpush1.bf16.msra.mxu0 0
      %3072 = vmatprep.subr.bf16.mxu0 0
      %3073 = vmatpush1.bf16.msra.mxu0 0
      %3074 = vmatprep.subr.bf16.mxu0 0
      %3075 = vmatpush1.bf16.msra.mxu0 0
      %3076 = vmatprep.subr.bf16.mxu0 0
      %3077 = vmatpush1.bf16.msra.mxu0 0
      %3078 = vmatprep.subr.bf16.mxu0 0
      %3079 = vmatpush1.bf16.msra.mxu0 0
      %3080 = vmatprep.subr.bf16.mxu0 0
      %3081 = vmatpush1.bf16.msra.mxu0 0
      %3082 = vmatprep.subr.bf16.mxu0 0
      %3083 = vmatpush1.bf16.msra.mxu0 0
      %3084 = vmatprep.subr.bf16.mxu0 0
      %3085 = vmatpush1.bf16.msra.mxu0 0
      %3086 = vmatprep.subr.bf16.mxu0 0
      %3087 = vmatpush1.bf16.msra.mxu0 0
      %3088 = vmatprep.subr.bf16.mxu0 0
      %3089 = vmatpush1.bf16.msra.mxu0 0
      %3090 = vmatprep.subr.bf16.mxu0 0
      %3091 = vmatpush1.bf16.msra.mxu0 0
      %3092 = vmatprep.subr.bf16.mxu0 0
      %3093 = vmatpush1.bf16.msra.mxu0 0
      %3094 = vmatprep.subr.bf16.mxu0 0
      %3095 = vmatpush1.bf16.msra.mxu0 0
      %3096 = vmatprep.subr.bf16.mxu0 0
      %3097 = vmatpush1.bf16.msra.mxu0 0
      %3098 = vmatprep.mubr.bf16.mxu0 0
      %3099 = vmatmul.mubr.bf16.gmra.mrb[0].mxu0 %v3023
      %v3100 = vpop.f32.mrb[0].mxu0
      %v3101 = vadd.f32 %v2793, %v3100
      %v3102 = vpop.f32.mrb[0].mxu0
      %v3103 = vadd.f32 %v2797, %v3102
      %v3104 = vpop.f32.mrb[0].mxu0
      %v3105 = vpop.f32.mrb[0].mxu0
      %3106 = vdwg.mxu0
      %3107 = vmatprep.subr.bf16.mxu0 %v2963
      %3108 = vmatpush1.bf16.msra.mxu0 %v2962
      %3109 = vmatprep.subr.bf16.mxu0 %v2979
      %3110 = vmatpush1.bf16.msra.mxu0 %v2978
      %3111 = vmatprep.subr.bf16.mxu0 0
      %3112 = vmatpush1.bf16.msra.mxu0 0
      %3113 = vmatprep.subr.bf16.mxu0 0
      %3114 = vmatpush1.bf16.msra.mxu0 0
      %3115 = vmatprep.subr.bf16.mxu0 0
      %3116 = vmatpush1.bf16.msra.mxu0 0
      %3117 = vmatprep.subr.bf16.mxu0 0
      %3118 = vmatpush1.bf16.msra.mxu0 0
      %3119 = vmatprep.subr.bf16.mxu0 0
      %3120 = vmatpush1.bf16.msra.mxu0 0
      %3121 = vmatprep.subr.bf16.mxu0 0
      %3122 = vmatpush1.bf16.msra.mxu0 0
      %3123 = vmatprep.subr.bf16.mxu0 0
      %3124 = vmatpush1.bf16.msra.mxu0 0
      %3125 = vmatprep.subr.bf16.mxu0 0
      %3126 = vmatpush1.bf16.msra.mxu0 0
      %3127 = vmatprep.subr.bf16.mxu0 0
      %3128 = vmatpush1.bf16.msra.mxu0 0
      %3129 = vmatprep.subr.bf16.mxu0 0
      %3130 = vmatpush1.bf16.msra.mxu0 0
      %3131 = vmatprep.subr.bf16.mxu0 0
      %3132 = vmatpush1.bf16.msra.mxu0 0
      %3133 = vmatprep.subr.bf16.mxu0 0
      %3134 = vmatpush1.bf16.msra.mxu0 0
      %3135 = vmatprep.subr.bf16.mxu0 0
      %3136 = vmatpush1.bf16.msra.mxu0 0
      %3137 = vmatprep.subr.bf16.mxu0 0
      %3138 = vmatpush1.bf16.msra.mxu0 0
      %3139 = vmatprep.mubr.bf16.mxu0 0
      %3140 = vmatmul.mubr.bf16.gmra.mrb[0].mxu0 %v3023
      %v3141 = vpop.f32.mrb[0].mxu0
      %v3142 = vadd.f32 %v2801, %v3141
      %v3143 = vpop.f32.mrb[0].mxu0
      %v3144 = vadd.f32 %v2805, %v3143
      %v3145 = vpop.f32.mrb[0].mxu0
      %v3146 = vpop.f32.mrb[0].mxu0
      %3147 = vdwg.mxu0
      %3148 = vmatprep.subr.bf16.mxu0 %v2965
      %3149 = vmatpush1.bf16.msra.mxu0 %v2964
      %3150 = vmatprep.subr.bf16.mxu0 %v2981
      %3151 = vmatpush1.bf16.msra.mxu0 %v2980
      %3152 = vmatprep.subr.bf16.mxu0 0
      %3153 = vmatpush1.bf16.msra.mxu0 0
      %3154 = vmatprep.subr.bf16.mxu0 0
      %3155 = vmatpush1.bf16.msra.mxu0 0
      %3156 = vmatprep.subr.bf16.mxu0 0
      %3157 = vmatpush1.bf16.msra.mxu0 0
      %3158 = vmatprep.subr.bf16.mxu0 0
      %3159 = vmatpush1.bf16.msra.mxu0 0
      %3160 = vmatprep.subr.bf16.mxu0 0
      %3161 = vmatpush1.bf16.msra.mxu0 0
      %3162 = vmatprep.subr.bf16.mxu0 0
      %3163 = vmatpush1.bf16.msra.mxu0 0
      %3164 = vmatprep.subr.bf16.mxu0 0
      %3165 = vmatpush1.bf16.msra.mxu0 0
      %3166 = vmatprep.subr.bf16.mxu0 0
      %3167 = vmatpush1.bf16.msra.mxu0 0
      %3168 = vmatprep.subr.bf16.mxu0 0
      %3169 = vmatpush1.bf16.msra.mxu0 0
      %3170 = vmatprep.subr.bf16.mxu0 0
      %3171 = vmatpush1.bf16.msra.mxu0 0
      %3172 = vmatprep.subr.bf16.mxu0 0
      %3173 = vmatpush1.bf16.msra.mxu0 0
      %3174 = vmatprep.subr.bf16.mxu0 0
      %3175 = vmatpush1.bf16.msra.mxu0 0
      %3176 = vmatprep.subr.bf16.mxu0 0
      %3177 = vmatpush1.bf16.msra.mxu0 0
      %3178 = vmatprep.subr.bf16.mxu0 0
      %3179 = vmatpush1.bf16.msra.mxu0 0
      %3180 = vmatprep.mubr.bf16.mxu0 0
      %3181 = vmatmul.mubr.bf16.gmra.mrb[0].mxu0 %v3023
      %v3182 = vpop.f32.mrb[0].mxu0
      %v3183 = vadd.f32 %v2809, %v3182
      %v3184 = vpop.f32.mrb[0].mxu0
      %v3185 = vadd.f32 %v2813, %v3184
      %v3186 = vpop.f32.mrb[0].mxu0
      %v3187 = vpop.f32.mrb[0].mxu0
      %3188 = vdwg.mxu0
      %3189 = vmatprep.subr.bf16.mxu0 %v2967
      %3190 = vmatpush1.bf16.msra.mxu0 %v2966
      %3191 = vmatprep.subr.bf16.mxu0 %v2983
      %3192 = vmatpush1.bf16.msra.mxu0 %v2982
      %3193 = vmatprep.subr.bf16.mxu0 0
      %3194 = vmatpush1.bf16.msra.mxu0 0
      %3195 = vmatprep.subr.bf16.mxu0 0
      %3196 = vmatpush1.bf16.msra.mxu0 0
      %3197 = vmatprep.subr.bf16.mxu0 0
      %3198 = vmatpush1.bf16.msra.mxu0 0
      %3199 = vmatprep.subr.bf16.mxu0 0
      %3200 = vmatpush1.bf16.msra.mxu0 0
      %3201 = vmatprep.subr.bf16.mxu0 0
      %3202 = vmatpush1.bf16.msra.mxu0 0
      %3203 = vmatprep.subr.bf16.mxu0 0
      %3204 = vmatpush1.bf16.msra.mxu0 0
      %3205 = vmatprep.subr.bf16.mxu0 0
      %3206 = vmatpush1.bf16.msra.mxu0 0
      %3207 = vmatprep.subr.bf16.mxu0 0
      %3208 = vmatpush1.bf16.msra.mxu0 0
      %3209 = vmatprep.subr.bf16.mxu0 0
      %3210 = vmatpush1.bf16.msra.mxu0 0
      %3211 = vmatprep.subr.bf16.mxu0 0
      %3212 = vmatpush1.bf16.msra.mxu0 0
      %3213 = vmatprep.subr.bf16.mxu0 0
      %3214 = vmatpush1.bf16.msra.mxu0 0
      %3215 = vmatprep.subr.bf16.mxu0 0
      %3216 = vmatpush1.bf16.msra.mxu0 0
      %3217 = vmatprep.subr.bf16.mxu0 0
      %3218 = vmatpush1.bf16.msra.mxu0 0
      %3219 = vmatprep.subr.bf16.mxu0 0
      %3220 = vmatpush1.bf16.msra.mxu0 0
      %3221 = vmatprep.mubr.bf16.mxu0 0
      %3222 = vmatmul.mubr.bf16.gmra.mrb[0].mxu0 %v3023
      %v3223 = vpop.f32.mrb[0].mxu0
      %v3224 = vadd.f32 %v2817, %v3223
      %v3225 = vpop.f32.mrb[0].mxu0
      %v3226 = vadd.f32 %v2821, %v3225
      %v3227 = vpop.f32.mrb[0].mxu0
      %v3228 = vpop.f32.mrb[0].mxu0
      %3229 = vdwg.mxu0
      %3230 = vmatprep.subr.bf16.mxu0 %v2969
      %3231 = vmatpush1.bf16.msra.mxu0 %v2968
      %3232 = vmatprep.subr.bf16.mxu0 %v2985
      %3233 = vmatpush1.bf16.msra.mxu0 %v2984
      %3234 = vmatprep.subr.bf16.mxu0 0
      %3235 = vmatpush1.bf16.msra.mxu0 0
      %3236 = vmatprep.subr.bf16.mxu0 0
      %3237 = vmatpush1.bf16.msra.mxu0 0
      %3238 = vmatprep.subr.bf16.mxu0 0
      %3239 = vmatpush1.bf16.msra.mxu0 0
      %3240 = vmatprep.subr.bf16.mxu0 0
      %3241 = vmatpush1.bf16.msra.mxu0 0
      %3242 = vmatprep.subr.bf16.mxu0 0
      %3243 = vmatpush1.bf16.msra.mxu0 0
      %3244 = vmatprep.subr.bf16.mxu0 0
      %3245 = vmatpush1.bf16.msra.mxu0 0
      %3246 = vmatprep.subr.bf16.mxu0 0
      %3247 = vmatpush1.bf16.msra.mxu0 0
      %3248 = vmatprep.subr.bf16.mxu0 0
      %3249 = vmatpush1.bf16.msra.mxu0 0
      %3250 = vmatprep.subr.bf16.mxu0 0
      %3251 = vmatpush1.bf16.msra.mxu0 0
      %3252 = vmatprep.subr.bf16.mxu0 0
      %3253 = vmatpush1.bf16.msra.mxu0 0
      %3254 = vmatprep.subr.bf16.mxu0 0
      %3255 = vmatpush1.bf16.msra.mxu0 0
      %3256 = vmatprep.subr.bf16.mxu0 0
      %3257 = vmatpush1.bf16.msra.mxu0 0
      %3258 = vmatprep.subr.bf16.mxu0 0
      %3259 = vmatpush1.bf16.msra.mxu0 0
      %3260 = vmatprep.subr.bf16.mxu0 0
      %3261 = vmatpush1.bf16.msra.mxu0 0
      %3262 = vmatprep.mubr.bf16.mxu0 0
      %3263 = vmatmul.mubr.bf16.gmra.mrb[0].mxu0 %v3023
      %v3264 = vpop.f32.mrb[0].mxu0
      %v3265 = vadd.f32 %v2825, %v3264
      %v3266 = vpop.f32.mrb[0].mxu0
      %v3267 = vadd.f32 %v2829, %v3266
      %v3268 = vpop.f32.mrb[0].mxu0
      %v3269 = vpop.f32.mrb[0].mxu0
      %3270 = vdwg.mxu0
      %3271 = vmatprep.subr.bf16.mxu0 %v2971
      %3272 = vmatpush1.bf16.msra.mxu0 %v2970
      %3273 = vmatprep.subr.bf16.mxu0 %v2987
      %3274 = vmatpush1.bf16.msra.mxu0 %v2986
      %3275 = vmatprep.subr.bf16.mxu0 0
      %3276 = vmatpush1.bf16.msra.mxu0 0
      %3277 = vmatprep.subr.bf16.mxu0 0
      %3278 = vmatpush1.bf16.msra.mxu0 0
      %3279 = vmatprep.subr.bf16.mxu0 0
      %3280 = vmatpush1.bf16.msra.mxu0 0
      %3281 = vmatprep.subr.bf16.mxu0 0
      %3282 = vmatpush1.bf16.msra.mxu0 0
      %3283 = vmatprep.subr.bf16.mxu0 0
      %3284 = vmatpush1.bf16.msra.mxu0 0
      %3285 = vmatprep.subr.bf16.mxu0 0
      %3286 = vmatpush1.bf16.msra.mxu0 0
      %3287 = vmatprep.subr.bf16.mxu0 0
      %3288 = vmatpush1.bf16.msra.mxu0 0
      %3289 = vmatprep.subr.bf16.mxu0 0
      %3290 = vmatpush1.bf16.msra.mxu0 0
      %3291 = vmatprep.subr.bf16.mxu0 0
      %3292 = vmatpush1.bf16.msra.mxu0 0
      %3293 = vmatprep.subr.bf16.mxu0 0
      %3294 = vmatpush1.bf16.msra.mxu0 0
      %3295 = vmatprep.subr.bf16.mxu0 0
      %3296 = vmatpush1.bf16.msra.mxu0 0
      %3297 = vmatprep.subr.bf16.mxu0 0
      %3298 = vmatpush1.bf16.msra.mxu0 0
      %3299 = vmatprep.subr.bf16.mxu0 0
      %3300 = vmatpush1.bf16.msra.mxu0 0
      %3301 = vmatprep.subr.bf16.mxu0 0
      %3302 = vmatpush1.bf16.msra.mxu0 0
      %3303 = vmatprep.mubr.bf16.mxu0 0
      %3304 = vmatmul.mubr.bf16.gmra.mrb[0].mxu0 %v3023
      %v3305 = vpop.f32.mrb[0].mxu0
      %v3306 = vadd.f32 %v2833, %v3305
      %v3307 = vpop.f32.mrb[0].mxu0
      %v3308 = vadd.f32 %v2837, %v3307
      %v3309 = vpop.f32.mrb[0].mxu0
      %v3310 = vpop.f32.mrb[0].mxu0
      %3311 = vdwg.mxu0
      %3312 = vmatprep.subr.bf16.mxu0 %v2973
      %3313 = vmatpush1.bf16.msra.mxu0 %v2972
      %3314 = vmatprep.subr.bf16.mxu0 %v2989
      %3315 = vmatpush1.bf16.msra.mxu0 %v2988
      %3316 = vmatprep.subr.bf16.mxu0 0
      %3317 = vmatpush1.bf16.msra.mxu0 0
      %3318 = vmatprep.subr.bf16.mxu0 0
      %3319 = vmatpush1.bf16.msra.mxu0 0
      %3320 = vmatprep.subr.bf16.mxu0 0
      %3321 = vmatpush1.bf16.msra.mxu0 0
      %3322 = vmatprep.subr.bf16.mxu0 0
      %3323 = vmatpush1.bf16.msra.mxu0 0
      %3324 = vmatprep.subr.bf16.mxu0 0
      %3325 = vmatpush1.bf16.msra.mxu0 0
      %3326 = vmatprep.subr.bf16.mxu0 0
      %3327 = vmatpush1.bf16.msra.mxu0 0
      %3328 = vmatprep.subr.bf16.mxu0 0
      %3329 = vmatpush1.bf16.msra.mxu0 0
      %3330 = vmatprep.subr.bf16.mxu0 0
      %3331 = vmatpush1.bf16.msra.mxu0 0
      %3332 = vmatprep.subr.bf16.mxu0 0
      %3333 = vmatpush1.bf16.msra.mxu0 0
      %3334 = vmatprep.subr.bf16.mxu0 0
      %3335 = vmatpush1.bf16.msra.mxu0 0
      %3336 = vmatprep.subr.bf16.mxu0 0
      %3337 = vmatpush1.bf16.msra.mxu0 0
      %3338 = vmatprep.subr.bf16.mxu0 0
      %3339 = vmatpush1.bf16.msra.mxu0 0
      %3340 = vmatprep.subr.bf16.mxu0 0
      %3341 = vmatpush1.bf16.msra.mxu0 0
      %3342 = vmatprep.subr.bf16.mxu0 0
      %3343 = vmatpush1.bf16.msra.mxu0 0
      %3344 = vmatprep.mubr.bf16.mxu0 0
      %3345 = vmatmul.mubr.bf16.gmra.mrb[0].mxu0 %v3023
      %v3346 = vpop.f32.mrb[0].mxu0
      %v3347 = vadd.f32 %v2841, %v3346
      %v3348 = vpop.f32.mrb[0].mxu0
      %v3349 = vadd.f32 %v2845, %v3348
      %v3350 = vpop.f32.mrb[0].mxu0
      %v3351 = vpop.f32.mrb[0].mxu0
      %3352 = vdwg.mxu0
      %v3353 = vmax.f32 %v3060, 0.0
      %v3354 = vmax.f32 %v3062, 0.0
      %v3355 = vmax.f32 %v3101, 0.0
      %v3356 = vmax.f32 %v3103, 0.0
      %v3357 = vmax.f32 %v3142, 0.0
      %v3358 = vmax.f32 %v3144, 0.0
      %v3359 = vmax.f32 %v3183, 0.0
      %v3360 = vmax.f32 %v3185, 0.0
      %v3361 = vmax.f32 %v3224, 0.0
      %v3362 = vmax.f32 %v3226, 0.0
      %v3363 = vmax.f32 %v3265, 0.0
      %v3364 = vmax.f32 %v3267, 0.0
      %v3365 = vmax.f32 %v3306, 0.0
      %v3366 = vmax.f32 %v3308, 0.0
      %v3367 = vmax.f32 %v3347, 0.0
      %v3368 = vmax.f32 %v3349, 0.0
      %v3369 = vpack.c.bf16 %v3353, %v3353
      %v3370 = vpack.c.bf16 %v3354, %v3354
      %v3371 = vpack.c.bf16 %v3355, %v3355
      %v3372 = vpack.c.bf16 %v3356, %v3356
      %v3373 = vpack.c.bf16 %v3357, %v3357
      %v3374 = vpack.c.bf16 %v3358, %v3358
      %v3375 = vpack.c.bf16 %v3359, %v3359
      %v3376 = vpack.c.bf16 %v3360, %v3360
      %v3377 = vpack.c.bf16 %v3361, %v3361
      %v3378 = vpack.c.bf16 %v3362, %v3362
      %v3379 = vpack.c.bf16 %v3363, %v3363
      %v3380 = vpack.c.bf16 %v3364, %v3364
      %v3381 = vpack.c.bf16 %v3365, %v3365
      %v3382 = vpack.c.bf16 %v3366, %v3366
      %v3383 = vpack.c.bf16 %v3367, %v3367
      %v3384 = vpack.c.bf16 %v3368, %v3368
      %v3385 = vld [vmem:[%s9] sm:$0xf]
      %v3386 = vld [vmem:[%s9 + $0x4] sm:$0xf]
      %v3387 = vld [vmem:[%s9 + $0x8] sm:$0xf]
      %v3388 = vld [vmem:[%s9 + $0xc] sm:$0xf]
      %v3389 = vld [vmem:[%s9 + $0x10] sm:$0xf]
      %v3390 = vld [vmem:[%s9 + $0x14] sm:$0xf]
      %v3391 = vld [vmem:[%s9 + $0x18] sm:$0xf]
      %v3392 = vld [vmem:[%s9 + $0x1c] sm:$0xf]
      %v3393 = vld [vmem:[%s9 + $0x20] sm:$0xf]
      %v3394 = vld [vmem:[%s9 + $0x24] sm:$0xf]
      %v3395 = vld [vmem:[%s9 + $0x28] sm:$0xf]
      %v3396 = vld [vmem:[%s9 + $0x2c] sm:$0xf]
      %v3397 = vld [vmem:[%s9 + $0x30] sm:$0xf]
      %v3398 = vld [vmem:[%s9 + $0x34] sm:$0xf]
      %v3399 = vld [vmem:[%s9 + $0x38] sm:$0xf]
      %v3400 = vld [vmem:[%s9 + $0x3c] sm:$0xf]
      %v3401 = vld [vmem:[%s9 + $0x40] sm:$0xf]
      %v3402 = vld [vmem:[%s9 + $0x44] sm:$0xf]
      %v3403 = vld [vmem:[%s9 + $0x48] sm:$0xf]
      %v3404 = vld [vmem:[%s9 + $0x4c] sm:$0xf]
      %v3405 = vld [vmem:[%s9 + $0x50] sm:$0xf]
      %v3406 = vld [vmem:[%s9 + $0x54] sm:$0xf]
      %v3407 = vld [vmem:[%s9 + $0x58] sm:$0xf]
      %v3408 = vld [vmem:[%s9 + $0x5c] sm:$0xf]
      %v3409 = vld [vmem:[%s9 + $0x60] sm:$0xf]
      %v3410 = vld [vmem:[%s9 + $0x64] sm:$0xf]
      %v3411 = vld [vmem:[%s9 + $0x68] sm:$0xf]
      %v3412 = vld [vmem:[%s9 + $0x6c] sm:$0xf]
      %v3413 = vld [vmem:[%s9 + $0x70] sm:$0xf]
      %v3414 = vld [vmem:[%s9 + $0x74] sm:$0xf]
      %v3415 = vld [vmem:[%s9 + $0x78] sm:$0xf]
      %v3416 = vld [vmem:[%s9 + $0x7c] sm:$0xf]
      %v3417 = vld [vmem:[%s9 + $0x80] sm:$0xf]
      %v3418 = vld [vmem:[%s9 + $0x84] sm:$0xf]
      %v3419 = vld [vmem:[%s9 + $0x88] sm:$0xf]
      %v3420 = vld [vmem:[%s9 + $0x8c] sm:$0xf]
      %v3421 = vld [vmem:[%s9 + $0x90] sm:$0xf]
      %v3422 = vld [vmem:[%s9 + $0x94] sm:$0xf]
      %v3423 = vld [vmem:[%s9 + $0x98] sm:$0xf]
      %v3424 = vld [vmem:[%s9 + $0x9c] sm:$0xf]
      %v3425 = vld [vmem:[%s9 + $0xa0] sm:$0xf]
      %v3426 = vld [vmem:[%s9 + $0xa4] sm:$0xf]
      %v3427 = vld [vmem:[%s9 + $0xa8] sm:$0xf]
      %v3428 = vld [vmem:[%s9 + $0xac] sm:$0xf]
      %v3429 = vld [vmem:[%s9 + $0xb0] sm:$0xf]
      %v3430 = vld [vmem:[%s9 + $0xb4] sm:$0xf]
      %v3431 = vld [vmem:[%s9 + $0xb8] sm:$0xf]
      %v3432 = vld [vmem:[%s9 + $0xbc] sm:$0xf]
      %v3433 = vld [vmem:[%s9 + $0xc0] sm:$0xf]
      %v3434 = vld [vmem:[%s9 + $0xc4] sm:$0xf]
      %v3435 = vld [vmem:[%s9 + $0xc8] sm:$0xf]
      %v3436 = vld [vmem:[%s9 + $0xcc] sm:$0xf]
      %v3437 = vld [vmem:[%s9 + $0xd0] sm:$0xf]
      %v3438 = vld [vmem:[%s9 + $0xd4] sm:$0xf]
      %v3439 = vld [vmem:[%s9 + $0xd8] sm:$0xf]
      %v3440 = vld [vmem:[%s9 + $0xdc] sm:$0xf]
      %v3441 = vld [vmem:[%s9 + $0xe0] sm:$0xf]
      %v3442 = vld [vmem:[%s9 + $0xe4] sm:$0xf]
      %v3443 = vld [vmem:[%s9 + $0xe8] sm:$0xf]
      %v3444 = vld [vmem:[%s9 + $0xec] sm:$0xf]
      %v3445 = vld [vmem:[%s9 + $0xf0] sm:$0xf]
      %v3446 = vld [vmem:[%s9 + $0xf4] sm:$0xf]
      %v3447 = vld [vmem:[%s9 + $0xf8] sm:$0xf]
      %v3448 = vld [vmem:[%s9 + $0xfc] sm:$0xf]
      %v3449 = vld [vmem:[%s9 + $0x100] sm:$0xf]
      %v3450 = vld [vmem:[%s9 + $0x104] sm:$0xf]
      %v3451 = vld [vmem:[%s9 + $0x108] sm:$0xf]
      %v3452 = vld [vmem:[%s9 + $0x10c] sm:$0xf]
      %v3453 = vld [vmem:[%s9 + $0x110] sm:$0xf]
      %v3454 = vld [vmem:[%s9 + $0x114] sm:$0xf]
      %v3455 = vld [vmem:[%s9 + $0x118] sm:$0xf]
      %v3456 = vld [vmem:[%s9 + $0x11c] sm:$0xf]
      %v3457 = vld [vmem:[%s9 + $0x120] sm:$0xf]
      %v3458 = vld [vmem:[%s9 + $0x124] sm:$0xf]
      %v3459 = vld [vmem:[%s9 + $0x128] sm:$0xf]
      %v3460 = vld [vmem:[%s9 + $0x12c] sm:$0xf]
      %v3461 = vld [vmem:[%s9 + $0x130] sm:$0xf]
      %v3462 = vld [vmem:[%s9 + $0x134] sm:$0xf]
      %v3463 = vld [vmem:[%s9 + $0x138] sm:$0xf]
      %v3464 = vld [vmem:[%s9 + $0x13c] sm:$0xf]
      %v3465 = vld [vmem:[%s9 + $0x140] sm:$0xf]
      %v3466 = vld [vmem:[%s9 + $0x144] sm:$0xf]
      %v3467 = vld [vmem:[%s9 + $0x148] sm:$0xf]
      %v3468 = vld [vmem:[%s9 + $0x14c] sm:$0xf]
      %v3469 = vld [vmem:[%s9 + $0x150] sm:$0xf]
      %v3470 = vld [vmem:[%s9 + $0x154] sm:$0xf]
      %v3471 = vld [vmem:[%s9 + $0x158] sm:$0xf]
      %v3472 = vld [vmem:[%s9 + $0x15c] sm:$0xf]
      %v3473 = vld [vmem:[%s9 + $0x160] sm:$0xf]
      %v3474 = vld [vmem:[%s9 + $0x164] sm:$0xf]
      %v3475 = vld [vmem:[%s9 + $0x168] sm:$0xf]
      %v3476 = vld [vmem:[%s9 + $0x16c] sm:$0xf]
      %v3477 = vld [vmem:[%s9 + $0x170] sm:$0xf]
      %v3478 = vld [vmem:[%s9 + $0x174] sm:$0xf]
      %v3479 = vld [vmem:[%s9 + $0x178] sm:$0xf]
      %v3480 = vld [vmem:[%s9 + $0x17c] sm:$0xf]
      %v3481 = vld [vmem:[%s9 + $0x180] sm:$0xf]
      %v3482 = vld [vmem:[%s9 + $0x184] sm:$0xf]
      %v3483 = vld [vmem:[%s9 + $0x188] sm:$0xf]
      %v3484 = vld [vmem:[%s9 + $0x18c] sm:$0xf]
      %v3485 = vld [vmem:[%s9 + $0x190] sm:$0xf]
      %v3486 = vld [vmem:[%s9 + $0x194] sm:$0xf]
      %v3487 = vld [vmem:[%s9 + $0x198] sm:$0xf]
      %v3488 = vld [vmem:[%s9 + $0x19c] sm:$0xf]
      %v3489 = vld [vmem:[%s9 + $0x1a0] sm:$0xf]
      %v3490 = vld [vmem:[%s9 + $0x1a4] sm:$0xf]
      %v3491 = vld [vmem:[%s9 + $0x1a8] sm:$0xf]
      %v3492 = vld [vmem:[%s9 + $0x1ac] sm:$0xf]
      %v3493 = vld [vmem:[%s9 + $0x1b0] sm:$0xf]
      %v3494 = vld [vmem:[%s9 + $0x1b4] sm:$0xf]
      %v3495 = vld [vmem:[%s9 + $0x1b8] sm:$0xf]
      %v3496 = vld [vmem:[%s9 + $0x1bc] sm:$0xf]
      %v3497 = vld [vmem:[%s9 + $0x1c0] sm:$0xf]
      %v3498 = vld [vmem:[%s9 + $0x1c4] sm:$0xf]
      %v3499 = vld [vmem:[%s9 + $0x1c8] sm:$0xf]
      %v3500 = vld [vmem:[%s9 + $0x1cc] sm:$0xf]
      %v3501 = vld [vmem:[%s9 + $0x1d0] sm:$0xf]
      %v3502 = vld [vmem:[%s9 + $0x1d4] sm:$0xf]
      %v3503 = vld [vmem:[%s9 + $0x1d8] sm:$0xf]
      %v3504 = vld [vmem:[%s9 + $0x1dc] sm:$0xf]
      %v3505 = vld [vmem:[%s9 + $0x1e0] sm:$0xf]
      %v3506 = vld [vmem:[%s9 + $0x1e4] sm:$0xf]
      %v3507 = vld [vmem:[%s9 + $0x1e8] sm:$0xf]
      %v3508 = vld [vmem:[%s9 + $0x1ec] sm:$0xf]
      %v3509 = vld [vmem:[%s9 + $0x1f0] sm:$0xf]
      %v3510 = vld [vmem:[%s9 + $0x1f4] sm:$0xf]
      %v3511 = vld [vmem:[%s9 + $0x1f8] sm:$0xf]
      %v3512 = vld [vmem:[%s9 + $0x1fc] sm:$0xf]
      %v3513 = vld [vmem:[%s9 + $0x200] sm:$0xf]
      %v3514 = vld [vmem:[%s9 + $0x204] sm:$0xf]
      %v3515 = vld [vmem:[%s9 + $0x208] sm:$0xf]
      %v3516 = vld [vmem:[%s9 + $0x20c] sm:$0xf]
      %v3517 = vld [vmem:[%s9 + $0x210] sm:$0xf]
      %v3518 = vld [vmem:[%s9 + $0x214] sm:$0xf]
      %v3519 = vld [vmem:[%s9 + $0x218] sm:$0xf]
      %v3520 = vld [vmem:[%s9 + $0x21c] sm:$0xf]
      %v3521 = vld [vmem:[%s9 + $0x220] sm:$0xf]
      %v3522 = vld [vmem:[%s9 + $0x224] sm:$0xf]
      %v3523 = vld [vmem:[%s9 + $0x228] sm:$0xf]
      %v3524 = vld [vmem:[%s9 + $0x22c] sm:$0xf]
      %v3525 = vld [vmem:[%s9 + $0x230] sm:$0xf]
      %v3526 = vld [vmem:[%s9 + $0x234] sm:$0xf]
      %v3527 = vld [vmem:[%s9 + $0x238] sm:$0xf]
      %v3528 = vld [vmem:[%s9 + $0x23c] sm:$0xf]
      %v3529 = vld [vmem:[%s9 + $0x240] sm:$0xf]
      %v3530 = vld [vmem:[%s9 + $0x244] sm:$0xf]
      %v3531 = vld [vmem:[%s9 + $0x248] sm:$0xf]
      %v3532 = vld [vmem:[%s9 + $0x24c] sm:$0xf]
      %v3533 = vld [vmem:[%s9 + $0x250] sm:$0xf]
      %v3534 = vld [vmem:[%s9 + $0x254] sm:$0xf]
      %v3535 = vld [vmem:[%s9 + $0x258] sm:$0xf]
      %v3536 = vld [vmem:[%s9 + $0x25c] sm:$0xf]
      %v3537 = vld [vmem:[%s9 + $0x260] sm:$0xf]
      %v3538 = vld [vmem:[%s9 + $0x264] sm:$0xf]
      %v3539 = vld [vmem:[%s9 + $0x268] sm:$0xf]
      %v3540 = vld [vmem:[%s9 + $0x26c] sm:$0xf]
      %v3541 = vld [vmem:[%s9 + $0x270] sm:$0xf]
      %v3542 = vld [vmem:[%s9 + $0x274] sm:$0xf]
      %v3543 = vld [vmem:[%s9 + $0x278] sm:$0xf]
      %v3544 = vld [vmem:[%s9 + $0x27c] sm:$0xf]
      %v3545 = vld [vmem:[%s9 + $0x280] sm:$0xf]
      %v3546 = vld [vmem:[%s9 + $0x284] sm:$0xf]
      %v3547 = vld [vmem:[%s9 + $0x288] sm:$0xf]
      %v3548 = vld [vmem:[%s9 + $0x28c] sm:$0xf]
      %v3549 = vld [vmem:[%s9 + $0x290] sm:$0xf]
      %v3550 = vld [vmem:[%s9 + $0x294] sm:$0xf]
      %v3551 = vld [vmem:[%s9 + $0x298] sm:$0xf]
      %v3552 = vld [vmem:[%s9 + $0x29c] sm:$0xf]
      %v3553 = vld [vmem:[%s9 + $0x2a0] sm:$0xf]
      %v3554 = vld [vmem:[%s9 + $0x2a4] sm:$0xf]
      %v3555 = vld [vmem:[%s9 + $0x2a8] sm:$0xf]
      %v3556 = vld [vmem:[%s9 + $0x2ac] sm:$0xf]
      %v3557 = vld [vmem:[%s9 + $0x2b0] sm:$0xf]
      %v3558 = vld [vmem:[%s9 + $0x2b4] sm:$0xf]
      %v3559 = vld [vmem:[%s9 + $0x2b8] sm:$0xf]
      %v3560 = vld [vmem:[%s9 + $0x2bc] sm:$0xf]
      %v3561 = vld [vmem:[%s9 + $0x2c0] sm:$0xf]
      %v3562 = vld [vmem:[%s9 + $0x2c4] sm:$0xf]
      %v3563 = vld [vmem:[%s9 + $0x2c8] sm:$0xf]
      %v3564 = vld [vmem:[%s9 + $0x2cc] sm:$0xf]
      %v3565 = vld [vmem:[%s9 + $0x2d0] sm:$0xf]
      %v3566 = vld [vmem:[%s9 + $0x2d4] sm:$0xf]
      %v3567 = vld [vmem:[%s9 + $0x2d8] sm:$0xf]
      %v3568 = vld [vmem:[%s9 + $0x2dc] sm:$0xf]
      %v3569 = vld [vmem:[%s9 + $0x2e0] sm:$0xf]
      %v3570 = vld [vmem:[%s9 + $0x2e4] sm:$0xf]
      %v3571 = vld [vmem:[%s9 + $0x2e8] sm:$0xf]
      %v3572 = vld [vmem:[%s9 + $0x2ec] sm:$0xf]
      %v3573 = vld [vmem:[%s9 + $0x2f0] sm:$0xf]
      %v3574 = vld [vmem:[%s9 + $0x2f4] sm:$0xf]
      %v3575 = vld [vmem:[%s9 + $0x2f8] sm:$0xf]
      %v3576 = vld [vmem:[%s9 + $0x2fc] sm:$0xf]
      %v3577 = vld [vmem:[%s9 + $0x300] sm:$0xf]
      %v3578 = vld [vmem:[%s9 + $0x304] sm:$0xf]
      %v3579 = vld [vmem:[%s9 + $0x308] sm:$0xf]
      %v3580 = vld [vmem:[%s9 + $0x30c] sm:$0xf]
      %v3581 = vld [vmem:[%s9 + $0x310] sm:$0xf]
      %v3582 = vld [vmem:[%s9 + $0x314] sm:$0xf]
      %v3583 = vld [vmem:[%s9 + $0x318] sm:$0xf]
      %v3584 = vld [vmem:[%s9 + $0x31c] sm:$0xf]
      %v3585 = vld [vmem:[%s9 + $0x320] sm:$0xf]
      %v3586 = vld [vmem:[%s9 + $0x324] sm:$0xf]
      %v3587 = vld [vmem:[%s9 + $0x328] sm:$0xf]
      %v3588 = vld [vmem:[%s9 + $0x32c] sm:$0xf]
      %v3589 = vld [vmem:[%s9 + $0x330] sm:$0xf]
      %v3590 = vld [vmem:[%s9 + $0x334] sm:$0xf]
      %v3591 = vld [vmem:[%s9 + $0x338] sm:$0xf]
      %v3592 = vld [vmem:[%s9 + $0x33c] sm:$0xf]
      %v3593 = vld [vmem:[%s9 + $0x340] sm:$0xf]
      %v3594 = vld [vmem:[%s9 + $0x344] sm:$0xf]
      %v3595 = vld [vmem:[%s9 + $0x348] sm:$0xf]
      %v3596 = vld [vmem:[%s9 + $0x34c] sm:$0xf]
      %v3597 = vld [vmem:[%s9 + $0x350] sm:$0xf]
      %v3598 = vld [vmem:[%s9 + $0x354] sm:$0xf]
      %v3599 = vld [vmem:[%s9 + $0x358] sm:$0xf]
      %v3600 = vld [vmem:[%s9 + $0x35c] sm:$0xf]
      %v3601 = vld [vmem:[%s9 + $0x360] sm:$0xf]
      %v3602 = vld [vmem:[%s9 + $0x364] sm:$0xf]
      %v3603 = vld [vmem:[%s9 + $0x368] sm:$0xf]
      %v3604 = vld [vmem:[%s9 + $0x36c] sm:$0xf]
      %v3605 = vld [vmem:[%s9 + $0x370] sm:$0xf]
      %v3606 = vld [vmem:[%s9 + $0x374] sm:$0xf]
      %v3607 = vld [vmem:[%s9 + $0x378] sm:$0xf]
      %v3608 = vld [vmem:[%s9 + $0x37c] sm:$0xf]
      %v3609 = vld [vmem:[%s9 + $0x380] sm:$0xf]
      %v3610 = vld [vmem:[%s9 + $0x384] sm:$0xf]
      %v3611 = vld [vmem:[%s9 + $0x388] sm:$0xf]
      %v3612 = vld [vmem:[%s9 + $0x38c] sm:$0xf]
      %v3613 = vld [vmem:[%s9 + $0x390] sm:$0xf]
      %v3614 = vld [vmem:[%s9 + $0x394] sm:$0xf]
      %v3615 = vld [vmem:[%s9 + $0x398] sm:$0xf]
      %v3616 = vld [vmem:[%s9 + $0x39c] sm:$0xf]
      %v3617 = vld [vmem:[%s9 + $0x3a0] sm:$0xf]
      %v3618 = vld [vmem:[%s9 + $0x3a4] sm:$0xf]
      %v3619 = vld [vmem:[%s9 + $0x3a8] sm:$0xf]
      %v3620 = vld [vmem:[%s9 + $0x3ac] sm:$0xf]
      %v3621 = vld [vmem:[%s9 + $0x3b0] sm:$0xf]
      %v3622 = vld [vmem:[%s9 + $0x3b4] sm:$0xf]
      %v3623 = vld [vmem:[%s9 + $0x3b8] sm:$0xf]
      %v3624 = vld [vmem:[%s9 + $0x3bc] sm:$0xf]
      %v3625 = vld [vmem:[%s9 + $0x3c0] sm:$0xf]
      %v3626 = vld [vmem:[%s9 + $0x3c4] sm:$0xf]
      %v3627 = vld [vmem:[%s9 + $0x3c8] sm:$0xf]
      %v3628 = vld [vmem:[%s9 + $0x3cc] sm:$0xf]
      %v3629 = vld [vmem:[%s9 + $0x3d0] sm:$0xf]
      %v3630 = vld [vmem:[%s9 + $0x3d4] sm:$0xf]
      %v3631 = vld [vmem:[%s9 + $0x3d8] sm:$0xf]
      %v3632 = vld [vmem:[%s9 + $0x3dc] sm:$0xf]
      %v3633 = vld [vmem:[%s9 + $0x3e0] sm:$0xf]
      %v3634 = vld [vmem:[%s9 + $0x3e4] sm:$0xf]
      %v3635 = vld [vmem:[%s9 + $0x3e8] sm:$0xf]
      %v3636 = vld [vmem:[%s9 + $0x3ec] sm:$0xf]
      %v3637 = vld [vmem:[%s9 + $0x3f0] sm:$0xf]
      %v3638 = vld [vmem:[%s9 + $0x3f4] sm:$0xf]
      %v3639 = vld [vmem:[%s9 + $0x3f8] sm:$0xf]
      %v3640 = vld [vmem:[%s9 + $0x3fc] sm:$0xf]
      %v3641 = vld [vmem:[%s10] sm:$0x1]
      %v3643 = vlaneseq
      %v3644 = vshrl.u32 %v3643, 7
      %v3645 = vsub.s32 0, %v3644
      %v3646 = vrot.slane %v3641, %v3645
      %v3904 = vunpack.c.l.b16 %v3385
      %v3905 = vunpack.c.l.b16 %v3386
      %v3906 = vunpack.c.l.b16 %v3387
      %v3907 = vunpack.c.l.b16 %v3388
      %v3908 = vunpack.c.l.b16 %v3389
      %v3909 = vunpack.c.l.b16 %v3390
      %v3910 = vunpack.c.l.b16 %v3391
      %v3911 = vunpack.c.l.b16 %v3392
      %v3912 = vunpack.c.l.b16 %v3393
      %v3913 = vunpack.c.l.b16 %v3394
      %v3914 = vunpack.c.l.b16 %v3395
      %v3915 = vunpack.c.l.b16 %v3396
      %v3916 = vunpack.c.l.b16 %v3397
      %v3917 = vunpack.c.l.b16 %v3398
      %v3918 = vunpack.c.l.b16 %v3399
      %v3919 = vunpack.c.l.b16 %v3400
      %v3920 = vunpack.c.l.b16 %v3401
      %v3921 = vunpack.c.l.b16 %v3402
      %v3922 = vunpack.c.l.b16 %v3403
      %v3923 = vunpack.c.l.b16 %v3404
      %v3924 = vunpack.c.l.b16 %v3405
      %v3925 = vunpack.c.l.b16 %v3406
      %v3926 = vunpack.c.l.b16 %v3407
      %v3927 = vunpack.c.l.b16 %v3408
      %v3928 = vunpack.c.l.b16 %v3409
      %v3929 = vunpack.c.l.b16 %v3410
      %v3930 = vunpack.c.l.b16 %v3411
      %v3931 = vunpack.c.l.b16 %v3412
      %v3932 = vunpack.c.l.b16 %v3413
      %v3933 = vunpack.c.l.b16 %v3414
      %v3934 = vunpack.c.l.b16 %v3415
      %v3935 = vunpack.c.l.b16 %v3416
      %v3936 = vunpack.c.l.b16 %v3417
      %v3937 = vunpack.c.l.b16 %v3418
      %v3938 = vunpack.c.l.b16 %v3419
      %v3939 = vunpack.c.l.b16 %v3420
      %v3940 = vunpack.c.l.b16 %v3421
      %v3941 = vunpack.c.l.b16 %v3422
      %v3942 = vunpack.c.l.b16 %v3423
      %v3943 = vunpack.c.l.b16 %v3424
      %v3944 = vunpack.c.l.b16 %v3425
      %v3945 = vunpack.c.l.b16 %v3426
      %v3946 = vunpack.c.l.b16 %v3427
      %v3947 = vunpack.c.l.b16 %v3428
      %v3948 = vunpack.c.l.b16 %v3429
      %v3949 = vunpack.c.l.b16 %v3430
      %v3950 = vunpack.c.l.b16 %v3431
      %v3951 = vunpack.c.l.b16 %v3432
      %v3952 = vunpack.c.l.b16 %v3433
      %v3953 = vunpack.c.l.b16 %v3434
      %v3954 = vunpack.c.l.b16 %v3435
      %v3955 = vunpack.c.l.b16 %v3436
      %v3956 = vunpack.c.l.b16 %v3437
      %v3957 = vunpack.c.l.b16 %v3438
      %v3958 = vunpack.c.l.b16 %v3439
      %v3959 = vunpack.c.l.b16 %v3440
      %v3960 = vunpack.c.l.b16 %v3441
      %v3961 = vunpack.c.l.b16 %v3442
      %v3962 = vunpack.c.l.b16 %v3443
      %v3963 = vunpack.c.l.b16 %v3444
      %v3964 = vunpack.c.l.b16 %v3445
      %v3965 = vunpack.c.l.b16 %v3446
      %v3966 = vunpack.c.l.b16 %v3447
      %v3967 = vunpack.c.l.b16 %v3448
      %v3968 = vunpack.c.l.b16 %v3449
      %v3969 = vunpack.c.l.b16 %v3450
      %v3970 = vunpack.c.l.b16 %v3451
      %v3971 = vunpack.c.l.b16 %v3452
      %v3972 = vunpack.c.l.b16 %v3453
      %v3973 = vunpack.c.l.b16 %v3454
      %v3974 = vunpack.c.l.b16 %v3455
      %v3975 = vunpack.c.l.b16 %v3456
      %v3976 = vunpack.c.l.b16 %v3457
      %v3977 = vunpack.c.l.b16 %v3458
      %v3978 = vunpack.c.l.b16 %v3459
      %v3979 = vunpack.c.l.b16 %v3460
      %v3980 = vunpack.c.l.b16 %v3461
      %v3981 = vunpack.c.l.b16 %v3462
      %v3982 = vunpack.c.l.b16 %v3463
      %v3983 = vunpack.c.l.b16 %v3464
      %v3984 = vunpack.c.l.b16 %v3465
      %v3985 = vunpack.c.l.b16 %v3466
      %v3986 = vunpack.c.l.b16 %v3467
      %v3987 = vunpack.c.l.b16 %v3468
      %v3988 = vunpack.c.l.b16 %v3469
      %v3989 = vunpack.c.l.b16 %v3470
      %v3990 = vunpack.c.l.b16 %v3471
      %v3991 = vunpack.c.l.b16 %v3472
      %v3992 = vunpack.c.l.b16 %v3473
      %v3993 = vunpack.c.l.b16 %v3474
      %v3994 = vunpack.c.l.b16 %v3475
      %v3995 = vunpack.c.l.b16 %v3476
      %v3996 = vunpack.c.l.b16 %v3477
      %v3997 = vunpack.c.l.b16 %v3478
      %v3998 = vunpack.c.l.b16 %v3479
      %v3999 = vunpack.c.l.b16 %v3480
      %v4000 = vunpack.c.l.b16 %v3481
      %v4001 = vunpack.c.l.b16 %v3482
      %v4002 = vunpack.c.l.b16 %v3483
      %v4003 = vunpack.c.l.b16 %v3484
      %v4004 = vunpack.c.l.b16 %v3485
      %v4005 = vunpack.c.l.b16 %v3486
      %v4006 = vunpack.c.l.b16 %v3487
      %v4007 = vunpack.c.l.b16 %v3488
      %v4008 = vunpack.c.l.b16 %v3489
      %v4009 = vunpack.c.l.b16 %v3490
      %v4010 = vunpack.c.l.b16 %v3491
      %v4011 = vunpack.c.l.b16 %v3492
      %v4012 = vunpack.c.l.b16 %v3493
      %v4013 = vunpack.c.l.b16 %v3494
      %v4014 = vunpack.c.l.b16 %v3495
      %v4015 = vunpack.c.l.b16 %v3496
      %v4016 = vunpack.c.l.b16 %v3497
      %v4017 = vunpack.c.l.b16 %v3498
      %v4018 = vunpack.c.l.b16 %v3499
      %v4019 = vunpack.c.l.b16 %v3500
      %v4020 = vunpack.c.l.b16 %v3501
      %v4021 = vunpack.c.l.b16 %v3502
      %v4022 = vunpack.c.l.b16 %v3503
      %v4023 = vunpack.c.l.b16 %v3504
      %v4024 = vunpack.c.l.b16 %v3505
      %v4025 = vunpack.c.l.b16 %v3506
      %v4026 = vunpack.c.l.b16 %v3507
      %v4027 = vunpack.c.l.b16 %v3508
      %v4028 = vunpack.c.l.b16 %v3509
      %v4029 = vunpack.c.l.b16 %v3510
      %v4030 = vunpack.c.l.b16 %v3511
      %v4031 = vunpack.c.l.b16 %v3512
      %v4032 = vunpack.c.l.b16 %v3513
      %v4033 = vunpack.c.l.b16 %v3514
      %v4034 = vunpack.c.l.b16 %v3515
      %v4035 = vunpack.c.l.b16 %v3516
      %v4036 = vunpack.c.l.b16 %v3517
      %v4037 = vunpack.c.l.b16 %v3518
      %v4038 = vunpack.c.l.b16 %v3519
      %v4039 = vunpack.c.l.b16 %v3520
      %v4040 = vunpack.c.l.b16 %v3521
      %v4041 = vunpack.c.l.b16 %v3522
      %v4042 = vunpack.c.l.b16 %v3523
      %v4043 = vunpack.c.l.b16 %v3524
      %v4044 = vunpack.c.l.b16 %v3525
      %v4045 = vunpack.c.l.b16 %v3526
      %v4046 = vunpack.c.l.b16 %v3527
      %v4047 = vunpack.c.l.b16 %v3528
      %v4048 = vunpack.c.l.b16 %v3529
      %v4049 = vunpack.c.l.b16 %v3530
      %v4050 = vunpack.c.l.b16 %v3531
      %v4051 = vunpack.c.l.b16 %v3532
      %v4052 = vunpack.c.l.b16 %v3533
      %v4053 = vunpack.c.l.b16 %v3534
      %v4054 = vunpack.c.l.b16 %v3535
      %v4055 = vunpack.c.l.b16 %v3536
      %v4056 = vunpack.c.l.b16 %v3537
      %v4057 = vunpack.c.l.b16 %v3538
      %v4058 = vunpack.c.l.b16 %v3539
      %v4059 = vunpack.c.l.b16 %v3540
      %v4060 = vunpack.c.l.b16 %v3541
      %v4061 = vunpack.c.l.b16 %v3542
      %v4062 = vunpack.c.l.b16 %v3543
      %v4063 = vunpack.c.l.b16 %v3544
      %v4064 = vunpack.c.l.b16 %v3545
      %v4065 = vunpack.c.l.b16 %v3546
      %v4066 = vunpack.c.l.b16 %v3547
      %v4067 = vunpack.c.l.b16 %v3548
      %v4068 = vunpack.c.l.b16 %v3549
      %v4069 = vunpack.c.l.b16 %v3550
      %v4070 = vunpack.c.l.b16 %v3551
      %v4071 = vunpack.c.l.b16 %v3552
      %v4072 = vunpack.c.l.b16 %v3553
      %v4073 = vunpack.c.l.b16 %v3554
      %v4074 = vunpack.c.l.b16 %v3555
      %v4075 = vunpack.c.l.b16 %v3556
      %v4076 = vunpack.c.l.b16 %v3557
      %v4077 = vunpack.c.l.b16 %v3558
      %v4078 = vunpack.c.l.b16 %v3559
      %v4079 = vunpack.c.l.b16 %v3560
      %v4080 = vunpack.c.l.b16 %v3561
      %v4081 = vunpack.c.l.b16 %v3562
      %v4082 = vunpack.c.l.b16 %v3563
      %v4083 = vunpack.c.l.b16 %v3564
      %v4084 = vunpack.c.l.b16 %v3565
      %v4085 = vunpack.c.l.b16 %v3566
      %v4086 = vunpack.c.l.b16 %v3567
      %v4087 = vunpack.c.l.b16 %v3568
      %v4088 = vunpack.c.l.b16 %v3569
      %v4089 = vunpack.c.l.b16 %v3570
      %v4090 = vunpack.c.l.b16 %v3571
      %v4091 = vunpack.c.l.b16 %v3572
      %v4092 = vunpack.c.l.b16 %v3573
      %v4093 = vunpack.c.l.b16 %v3574
      %v4094 = vunpack.c.l.b16 %v3575
      %v4095 = vunpack.c.l.b16 %v3576
      %v4096 = vunpack.c.l.b16 %v3577
      %v4097 = vunpack.c.l.b16 %v3578
      %v4098 = vunpack.c.l.b16 %v3579
      %v4099 = vunpack.c.l.b16 %v3580
      %v4100 = vunpack.c.l.b16 %v3581
      %v4101 = vunpack.c.l.b16 %v3582
      %v4102 = vunpack.c.l.b16 %v3583
      %v4103 = vunpack.c.l.b16 %v3584
      %v4104 = vunpack.c.l.b16 %v3585
      %v4105 = vunpack.c.l.b16 %v3586
      %v4106 = vunpack.c.l.b16 %v3587
      %v4107 = vunpack.c.l.b16 %v3588
      %v4108 = vunpack.c.l.b16 %v3589
      %v4109 = vunpack.c.l.b16 %v3590
      %v4110 = vunpack.c.l.b16 %v3591
      %v4111 = vunpack.c.l.b16 %v3592
      %v4112 = vunpack.c.l.b16 %v3593
      %v4113 = vunpack.c.l.b16 %v3594
      %v4114 = vunpack.c.l.b16 %v3595
      %v4115 = vunpack.c.l.b16 %v3596
      %v4116 = vunpack.c.l.b16 %v3597
      %v4117 = vunpack.c.l.b16 %v3598
      %v4118 = vunpack.c.l.b16 %v3599
      %v4119 = vunpack.c.l.b16 %v3600
      %v4120 = vunpack.c.l.b16 %v3601
      %v4121 = vunpack.c.l.b16 %v3602
      %v4122 = vunpack.c.l.b16 %v3603
      %v4123 = vunpack.c.l.b16 %v3604
      %v4124 = vunpack.c.l.b16 %v3605
      %v4125 = vunpack.c.l.b16 %v3606
      %v4126 = vunpack.c.l.b16 %v3607
      %v4127 = vunpack.c.l.b16 %v3608
      %v4128 = vunpack.c.l.b16 %v3609
      %v4129 = vunpack.c.l.b16 %v3610
      %v4130 = vunpack.c.l.b16 %v3611
      %v4131 = vunpack.c.l.b16 %v3612
      %v4132 = vunpack.c.l.b16 %v3613
      %v4133 = vunpack.c.l.b16 %v3614
      %v4134 = vunpack.c.l.b16 %v3615
      %v4135 = vunpack.c.l.b16 %v3616
      %v4136 = vunpack.c.l.b16 %v3617
      %v4137 = vunpack.c.l.b16 %v3618
      %v4138 = vunpack.c.l.b16 %v3619
      %v4139 = vunpack.c.l.b16 %v3620
      %v4140 = vunpack.c.l.b16 %v3621
      %v4141 = vunpack.c.l.b16 %v3622
      %v4142 = vunpack.c.l.b16 %v3623
      %v4143 = vunpack.c.l.b16 %v3624
      %v4144 = vunpack.c.l.b16 %v3625
      %v4145 = vunpack.c.l.b16 %v3626
      %v4146 = vunpack.c.l.b16 %v3627
      %v4147 = vunpack.c.l.b16 %v3628
      %v4148 = vunpack.c.l.b16 %v3629
      %v4149 = vunpack.c.l.b16 %v3630
      %v4150 = vunpack.c.l.b16 %v3631
      %v4151 = vunpack.c.l.b16 %v3632
      %v4152 = vunpack.c.l.b16 %v3633
      %v4153 = vunpack.c.l.b16 %v3634
      %v4154 = vunpack.c.l.b16 %v3635
      %v4155 = vunpack.c.l.b16 %v3636
      %v4156 = vunpack.c.l.b16 %v3637
      %v4157 = vunpack.c.l.b16 %v3638
      %v4158 = vunpack.c.l.b16 %v3639
      %v4159 = vunpack.c.l.b16 %v3640
      %v4160 = vpack.c.b16 %v3905, %v3904
      %v4161 = vpack.c.b16 %v3907, %v3906
      %v4162 = vpack.c.b16 %v3909, %v3908
      %v4163 = vpack.c.b16 %v3911, %v3910
      %v4164 = vpack.c.b16 %v3913, %v3912
      %v4165 = vpack.c.b16 %v3915, %v3914
      %v4166 = vpack.c.b16 %v3917, %v3916
      %v4167 = vpack.c.b16 %v3919, %v3918
      %v4168 = vpack.c.b16 %v3921, %v3920
      %v4169 = vpack.c.b16 %v3923, %v3922
      %v4170 = vpack.c.b16 %v3925, %v3924
      %v4171 = vpack.c.b16 %v3927, %v3926
      %v4172 = vpack.c.b16 %v3929, %v3928
      %v4173 = vpack.c.b16 %v3931, %v3930
      %v4174 = vpack.c.b16 %v3933, %v3932
      %v4175 = vpack.c.b16 %v3935, %v3934
      %v4176 = vpack.c.b16 %v3937, %v3936
      %v4177 = vpack.c.b16 %v3939, %v3938
      %v4178 = vpack.c.b16 %v3941, %v3940
      %v4179 = vpack.c.b16 %v3943, %v3942
      %v4180 = vpack.c.b16 %v3945, %v3944
      %v4181 = vpack.c.b16 %v3947, %v3946
      %v4182 = vpack.c.b16 %v3949, %v3948
      %v4183 = vpack.c.b16 %v3951, %v3950
      %v4184 = vpack.c.b16 %v3953, %v3952
      %v4185 = vpack.c.b16 %v3955, %v3954
      %v4186 = vpack.c.b16 %v3957, %v3956
      %v4187 = vpack.c.b16 %v3959, %v3958
      %v4188 = vpack.c.b16 %v3961, %v3960
      %v4189 = vpack.c.b16 %v3963, %v3962
      %v4190 = vpack.c.b16 %v3965, %v3964
      %v4191 = vpack.c.b16 %v3967, %v3966
      %v4192 = vpack.c.b16 %v3969, %v3968
      %v4193 = vpack.c.b16 %v3971, %v3970
      %v4194 = vpack.c.b16 %v3973, %v3972
      %v4195 = vpack.c.b16 %v3975, %v3974
      %v4196 = vpack.c.b16 %v3977, %v3976
      %v4197 = vpack.c.b16 %v3979, %v3978
      %v4198 = vpack.c.b16 %v3981, %v3980
      %v4199 = vpack.c.b16 %v3983, %v3982
      %v4200 = vpack.c.b16 %v3985, %v3984
      %v4201 = vpack.c.b16 %v3987, %v3986
      %v4202 = vpack.c.b16 %v3989, %v3988
      %v4203 = vpack.c.b16 %v3991, %v3990
      %v4204 = vpack.c.b16 %v3993, %v3992
      %v4205 = vpack.c.b16 %v3995, %v3994
      %v4206 = vpack.c.b16 %v3997, %v3996
      %v4207 = vpack.c.b16 %v3999, %v3998
      %v4208 = vpack.c.b16 %v4001, %v4000
      %v4209 = vpack.c.b16 %v4003, %v4002
      %v4210 = vpack.c.b16 %v4005, %v4004
      %v4211 = vpack.c.b16 %v4007, %v4006
      %v4212 = vpack.c.b16 %v4009, %v4008
      %v4213 = vpack.c.b16 %v4011, %v4010
      %v4214 = vpack.c.b16 %v4013, %v4012
      %v4215 = vpack.c.b16 %v4015, %v4014
      %v4216 = vpack.c.b16 %v4017, %v4016
      %v4217 = vpack.c.b16 %v4019, %v4018
      %v4218 = vpack.c.b16 %v4021, %v4020
      %v4219 = vpack.c.b16 %v4023, %v4022
      %v4220 = vpack.c.b16 %v4025, %v4024
      %v4221 = vpack.c.b16 %v4027, %v4026
      %v4222 = vpack.c.b16 %v4029, %v4028
      %v4223 = vpack.c.b16 %v4031, %v4030
      %v4224 = vpack.c.b16 %v4033, %v4032
      %v4225 = vpack.c.b16 %v4035, %v4034
      %v4226 = vpack.c.b16 %v4037, %v4036
      %v4227 = vpack.c.b16 %v4039, %v4038
      %v4228 = vpack.c.b16 %v4041, %v4040
      %v4229 = vpack.c.b16 %v4043, %v4042
      %v4230 = vpack.c.b16 %v4045, %v4044
      %v4231 = vpack.c.b16 %v4047, %v4046
      %v4232 = vpack.c.b16 %v4049, %v4048
      %v4233 = vpack.c.b16 %v4051, %v4050
      %v4234 = vpack.c.b16 %v4053, %v4052
      %v4235 = vpack.c.b16 %v4055, %v4054
      %v4236 = vpack.c.b16 %v4057, %v4056
      %v4237 = vpack.c.b16 %v4059, %v4058
      %v4238 = vpack.c.b16 %v4061, %v4060
      %v4239 = vpack.c.b16 %v4063, %v4062
      %v4240 = vpack.c.b16 %v4065, %v4064
      %v4241 = vpack.c.b16 %v4067, %v4066
      %v4242 = vpack.c.b16 %v4069, %v4068
      %v4243 = vpack.c.b16 %v4071, %v4070
      %v4244 = vpack.c.b16 %v4073, %v4072
      %v4245 = vpack.c.b16 %v4075, %v4074
      %v4246 = vpack.c.b16 %v4077, %v4076
      %v4247 = vpack.c.b16 %v4079, %v4078
      %v4248 = vpack.c.b16 %v4081, %v4080
      %v4249 = vpack.c.b16 %v4083, %v4082
      %v4250 = vpack.c.b16 %v4085, %v4084
      %v4251 = vpack.c.b16 %v4087, %v4086
      %v4252 = vpack.c.b16 %v4089, %v4088
      %v4253 = vpack.c.b16 %v4091, %v4090
      %v4254 = vpack.c.b16 %v4093, %v4092
      %v4255 = vpack.c.b16 %v4095, %v4094
      %v4256 = vpack.c.b16 %v4097, %v4096
      %v4257 = vpack.c.b16 %v4099, %v4098
      %v4258 = vpack.c.b16 %v4101, %v4100
      %v4259 = vpack.c.b16 %v4103, %v4102
      %v4260 = vpack.c.b16 %v4105, %v4104
      %v4261 = vpack.c.b16 %v4107, %v4106
      %v4262 = vpack.c.b16 %v4109, %v4108
      %v4263 = vpack.c.b16 %v4111, %v4110
      %v4264 = vpack.c.b16 %v4113, %v4112
      %v4265 = vpack.c.b16 %v4115, %v4114
      %v4266 = vpack.c.b16 %v4117, %v4116
      %v4267 = vpack.c.b16 %v4119, %v4118
      %v4268 = vpack.c.b16 %v4121, %v4120
      %v4269 = vpack.c.b16 %v4123, %v4122
      %v4270 = vpack.c.b16 %v4125, %v4124
      %v4271 = vpack.c.b16 %v4127, %v4126
      %v4272 = vpack.c.b16 %v4129, %v4128
      %v4273 = vpack.c.b16 %v4131, %v4130
      %v4274 = vpack.c.b16 %v4133, %v4132
      %v4275 = vpack.c.b16 %v4135, %v4134
      %v4276 = vpack.c.b16 %v4137, %v4136
      %v4277 = vpack.c.b16 %v4139, %v4138
      %v4278 = vpack.c.b16 %v4141, %v4140
      %v4279 = vpack.c.b16 %v4143, %v4142
      %v4280 = vpack.c.b16 %v4145, %v4144
      %v4281 = vpack.c.b16 %v4147, %v4146
      %v4282 = vpack.c.b16 %v4149, %v4148
      %v4283 = vpack.c.b16 %v4151, %v4150
      %v4284 = vpack.c.b16 %v4153, %v4152
      %v4285 = vpack.c.b16 %v4155, %v4154
      %v4286 = vpack.c.b16 %v4157, %v4156
      %v4287 = vpack.c.b16 %v4159, %v4158
      %4416 = vmatprep.subr.bf16.mxu0 0
      %4417 = vmatpush1.bf16.msra.mxu0 %v4160
      %4418 = vmatprep.subr.bf16.mxu0 0
      %4419 = vmatpush1.bf16.msra.mxu0 %v4161
      %4420 = vmatprep.subr.bf16.mxu0 0
      %4421 = vmatpush1.bf16.msra.mxu0 %v4162
      %4422 = vmatprep.subr.bf16.mxu0 0
      %4423 = vmatpush1.bf16.msra.mxu0 %v4163
      %4424 = vmatprep.subr.bf16.mxu0 0
      %4425 = vmatpush1.bf16.msra.mxu0 %v4164
      %4426 = vmatprep.subr.bf16.mxu0 0
      %4427 = vmatpush1.bf16.msra.mxu0 %v4165
      %4428 = vmatprep.subr.bf16.mxu0 0
      %4429 = vmatpush1.bf16.msra.mxu0 %v4166
      %4430 = vmatprep.subr.bf16.mxu0 0
      %4431 = vmatpush1.bf16.msra.mxu0 %v4167
      %4432 = vmatprep.subr.bf16.mxu0 0
      %4433 = vmatpush1.bf16.msra.mxu0 %v4168
      %4434 = vmatprep.subr.bf16.mxu0 0
      %4435 = vmatpush1.bf16.msra.mxu0 %v4169
      %4436 = vmatprep.subr.bf16.mxu0 0
      %4437 = vmatpush1.bf16.msra.mxu0 %v4170
      %4438 = vmatprep.subr.bf16.mxu0 0
      %4439 = vmatpush1.bf16.msra.mxu0 %v4171
      %4440 = vmatprep.subr.bf16.mxu0 0
      %4441 = vmatpush1.bf16.msra.mxu0 %v4172
      %4442 = vmatprep.subr.bf16.mxu0 0
      %4443 = vmatpush1.bf16.msra.mxu0 %v4173
      %4444 = vmatprep.subr.bf16.mxu0 0
      %4445 = vmatpush1.bf16.msra.mxu0 %v4174
      %4446 = vmatprep.subr.bf16.mxu0 0
      %4447 = vmatpush1.bf16.msra.mxu0 %v4175
      %4448 = vmatprep.mubr.bf16.mxu0 %v3370
      %4449 = vmatmul.mubr.bf16.gmra.mrb[0].mxu0 %v3369
      %v4450 = vpop.f32.mrb[0].mxu0
      %v4451 = vadd.f32 %v3646, %v4450
      %v4452 = vpop.f32.mrb[0].mxu0
      %v4453 = vpop.f32.mrb[0].mxu0
      %v4454 = vpop.f32.mrb[0].mxu0
      %4455 = vdwg.mxu0
      %4456 = vmatprep.subr.bf16.mxu0 0
      %4457 = vmatpush1.bf16.msra.mxu0 %v4176
      %4458 = vmatprep.subr.bf16.mxu0 0
      %4459 = vmatpush1.bf16.msra.mxu0 %v4177
      %4460 = vmatprep.subr.bf16.mxu0 0
      %4461 = vmatpush1.bf16.msra.mxu0 %v4178
      %4462 = vmatprep.subr.bf16.mxu0 0
      %4463 = vmatpush1.bf16.msra.mxu0 %v4179
      %4464 = vmatprep.subr.bf16.mxu0 0
      %4465 = vmatpush1.bf16.msra.mxu0 %v4180
      %4466 = vmatprep.subr.bf16.mxu0 0
      %4467 = vmatpush1.bf16.msra.mxu0 %v4181
      %4468 = vmatprep.subr.bf16.mxu0 0
      %4469 = vmatpush1.bf16.msra.mxu0 %v4182
      %4470 = vmatprep.subr.bf16.mxu0 0
      %4471 = vmatpush1.bf16.msra.mxu0 %v4183
      %4472 = vmatprep.subr.bf16.mxu0 0
      %4473 = vmatpush1.bf16.msra.mxu0 %v4184
      %4474 = vmatprep.subr.bf16.mxu0 0
      %4475 = vmatpush1.bf16.msra.mxu0 %v4185
      %4476 = vmatprep.subr.bf16.mxu0 0
      %4477 = vmatpush1.bf16.msra.mxu0 %v4186
      %4478 = vmatprep.subr.bf16.mxu0 0
      %4479 = vmatpush1.bf16.msra.mxu0 %v4187
      %4480 = vmatprep.subr.bf16.mxu0 0
      %4481 = vmatpush1.bf16.msra.mxu0 %v4188
      %4482 = vmatprep.subr.bf16.mxu0 0
      %4483 = vmatpush1.bf16.msra.mxu0 %v4189
      %4484 = vmatprep.subr.bf16.mxu0 0
      %4485 = vmatpush1.bf16.msra.mxu0 %v4190
      %4486 = vmatprep.subr.bf16.mxu0 0
      %4487 = vmatpush1.bf16.msra.mxu0 %v4191
      %4488 = vmatprep.mubr.bf16.mxu0 %v3372
      %4489 = vmatmul.mubr.bf16.gmra.mrb[0].mxu0 %v3371
      %v4490 = vpop.f32.mrb[0].mxu0
      %v4491 = vadd.f32 %v4451, %v4490
      %v4492 = vpop.f32.mrb[0].mxu0
      %v4493 = vpop.f32.mrb[0].mxu0
      %v4494 = vpop.f32.mrb[0].mxu0
      %4495 = vdwg.mxu0
      %4496 = vmatprep.subr.bf16.mxu0 0
      %4497 = vmatpush1.bf16.msra.mxu0 %v4192
      %4498 = vmatprep.subr.bf16.mxu0 0
      %4499 = vmatpush1.bf16.msra.mxu0 %v4193
      %4500 = vmatprep.subr.bf16.mxu0 0
      %4501 = vmatpush1.bf16.msra.mxu0 %v4194
      %4502 = vmatprep.subr.bf16.mxu0 0
      %4503 = vmatpush1.bf16.msra.mxu0 %v4195
      %4504 = vmatprep.subr.bf16.mxu0 0
      %4505 = vmatpush1.bf16.msra.mxu0 %v4196
      %4506 = vmatprep.subr.bf16.mxu0 0
      %4507 = vmatpush1.bf16.msra.mxu0 %v4197
      %4508 = vmatprep.subr.bf16.mxu0 0
      %4509 = vmatpush1.bf16.msra.mxu0 %v4198
      %4510 = vmatprep.subr.bf16.mxu0 0
      %4511 = vmatpush1.bf16.msra.mxu0 %v4199
      %4512 = vmatprep.subr.bf16.mxu0 0
      %4513 = vmatpush1.bf16.msra.mxu0 %v4200
      %4514 = vmatprep.subr.bf16.mxu0 0
      %4515 = vmatpush1.bf16.msra.mxu0 %v4201
      %4516 = vmatprep.subr.bf16.mxu0 0
      %4517 = vmatpush1.bf16.msra.mxu0 %v4202
      %4518 = vmatprep.subr.bf16.mxu0 0
      %4519 = vmatpush1.bf16.msra.mxu0 %v4203
      %4520 = vmatprep.subr.bf16.mxu0 0
      %4521 = vmatpush1.bf16.msra.mxu0 %v4204
      %4522 = vmatprep.subr.bf16.mxu0 0
      %4523 = vmatpush1.bf16.msra.mxu0 %v4205
      %4524 = vmatprep.subr.bf16.mxu0 0
      %4525 = vmatpush1.bf16.msra.mxu0 %v4206
      %4526 = vmatprep.subr.bf16.mxu0 0
      %4527 = vmatpush1.bf16.msra.mxu0 %v4207
      %4528 = vmatprep.mubr.bf16.mxu0 %v3374
      %4529 = vmatmul.mubr.bf16.gmra.mrb[0].mxu0 %v3373
      %v4530 = vpop.f32.mrb[0].mxu0
      %v4531 = vadd.f32 %v4491, %v4530
      %v4532 = vpop.f32.mrb[0].mxu0
      %v4533 = vpop.f32.mrb[0].mxu0
      %v4534 = vpop.f32.mrb[0].mxu0
      %4535 = vdwg.mxu0
      %4536 = vmatprep.subr.bf16.mxu0 0
      %4537 = vmatpush1.bf16.msra.mxu0 %v4208
      %4538 = vmatprep.subr.bf16.mxu0 0
      %4539 = vmatpush1.bf16.msra.mxu0 %v4209
      %4540 = vmatprep.subr.bf16.mxu0 0
      %4541 = vmatpush1.bf16.msra.mxu0 %v4210
      %4542 = vmatprep.subr.bf16.mxu0 0
      %4543 = vmatpush1.bf16.msra.mxu0 %v4211
      %4544 = vmatprep.subr.bf16.mxu0 0
      %4545 = vmatpush1.bf16.msra.mxu0 %v4212
      %4546 = vmatprep.subr.bf16.mxu0 0
      %4547 = vmatpush1.bf16.msra.mxu0 %v4213
      %4548 = vmatprep.subr.bf16.mxu0 0
      %4549 = vmatpush1.bf16.msra.mxu0 %v4214
      %4550 = vmatprep.subr.bf16.mxu0 0
      %4551 = vmatpush1.bf16.msra.mxu0 %v4215
      %4552 = vmatprep.subr.bf16.mxu0 0
      %4553 = vmatpush1.bf16.msra.mxu0 %v4216
      %4554 = vmatprep.subr.bf16.mxu0 0
      %4555 = vmatpush1.bf16.msra.mxu0 %v4217
      %4556 = vmatprep.subr.bf16.mxu0 0
      %4557 = vmatpush1.bf16.msra.mxu0 %v4218
      %4558 = vmatprep.subr.bf16.mxu0 0
      %4559 = vmatpush1.bf16.msra.mxu0 %v4219
      %4560 = vmatprep.subr.bf16.mxu0 0
      %4561 = vmatpush1.bf16.msra.mxu0 %v4220
      %4562 = vmatprep.subr.bf16.mxu0 0
      %4563 = vmatpush1.bf16.msra.mxu0 %v4221
      %4564 = vmatprep.subr.bf16.mxu0 0
      %4565 = vmatpush1.bf16.msra.mxu0 %v4222
      %4566 = vmatprep.subr.bf16.mxu0 0
      %4567 = vmatpush1.bf16.msra.mxu0 %v4223
      %4568 = vmatprep.mubr.bf16.mxu0 %v3376
      %4569 = vmatmul.mubr.bf16.gmra.mrb[0].mxu0 %v3375
      %v4570 = vpop.f32.mrb[0].mxu0
      %v4571 = vadd.f32 %v4531, %v4570
      %v4572 = vpop.f32.mrb[0].mxu0
      %v4573 = vpop.f32.mrb[0].mxu0
      %v4574 = vpop.f32.mrb[0].mxu0
      %4575 = vdwg.mxu0
      %4576 = vmatprep.subr.bf16.mxu0 0
      %4577 = vmatpush1.bf16.msra.mxu0 %v4224
      %4578 = vmatprep.subr.bf16.mxu0 0
      %4579 = vmatpush1.bf16.msra.mxu0 %v4225
      %4580 = vmatprep.subr.bf16.mxu0 0
      %4581 = vmatpush1.bf16.msra.mxu0 %v4226
      %4582 = vmatprep.subr.bf16.mxu0 0
      %4583 = vmatpush1.bf16.msra.mxu0 %v4227
      %4584 = vmatprep.subr.bf16.mxu0 0
      %4585 = vmatpush1.bf16.msra.mxu0 %v4228
      %4586 = vmatprep.subr.bf16.mxu0 0
      %4587 = vmatpush1.bf16.msra.mxu0 %v4229
      %4588 = vmatprep.subr.bf16.mxu0 0
      %4589 = vmatpush1.bf16.msra.mxu0 %v4230
      %4590 = vmatprep.subr.bf16.mxu0 0
      %4591 = vmatpush1.bf16.msra.mxu0 %v4231
      %4592 = vmatprep.subr.bf16.mxu0 0
      %4593 = vmatpush1.bf16.msra.mxu0 %v4232
      %4594 = vmatprep.subr.bf16.mxu0 0
      %4595 = vmatpush1.bf16.msra.mxu0 %v4233
      %4596 = vmatprep.subr.bf16.mxu0 0
      %4597 = vmatpush1.bf16.msra.mxu0 %v4234
      %4598 = vmatprep.subr.bf16.mxu0 0
      %4599 = vmatpush1.bf16.msra.mxu0 %v4235
      %4600 = vmatprep.subr.bf16.mxu0 0
      %4601 = vmatpush1.bf16.msra.mxu0 %v4236
      %4602 = vmatprep.subr.bf16.mxu0 0
      %4603 = vmatpush1.bf16.msra.mxu0 %v4237
      %4604 = vmatprep.subr.bf16.mxu0 0
      %4605 = vmatpush1.bf16.msra.mxu0 %v4238
      %4606 = vmatprep.subr.bf16.mxu0 0
      %4607 = vmatpush1.bf16.msra.mxu0 %v4239
      %4608 = vmatprep.mubr.bf16.mxu0 %v3378
      %4609 = vmatmul.mubr.bf16.gmra.mrb[0].mxu0 %v3377
      %v4610 = vpop.f32.mrb[0].mxu0
      %v4611 = vadd.f32 %v4571, %v4610
      %v4612 = vpop.f32.mrb[0].mxu0
      %v4613 = vpop.f32.mrb[0].mxu0
      %v4614 = vpop.f32.mrb[0].mxu0
      %4615 = vdwg.mxu0
      %4616 = vmatprep.subr.bf16.mxu0 0
      %4617 = vmatpush1.bf16.msra.mxu0 %v4240
      %4618 = vmatprep.subr.bf16.mxu0 0
      %4619 = vmatpush1.bf16.msra.mxu0 %v4241
      %4620 = vmatprep.subr.bf16.mxu0 0
      %4621 = vmatpush1.bf16.msra.mxu0 %v4242
      %4622 = vmatprep.subr.bf16.mxu0 0
      %4623 = vmatpush1.bf16.msra.mxu0 %v4243
      %4624 = vmatprep.subr.bf16.mxu0 0
      %4625 = vmatpush1.bf16.msra.mxu0 %v4244
      %4626 = vmatprep.subr.bf16.mxu0 0
      %4627 = vmatpush1.bf16.msra.mxu0 %v4245
      %4628 = vmatprep.subr.bf16.mxu0 0
      %4629 = vmatpush1.bf16.msra.mxu0 %v4246
      %4630 = vmatprep.subr.bf16.mxu0 0
      %4631 = vmatpush1.bf16.msra.mxu0 %v4247
      %4632 = vmatprep.subr.bf16.mxu0 0
      %4633 = vmatpush1.bf16.msra.mxu0 %v4248
      %4634 = vmatprep.subr.bf16.mxu0 0
      %4635 = vmatpush1.bf16.msra.mxu0 %v4249
      %4636 = vmatprep.subr.bf16.mxu0 0
      %4637 = vmatpush1.bf16.msra.mxu0 %v4250
      %4638 = vmatprep.subr.bf16.mxu0 0
      %4639 = vmatpush1.bf16.msra.mxu0 %v4251
      %4640 = vmatprep.subr.bf16.mxu0 0
      %4641 = vmatpush1.bf16.msra.mxu0 %v4252
      %4642 = vmatprep.subr.bf16.mxu0 0
      %4643 = vmatpush1.bf16.msra.mxu0 %v4253
      %4644 = vmatprep.subr.bf16.mxu0 0
      %4645 = vmatpush1.bf16.msra.mxu0 %v4254
      %4646 = vmatprep.subr.bf16.mxu0 0
      %4647 = vmatpush1.bf16.msra.mxu0 %v4255
      %4648 = vmatprep.mubr.bf16.mxu0 %v3380
      %4649 = vmatmul.mubr.bf16.gmra.mrb[0].mxu0 %v3379
      %v4650 = vpop.f32.mrb[0].mxu0
      %v4651 = vadd.f32 %v4611, %v4650
      %v4652 = vpop.f32.mrb[0].mxu0
      %v4653 = vpop.f32.mrb[0].mxu0
      %v4654 = vpop.f32.mrb[0].mxu0
      %4655 = vdwg.mxu0
      %4656 = vmatprep.subr.bf16.mxu0 0
      %4657 = vmatpush1.bf16.msra.mxu0 %v4256
      %4658 = vmatprep.subr.bf16.mxu0 0
      %4659 = vmatpush1.bf16.msra.mxu0 %v4257
      %4660 = vmatprep.subr.bf16.mxu0 0
      %4661 = vmatpush1.bf16.msra.mxu0 %v4258
      %4662 = vmatprep.subr.bf16.mxu0 0
      %4663 = vmatpush1.bf16.msra.mxu0 %v4259
      %4664 = vmatprep.subr.bf16.mxu0 0
      %4665 = vmatpush1.bf16.msra.mxu0 %v4260
      %4666 = vmatprep.subr.bf16.mxu0 0
      %4667 = vmatpush1.bf16.msra.mxu0 %v4261
      %4668 = vmatprep.subr.bf16.mxu0 0
      %4669 = vmatpush1.bf16.msra.mxu0 %v4262
      %4670 = vmatprep.subr.bf16.mxu0 0
      %4671 = vmatpush1.bf16.msra.mxu0 %v4263
      %4672 = vmatprep.subr.bf16.mxu0 0
      %4673 = vmatpush1.bf16.msra.mxu0 %v4264
      %4674 = vmatprep.subr.bf16.mxu0 0
      %4675 = vmatpush1.bf16.msra.mxu0 %v4265
      %4676 = vmatprep.subr.bf16.mxu0 0
      %4677 = vmatpush1.bf16.msra.mxu0 %v4266
      %4678 = vmatprep.subr.bf16.mxu0 0
      %4679 = vmatpush1.bf16.msra.mxu0 %v4267
      %4680 = vmatprep.subr.bf16.mxu0 0
      %4681 = vmatpush1.bf16.msra.mxu0 %v4268
      %4682 = vmatprep.subr.bf16.mxu0 0
      %4683 = vmatpush1.bf16.msra.mxu0 %v4269
      %4684 = vmatprep.subr.bf16.mxu0 0
      %4685 = vmatpush1.bf16.msra.mxu0 %v4270
      %4686 = vmatprep.subr.bf16.mxu0 0
      %4687 = vmatpush1.bf16.msra.mxu0 %v4271
      %4688 = vmatprep.mubr.bf16.mxu0 %v3382
      %4689 = vmatmul.mubr.bf16.gmra.mrb[0].mxu0 %v3381
      %v4690 = vpop.f32.mrb[0].mxu0
      %v4691 = vadd.f32 %v4651, %v4690
      %v4692 = vpop.f32.mrb[0].mxu0
      %v4693 = vpop.f32.mrb[0].mxu0
      %v4694 = vpop.f32.mrb[0].mxu0
      %4695 = vdwg.mxu0
      %4696 = vmatprep.subr.bf16.mxu0 0
      %4697 = vmatpush1.bf16.msra.mxu0 %v4272
      %4698 = vmatprep.subr.bf16.mxu0 0
      %4699 = vmatpush1.bf16.msra.mxu0 %v4273
      %4700 = vmatprep.subr.bf16.mxu0 0
      %4701 = vmatpush1.bf16.msra.mxu0 %v4274
      %4702 = vmatprep.subr.bf16.mxu0 0
      %4703 = vmatpush1.bf16.msra.mxu0 %v4275
      %4704 = vmatprep.subr.bf16.mxu0 0
      %4705 = vmatpush1.bf16.msra.mxu0 %v4276
      %4706 = vmatprep.subr.bf16.mxu0 0
      %4707 = vmatpush1.bf16.msra.mxu0 %v4277
      %4708 = vmatprep.subr.bf16.mxu0 0
      %4709 = vmatpush1.bf16.msra.mxu0 %v4278
      %4710 = vmatprep.subr.bf16.mxu0 0
      %4711 = vmatpush1.bf16.msra.mxu0 %v4279
      %4712 = vmatprep.subr.bf16.mxu0 0
      %4713 = vmatpush1.bf16.msra.mxu0 %v4280
      %4714 = vmatprep.subr.bf16.mxu0 0
      %4715 = vmatpush1.bf16.msra.mxu0 %v4281
      %4716 = vmatprep.subr.bf16.mxu0 0
      %4717 = vmatpush1.bf16.msra.mxu0 %v4282
      %4718 = vmatprep.subr.bf16.mxu0 0
      %4719 = vmatpush1.bf16.msra.mxu0 %v4283
      %4720 = vmatprep.subr.bf16.mxu0 0
      %4721 = vmatpush1.bf16.msra.mxu0 %v4284
      %4722 = vmatprep.subr.bf16.mxu0 0
      %4723 = vmatpush1.bf16.msra.mxu0 %v4285
      %4724 = vmatprep.subr.bf16.mxu0 0
      %4725 = vmatpush1.bf16.msra.mxu0 %v4286
      %4726 = vmatprep.subr.bf16.mxu0 0
      %4727 = vmatpush1.bf16.msra.mxu0 %v4287
      %4728 = vmatprep.mubr.bf16.mxu0 %v3384
      %4729 = vmatmul.mubr.bf16.gmra.mrb[0].mxu0 %v3383
      %v4730 = vpop.f32.mrb[0].mxu0
      %v4731 = vadd.f32 %v4691, %v4730
      %v4732 = vpop.f32.mrb[0].mxu0
      %v4733 = vpop.f32.mrb[0].mxu0
      %v4734 = vpop.f32.mrb[0].mxu0
      %4735 = vdwg.mxu0
      %v4736 = vadd.f32 %v2744, %v4731
      %v4737 = vld [vmem:[%s11] sm:$0x1]
      %v4738 = vld [vmem:[%s12] sm:$0x1]
      %v4739 = vsel %vm462, %v4736, 0.0
      %4740 = vadd.xlane.f32.xlu0 %v4739
      %v4741 = vpop.xlane.xlu0 %4740
      %v4742 = vmul.f32 %v4741, %v2720
      %v4743 = vsub.f32 %v4736, %v4742
      %v4744 = vmul.f32 %v4743, %v4743
      %v4745 = vsel %vm462, %v4744, 0.0
      %4746 = vadd.xlane.f32.xlu0 %v4745
      %v4747 = vpop.xlane.xlu0 %4746
      %v4748 = vmul.f32 %v4747, %v2720
      %v4749 = vadd.f32 %v4748, 1e-05
      %v4750 = vrsqrt.pop %v4749
      %v4751 = vmul.f32 %v4743, %v4750
      %v4753 = vlaneseq
      %v4754 = vshrl.u32 %v4753, 7
      %v4755 = vsub.s32 0, %v4754
      %v4756 = vrot.slane %v4737, %v4755
      %v4758 = vmul.f32 %v4751, %v4756
      %v4760 = vlaneseq
      %v4761 = vshrl.u32 %v4760, 7
      %v4762 = vsub.s32 0, %v4761
      %v4763 = vrot.slane %v4738, %v4762
      %v4765 = vadd.f32 %v4758, %v4763
      %v4766 = vpack.c.bf16 %v4765, %v4765
      %vm4767 = vcmask 257024
      %4768 = vst.msk [vmem:[%s435] sm:$0xf] %vm4767, %v4766
      %p4769 = scmp.lt.s32.totalorder %s24, 3
      %s4770 = scalar_select %p4769, %s24, 3
      %s4771 = smul.addr %s4770, 4
      %s4772 = scalar_lea.vmem %s13, %s4771
      // Predicated region
      $region73: #{siamese_forward.4} parent=71 // pred_check
        %p4773 = pneg %p320
      $region74: #{siamese_forward.4} parent=71 // pred_check_branch
        %4775 = sbr.rel (%p4773) target = $region76
      $region75: #{siamese_forward.4} parent=71 // pred_region
        _
      $region76: #{siamese_forward.4} parent=71 // pred_fallthru
        _
    $region72: #{siamese_forward.4} parent=5 // pred_fallthru
      _
    %p4776 = scmp.le.s32.totalorder 2, %s19
    // Predicated region
    $region77: #{siamese_forward.4} parent=5 // pred_check
      %p4777 = pneg %p4776
    $region78: #{siamese_forward.4} parent=5 // pred_check_branch
      %4779 = sbr.rel (%p4777) target = $region80
    $region79: #{siamese_forward.4} parent=5 // pred_region
      %s4780 = ssub.s32 %s19, 2
      // Predicated region
      $region81: #{siamese_forward.4} parent=79 // pred_check
        %p4781 = pneg %p326
      $region82: #{siamese_forward.4} parent=79 // pred_check_branch
        %4783 = sbr.rel (%p4781) target = $region84
      $region83: #{siamese_forward.4} parent=79 // pred_region
        %p4784 = scmp.lt.s32.totalorder %s25, 3
        %s4785 = scalar_select %p4784, %s25, 3
        %s4786 = smul.addr %s4785, 4
        %s4787 = scalar_lea.vmem %s13, %s4786
      $region84: #{siamese_forward.4} parent=79 // pred_fallthru
        _
    $region80: #{siamese_forward.4} parent=5 // pred_fallthru
      _
  $region6: #{siamese_forward.4} parent=0 // loop_footer
    %s23 = sadd.s32 1, %s19
  $region7: #{siamese_forward.4} parent=0 // loop_footer_branch
    %18 = sbr.rel target = $region3
  $region8: #{siamese_forward.4} parent=0 // loop_exit
    _

// kernel: siamese_forward.3
$region0: #{siamese_forward.3}
  #allocation0 [shape = 'u32[]', space=smem, size = 0x4, offset = 0x4, fixed_abs, tag = 'smem constant byte address 0x4 - core index']
  #allocation1 [shape = 'u32[144,128]{1,0:T(1,128)}', space=vmem, size = 0x12000, scoped, tag = 'internal scratch']
  %s0 = inlined_call_operand.vmem [shape: bf16[32,32], index: 0, kind: input, shape index: {}]
  %s1 = inlined_call_operand.vmem [shape: bf16[32,96], index: 1, kind: input, shape index: {}]
  %s2 = inlined_call_operand.vmem [shape: f32[1,96], index: 2, kind: input, shape index: {}]
  %s3 = inlined_call_operand.vmem [shape: bf16[32,32], index: 3, kind: input, shape index: {}]
  %s4 = inlined_call_operand.vmem [shape: f32[1,32], index: 4, kind: input, shape index: {}]
  %s5 = inlined_call_operand.vmem [shape: f32[1,32], index: 5, kind: input, shape index: {}, may-alias: {5,11}]
  %s6 = inlined_call_operand.vmem [shape: f32[1,32], index: 6, kind: input, shape index: {}, may-alias: {6,12}]
  %s7 = inlined_call_operand.vmem [shape: bf16[32,2048], index: 7, kind: input, shape index: {}]
  %s8 = inlined_call_operand.vmem [shape: f32[1,2048], index: 8, kind: input, shape index: {}]
  %s9 = inlined_call_operand.hbm [shape: bf16[2048,32], index: 9, kind: input, shape index: {}]
  %s10 = inlined_call_operand.vmem [shape: f32[1,32], index: 10, kind: input, shape index: {}]
  %s11 = inlined_call_operand.vmem [shape: f32[1,32], index: 11, kind: input, shape index: {}, may-alias: {5,11}]
  %s12 = inlined_call_operand.vmem [shape: f32[1,32], index: 12, kind: input, shape index: {}, may-alias: {6,12}]
  %s13 = inlined_call_operand.vmem [shape: bf16[32,32], index: 13, kind: output, shape index: {}]
  %s14 = sld [smem:[#allocation0]]
  $region89: #{siamese_forward.3} parent=0
    _
  %s16 = ssub.s32 1, %s14
  %s17 = scalar_select 0, %s16, %s14
  $region1: #{siamese_forward.3} parent=0
    #allocation2 [shape = 'u8[524288]{0}', space=vmem, size = 0x80000, scoped, tag = 'input window, operand 9, single buffered']
    #allocation3 [shape = 's32[2]{0}', space=sflag, size = 0x8, scoped, tag = 'scoped memory for siamese_forward.3']
    %18 = vsyncpa [#allocation3], 0
    loop: start=0, step=1, limit=6
    $region2: #{siamese_forward.3} parent=1 // loop_pre_header
      _
    $region3: #{siamese_forward.3} parent=1 // loop_header
      %s20 = sphi 0, %s24
      %p21 = scmp.ge.s32.totalorder %s20, 6
      %s30 = sphi 0, %s32
      %s33 = sphi 0, %s30
      %s34 = sphi 0, %s33
      %s50 = sphi 0, %s34
      %s54 = sphi 0, %s54
      %s56 = sphi 0, %s54
      %s57 = sphi 0, %s56
      %s71 = sphi 0, %s57
      %s75 = sphi 0, %s75
      %s77 = sphi 0, %s75
      %s78 = sphi 0, %s77
      %s92 = sphi 0, %s78
      %s96 = sphi 0, %s96
      %s98 = sphi 0, %s96
      %s99 = sphi 0, %s98
      %s113 = sphi 0, %s99
      %s117 = sphi 0, %s117
      %s119 = sphi 0, %s117
      %s120 = sphi 0, %s119
      %s134 = sphi 0, %s120
      %s138 = sphi 0, %s138
      %s140 = sphi 0, %s138
      %s141 = sphi 0, %s140
      %s155 = sphi 0, %s141
      %s159 = sphi 0, %s159
      %s161 = sphi 0, %s159
      %s162 = sphi 0, %s161
      %s176 = sphi 0, %s162
      %s180 = sphi 0, %s180
      %s182 = sphi 0, %s180
      %s183 = sphi 0, %s182
      %s197 = sphi 0, %s183
      %s201 = sphi 0, %s201
      %s203 = sphi 0, %s201
      %s204 = sphi 0, %s203
      %s218 = sphi 0, %s204
      %s222 = sphi 0, %s222
      %s224 = sphi 0, %s222
      %s225 = sphi 0, %s224
      %s239 = sphi 0, %s225
      %s243 = sphi 0, %s243
      %s245 = sphi 0, %s243
      %s246 = sphi 0, %s245
      %s260 = sphi 0, %s246
      %s264 = sphi 0, %s264
      %s266 = sphi 0, %s264
      %s267 = sphi 0, %s266
      %s281 = sphi 0, %s267
      %s285 = sphi 0, %s285
      %s287 = sphi 0, %s285
      %s288 = sphi 0, %s287
      %s302 = sphi 0, %s288
      %s308 = sphi 0, %s310
      %s311 = sphi 0, %s308
      %s312 = sphi 0, %s311
      %s328 = sphi 0, %s312
    $region4: #{siamese_forward.3} parent=1 // loop_header_branch
      %23 = sbr.rel (%p21) target = $region8
    $region5: #{siamese_forward.3} parent=1 // loop_body
      %s25 = ssub.s32 %s20, 1
      %s26 = ssub.s32 %s20, 2
      %s27 = sadd.s32 %s20, 1
      %s28 = ssub.s32 %s20, %s27
      %p29 = scmp.eq.s32.totalorder %s28, 0
      %s31 = sadd.s32 %s30, 1
      %s32 = scalar_select %p29, %s30, %s31
      %p35 = pneg %p29
      %p36 = scmp.eq.s32.totalorder %s20, 3
      %p37 = por %p35, %p36
      %p38 = scmp.ne.s32.totalorder %s30, %s33
      %p39 = scmp.eq.s32.totalorder %s20, 0
      %p40 = por %p38, %p39
      %p41 = scmp.ne.s32.totalorder %s30, %s33
      %p42 = scmp.eq.s32.totalorder %s25, 3
      %p43 = por %p41, %p42
      %p44 = scmp.ne.s32.totalorder %s33, %s34
      %p45 = scmp.eq.s32.totalorder %s25, 0
      %p46 = por %p44, %p45
      %p47 = scmp.ne.s32.totalorder %s33, %s34
      %p48 = scmp.eq.s32.totalorder %s26, 3
      %p49 = por %p47, %p48
      %p51 = scmp.ne.s32.totalorder %s34, %s50
      %p52 = scmp.eq.s32.totalorder %s26, 0
      %p53 = por %p51, %p52
      %s55 = sadd.s32 %s54, 1
      %p58 = scmp.eq.s32.totalorder %s20, 3
      %p59 = scmp.ne.s32.totalorder %s54, %s56
      %p60 = scmp.eq.s32.totalorder %s20, 0
      %p61 = por %p59, %p60
      %p62 = scmp.ne.s32.totalorder %s54, %s56
      %p63 = scmp.eq.s32.totalorder %s25, 3
      %p64 = por %p62, %p63
      %p65 = scmp.ne.s32.totalorder %s56, %s57
      %p66 = scmp.eq.s32.totalorder %s25, 0
      %p67 = por %p65, %p66
      %p68 = scmp.ne.s32.totalorder %s56, %s57
      %p69 = scmp.eq.s32.totalorder %s26, 3
      %p70 = por %p68, %p69
      %p72 = scmp.ne.s32.totalorder %s57, %s71
      %p73 = scmp.eq.s32.totalorder %s26, 0
      %p74 = por %p72, %p73
      %s76 = sadd.s32 %s75, 1
      %p79 = scmp.eq.s32.totalorder %s20, 3
      %p80 = scmp.ne.s32.totalorder %s75, %s77
      %p81 = scmp.eq.s32.totalorder %s20, 0
      %p82 = por %p80, %p81
      %p83 = scmp.ne.s32.totalorder %s75, %s77
      %p84 = scmp.eq.s32.totalorder %s25, 3
      %p85 = por %p83, %p84
      %p86 = scmp.ne.s32.totalorder %s77, %s78
      %p87 = scmp.eq.s32.totalorder %s25, 0
      %p88 = por %p86, %p87
      %p89 = scmp.ne.s32.totalorder %s77, %s78
      %p90 = scmp.eq.s32.totalorder %s26, 3
      %p91 = por %p89, %p90
      %p93 = scmp.ne.s32.totalorder %s78, %s92
      %p94 = scmp.eq.s32.totalorder %s26, 0
      %p95 = por %p93, %p94
      %s97 = sadd.s32 %s96, 1
      %p100 = scmp.eq.s32.totalorder %s20, 3
      %p101 = scmp.ne.s32.totalorder %s96, %s98
      %p102 = scmp.eq.s32.totalorder %s20, 0
      %p103 = por %p101, %p102
      %p104 = scmp.ne.s32.totalorder %s96, %s98
      %p105 = scmp.eq.s32.totalorder %s25, 3
      %p106 = por %p104, %p105
      %p107 = scmp.ne.s32.totalorder %s98, %s99
      %p108 = scmp.eq.s32.totalorder %s25, 0
      %p109 = por %p107, %p108
      %p110 = scmp.ne.s32.totalorder %s98, %s99
      %p111 = scmp.eq.s32.totalorder %s26, 3
      %p112 = por %p110, %p111
      %p114 = scmp.ne.s32.totalorder %s99, %s113
      %p115 = scmp.eq.s32.totalorder %s26, 0
      %p116 = por %p114, %p115
      %s118 = sadd.s32 %s117, 1
      %p121 = scmp.eq.s32.totalorder %s20, 3
      %p122 = scmp.ne.s32.totalorder %s117, %s119
      %p123 = scmp.eq.s32.totalorder %s20, 0
      %p124 = por %p122, %p123
      %p125 = scmp.ne.s32.totalorder %s117, %s119
      %p126 = scmp.eq.s32.totalorder %s25, 3
      %p127 = por %p125, %p126
      %p128 = scmp.ne.s32.totalorder %s119, %s120
      %p129 = scmp.eq.s32.totalorder %s25, 0
      %p130 = por %p128, %p129
      %p131 = scmp.ne.s32.totalorder %s119, %s120
      %p132 = scmp.eq.s32.totalorder %s26, 3
      %p133 = por %p131, %p132
      %p135 = scmp.ne.s32.totalorder %s120, %s134
      %p136 = scmp.eq.s32.totalorder %s26, 0
      %p137 = por %p135, %p136
      %s139 = sadd.s32 %s138, 1
      %p142 = scmp.eq.s32.totalorder %s20, 3
      %p143 = scmp.ne.s32.totalorder %s138, %s140
      %p144 = scmp.eq.s32.totalorder %s20, 0
      %p145 = por %p143, %p144
      %p146 = scmp.ne.s32.totalorder %s138, %s140
      %p147 = scmp.eq.s32.totalorder %s25, 3
      %p148 = por %p146, %p147
      %p149 = scmp.ne.s32.totalorder %s140, %s141
      %p150 = scmp.eq.s32.totalorder %s25, 0
      %p151 = por %p149, %p150
      %p152 = scmp.ne.s32.totalorder %s140, %s141
      %p153 = scmp.eq.s32.totalorder %s26, 3
      %p154 = por %p152, %p153
      %p156 = scmp.ne.s32.totalorder %s141, %s155
      %p157 = scmp.eq.s32.totalorder %s26, 0
      %p158 = por %p156, %p157
      %s160 = sadd.s32 %s159, 1
      %p163 = scmp.eq.s32.totalorder %s20, 3
      %p164 = scmp.ne.s32.totalorder %s159, %s161
      %p165 = scmp.eq.s32.totalorder %s20, 0
      %p166 = por %p164, %p165
      %p167 = scmp.ne.s32.totalorder %s159, %s161
      %p168 = scmp.eq.s32.totalorder %s25, 3
      %p169 = por %p167, %p168
      %p170 = scmp.ne.s32.totalorder %s161, %s162
      %p171 = scmp.eq.s32.totalorder %s25, 0
      %p172 = por %p170, %p171
      %p173 = scmp.ne.s32.totalorder %s161, %s162
      %p174 = scmp.eq.s32.totalorder %s26, 3
      %p175 = por %p173, %p174
      %p177 = scmp.ne.s32.totalorder %s162, %s176
      %p178 = scmp.eq.s32.totalorder %s26, 0
      %p179 = por %p177, %p178
      %s181 = sadd.s32 %s180, 1
      %p184 = scmp.eq.s32.totalorder %s20, 3
      %p185 = scmp.ne.s32.totalorder %s180, %s182
      %p186 = scmp.eq.s32.totalorder %s20, 0
      %p187 = por %p185, %p186
      %p188 = scmp.ne.s32.totalorder %s180, %s182
      %p189 = scmp.eq.s32.totalorder %s25, 3
      %p190 = por %p188, %p189
      %p191 = scmp.ne.s32.totalorder %s182, %s183
      %p192 = scmp.eq.s32.totalorder %s25, 0
      %p193 = por %p191, %p192
      %p194 = scmp.ne.s32.totalorder %s182, %s183
      %p195 = scmp.eq.s32.totalorder %s26, 3
      %p196 = por %p194, %p195
      %p198 = scmp.ne.s32.totalorder %s183, %s197
      %p199 = scmp.eq.s32.totalorder %s26, 0
      %p200 = por %p198, %p199
      %s202 = sadd.s32 %s201, 1
      %p205 = scmp.eq.s32.totalorder %s20, 3
      %p206 = scmp.ne.s32.totalorder %s201, %s203
      %p207 = scmp.eq.s32.totalorder %s20, 0
      %p208 = por %p206, %p207
      %p209 = scmp.ne.s32.totalorder %s201, %s203
      %p210 = scmp.eq.s32.totalorder %s25, 3
      %p211 = por %p209, %p210
      %p212 = scmp.ne.s32.totalorder %s203, %s204
      %p213 = scmp.eq.s32.totalorder %s25, 0
      %p214 = por %p212, %p213
      %p215 = scmp.ne.s32.totalorder %s203, %s204
      %p216 = scmp.eq.s32.totalorder %s26, 3
      %p217 = por %p215, %p216
      %p219 = scmp.ne.s32.totalorder %s204, %s218
      %p220 = scmp.eq.s32.totalorder %s26, 0
      %p221 = por %p219, %p220
      %s223 = sadd.s32 %s222, 1
      %p226 = scmp.eq.s32.totalorder %s20, 3
      %p227 = scmp.ne.s32.totalorder %s222, %s224
      %p228 = scmp.eq.s32.totalorder %s20, 0
      %p229 = por %p227, %p228
      %p230 = scmp.ne.s32.totalorder %s222, %s224
      %p231 = scmp.eq.s32.totalorder %s25, 3
      %p232 = por %p230, %p231
      %p233 = scmp.ne.s32.totalorder %s224, %s225
      %p234 = scmp.eq.s32.totalorder %s25, 0
      %p235 = por %p233, %p234
      %p236 = scmp.ne.s32.totalorder %s224, %s225
      %p237 = scmp.eq.s32.totalorder %s26, 3
      %p238 = por %p236, %p237
      %p240 = scmp.ne.s32.totalorder %s225, %s239
      %p241 = scmp.eq.s32.totalorder %s26, 0
      %p242 = por %p240, %p241
      %s244 = sadd.s32 %s243, 1
      %p247 = scmp.eq.s32.totalorder %s20, 3
      %p248 = scmp.ne.s32.totalorder %s243, %s245
      %p249 = scmp.eq.s32.totalorder %s20, 0
      %p250 = por %p248, %p249
      %p251 = scmp.ne.s32.totalorder %s243, %s245
      %p252 = scmp.eq.s32.totalorder %s25, 3
      %p253 = por %p251, %p252
      %p254 = scmp.ne.s32.totalorder %s245, %s246
      %p255 = scmp.eq.s32.totalorder %s25, 0
      %p256 = por %p254, %p255
      %p257 = scmp.ne.s32.totalorder %s245, %s246
      %p258 = scmp.eq.s32.totalorder %s26, 3
      %p259 = por %p257, %p258
      %p261 = scmp.ne.s32.totalorder %s246, %s260
      %p262 = scmp.eq.s32.totalorder %s26, 0
      %p263 = por %p261, %p262
      %s265 = sadd.s32 %s264, 1
      %p268 = scmp.eq.s32.totalorder %s20, 3
      %p269 = scmp.ne.s32.totalorder %s264, %s266
      %p270 = scmp.eq.s32.totalorder %s20, 0
      %p271 = por %p269, %p270
      %p272 = scmp.ne.s32.totalorder %s264, %s266
      %p273 = scmp.eq.s32.totalorder %s25, 3
      %p274 = por %p272, %p273
      %p275 = scmp.ne.s32.totalorder %s266, %s267
      %p276 = scmp.eq.s32.totalorder %s25, 0
      %p277 = por %p275, %p276
      %p278 = scmp.ne.s32.totalorder %s266, %s267
      %p279 = scmp.eq.s32.totalorder %s26, 3
      %p280 = por %p278, %p279
      %p282 = scmp.ne.s32.totalorder %s267, %s281
      %p283 = scmp.eq.s32.totalorder %s26, 0
      %p284 = por %p282, %p283
      %s286 = sadd.s32 %s285, 1
      %p289 = scmp.eq.s32.totalorder %s20, 3
      %p290 = scmp.ne.s32.totalorder %s285, %s287
      %p291 = scmp.eq.s32.totalorder %s20, 0
      %p292 = por %p290, %p291
      %p293 = scmp.ne.s32.totalorder %s285, %s287
      %p294 = scmp.eq.s32.totalorder %s25, 3
      %p295 = por %p293, %p294
      %p296 = scmp.ne.s32.totalorder %s287, %s288
      %p297 = scmp.eq.s32.totalorder %s25, 0
      %p298 = por %p296, %p297
      %p299 = scmp.ne.s32.totalorder %s287, %s288
      %p300 = scmp.eq.s32.totalorder %s26, 3
      %p301 = por %p299, %p300
      %p303 = scmp.ne.s32.totalorder %s288, %s302
      %p304 = scmp.eq.s32.totalorder %s26, 0
      %p305 = por %p303, %p304
      %s306 = ssub.s32 %s20, %s27
      %p307 = scmp.eq.s32.totalorder %s306, 0
      %s309 = sadd.s32 %s308, 1
      %s310 = scalar_select %p307, %s308, %s309
      %p313 = pneg %p307
      %p314 = scmp.eq.s32.totalorder %s20, 3
      %p315 = por %p313, %p314
      %p316 = scmp.ne.s32.totalorder %s308, %s311
      %p317 = scmp.eq.s32.totalorder %s20, 0
      %p318 = por %p316, %p317
      %p319 = scmp.ne.s32.totalorder %s308, %s311
      %p320 = scmp.eq.s32.totalorder %s25, 3
      %p321 = por %p319, %p320
      %p322 = scmp.ne.s32.totalorder %s311, %s312
      %p323 = scmp.eq.s32.totalorder %s25, 0
      %p324 = por %p322, %p323
      %p325 = scmp.ne.s32.totalorder %s311, %s312
      %p326 = scmp.eq.s32.totalorder %s26, 3
      %p327 = por %p325, %p326
      %p329 = scmp.ne.s32.totalorder %s312, %s328
      %p330 = scmp.eq.s32.totalorder %s26, 0
      %p331 = por %p329, %p330
      %p332 = scmp.le.s32.totalorder 1, %s20
      %p333 = scmp.lt.s32.totalorder %s20, 5
      %p334 = pnand %p332, %p333
      %p335 = pneg %p334
      // Predicated region
      $region9: #{siamese_forward.3} parent=5 // pred_check
        _
      $region10: #{siamese_forward.3} parent=5 // pred_check_branch
        %337 = sbr.rel (%p334) target = $region12
      $region11: #{siamese_forward.3} parent=5 // pred_region
        %s338 = ssub.s32 %s20, 1
        // Predicated region
        $region13: #{siamese_forward.3} parent=11 // pred_check
          %p339 = pneg %p67
        $region14: #{siamese_forward.3} parent=11 // pred_check_branch
          %341 = sbr.rel (%p339) target = $region16
        $region15: #{siamese_forward.3} parent=11 // pred_region
          _
        $region16: #{siamese_forward.3} parent=11 // pred_fallthru
          _
        // Predicated region
        $region17: #{siamese_forward.3} parent=11 // pred_check
          %p342 = pneg %p88
        $region18: #{siamese_forward.3} parent=11 // pred_check_branch
          %344 = sbr.rel (%p342) target = $region20
        $region19: #{siamese_forward.3} parent=11 // pred_region
          _
        $region20: #{siamese_forward.3} parent=11 // pred_fallthru
          _
        // Predicated region
        $region21: #{siamese_forward.3} parent=11 // pred_check
          %p345 = pneg %p109
        $region22: #{siamese_forward.3} parent=11 // pred_check_branch
          %347 = sbr.rel (%p345) target = $region24
        $region23: #{siamese_forward.3} parent=11 // pred_region
          _
        $region24: #{siamese_forward.3} parent=11 // pred_fallthru
          _
        // Predicated region
        $region25: #{siamese_forward.3} parent=11 // pred_check
          %p348 = pneg %p130
        $region26: #{siamese_forward.3} parent=11 // pred_check_branch
          %350 = sbr.rel (%p348) target = $region28
        $region27: #{siamese_forward.3} parent=11 // pred_region
          _
        $region28: #{siamese_forward.3} parent=11 // pred_fallthru
          _
        // Predicated region
        $region29: #{siamese_forward.3} parent=11 // pred_check
          %p351 = pneg %p151
        $region30: #{siamese_forward.3} parent=11 // pred_check_branch
          %353 = sbr.rel (%p351) target = $region32
        $region31: #{siamese_forward.3} parent=11 // pred_region
          _
        $region32: #{siamese_forward.3} parent=11 // pred_fallthru
          _
        // Predicated region
        $region33: #{siamese_forward.3} parent=11 // pred_check
          %p354 = pneg %p172
        $region34: #{siamese_forward.3} parent=11 // pred_check_branch
          %356 = sbr.rel (%p354) target = $region36
        $region35: #{siamese_forward.3} parent=11 // pred_region
          _
        $region36: #{siamese_forward.3} parent=11 // pred_fallthru
          _
        // Predicated region
        $region37: #{siamese_forward.3} parent=11 // pred_check
          %p357 = pneg %p193
        $region38: #{siamese_forward.3} parent=11 // pred_check_branch
          %359 = sbr.rel (%p357) target = $region40
        $region39: #{siamese_forward.3} parent=11 // pred_region
          _
        $region40: #{siamese_forward.3} parent=11 // pred_fallthru
          _
        // Predicated region
        $region41: #{siamese_forward.3} parent=11 // pred_check
          %p360 = pneg %p214
        $region42: #{siamese_forward.3} parent=11 // pred_check_branch
          %362 = sbr.rel (%p360) target = $region44
        $region43: #{siamese_forward.3} parent=11 // pred_region
          _
        $region44: #{siamese_forward.3} parent=11 // pred_fallthru
          _
        // Predicated region
        $region45: #{siamese_forward.3} parent=11 // pred_check
          %p363 = pneg %p235
        $region46: #{siamese_forward.3} parent=11 // pred_check_branch
          %365 = sbr.rel (%p363) target = $region48
        $region47: #{siamese_forward.3} parent=11 // pred_region
          %s367 = ssub.s32 16384, 16384
          %368 = vsyncadd [#allocation3], %s367
          %s369 = sshll.u32 [#allocation2], 4
          %s370 = int_to_ptr.vmem [resolvable:$true] %s369
          %375 = dma.hbm_to_vmem [thread:$0]  %s9, 16384, %s370, [#allocation3], 64, 64, 4
        $region48: #{siamese_forward.3} parent=11 // pred_fallthru
          _
        // Predicated region
        $region49: #{siamese_forward.3} parent=11 // pred_check
          %p376 = pneg %p256
        $region50: #{siamese_forward.3} parent=11 // pred_check_branch
          %378 = sbr.rel (%p376) target = $region52
        $region51: #{siamese_forward.3} parent=11 // pred_region
          _
        $region52: #{siamese_forward.3} parent=11 // pred_fallthru
          _
        // Predicated region
        $region53: #{siamese_forward.3} parent=11 // pred_check
          %p379 = pneg %p277
        $region54: #{siamese_forward.3} parent=11 // pred_check_branch
          %381 = sbr.rel (%p379) target = $region56
        $region55: #{siamese_forward.3} parent=11 // pred_region
          _
        $region56: #{siamese_forward.3} parent=11 // pred_fallthru
          _
        // Predicated region
        $region57: #{siamese_forward.3} parent=11 // pred_check
          %p382 = pneg %p298
        $region58: #{siamese_forward.3} parent=11 // pred_check_branch
          %384 = sbr.rel (%p382) target = $region60
        $region59: #{siamese_forward.3} parent=11 // pred_region
          _
        $region60: #{siamese_forward.3} parent=11 // pred_fallthru
          _
      $region12: #{siamese_forward.3} parent=5 // pred_fallthru
        _
      %p385 = scmp.lt.s32.totalorder %s20, 4
      // Predicated region
      $region61: #{siamese_forward.3} parent=5 // pred_check
        %p386 = pneg %p385
      $region62: #{siamese_forward.3} parent=5 // pred_check_branch
        %388 = sbr.rel (%p386) target = $region64
      $region63: #{siamese_forward.3} parent=5 // pred_region
        // Predicated region
        $region65: #{siamese_forward.3} parent=63 // pred_check
          %p389 = pneg %p40
        $region66: #{siamese_forward.3} parent=63 // pred_check_branch
          %391 = sbr.rel (%p389) target = $region68
        $region67: #{siamese_forward.3} parent=63 // pred_region
          %p392 = scmp.lt.s32.totalorder %s20, 3
          %s393 = scalar_select %p392, %s20, 3
          %s394 = smul.addr %s393, 4
          %s395 = scalar_lea.vmem %s0, %s394
        $region68: #{siamese_forward.3} parent=63 // pred_fallthru
          _
      $region64: #{siamese_forward.3} parent=5 // pred_fallthru
        _
      %p396 = scmp.le.s32.totalorder 1, %s20
      %p397 = scmp.lt.s32.totalorder %s20, 5
      %p398 = pnand %p396, %p397
      %p399 = pneg %p398
      // Predicated region
      $region69: #{siamese_forward.3} parent=5 // pred_check
        _
      $region70: #{siamese_forward.3} parent=5 // pred_check_branch
        %401 = sbr.rel (%p398) target = $region72
      $region71: #{siamese_forward.3} parent=5 // pred_region
        %s402 = ssub.s32 %s20, 1
        // Predicated region
        $region73: #{siamese_forward.3} parent=71 // pred_check
          %p403 = pneg %p235
        $region74: #{siamese_forward.3} parent=71 // pred_check_branch
          %405 = sbr.rel (%p403) target = $region76
        $region75: #{siamese_forward.3} parent=71 // pred_region
          %406 = dma.done [#allocation3], 16384
        $region76: #{siamese_forward.3} parent=71 // pred_fallthru
          _
        %p407 = scmp.lt.s32.totalorder %s25, 3
        %s408 = scalar_select %p407, %s25, 3
        %s409 = smul.addr %s408, 4
        %s410 = scalar_lea.vmem %s0, %s409
        %p411 = pneg %p46
        %p412 = pneg %p43
        %p413 = pneg %p67
        %p414 = pneg %p64
        %p415 = pneg %p88
        %p416 = pneg %p85
        %p417 = pneg %p109
        %p418 = pneg %p106
        %p419 = pneg %p130
        %p420 = pneg %p127
        %p421 = pneg %p151
        %p422 = pneg %p148
        %p423 = pneg %p172
        %p424 = pneg %p169
        %p425 = pneg %p193
        %p426 = pneg %p190
        %p427 = pneg %p214
        %p428 = pneg %p211
        %p429 = pneg %p235
        %p430 = pneg %p232
        %p431 = pneg %p256
        %p432 = pneg %p253
        %p433 = pneg %p277
        %p434 = pneg %p274
        %p435 = pneg %p298
        %p436 = pneg %p295
        %p437 = pneg %p324
        %p438 = pneg %p321
        %p439 = scmp.lt.s32.totalorder %s25, 3
        %s440 = scalar_select %p439, %s25, 3
        %s441 = smul.addr %s440, 4
        %s442 = scalar_lea.vmem %s13, %s441
        %p443 = scmp.lt.s32.totalorder %s25, 3
        %s444 = scalar_select %p443, %s25, 3
        %s445 = smul.addr %s444, 4
        %s446 = scalar_lea.vmem %s0, %s445
        %p447 = scmp.lt.s32.totalorder %s25, 3
        %s448 = scalar_select %p447, %s25, 3
        %s449 = smul.addr %s448, 4
        %s450 = scalar_lea.vmem %s13, %s449
        %v452 = vld [vmem:[%s446] sm:$0xf]
        %v453 = vunpack.c.l.bf16 %v452
        %v454 = vld [vmem:[%s1] sm:$0xf]
        %v455 = vld [vmem:[%s1 + $0x4] sm:$0xf]
        %v456 = vld [vmem:[%s1 + $0x8] sm:$0xf]
        %v457 = vld [vmem:[%s1 + $0xc] sm:$0xf]
        %v458 = vld [vmem:[%s2] sm:$0x1]
        %v460 = vlaneseq
        %v461 = vshrl.u32 %v460, 7
        %v462 = vsub.s32 0, %v461
        %v463 = vrot.slane %v458, %v462
        %v469 = vunpack.c.l.b16 %v454
        %v470 = vunpack.c.l.b16 %v455
        %v471 = vunpack.c.l.b16 %v456
        %v472 = vunpack.c.l.b16 %v457
        %v473 = vpack.c.b16 %v470, %v469
        %v474 = vpack.c.b16 %v472, %v471
        %vm477 = vcmask 261120
        %v479 = vsel %vm477, %v452, 0
        %481 = vmatprep.subr.bf16.mxu0 0
        %482 = vmatpush1.bf16.msra.mxu0 %v473
        %483 = vmatprep.subr.bf16.mxu0 0
        %484 = vmatpush1.bf16.msra.mxu0 %v474
        %485 = vmatprep.subr.bf16.mxu0 0
        %486 = vmatpush1.bf16.msra.mxu0 0
        %487 = vmatprep.subr.bf16.mxu0 0
        %488 = vmatpush1.bf16.msra.mxu0 0
        %489 = vmatprep.subr.bf16.mxu0 0
        %490 = vmatpush1.bf16.msra.mxu0 0
        %491 = vmatprep.subr.bf16.mxu0 0
        %492 = vmatpush1.bf16.msra.mxu0 0
        %493 = vmatprep.subr.bf16.mxu0 0
        %494 = vmatpush1.bf16.msra.mxu0 0
        %495 = vmatprep.subr.bf16.mxu0 0
        %496 = vmatpush1.bf16.msra.mxu0 0
        %497 = vmatprep.subr.bf16.mxu0 0
        %498 = vmatpush1.bf16.msra.mxu0 0
        %499 = vmatprep.subr.bf16.mxu0 0
        %500 = vmatpush1.bf16.msra.mxu0 0
        %501 = vmatprep.subr.bf16.mxu0 0
        %502 = vmatpush1.bf16.msra.mxu0 0
        %503 = vmatprep.subr.bf16.mxu0 0
        %504 = vmatpush1.bf16.msra.mxu0 0
        %505 = vmatprep.subr.bf16.mxu0 0
        %506 = vmatpush1.bf16.msra.mxu0 0
        %507 = vmatprep.subr.bf16.mxu0 0
        %508 = vmatpush1.bf16.msra.mxu0 0
        %509 = vmatprep.subr.bf16.mxu0 0
        %510 = vmatpush1.bf16.msra.mxu0 0
        %511 = vmatprep.subr.bf16.mxu0 0
        %512 = vmatpush1.bf16.msra.mxu0 0
        %513 = vmatprep.mubr.bf16.mxu0 0
        %514 = vmatmul.mubr.bf16.gmra.mrb[0].mxu0 %v479
        %v515 = vpop.f32.mrb[0].mxu0
        %v516 = vadd.f32 %v463, %v515
        %v517 = vpop.f32.mrb[0].mxu0
        %v518 = vpop.f32.mrb[0].mxu0
        %v519 = vpop.f32.mrb[0].mxu0
        %520 = vdwg.mxu0
        %v521 = vmul.f32 %v516, 0.35355338
        %v522 = vpack.c.bf16 %v521, %v521
        %v523 = vpack.c.bf16 %v516, %v516
        %v526 = vunpack.c.l.s4 1966171168
        %v527 = vunpack.c.0.s8 %v526
        %v528 = vlaneseq
        %v529 = vshrl.u32 %v528, 7
        %v530 = vsub.s32 %v527, %v529
        %v531 = vrot.slane %v522, %v530
        %v532 = vcombine.high %v531, %v531
        %v534 = vunpack.c.l.s4 1966171168
        %v535 = vunpack.c.0.s8 %v534
        %v536 = vlaneseq
        %v537 = vshrl.u32 %v536, 7
        %v538 = vsub.s32 %v535, %v537
        %v539 = vrot.slane %v531, %v538
        %v541 = vunpack.c.l.s4 1966171168
        %v542 = vunpack.c.0.s8 %v541
        %v543 = vlaneseq
        %v544 = vshrl.u32 %v543, 7
        %v545 = vsub.s32 %v542, %v544
        %v546 = vrot.slane %v532, %v545
        %v547 = vcombine.high %v539, %v539
        %v548 = vcombine.high %v546, %v546
        %549 = vrot.lane.b32.xlu0 %v539, 120
        %v550 = vpop.permute.xlu0 %549
        %551 = vrot.lane.b32.xlu0 %v546, 120
        %v552 = vpop.permute.xlu0 %551
        %553 = vrot.lane.b32.xlu0 %v547, 120
        %v554 = vpop.permute.xlu0 %553
        %555 = vrot.lane.b32.xlu0 %v548, 120
        %v556 = vpop.permute.xlu0 %555
        %557 = vrot.lane.b32.xlu0 %v539, 112
        %v558 = vpop.permute.xlu0 %557
        %559 = vrot.lane.b32.xlu0 %v546, 112
        %v560 = vpop.permute.xlu0 %559
        %561 = vrot.lane.b32.xlu0 %v547, 112
        %v562 = vpop.permute.xlu0 %561
        %563 = vrot.lane.b32.xlu0 %v548, 112
        %v564 = vpop.permute.xlu0 %563
        %565 = vrot.lane.b32.xlu0 %v539, 104
        %v566 = vpop.permute.xlu0 %565
        %567 = vrot.lane.b32.xlu0 %v546, 104
        %v568 = vpop.permute.xlu0 %567
        %569 = vrot.lane.b32.xlu0 %v547, 104
        %v570 = vpop.permute.xlu0 %569
        %571 = vrot.lane.b32.xlu0 %v548, 104
        %v572 = vpop.permute.xlu0 %571
        %v575 = vunpack.c.l.s4 1966171168
        %v576 = vunpack.c.0.s8 %v575
        %v577 = vlaneseq
        %v578 = vshrl.u32 %v577, 7
        %v579 = vsub.s32 %v576, %v578
        %v580 = vrot.slane %v523, %v579
        %v581 = vcombine.high %v580, %v580
        %v583 = vunpack.c.l.s4 1966171168
        %v584 = vunpack.c.0.s8 %v583
        %v585 = vlaneseq
        %v586 = vshrl.u32 %v585, 7
        %v587 = vsub.s32 %v584, %v586
        %v588 = vrot.slane %v580, %v587
        %v590 = vunpack.c.l.s4 1966171168
        %v591 = vunpack.c.0.s8 %v590
        %v592 = vlaneseq
        %v593 = vshrl.u32 %v592, 7
        %v594 = vsub.s32 %v591, %v593
        %v595 = vrot.slane %v581, %v594
        %v596 = vcombine.high %v588, %v588
        %v597 = vcombine.high %v595, %v595
        %598 = vrot.lane.b32.xlu0 %v588, 120
        %v599 = vpop.permute.xlu0 %598
        %600 = vrot.lane.b32.xlu0 %v595, 120
        %v601 = vpop.permute.xlu0 %600
        %602 = vrot.lane.b32.xlu0 %v596, 120
        %v603 = vpop.permute.xlu0 %602
        %604 = vrot.lane.b32.xlu0 %v597, 120
        %v605 = vpop.permute.xlu0 %604
        %606 = vrot.lane.b32.xlu0 %v588, 112
        %v607 = vpop.permute.xlu0 %606
        %608 = vrot.lane.b32.xlu0 %v595, 112
        %v609 = vpop.permute.xlu0 %608
        %610 = vrot.lane.b32.xlu0 %v596, 112
        %v611 = vpop.permute.xlu0 %610
        %612 = vrot.lane.b32.xlu0 %v597, 112
        %v613 = vpop.permute.xlu0 %612
        %614 = vrot.lane.b32.xlu0 %v588, 104
        %v615 = vpop.permute.xlu0 %614
        %616 = vrot.lane.b32.xlu0 %v595, 104
        %v617 = vpop.permute.xlu0 %616
        %618 = vrot.lane.b32.xlu0 %v596, 104
        %v619 = vpop.permute.xlu0 %618
        %620 = vrot.lane.b32.xlu0 %v597, 104
        %v621 = vpop.permute.xlu0 %620
        %v623 = vunpack.c.l.s4 1966171168
        %v624 = vunpack.c.0.s8 %v623
        %v625 = vlaneseq
        %v626 = vshrl.u32 %v625, 7
        %v627 = vsub.s32 %v624, %v626
        %v628 = vrot.slane %v588, %v627
        %v630 = vunpack.c.l.s4 1966171168
        %v631 = vunpack.c.0.s8 %v630
        %v632 = vlaneseq
        %v633 = vshrl.u32 %v632, 7
        %v634 = vsub.s32 %v631, %v633
        %v635 = vrot.slane %v628, %v634
        %636 = vrot.lane.b32.xlu0 %v635, 96
        %v637 = vpop.permute.xlu0 %636
        %vm638 = vcmask 64512
        %v640 = vsel %vm638, %v539, 0
        %v643 = vsel %vm638, %v637, 0
        %645 = vmatprep.subr.bf16.mxu0 0
        %646 = vmatpush1.bf16.xpose.msra.mxu0 %v643
        %647 = vmatprep.subr.bf16.mxu0 0
        %648 = vmatpush1.bf16.xpose.msra.mxu0 0
        %649 = vmatprep.subr.bf16.mxu0 0
        %650 = vmatpush1.bf16.xpose.msra.mxu0 0
        %651 = vmatprep.subr.bf16.mxu0 0
        %652 = vmatpush1.bf16.xpose.msra.mxu0 0
        %653 = vmatprep.subr.bf16.mxu0 0
        %654 = vmatpush1.bf16.xpose.msra.mxu0 0
        %655 = vmatprep.subr.bf16.mxu0 0
        %656 = vmatpush1.bf16.xpose.msra.mxu0 0
        %657 = vmatprep.subr.bf16.mxu0 0
        %658 = vmatpush1.bf16.xpose.msra.mxu0 0
        %659 = vmatprep.subr.bf16.mxu0 0
        %660 = vmatpush1.bf16.xpose.msra.mxu0 0
        %661 = vmatprep.subr.bf16.mxu0 0
        %662 = vmatpush1.bf16.xpose.msra.mxu0 0
        %663 = vmatprep.subr.bf16.mxu0 0
        %664 = vmatpush1.bf16.xpose.msra.mxu0 0
        %665 = vmatprep.subr.bf16.mxu0 0
        %666 = vmatpush1.bf16.xpose.msra.mxu0 0
        %667 = vmatprep.subr.bf16.mxu0 0
        %668 = vmatpush1.bf16.xpose.msra.mxu0 0
        %669 = vmatprep.subr.bf16.mxu0 0
        %670 = vmatpush1.bf16.xpose.msra.mxu0 0
        %671 = vmatprep.subr.bf16.mxu0 0
        %672 = vmatpush1.bf16.xpose.msra.mxu0 0
        %673 = vmatprep.subr.bf16.mxu0 0
        %674 = vmatpush1.bf16.xpose.msra.mxu0 0
        %675 = vmatprep.subr.bf16.mxu0 0
        %676 = vmatpush1.bf16.xpose.msra.mxu0 0
        %677 = vmatprep.mubr.bf16.mxu0 0
        %678 = vmatmul.mubr.bf16.gmra.mrb[0].mxu0 %v640
        %v679 = vpop.f32.mrb[0].mxu0
        %v680 = vadd.f32 0.0, %v679
        %v681 = vpop.f32.mrb[0].mxu0
        %v682 = vpop.f32.mrb[0].mxu0
        %v683 = vpop.f32.mrb[0].mxu0
        %684 = vdwg.mxu0
        %v686 = vunpack.c.l.s4 1966171168
        %v687 = vunpack.c.0.s8 %v686
        %v688 = vlaneseq
        %v689 = vshrl.u32 %v688, 7
        %v690 = vsub.s32 %v687, %v689
        %v691 = vrot.slane %v595, %v690
        %v693 = vunpack.c.l.s4 1966171168
        %v694 = vunpack.c.0.s8 %v693
        %v695 = vlaneseq
        %v696 = vshrl.u32 %v695, 7
        %v697 = vsub.s32 %v694, %v696
        %v698 = vrot.slane %v691, %v697
        %699 = vrot.lane.b32.xlu0 %v698, 96
        %v700 = vpop.permute.xlu0 %699
        %v702 = vsel %vm638, %v546, 0
        %v705 = vsel %vm638, %v700, 0
        %707 = vmatprep.subr.bf16.mxu0 0
        %708 = vmatpush1.bf16.xpose.msra.mxu0 %v705
        %709 = vmatprep.subr.bf16.mxu0 0
        %710 = vmatpush1.bf16.xpose.msra.mxu0 0
        %711 = vmatprep.subr.bf16.mxu0 0
        %712 = vmatpush1.bf16.xpose.msra.mxu0 0
        %713 = vmatprep.subr.bf16.mxu0 0
        %714 = vmatpush1.bf16.xpose.msra.mxu0 0
        %715 = vmatprep.subr.bf16.mxu0 0
        %716 = vmatpush1.bf16.xpose.msra.mxu0 0
        %717 = vmatprep.subr.bf16.mxu0 0
        %718 = vmatpush1.bf16.xpose.msra.mxu0 0
        %719 = vmatprep.subr.bf16.mxu0 0
        %720 = vmatpush1.bf16.xpose.msra.mxu0 0
        %721 = vmatprep.subr.bf16.mxu0 0
        %722 = vmatpush1.bf16.xpose.msra.mxu0 0
        %723 = vmatprep.subr.bf16.mxu0 0
        %724 = vmatpush1.bf16.xpose.msra.mxu0 0
        %725 = vmatprep.subr.bf16.mxu0 0
        %726 = vmatpush1.bf16.xpose.msra.mxu0 0
        %727 = vmatprep.subr.bf16.mxu0 0
        %728 = vmatpush1.bf16.xpose.msra.mxu0 0
        %729 = vmatprep.subr.bf16.mxu0 0
        %730 = vmatpush1.bf16.xpose.msra.mxu0 0
        %731 = vmatprep.subr.bf16.mxu0 0
        %732 = vmatpush1.bf16.xpose.msra.mxu0 0
        %733 = vmatprep.subr.bf16.mxu0 0
        %734 = vmatpush1.bf16.xpose.msra.mxu0 0
        %735 = vmatprep.subr.bf16.mxu0 0
        %736 = vmatpush1.bf16.xpose.msra.mxu0 0
        %737 = vmatprep.subr.bf16.mxu0 0
        %738 = vmatpush1.bf16.xpose.msra.mxu0 0
        %739 = vmatprep.mubr.bf16.mxu0 0
        %740 = vmatmul.mubr.bf16.gmra.mrb[0].mxu0 %v702
        %v741 = vpop.f32.mrb[0].mxu0
        %v742 = vadd.f32 0.0, %v741
        %v743 = vpop.f32.mrb[0].mxu0
        %v744 = vpop.f32.mrb[0].mxu0
        %v745 = vpop.f32.mrb[0].mxu0
        %746 = vdwg.mxu0
        %v748 = vunpack.c.l.s4 1966171168
        %v749 = vunpack.c.0.s8 %v748
        %v750 = vlaneseq
        %v751 = vshrl.u32 %v750, 7
        %v752 = vsub.s32 %v749, %v751
        %v753 = vrot.slane %v596, %v752
        %v755 = vunpack.c.l.s4 1966171168
        %v756 = vunpack.c.0.s8 %v755
        %v757 = vlaneseq
        %v758 = vshrl.u32 %v757, 7
        %v759 = vsub.s32 %v756, %v758
        %v760 = vrot.slane %v753, %v759
        %761 = vrot.lane.b32.xlu0 %v760, 96
        %v762 = vpop.permute.xlu0 %761
        %v764 = vsel %vm638, %v547, 0
        %v767 = vsel %vm638, %v762, 0
        %769 = vmatprep.subr.bf16.mxu0 0
        %770 = vmatpush1.bf16.xpose.msra.mxu0 %v767
        %771 = vmatprep.subr.bf16.mxu0 0
        %772 = vmatpush1.bf16.xpose.msra.mxu0 0
        %773 = vmatprep.subr.bf16.mxu0 0
        %774 = vmatpush1.bf16.xpose.msra.mxu0 0
        %775 = vmatprep.subr.bf16.mxu0 0
        %776 = vmatpush1.bf16.xpose.msra.mxu0 0
        %777 = vmatprep.subr.bf16.mxu0 0
        %778 = vmatpush1.bf16.xpose.msra.mxu0 0
        %779 = vmatprep.subr.bf16.mxu0 0
        %780 = vmatpush1.bf16.xpose.msra.mxu0 0
        %781 = vmatprep.subr.bf16.mxu0 0
        %782 = vmatpush1.bf16.xpose.msra.mxu0 0
        %783 = vmatprep.subr.bf16.mxu0 0
        %784 = vmatpush1.bf16.xpose.msra.mxu0 0
        %785 = vmatprep.subr.bf16.mxu0 0
        %786 = vmatpush1.bf16.xpose.msra.mxu0 0
        %787 = vmatprep.subr.bf16.mxu0 0
        %788 = vmatpush1.bf16.xpose.msra.mxu0 0
        %789 = vmatprep.subr.bf16.mxu0 0
        %790 = vmatpush1.bf16.xpose.msra.mxu0 0
        %791 = vmatprep.subr.bf16.mxu0 0
        %792 = vmatpush1.bf16.xpose.msra.mxu0 0
        %793 = vmatprep.subr.bf16.mxu0 0
        %794 = vmatpush1.bf16.xpose.msra.mxu0 0
        %795 = vmatprep.subr.bf16.mxu0 0
        %796 = vmatpush1.bf16.xpose.msra.mxu0 0
        %797 = vmatprep.subr.bf16.mxu0 0
        %798 = vmatpush1.bf16.xpose.msra.mxu0 0
        %799 = vmatprep.subr.bf16.mxu0 0
        %800 = vmatpush1.bf16.xpose.msra.mxu0 0
        %801 = vmatprep.mubr.bf16.mxu0 0
        %802 = vmatmul.mubr.bf16.gmra.mrb[0].mxu0 %v764
        %v803 = vpop.f32.mrb[0].mxu0
        %v804 = vadd.f32 0.0, %v803
        %v805 = vpop.f32.mrb[0].mxu0
        %v806 = vpop.f32.mrb[0].mxu0
        %v807 = vpop.f32.mrb[0].mxu0
        %808 = vdwg.mxu0
        %v810 = vunpack.c.l.s4 1966171168
        %v811 = vunpack.c.0.s8 %v810
        %v812 = vlaneseq
        %v813 = vshrl.u32 %v812, 7
        %v814 = vsub.s32 %v811, %v813
        %v815 = vrot.slane %v597, %v814
        %v817 = vunpack.c.l.s4 1966171168
        %v818 = vunpack.c.0.s8 %v817
        %v819 = vlaneseq
        %v820 = vshrl.u32 %v819, 7
        %v821 = vsub.s32 %v818, %v820
        %v822 = vrot.slane %v815, %v821
        %823 = vrot.lane.b32.xlu0 %v822, 96
        %v824 = vpop.permute.xlu0 %823
        %v826 = vsel %vm638, %v548, 0
        %v829 = vsel %vm638, %v824, 0
        %831 = vmatprep.subr.bf16.mxu0 0
        %832 = vmatpush1.bf16.xpose.msra.mxu0 %v829
        %833 = vmatprep.subr.bf16.mxu0 0
        %834 = vmatpush1.bf16.xpose.msra.mxu0 0
        %835 = vmatprep.subr.bf16.mxu0 0
        %836 = vmatpush1.bf16.xpose.msra.mxu0 0
        %837 = vmatprep.subr.bf16.mxu0 0
        %838 = vmatpush1.bf16.xpose.msra.mxu0 0
        %839 = vmatprep.subr.bf16.mxu0 0
        %840 = vmatpush1.bf16.xpose.msra.mxu0 0
        %841 = vmatprep.subr.bf16.mxu0 0
        %842 = vmatpush1.bf16.xpose.msra.mxu0 0
        %843 = vmatprep.subr.bf16.mxu0 0
        %844 = vmatpush1.bf16.xpose.msra.mxu0 0
        %845 = vmatprep.subr.bf16.mxu0 0
        %846 = vmatpush1.bf16.xpose.msra.mxu0 0
        %847 = vmatprep.subr.bf16.mxu0 0
        %848 = vmatpush1.bf16.xpose.msra.mxu0 0
        %849 = vmatprep.subr.bf16.mxu0 0
        %850 = vmatpush1.bf16.xpose.msra.mxu0 0
        %851 = vmatprep.subr.bf16.mxu0 0
        %852 = vmatpush1.bf16.xpose.msra.mxu0 0
        %853 = vmatprep.subr.bf16.mxu0 0
        %854 = vmatpush1.bf16.xpose.msra.mxu0 0
        %855 = vmatprep.subr.bf16.mxu0 0
        %856 = vmatpush1.bf16.xpose.msra.mxu0 0
        %857 = vmatprep.subr.bf16.mxu0 0
        %858 = vmatpush1.bf16.xpose.msra.mxu0 0
        %859 = vmatprep.subr.bf16.mxu0 0
        %860 = vmatpush1.bf16.xpose.msra.mxu0 0
        %861 = vmatprep.subr.bf16.mxu0 0
        %862 = vmatpush1.bf16.xpose.msra.mxu0 0
        %863 = vmatprep.mubr.bf16.mxu0 0
        %864 = vmatmul.mubr.bf16.gmra.mrb[0].mxu0 %v826
        %v865 = vpop.f32.mrb[0].mxu0
        %v866 = vadd.f32 0.0, %v865
        %v867 = vpop.f32.mrb[0].mxu0
        %v868 = vpop.f32.mrb[0].mxu0
        %v869 = vpop.f32.mrb[0].mxu0
        %870 = vdwg.mxu0
        %v872 = vunpack.c.l.s4 1966171168
        %v873 = vunpack.c.0.s8 %v872
        %v874 = vlaneseq
        %v875 = vshrl.u32 %v874, 7
        %v876 = vsub.s32 %v873, %v875
        %v877 = vrot.slane %v599, %v876
        %v879 = vunpack.c.l.s4 1966171168
        %v880 = vunpack.c.0.s8 %v879
        %v881 = vlaneseq
        %v882 = vshrl.u32 %v881, 7
        %v883 = vsub.s32 %v880, %v882
        %v884 = vrot.slane %v877, %v883
        %885 = vrot.lane.b32.xlu0 %v884, 96
        %v886 = vpop.permute.xlu0 %885
        %v888 = vsel %vm638, %v550, 0
        %v891 = vsel %vm638, %v886, 0
        %893 = vmatprep.subr.bf16.mxu0 0
        %894 = vmatpush1.bf16.xpose.msra.mxu0 %v891
        %895 = vmatprep.subr.bf16.mxu0 0
        %896 = vmatpush1.bf16.xpose.msra.mxu0 0
        %897 = vmatprep.subr.bf16.mxu0 0
        %898 = vmatpush1.bf16.xpose.msra.mxu0 0
        %899 = vmatprep.subr.bf16.mxu0 0
        %900 = vmatpush1.bf16.xpose.msra.mxu0 0
        %901 = vmatprep.subr.bf16.mxu0 0
        %902 = vmatpush1.bf16.xpose.msra.mxu0 0
        %903 = vmatprep.subr.bf16.mxu0 0
        %904 = vmatpush1.bf16.xpose.msra.mxu0 0
        %905 = vmatprep.subr.bf16.mxu0 0
        %906 = vmatpush1.bf16.xpose.msra.mxu0 0
        %907 = vmatprep.subr.bf16.mxu0 0
        %908 = vmatpush1.bf16.xpose.msra.mxu0 0
        %909 = vmatprep.subr.bf16.mxu0 0
        %910 = vmatpush1.bf16.xpose.msra.mxu0 0
        %911 = vmatprep.subr.bf16.mxu0 0
        %912 = vmatpush1.bf16.xpose.msra.mxu0 0
        %913 = vmatprep.subr.bf16.mxu0 0
        %914 = vmatpush1.bf16.xpose.msra.mxu0 0
        %915 = vmatprep.subr.bf16.mxu0 0
        %916 = vmatpush1.bf16.xpose.msra.mxu0 0
        %917 = vmatprep.subr.bf16.mxu0 0
        %918 = vmatpush1.bf16.xpose.msra.mxu0 0
        %919 = vmatprep.subr.bf16.mxu0 0
        %920 = vmatpush1.bf16.xpose.msra.mxu0 0
        %921 = vmatprep.subr.bf16.mxu0 0
        %922 = vmatpush1.bf16.xpose.msra.mxu0 0
        %923 = vmatprep.subr.bf16.mxu0 0
        %924 = vmatpush1.bf16.xpose.msra.mxu0 0
        %925 = vmatprep.mubr.bf16.mxu0 0
        %926 = vmatmul.mubr.bf16.gmra.mrb[0].mxu0 %v888
        %v927 = vpop.f32.mrb[0].mxu0
        %v928 = vadd.f32 0.0, %v927
        %v929 = vpop.f32.mrb[0].mxu0
        %v930 = vpop.f32.mrb[0].mxu0
        %v931 = vpop.f32.mrb[0].mxu0
        %932 = vdwg.mxu0
        %v934 = vunpack.c.l.s4 1966171168
        %v935 = vunpack.c.0.s8 %v934
        %v936 = vlaneseq
        %v937 = vshrl.u32 %v936, 7
        %v938 = vsub.s32 %v935, %v937
        %v939 = vrot.slane %v601, %v938
        %v941 = vunpack.c.l.s4 1966171168
        %v942 = vunpack.c.0.s8 %v941
        %v943 = vlaneseq
        %v944 = vshrl.u32 %v943, 7
        %v945 = vsub.s32 %v942, %v944
        %v946 = vrot.slane %v939, %v945
        %947 = vrot.lane.b32.xlu0 %v946, 96
        %v948 = vpop.permute.xlu0 %947
        %v950 = vsel %vm638, %v552, 0
        %v953 = vsel %vm638, %v948, 0
        %955 = vmatprep.subr.bf16.mxu0 0
        %956 = vmatpush1.bf16.xpose.msra.mxu0 %v953
        %957 = vmatprep.subr.bf16.mxu0 0
        %958 = vmatpush1.bf16.xpose.msra.mxu0 0
        %959 = vmatprep.subr.bf16.mxu0 0
        %960 = vmatpush1.bf16.xpose.msra.mxu0 0
        %961 = vmatprep.subr.bf16.mxu0 0
        %962 = vmatpush1.bf16.xpose.msra.mxu0 0
        %963 = vmatprep.subr.bf16.mxu0 0
        %964 = vmatpush1.bf16.xpose.msra.mxu0 0
        %965 = vmatprep.subr.bf16.mxu0 0
        %966 = vmatpush1.bf16.xpose.msra.mxu0 0
        %967 = vmatprep.subr.bf16.mxu0 0
        %968 = vmatpush1.bf16.xpose.msra.mxu0 0
        %969 = vmatprep.subr.bf16.mxu0 0
        %970 = vmatpush1.bf16.xpose.msra.mxu0 0
        %971 = vmatprep.subr.bf16.mxu0 0
        %972 = vmatpush1.bf16.xpose.msra.mxu0 0
        %973 = vmatprep.subr.bf16.mxu0 0
        %974 = vmatpush1.bf16.xpose.msra.mxu0 0
        %975 = vmatprep.subr.bf16.mxu0 0
        %976 = vmatpush1.bf16.xpose.msra.mxu0 0
        %977 = vmatprep.subr.bf16.mxu0 0
        %978 = vmatpush1.bf16.xpose.msra.mxu0 0
        %979 = vmatprep.subr.bf16.mxu0 0
        %980 = vmatpush1.bf16.xpose.msra.mxu0 0
        %981 = vmatprep.subr.bf16.mxu0 0
        %982 = vmatpush1.bf16.xpose.msra.mxu0 0
        %983 = vmatprep.subr.bf16.mxu0 0
        %984 = vmatpush1.bf16.xpose.msra.mxu0 0
        %985 = vmatprep.subr.bf16.mxu0 0
        %986 = vmatpush1.bf16.xpose.msra.mxu0 0
        %987 = vmatprep.mubr.bf16.mxu0 0
        %988 = vmatmul.mubr.bf16.gmra.mrb[0].mxu0 %v950
        %v989 = vpop.f32.mrb[0].mxu0
        %v990 = vadd.f32 0.0, %v989
        %v991 = vpop.f32.mrb[0].mxu0
        %v992 = vpop.f32.mrb[0].mxu0
        %v993 = vpop.f32.mrb[0].mxu0
        %994 = vdwg.mxu0
        %v996 = vunpack.c.l.s4 1966171168
        %v997 = vunpack.c.0.s8 %v996
        %v998 = vlaneseq
        %v999 = vshrl.u32 %v998, 7
        %v1000 = vsub.s32 %v997, %v999
        %v1001 = vrot.slane %v603, %v1000
        %v1003 = vunpack.c.l.s4 1966171168
        %v1004 = vunpack.c.0.s8 %v1003
        %v1005 = vlaneseq
        %v1006 = vshrl.u32 %v1005, 7
        %v1007 = vsub.s32 %v1004, %v1006
        %v1008 = vrot.slane %v1001, %v1007
        %1009 = vrot.lane.b32.xlu0 %v1008, 96
        %v1010 = vpop.permute.xlu0 %1009
        %v1012 = vsel %vm638, %v554, 0
        %v1015 = vsel %vm638, %v1010, 0
        %1017 = vmatprep.subr.bf16.mxu0 0
        %1018 = vmatpush1.bf16.xpose.msra.mxu0 %v1015
        %1019 = vmatprep.subr.bf16.mxu0 0
        %1020 = vmatpush1.bf16.xpose.msra.mxu0 0
        %1021 = vmatprep.subr.bf16.mxu0 0
        %1022 = vmatpush1.bf16.xpose.msra.mxu0 0
        %1023 = vmatprep.subr.bf16.mxu0 0
        %1024 = vmatpush1.bf16.xpose.msra.mxu0 0
        %1025 = vmatprep.subr.bf16.mxu0 0
        %1026 = vmatpush1.bf16.xpose.msra.mxu0 0
        %1027 = vmatprep.subr.bf16.mxu0 0
        %1028 = vmatpush1.bf16.xpose.msra.mxu0 0
        %1029 = vmatprep.subr.bf16.mxu0 0
        %1030 = vmatpush1.bf16.xpose.msra.mxu0 0
        %1031 = vmatprep.subr.bf16.mxu0 0
        %1032 = vmatpush1.bf16.xpose.msra.mxu0 0
        %1033 = vmatprep.subr.bf16.mxu0 0
        %1034 = vmatpush1.bf16.xpose.msra.mxu0 0
        %1035 = vmatprep.subr.bf16.mxu0 0
        %1036 = vmatpush1.bf16.xpose.msra.mxu0 0
        %1037 = vmatprep.subr.bf16.mxu0 0
        %1038 = vmatpush1.bf16.xpose.msra.mxu0 0
        %1039 = vmatprep.subr.bf16.mxu0 0
        %1040 = vmatpush1.bf16.xpose.msra.mxu0 0
        %1041 = vmatprep.subr.bf16.mxu0 0
        %1042 = vmatpush1.bf16.xpose.msra.mxu0 0
        %1043 = vmatprep.subr.bf16.mxu0 0
        %1044 = vmatpush1.bf16.xpose.msra.mxu0 0
        %1045 = vmatprep.subr.bf16.mxu0 0
        %1046 = vmatpush1.bf16.xpose.msra.mxu0 0
        %1047 = vmatprep.subr.bf16.mxu0 0
        %1048 = vmatpush1.bf16.xpose.msra.mxu0 0
        %1049 = vmatprep.mubr.bf16.mxu0 0
        %1050 = vmatmul.mubr.bf16.gmra.mrb[0].mxu0 %v1012
        %v1051 = vpop.f32.mrb[0].mxu0
        %v1052 = vadd.f32 0.0, %v1051
        %v1053 = vpop.f32.mrb[0].mxu0
        %v1054 = vpop.f32.mrb[0].mxu0
        %v1055 = vpop.f32.mrb[0].mxu0
        %1056 = vdwg.mxu0
        %v1058 = vunpack.c.l.s4 1966171168
        %v1059 = vunpack.c.0.s8 %v1058
        %v1060 = vlaneseq
        %v1061 = vshrl.u32 %v1060, 7
        %v1062 = vsub.s32 %v1059, %v1061
        %v1063 = vrot.slane %v605, %v1062
        %v1065 = vunpack.c.l.s4 1966171168
        %v1066 = vunpack.c.0.s8 %v1065
        %v1067 = vlaneseq
        %v1068 = vshrl.u32 %v1067, 7
        %v1069 = vsub.s32 %v1066, %v1068
        %v1070 = vrot.slane %v1063, %v1069
        %1071 = vrot.lane.b32.xlu0 %v1070, 96
        %v1072 = vpop.permute.xlu0 %1071
        %v1074 = vsel %vm638, %v556, 0
        %v1077 = vsel %vm638, %v1072, 0
        %1079 = vmatprep.subr.bf16.mxu0 0
        %1080 = vmatpush1.bf16.xpose.msra.mxu0 %v1077
        %1081 = vmatprep.subr.bf16.mxu0 0
        %1082 = vmatpush1.bf16.xpose.msra.mxu0 0
        %1083 = vmatprep.subr.bf16.mxu0 0
        %1084 = vmatpush1.bf16.xpose.msra.mxu0 0
        %1085 = vmatprep.subr.bf16.mxu0 0
        %1086 = vmatpush1.bf16.xpose.msra.mxu0 0
        %1087 = vmatprep.subr.bf16.mxu0 0
        %1088 = vmatpush1.bf16.xpose.msra.mxu0 0
        %1089 = vmatprep.subr.bf16.mxu0 0
        %1090 = vmatpush1.bf16.xpose.msra.mxu0 0
        %1091 = vmatprep.subr.bf16.mxu0 0
        %1092 = vmatpush1.bf16.xpose.msra.mxu0 0
        %1093 = vmatprep.subr.bf16.mxu0 0
        %1094 = vmatpush1.bf16.xpose.msra.mxu0 0
        %1095 = vmatprep.subr.bf16.mxu0 0
        %1096 = vmatpush1.bf16.xpose.msra.mxu0 0
        %1097 = vmatprep.subr.bf16.mxu0 0
        %1098 = vmatpush1.bf16.xpose.msra.mxu0 0
        %1099 = vmatprep.subr.bf16.mxu0 0
        %1100 = vmatpush1.bf16.xpose.msra.mxu0 0
        %1101 = vmatprep.subr.bf16.mxu0 0
        %1102 = vmatpush1.bf16.xpose.msra.mxu0 0
        %1103 = vmatprep.subr.bf16.mxu0 0
        %1104 = vmatpush1.bf16.xpose.msra.mxu0 0
        %1105 = vmatprep.subr.bf16.mxu0 0
        %1106 = vmatpush1.bf16.xpose.msra.mxu0 0
        %1107 = vmatprep.subr.bf16.mxu0 0
        %1108 = vmatpush1.bf16.xpose.msra.mxu0 0
        %1109 = vmatprep.subr.bf16.mxu0 0
        %1110 = vmatpush1.bf16.xpose.msra.mxu0 0
        %1111 = vmatprep.mubr.bf16.mxu0 0
        %1112 = vmatmul.mubr.bf16.gmra.mrb[0].mxu0 %v1074
        %v1113 = vpop.f32.mrb[0].mxu0
        %v1114 = vadd.f32 0.0, %v1113
        %v1115 = vpop.f32.mrb[0].mxu0
        %v1116 = vpop.f32.mrb[0].mxu0
        %v1117 = vpop.f32.mrb[0].mxu0
        %1118 = vdwg.mxu0
        %v1120 = vunpack.c.l.s4 1966171168
        %v1121 = vunpack.c.0.s8 %v1120
        %v1122 = vlaneseq
        %v1123 = vshrl.u32 %v1122, 7
        %v1124 = vsub.s32 %v1121, %v1123
        %v1125 = vrot.slane %v607, %v1124
        %v1127 = vunpack.c.l.s4 1966171168
        %v1128 = vunpack.c.0.s8 %v1127
        %v1129 = vlaneseq
        %v1130 = vshrl.u32 %v1129, 7
        %v1131 = vsub.s32 %v1128, %v1130
        %v1132 = vrot.slane %v1125, %v1131
        %1133 = vrot.lane.b32.xlu0 %v1132, 96
        %v1134 = vpop.permute.xlu0 %1133
        %v1136 = vsel %vm638, %v558, 0
        %v1139 = vsel %vm638, %v1134, 0
        %1141 = vmatprep.subr.bf16.mxu0 0
        %1142 = vmatpush1.bf16.xpose.msra.mxu0 %v1139
        %1143 = vmatprep.subr.bf16.mxu0 0
        %1144 = vmatpush1.bf16.xpose.msra.mxu0 0
        %1145 = vmatprep.subr.bf16.mxu0 0
        %1146 = vmatpush1.bf16.xpose.msra.mxu0 0
        %1147 = vmatprep.subr.bf16.mxu0 0
        %1148 = vmatpush1.bf16.xpose.msra.mxu0 0
        %1149 = vmatprep.subr.bf16.mxu0 0
        %1150 = vmatpush1.bf16.xpose.msra.mxu0 0
        %1151 = vmatprep.subr.bf16.mxu0 0
        %1152 = vmatpush1.bf16.xpose.msra.mxu0 0
        %1153 = vmatprep.subr.bf16.mxu0 0
        %1154 = vmatpush1.bf16.xpose.msra.mxu0 0
        %1155 = vmatprep.subr.bf16.mxu0 0
        %1156 = vmatpush1.bf16.xpose.msra.mxu0 0
        %1157 = vmatprep.subr.bf16.mxu0 0
        %1158 = vmatpush1.bf16.xpose.msra.mxu0 0
        %1159 = vmatprep.subr.bf16.mxu0 0
        %1160 = vmatpush1.bf16.xpose.msra.mxu0 0
        %1161 = vmatprep.subr.bf16.mxu0 0
        %1162 = vmatpush1.bf16.xpose.msra.mxu0 0
        %1163 = vmatprep.subr.bf16.mxu0 0
        %1164 = vmatpush1.bf16.xpose.msra.mxu0 0
        %1165 = vmatprep.subr.bf16.mxu0 0
        %1166 = vmatpush1.bf16.xpose.msra.mxu0 0
        %1167 = vmatprep.subr.bf16.mxu0 0
        %1168 = vmatpush1.bf16.xpose.msra.mxu0 0
        %1169 = vmatprep.subr.bf16.mxu0 0
        %1170 = vmatpush1.bf16.xpose.msra.mxu0 0
        %1171 = vmatprep.subr.bf16.mxu0 0
        %1172 = vmatpush1.bf16.xpose.msra.mxu0 0
        %1173 = vmatprep.mubr.bf16.mxu0 0
        %1174 = vmatmul.mubr.bf16.gmra.mrb[0].mxu0 %v1136
        %v1175 = vpop.f32.mrb[0].mxu0
        %v1176 = vadd.f32 0.0, %v1175
        %v1177 = vpop.f32.mrb[0].mxu0
        %v1178 = vpop.f32.mrb[0].mxu0
        %v1179 = vpop.f32.mrb[0].mxu0
        %1180 = vdwg.mxu0
        %v1182 = vunpack.c.l.s4 1966171168
        %v1183 = vunpack.c.0.s8 %v1182
        %v1184 = vlaneseq
        %v1185 = vshrl.u32 %v1184, 7
        %v1186 = vsub.s32 %v1183, %v1185
        %v1187 = vrot.slane %v609, %v1186
        %v1189 = vunpack.c.l.s4 1966171168
        %v1190 = vunpack.c.0.s8 %v1189
        %v1191 = vlaneseq
        %v1192 = vshrl.u32 %v1191, 7
        %v1193 = vsub.s32 %v1190, %v1192
        %v1194 = vrot.slane %v1187, %v1193
        %1195 = vrot.lane.b32.xlu0 %v1194, 96
        %v1196 = vpop.permute.xlu0 %1195
        %v1198 = vsel %vm638, %v560, 0
        %v1201 = vsel %vm638, %v1196, 0
        %1203 = vmatprep.subr.bf16.mxu0 0
        %1204 = vmatpush1.bf16.xpose.msra.mxu0 %v1201
        %1205 = vmatprep.subr.bf16.mxu0 0
        %1206 = vmatpush1.bf16.xpose.msra.mxu0 0
        %1207 = vmatprep.subr.bf16.mxu0 0
        %1208 = vmatpush1.bf16.xpose.msra.mxu0 0
        %1209 = vmatprep.subr.bf16.mxu0 0
        %1210 = vmatpush1.bf16.xpose.msra.mxu0 0
        %1211 = vmatprep.subr.bf16.mxu0 0
        %1212 = vmatpush1.bf16.xpose.msra.mxu0 0
        %1213 = vmatprep.subr.bf16.mxu0 0
        %1214 = vmatpush1.bf16.xpose.msra.mxu0 0
        %1215 = vmatprep.subr.bf16.mxu0 0
        %1216 = vmatpush1.bf16.xpose.msra.mxu0 0
        %1217 = vmatprep.subr.bf16.mxu0 0
        %1218 = vmatpush1.bf16.xpose.msra.mxu0 0
        %1219 = vmatprep.subr.bf16.mxu0 0
        %1220 = vmatpush1.bf16.xpose.msra.mxu0 0
        %1221 = vmatprep.subr.bf16.mxu0 0
        %1222 = vmatpush1.bf16.xpose.msra.mxu0 0
        %1223 = vmatprep.subr.bf16.mxu0 0
        %1224 = vmatpush1.bf16.xpose.msra.mxu0 0
        %1225 = vmatprep.subr.bf16.mxu0 0
        %1226 = vmatpush1.bf16.xpose.msra.mxu0 0
        %1227 = vmatprep.subr.bf16.mxu0 0
        %1228 = vmatpush1.bf16.xpose.msra.mxu0 0
        %1229 = vmatprep.subr.bf16.mxu0 0
        %1230 = vmatpush1.bf16.xpose.msra.mxu0 0
        %1231 = vmatprep.subr.bf16.mxu0 0
        %1232 = vmatpush1.bf16.xpose.msra.mxu0 0
        %1233 = vmatprep.subr.bf16.mxu0 0
        %1234 = vmatpush1.bf16.xpose.msra.mxu0 0
        %1235 = vmatprep.mubr.bf16.mxu0 0
        %1236 = vmatmul.mubr.bf16.gmra.mrb[0].mxu0 %v1198
        %v1237 = vpop.f32.mrb[0].mxu0
        %v1238 = vadd.f32 0.0, %v1237
        %v1239 = vpop.f32.mrb[0].mxu0
        %v1240 = vpop.f32.mrb[0].mxu0
        %v1241 = vpop.f32.mrb[0].mxu0
        %1242 = vdwg.mxu0
        %v1244 = vunpack.c.l.s4 1966171168
        %v1245 = vunpack.c.0.s8 %v1244
        %v1246 = vlaneseq
        %v1247 = vshrl.u32 %v1246, 7
        %v1248 = vsub.s32 %v1245, %v1247
        %v1249 = vrot.slane %v611, %v1248
        %v1251 = vunpack.c.l.s4 1966171168
        %v1252 = vunpack.c.0.s8 %v1251
        %v1253 = vlaneseq
        %v1254 = vshrl.u32 %v1253, 7
        %v1255 = vsub.s32 %v1252, %v1254
        %v1256 = vrot.slane %v1249, %v1255
        %1257 = vrot.lane.b32.xlu0 %v1256, 96
        %v1258 = vpop.permute.xlu0 %1257
        %v1260 = vsel %vm638, %v562, 0
        %v1263 = vsel %vm638, %v1258, 0
        %1265 = vmatprep.subr.bf16.mxu0 0
        %1266 = vmatpush1.bf16.xpose.msra.mxu0 %v1263
        %1267 = vmatprep.subr.bf16.mxu0 0
        %1268 = vmatpush1.bf16.xpose.msra.mxu0 0
        %1269 = vmatprep.subr.bf16.mxu0 0
        %1270 = vmatpush1.bf16.xpose.msra.mxu0 0
        %1271 = vmatprep.subr.bf16.mxu0 0
        %1272 = vmatpush1.bf16.xpose.msra.mxu0 0
        %1273 = vmatprep.subr.bf16.mxu0 0
        %1274 = vmatpush1.bf16.xpose.msra.mxu0 0
        %1275 = vmatprep.subr.bf16.mxu0 0
        %1276 = vmatpush1.bf16.xpose.msra.mxu0 0
        %1277 = vmatprep.subr.bf16.mxu0 0
        %1278 = vmatpush1.bf16.xpose.msra.mxu0 0
        %1279 = vmatprep.subr.bf16.mxu0 0
        %1280 = vmatpush1.bf16.xpose.msra.mxu0 0
        %1281 = vmatprep.subr.bf16.mxu0 0
        %1282 = vmatpush1.bf16.xpose.msra.mxu0 0
        %1283 = vmatprep.subr.bf16.mxu0 0
        %1284 = vmatpush1.bf16.xpose.msra.mxu0 0
        %1285 = vmatprep.subr.bf16.mxu0 0
        %1286 = vmatpush1.bf16.xpose.msra.mxu0 0
        %1287 = vmatprep.subr.bf16.mxu0 0
        %1288 = vmatpush1.bf16.xpose.msra.mxu0 0
        %1289 = vmatprep.subr.bf16.mxu0 0
        %1290 = vmatpush1.bf16.xpose.msra.mxu0 0
        %1291 = vmatprep.subr.bf16.mxu0 0
        %1292 = vmatpush1.bf16.xpose.msra.mxu0 0
        %1293 = vmatprep.subr.bf16.mxu0 0
        %1294 = vmatpush1.bf16.xpose.msra.mxu0 0
        %1295 = vmatprep.subr.bf16.mxu0 0
        %1296 = vmatpush1.bf16.xpose.msra.mxu0 0
        %1297 = vmatprep.mubr.bf16.mxu0 0
        %1298 = vmatmul.mubr.bf16.gmra.mrb[0].mxu0 %v1260
        %v1299 = vpop.f32.mrb[0].mxu0
        %v1300 = vadd.f32 0.0, %v1299
        %v1301 = vpop.f32.mrb[0].mxu0
        %v1302 = vpop.f32.mrb[0].mxu0
        %v1303 = vpop.f32.mrb[0].mxu0
        %1304 = vdwg.mxu0
        %v1306 = vunpack.c.l.s4 1966171168
        %v1307 = vunpack.c.0.s8 %v1306
        %v1308 = vlaneseq
        %v1309 = vshrl.u32 %v1308, 7
        %v1310 = vsub.s32 %v1307, %v1309
        %v1311 = vrot.slane %v613, %v1310
        %v1313 = vunpack.c.l.s4 1966171168
        %v1314 = vunpack.c.0.s8 %v1313
        %v1315 = vlaneseq
        %v1316 = vshrl.u32 %v1315, 7
        %v1317 = vsub.s32 %v1314, %v1316
        %v1318 = vrot.slane %v1311, %v1317
        %1319 = vrot.lane.b32.xlu0 %v1318, 96
        %v1320 = vpop.permute.xlu0 %1319
        %v1322 = vsel %vm638, %v564, 0
        %v1325 = vsel %vm638, %v1320, 0
        %1327 = vmatprep.subr.bf16.mxu0 0
        %1328 = vmatpush1.bf16.xpose.msra.mxu0 %v1325
        %1329 = vmatprep.subr.bf16.mxu0 0
        %1330 = vmatpush1.bf16.xpose.msra.mxu0 0
        %1331 = vmatprep.subr.bf16.mxu0 0
        %1332 = vmatpush1.bf16.xpose.msra.mxu0 0
        %1333 = vmatprep.subr.bf16.mxu0 0
        %1334 = vmatpush1.bf16.xpose.msra.mxu0 0
        %1335 = vmatprep.subr.bf16.mxu0 0
        %1336 = vmatpush1.bf16.xpose.msra.mxu0 0
        %1337 = vmatprep.subr.bf16.mxu0 0
        %1338 = vmatpush1.bf16.xpose.msra.mxu0 0
        %1339 = vmatprep.subr.bf16.mxu0 0
        %1340 = vmatpush1.bf16.xpose.msra.mxu0 0
        %1341 = vmatprep.subr.bf16.mxu0 0
        %1342 = vmatpush1.bf16.xpose.msra.mxu0 0
        %1343 = vmatprep.subr.bf16.mxu0 0
        %1344 = vmatpush1.bf16.xpose.msra.mxu0 0
        %1345 = vmatprep.subr.bf16.mxu0 0
        %1346 = vmatpush1.bf16.xpose.msra.mxu0 0
        %1347 = vmatprep.subr.bf16.mxu0 0
        %1348 = vmatpush1.bf16.xpose.msra.mxu0 0
        %1349 = vmatprep.subr.bf16.mxu0 0
        %1350 = vmatpush1.bf16.xpose.msra.mxu0 0
        %1351 = vmatprep.subr.bf16.mxu0 0
        %1352 = vmatpush1.bf16.xpose.msra.mxu0 0
        %1353 = vmatprep.subr.bf16.mxu0 0
        %1354 = vmatpush1.bf16.xpose.msra.mxu0 0
        %1355 = vmatprep.subr.bf16.mxu0 0
        %1356 = vmatpush1.bf16.xpose.msra.mxu0 0
        %1357 = vmatprep.subr.bf16.mxu0 0
        %1358 = vmatpush1.bf16.xpose.msra.mxu0 0
        %1359 = vmatprep.mubr.bf16.mxu0 0
        %1360 = vmatmul.mubr.bf16.gmra.mrb[0].mxu0 %v1322
        %v1361 = vpop.f32.mrb[0].mxu0
        %v1362 = vadd.f32 0.0, %v1361
        %v1363 = vpop.f32.mrb[0].mxu0
        %v1364 = vpop.f32.mrb[0].mxu0
        %v1365 = vpop.f32.mrb[0].mxu0
        %1366 = vdwg.mxu0
        %v1368 = vunpack.c.l.s4 1966171168
        %v1369 = vunpack.c.0.s8 %v1368
        %v1370 = vlaneseq
        %v1371 = vshrl.u32 %v1370, 7
        %v1372 = vsub.s32 %v1369, %v1371
        %v1373 = vrot.slane %v615, %v1372
        %v1375 = vunpack.c.l.s4 1966171168
        %v1376 = vunpack.c.0.s8 %v1375
        %v1377 = vlaneseq
        %v1378 = vshrl.u32 %v1377, 7
        %v1379 = vsub.s32 %v1376, %v1378
        %v1380 = vrot.slane %v1373, %v1379
        %1381 = vrot.lane.b32.xlu0 %v1380, 96
        %v1382 = vpop.permute.xlu0 %1381
        %v1384 = vsel %vm638, %v566, 0
        %v1387 = vsel %vm638, %v1382, 0
        %1389 = vmatprep.subr.bf16.mxu0 0
        %1390 = vmatpush1.bf16.xpose.msra.mxu0 %v1387
        %1391 = vmatprep.subr.bf16.mxu0 0
        %1392 = vmatpush1.bf16.xpose.msra.mxu0 0
        %1393 = vmatprep.subr.bf16.mxu0 0
        %1394 = vmatpush1.bf16.xpose.msra.mxu0 0
        %1395 = vmatprep.subr.bf16.mxu0 0
        %1396 = vmatpush1.bf16.xpose.msra.mxu0 0
        %1397 = vmatprep.subr.bf16.mxu0 0
        %1398 = vmatpush1.bf16.xpose.msra.mxu0 0
        %1399 = vmatprep.subr.bf16.mxu0 0
        %1400 = vmatpush1.bf16.xpose.msra.mxu0 0
        %1401 = vmatprep.subr.bf16.mxu0 0
        %1402 = vmatpush1.bf16.xpose.msra.mxu0 0
        %1403 = vmatprep.subr.bf16.mxu0 0
        %1404 = vmatpush1.bf16.xpose.msra.mxu0 0
        %1405 = vmatprep.subr.bf16.mxu0 0
        %1406 = vmatpush1.bf16.xpose.msra.mxu0 0
        %1407 = vmatprep.subr.bf16.mxu0 0
        %1408 = vmatpush1.bf16.xpose.msra.mxu0 0
        %1409 = vmatprep.subr.bf16.mxu0 0
        %1410 = vmatpush1.bf16.xpose.msra.mxu0 0
        %1411 = vmatprep.subr.bf16.mxu0 0
        %1412 = vmatpush1.bf16.xpose.msra.mxu0 0
        %1413 = vmatprep.subr.bf16.mxu0 0
        %1414 = vmatpush1.bf16.xpose.msra.mxu0 0
        %1415 = vmatprep.subr.bf16.mxu0 0
        %1416 = vmatpush1.bf16.xpose.msra.mxu0 0
        %1417 = vmatprep.subr.bf16.mxu0 0
        %1418 = vmatpush1.bf16.xpose.msra.mxu0 0
        %1419 = vmatprep.subr.bf16.mxu0 0
        %1420 = vmatpush1.bf16.xpose.msra.mxu0 0
        %1421 = vmatprep.mubr.bf16.mxu0 0
        %1422 = vmatmul.mubr.bf16.gmra.mrb[0].mxu0 %v1384
        %v1423 = vpop.f32.mrb[0].mxu0
        %v1424 = vadd.f32 0.0, %v1423
        %v1425 = vpop.f32.mrb[0].mxu0
        %v1426 = vpop.f32.mrb[0].mxu0
        %v1427 = vpop.f32.mrb[0].mxu0
        %1428 = vdwg.mxu0
        %v1430 = vunpack.c.l.s4 1966171168
        %v1431 = vunpack.c.0.s8 %v1430
        %v1432 = vlaneseq
        %v1433 = vshrl.u32 %v1432, 7
        %v1434 = vsub.s32 %v1431, %v1433
        %v1435 = vrot.slane %v617, %v1434
        %v1437 = vunpack.c.l.s4 1966171168
        %v1438 = vunpack.c.0.s8 %v1437
        %v1439 = vlaneseq
        %v1440 = vshrl.u32 %v1439, 7
        %v1441 = vsub.s32 %v1438, %v1440
        %v1442 = vrot.slane %v1435, %v1441
        %1443 = vrot.lane.b32.xlu0 %v1442, 96
        %v1444 = vpop.permute.xlu0 %1443
        %v1446 = vsel %vm638, %v568, 0
        %v1449 = vsel %vm638, %v1444, 0
        %1451 = vmatprep.subr.bf16.mxu0 0
        %1452 = vmatpush1.bf16.xpose.msra.mxu0 %v1449
        %1453 = vmatprep.subr.bf16.mxu0 0
        %1454 = vmatpush1.bf16.xpose.msra.mxu0 0
        %1455 = vmatprep.subr.bf16.mxu0 0
        %1456 = vmatpush1.bf16.xpose.msra.mxu0 0
        %1457 = vmatprep.subr.bf16.mxu0 0
        %1458 = vmatpush1.bf16.xpose.msra.mxu0 0
        %1459 = vmatprep.subr.bf16.mxu0 0
        %1460 = vmatpush1.bf16.xpose.msra.mxu0 0
        %1461 = vmatprep.subr.bf16.mxu0 0
        %1462 = vmatpush1.bf16.xpose.msra.mxu0 0
        %1463 = vmatprep.subr.bf16.mxu0 0
        %1464 = vmatpush1.bf16.xpose.msra.mxu0 0
        %1465 = vmatprep.subr.bf16.mxu0 0
        %1466 = vmatpush1.bf16.xpose.msra.mxu0 0
        %1467 = vmatprep.subr.bf16.mxu0 0
        %1468 = vmatpush1.bf16.xpose.msra.mxu0 0
        %1469 = vmatprep.subr.bf16.mxu0 0
        %1470 = vmatpush1.bf16.xpose.msra.mxu0 0
        %1471 = vmatprep.subr.bf16.mxu0 0
        %1472 = vmatpush1.bf16.xpose.msra.mxu0 0
        %1473 = vmatprep.subr.bf16.mxu0 0
        %1474 = vmatpush1.bf16.xpose.msra.mxu0 0
        %1475 = vmatprep.subr.bf16.mxu0 0
        %1476 = vmatpush1.bf16.xpose.msra.mxu0 0
        %1477 = vmatprep.subr.bf16.mxu0 0
        %1478 = vmatpush1.bf16.xpose.msra.mxu0 0
        %1479 = vmatprep.subr.bf16.mxu0 0
        %1480 = vmatpush1.bf16.xpose.msra.mxu0 0
        %1481 = vmatprep.subr.bf16.mxu0 0
        %1482 = vmatpush1.bf16.xpose.msra.mxu0 0
        %1483 = vmatprep.mubr.bf16.mxu0 0
        %1484 = vmatmul.mubr.bf16.gmra.mrb[0].mxu0 %v1446
        %v1485 = vpop.f32.mrb[0].mxu0
        %v1486 = vadd.f32 0.0, %v1485
        %v1487 = vpop.f32.mrb[0].mxu0
        %v1488 = vpop.f32.mrb[0].mxu0
        %v1489 = vpop.f32.mrb[0].mxu0
        %1490 = vdwg.mxu0
        %v1492 = vunpack.c.l.s4 1966171168
        %v1493 = vunpack.c.0.s8 %v1492
        %v1494 = vlaneseq
        %v1495 = vshrl.u32 %v1494, 7
        %v1496 = vsub.s32 %v1493, %v1495
        %v1497 = vrot.slane %v619, %v1496
        %v1499 = vunpack.c.l.s4 1966171168
        %v1500 = vunpack.c.0.s8 %v1499
        %v1501 = vlaneseq
        %v1502 = vshrl.u32 %v1501, 7
        %v1503 = vsub.s32 %v1500, %v1502
        %v1504 = vrot.slane %v1497, %v1503
        %1505 = vrot.lane.b32.xlu0 %v1504, 96
        %v1506 = vpop.permute.xlu0 %1505
        %v1508 = vsel %vm638, %v570, 0
        %v1511 = vsel %vm638, %v1506, 0
        %1513 = vmatprep.subr.bf16.mxu0 0
        %1514 = vmatpush1.bf16.xpose.msra.mxu0 %v1511
        %1515 = vmatprep.subr.bf16.mxu0 0
        %1516 = vmatpush1.bf16.xpose.msra.mxu0 0
        %1517 = vmatprep.subr.bf16.mxu0 0
        %1518 = vmatpush1.bf16.xpose.msra.mxu0 0
        %1519 = vmatprep.subr.bf16.mxu0 0
        %1520 = vmatpush1.bf16.xpose.msra.mxu0 0
        %1521 = vmatprep.subr.bf16.mxu0 0
        %1522 = vmatpush1.bf16.xpose.msra.mxu0 0
        %1523 = vmatprep.subr.bf16.mxu0 0
        %1524 = vmatpush1.bf16.xpose.msra.mxu0 0
        %1525 = vmatprep.subr.bf16.mxu0 0
        %1526 = vmatpush1.bf16.xpose.msra.mxu0 0
        %1527 = vmatprep.subr.bf16.mxu0 0
        %1528 = vmatpush1.bf16.xpose.msra.mxu0 0
        %1529 = vmatprep.subr.bf16.mxu0 0
        %1530 = vmatpush1.bf16.xpose.msra.mxu0 0
        %1531 = vmatprep.subr.bf16.mxu0 0
        %1532 = vmatpush1.bf16.xpose.msra.mxu0 0
        %1533 = vmatprep.subr.bf16.mxu0 0
        %1534 = vmatpush1.bf16.xpose.msra.mxu0 0
        %1535 = vmatprep.subr.bf16.mxu0 0
        %1536 = vmatpush1.bf16.xpose.msra.mxu0 0
        %1537 = vmatprep.subr.bf16.mxu0 0
        %1538 = vmatpush1.bf16.xpose.msra.mxu0 0
        %1539 = vmatprep.subr.bf16.mxu0 0
        %1540 = vmatpush1.bf16.xpose.msra.mxu0 0
        %1541 = vmatprep.subr.bf16.mxu0 0
        %1542 = vmatpush1.bf16.xpose.msra.mxu0 0
        %1543 = vmatprep.subr.bf16.mxu0 0
        %1544 = vmatpush1.bf16.xpose.msra.mxu0 0
        %1545 = vmatprep.mubr.bf16.mxu0 0
        %1546 = vmatmul.mubr.bf16.gmra.mrb[0].mxu0 %v1508
        %v1547 = vpop.f32.mrb[0].mxu0
        %v1548 = vadd.f32 0.0, %v1547
        %v1549 = vpop.f32.mrb[0].mxu0
        %v1550 = vpop.f32.mrb[0].mxu0
        %v1551 = vpop.f32.mrb[0].mxu0
        %1552 = vdwg.mxu0
        %v1554 = vunpack.c.l.s4 1966171168
        %v1555 = vunpack.c.0.s8 %v1554
        %v1556 = vlaneseq
        %v1557 = vshrl.u32 %v1556, 7
        %v1558 = vsub.s32 %v1555, %v1557
        %v1559 = vrot.slane %v621, %v1558
        %v1561 = vunpack.c.l.s4 1966171168
        %v1562 = vunpack.c.0.s8 %v1561
        %v1563 = vlaneseq
        %v1564 = vshrl.u32 %v1563, 7
        %v1565 = vsub.s32 %v1562, %v1564
        %v1566 = vrot.slane %v1559, %v1565
        %1567 = vrot.lane.b32.xlu0 %v1566, 96
        %v1568 = vpop.permute.xlu0 %1567
        %v1570 = vsel %vm638, %v572, 0
        %v1573 = vsel %vm638, %v1568, 0
        %1575 = vmatprep.subr.bf16.mxu0 0
        %1576 = vmatpush1.bf16.xpose.msra.mxu0 %v1573
        %1577 = vmatprep.subr.bf16.mxu0 0
        %1578 = vmatpush1.bf16.xpose.msra.mxu0 0
        %1579 = vmatprep.subr.bf16.mxu0 0
        %1580 = vmatpush1.bf16.xpose.msra.mxu0 0
        %1581 = vmatprep.subr.bf16.mxu0 0
        %1582 = vmatpush1.bf16.xpose.msra.mxu0 0
        %1583 = vmatprep.subr.bf16.mxu0 0
        %1584 = vmatpush1.bf16.xpose.msra.mxu0 0
        %1585 = vmatprep.subr.bf16.mxu0 0
        %1586 = vmatpush1.bf16.xpose.msra.mxu0 0
        %1587 = vmatprep.subr.bf16.mxu0 0
        %1588 = vmatpush1.bf16.xpose.msra.mxu0 0
        %1589 = vmatprep.subr.bf16.mxu0 0
        %1590 = vmatpush1.bf16.xpose.msra.mxu0 0
        %1591 = vmatprep.subr.bf16.mxu0 0
        %1592 = vmatpush1.bf16.xpose.msra.mxu0 0
        %1593 = vmatprep.subr.bf16.mxu0 0
        %1594 = vmatpush1.bf16.xpose.msra.mxu0 0
        %1595 = vmatprep.subr.bf16.mxu0 0
        %1596 = vmatpush1.bf16.xpose.msra.mxu0 0
        %1597 = vmatprep.subr.bf16.mxu0 0
        %1598 = vmatpush1.bf16.xpose.msra.mxu0 0
        %1599 = vmatprep.subr.bf16.mxu0 0
        %1600 = vmatpush1.bf16.xpose.msra.mxu0 0
        %1601 = vmatprep.subr.bf16.mxu0 0
        %1602 = vmatpush1.bf16.xpose.msra.mxu0 0
        %1603 = vmatprep.subr.bf16.mxu0 0
        %1604 = vmatpush1.bf16.xpose.msra.mxu0 0
        %1605 = vmatprep.subr.bf16.mxu0 0
        %1606 = vmatpush1.bf16.xpose.msra.mxu0 0
        %1607 = vmatprep.mubr.bf16.mxu0 0
        %1608 = vmatmul.mubr.bf16.gmra.mrb[0].mxu0 %v1570
        %v1609 = vpop.f32.mrb[0].mxu0
        %v1610 = vadd.f32 0.0, %v1609
        %v1611 = vpop.f32.mrb[0].mxu0
        %v1612 = vpop.f32.mrb[0].mxu0
        %v1613 = vpop.f32.mrb[0].mxu0
        %1614 = vdwg.mxu0
        %vm1615 = vcmask 9216
        %v1616 = vsel %vm1615, %v680, -inf
        %1617 = vmax.xlane.f32.xlu0 %v1616
        %v1618 = vpop.xlane.xlu0 %1617
        %v1619 = vsel %vm1615, %v742, -inf
        %1620 = vmax.xlane.f32.xlu0 %v1619
        %v1621 = vpop.xlane.xlu0 %1620
        %v1622 = vsel %vm1615, %v804, -inf
        %1623 = vmax.xlane.f32.xlu0 %v1622
        %v1624 = vpop.xlane.xlu0 %1623
        %v1625 = vsel %vm1615, %v866, -inf
        %1626 = vmax.xlane.f32.xlu0 %v1625
        %v1627 = vpop.xlane.xlu0 %1626
        %v1628 = vsel %vm1615, %v928, -inf
        %1629 = vmax.xlane.f32.xlu0 %v1628
        %v1630 = vpop.xlane.xlu0 %1629
        %v1631 = vsel %vm1615, %v990, -inf
        %1632 = vmax.xlane.f32.xlu0 %v1631
        %v1633 = vpop.xlane.xlu0 %1632
        %v1634 = vsel %vm1615, %v1052, -inf
        %1635 = vmax.xlane.f32.xlu0 %v1634
        %v1636 = vpop.xlane.xlu0 %1635
        %v1637 = vsel %vm1615, %v1114, -inf
        %1638 = vmax.xlane.f32.xlu0 %v1637
        %v1639 = vpop.xlane.xlu0 %1638
        %v1640 = vsel %vm1615, %v1176, -inf
        %1641 = vmax.xlane.f32.xlu0 %v1640
        %v1642 = vpop.xlane.xlu0 %1641
        %v1643 = vsel %vm1615, %v1238, -inf
        %1644 = vmax.xlane.f32.xlu0 %v1643
        %v1645 = vpop.xlane.xlu0 %1644
        %v1646 = vsel %vm1615, %v1300, -inf
        %1647 = vmax.xlane.f32.xlu0 %v1646
        %v1648 = vpop.xlane.xlu0 %1647
        %v1649 = vsel %vm1615, %v1362, -inf
        %1650 = vmax.xlane.f32.xlu0 %v1649
        %v1651 = vpop.xlane.xlu0 %1650
        %v1652 = vsel %vm1615, %v1424, -inf
        %1653 = vmax.xlane.f32.xlu0 %v1652
        %v1654 = vpop.xlane.xlu0 %1653
        %v1655 = vsel %vm1615, %v1486, -inf
        %1656 = vmax.xlane.f32.xlu0 %v1655
        %v1657 = vpop.xlane.xlu0 %1656
        %v1658 = vsel %vm1615, %v1548, -inf
        %1659 = vmax.xlane.f32.xlu0 %v1658
        %v1660 = vpop.xlane.xlu0 %1659
        %v1661 = vsel %vm1615, %v1610, -inf
        %1662 = vmax.xlane.f32.xlu0 %v1661
        %v1663 = vpop.xlane.xlu0 %1662
        %v1664 = vsub.f32 %v680, %v1618
        %v1665 = vsub.f32 %v742, %v1621
        %v1666 = vsub.f32 %v804, %v1624
        %v1667 = vsub.f32 %v866, %v1627
        %v1668 = vsub.f32 %v928, %v1630
        %v1669 = vsub.f32 %v990, %v1633
        %v1670 = vsub.f32 %v1052, %v1636
        %v1671 = vsub.f32 %v1114, %v1639
        %v1672 = vsub.f32 %v1176, %v1642
        %v1673 = vsub.f32 %v1238, %v1645
        %v1674 = vsub.f32 %v1300, %v1648
        %v1675 = vsub.f32 %v1362, %v1651
        %v1676 = vsub.f32 %v1424, %v1654
        %v1677 = vsub.f32 %v1486, %v1657
        %v1678 = vsub.f32 %v1548, %v1660
        %v1679 = vsub.f32 %v1610, %v1663
        %v1680 = vmul.f32 %v1664, 1.442695
        %v1681 = vpow.pop %v1680
        %v1682 = vmul.f32 %v1665, 1.442695
        %v1683 = vpow.pop %v1682
        %v1684 = vmul.f32 %v1666, 1.442695
        %v1685 = vpow.pop %v1684
        %v1686 = vmul.f32 %v1667, 1.442695
        %v1687 = vpow.pop %v1686
        %v1688 = vmul.f32 %v1668, 1.442695
        %v1689 = vpow.pop %v1688
        %v1690 = vmul.f32 %v1669, 1.442695
        %v1691 = vpow.pop %v1690
        %v1692 = vmul.f32 %v1670, 1.442695
        %v1693 = vpow.pop %v1692
        %v1694 = vmul.f32 %v1671, 1.442695
        %v1695 = vpow.pop %v1694
        %v1696 = vmul.f32 %v1672, 1.442695
        %v1697 = vpow.pop %v1696
        %v1698 = vmul.f32 %v1673, 1.442695
        %v1699 = vpow.pop %v1698
        %v1700 = vmul.f32 %v1674, 1.442695
        %v1701 = vpow.pop %v1700
        %v1702 = vmul.f32 %v1675, 1.442695
        %v1703 = vpow.pop %v1702
        %v1704 = vmul.f32 %v1676, 1.442695
        %v1705 = vpow.pop %v1704
        %v1706 = vmul.f32 %v1677, 1.442695
        %v1707 = vpow.pop %v1706
        %v1708 = vmul.f32 %v1678, 1.442695
        %v1709 = vpow.pop %v1708
        %v1710 = vmul.f32 %v1679, 1.442695
        %v1711 = vpow.pop %v1710
        %v1712 = vsel %vm1615, %v1681, 0.0
        %1713 = vadd.xlane.f32.xlu0 %v1712
        %v1714 = vpop.xlane.xlu0 %1713
        %v1715 = vsel %vm1615, %v1683, 0.0
        %1716 = vadd.xlane.f32.xlu0 %v1715
        %v1717 = vpop.xlane.xlu0 %1716
        %v1718 = vsel %vm1615, %v1685, 0.0
        %1719 = vadd.xlane.f32.xlu0 %v1718
        %v1720 = vpop.xlane.xlu0 %1719
        %v1721 = vsel %vm1615, %v1687, 0.0
        %1722 = vadd.xlane.f32.xlu0 %v1721
        %v1723 = vpop.xlane.xlu0 %1722
        %v1724 = vsel %vm1615, %v1689, 0.0
        %1725 = vadd.xlane.f32.xlu0 %v1724
        %v1726 = vpop.xlane.xlu0 %1725
        %v1727 = vsel %vm1615, %v1691, 0.0
        %1728 = vadd.xlane.f32.xlu0 %v1727
        %v1729 = vpop.xlane.xlu0 %1728
        %v1730 = vsel %vm1615, %v1693, 0.0
        %1731 = vadd.xlane.f32.xlu0 %v1730
        %v1732 = vpop.xlane.xlu0 %1731
        %v1733 = vsel %vm1615, %v1695, 0.0
        %1734 = vadd.xlane.f32.xlu0 %v1733
        %v1735 = vpop.xlane.xlu0 %1734
        %v1736 = vsel %vm1615, %v1697, 0.0
        %1737 = vadd.xlane.f32.xlu0 %v1736
        %v1738 = vpop.xlane.xlu0 %1737
        %v1739 = vsel %vm1615, %v1699, 0.0
        %1740 = vadd.xlane.f32.xlu0 %v1739
        %v1741 = vpop.xlane.xlu0 %1740
        %v1742 = vsel %vm1615, %v1701, 0.0
        %1743 = vadd.xlane.f32.xlu0 %v1742
        %v1744 = vpop.xlane.xlu0 %1743
        %v1745 = vsel %vm1615, %v1703, 0.0
        %1746 = vadd.xlane.f32.xlu0 %v1745
        %v1747 = vpop.xlane.xlu0 %1746
        %v1748 = vsel %vm1615, %v1705, 0.0
        %1749 = vadd.xlane.f32.xlu0 %v1748
        %v1750 = vpop.xlane.xlu0 %1749
        %v1751 = vsel %vm1615, %v1707, 0.0
        %1752 = vadd.xlane.f32.xlu0 %v1751
        %v1753 = vpop.xlane.xlu0 %1752
        %v1754 = vsel %vm1615, %v1709, 0.0
        %1755 = vadd.xlane.f32.xlu0 %v1754
        %v1756 = vpop.xlane.xlu0 %1755
        %v1757 = vsel %vm1615, %v1711, 0.0
        %1758 = vadd.xlane.f32.xlu0 %v1757
        %v1759 = vpop.xlane.xlu0 %1758
        %v1760 = vrcp.pop %v1714
        %v1761 = vrcp.pop %v1717
        %v1762 = vrcp.pop %v1720
        %v1763 = vrcp.pop %v1723
        %v1764 = vrcp.pop %v1726
        %v1765 = vrcp.pop %v1729
        %v1766 = vrcp.pop %v1732
        %v1767 = vrcp.pop %v1735
        %v1768 = vrcp.pop %v1738
        %v1769 = vrcp.pop %v1741
        %v1770 = vrcp.pop %v1744
        %v1771 = vrcp.pop %v1747
        %v1772 = vrcp.pop %v1750
        %v1773 = vrcp.pop %v1753
        %v1774 = vrcp.pop %v1756
        %v1775 = vrcp.pop %v1759
        %v1776 = vmul.f32 %v1681, %v1760
        %v1777 = vmul.f32 %v1683, %v1761
        %v1778 = vmul.f32 %v1685, %v1762
        %v1779 = vmul.f32 %v1687, %v1763
        %v1780 = vmul.f32 %v1689, %v1764
        %v1781 = vmul.f32 %v1691, %v1765
        %v1782 = vmul.f32 %v1693, %v1766
        %v1783 = vmul.f32 %v1695, %v1767
        %v1784 = vmul.f32 %v1697, %v1768
        %v1785 = vmul.f32 %v1699, %v1769
        %v1786 = vmul.f32 %v1701, %v1770
        %v1787 = vmul.f32 %v1703, %v1771
        %v1788 = vmul.f32 %v1705, %v1772
        %v1789 = vmul.f32 %v1707, %v1773
        %v1790 = vmul.f32 %v1709, %v1774
        %v1791 = vmul.f32 %v1711, %v1775
        %v1792 = vpack.c.bf16 %v1776, %v1776
        %v1793 = vpack.c.bf16 %v1777, %v1777
        %v1794 = vpack.c.bf16 %v1778, %v1778
        %v1795 = vpack.c.bf16 %v1779, %v1779
        %v1796 = vpack.c.bf16 %v1780, %v1780
        %v1797 = vpack.c.bf16 %v1781, %v1781
        %v1798 = vpack.c.bf16 %v1782, %v1782
        %v1799 = vpack.c.bf16 %v1783, %v1783
        %v1800 = vpack.c.bf16 %v1784, %v1784
        %v1801 = vpack.c.bf16 %v1785, %v1785
        %v1802 = vpack.c.bf16 %v1786, %v1786
        %v1803 = vpack.c.bf16 %v1787, %v1787
        %v1804 = vpack.c.bf16 %v1788, %v1788
        %v1805 = vpack.c.bf16 %v1789, %v1789
        %v1806 = vpack.c.bf16 %v1790, %v1790
        %v1807 = vpack.c.bf16 %v1791, %v1791
        %1808 = vrot.lane.b32.xlu0 %v635, 64
        %v1809 = vpop.permute.xlu0 %1808
        %vm1810 = vcmask 15360
        %v1812 = vsel %vm1810, %v1792, 0
        %vm1814 = vcmask 1040384
        %v1816 = vsel %vm1814, %v1809, 0
        %1818 = vmatprep.subr.bf16.mxu0 0
        %1819 = vmatpush1.bf16.msra.mxu0 %v1816
        %1820 = vmatprep.subr.bf16.mxu0 0
        %1821 = vmatpush1.bf16.msra.mxu0 0
        %1822 = vmatprep.subr.bf16.mxu0 0
        %1823 = vmatpush1.bf16.msra.mxu0 0
        %1824 = vmatprep.subr.bf16.mxu0 0
        %1825 = vmatpush1.bf16.msra.mxu0 0
        %1826 = vmatprep.subr.bf16.mxu0 0
        %1827 = vmatpush1.bf16.msra.mxu0 0
        %1828 = vmatprep.subr.bf16.mxu0 0
        %1829 = vmatpush1.bf16.msra.mxu0 0
        %1830 = vmatprep.subr.bf16.mxu0 0
        %1831 = vmatpush1.bf16.msra.mxu0 0
        %1832 = vmatprep.subr.bf16.mxu0 0
        %1833 = vmatpush1.bf16.msra.mxu0 0
        %1834 = vmatprep.subr.bf16.mxu0 0
        %1835 = vmatpush1.bf16.msra.mxu0 0
        %1836 = vmatprep.subr.bf16.mxu0 0
        %1837 = vmatpush1.bf16.msra.mxu0 0
        %1838 = vmatprep.subr.bf16.mxu0 0
        %1839 = vmatpush1.bf16.msra.mxu0 0
        %1840 = vmatprep.subr.bf16.mxu0 0
        %1841 = vmatpush1.bf16.msra.mxu0 0
        %1842 = vmatprep.subr.bf16.mxu0 0
        %1843 = vmatpush1.bf16.msra.mxu0 0
        %1844 = vmatprep.subr.bf16.mxu0 0
        %1845 = vmatpush1.bf16.msra.mxu0 0
        %1846 = vmatprep.subr.bf16.mxu0 0
        %1847 = vmatpush1.bf16.msra.mxu0 0
        %1848 = vmatprep.subr.bf16.mxu0 0
        %1849 = vmatpush1.bf16.msra.mxu0 0
        %1850 = vmatprep.mubr.bf16.mxu0 0
        %1851 = vmatmul.mubr.bf16.gmra.mrb[0].mxu0 %v1812
        %v1852 = vpop.f32.mrb[0].mxu0
        %v1853 = vadd.f32 0.0, %v1852
        %v1854 = vpop.f32.mrb[0].mxu0
        %v1855 = vpop.f32.mrb[0].mxu0
        %v1856 = vpop.f32.mrb[0].mxu0
        %1857 = vdwg.mxu0
        %1858 = vrot.lane.b32.xlu0 %v698, 64
        %v1859 = vpop.permute.xlu0 %1858
        %v1861 = vsel %vm1810, %v1793, 0
        %v1864 = vsel %vm1814, %v1859, 0
        %1866 = vmatprep.subr.bf16.mxu0 0
        %1867 = vmatpush1.bf16.msra.mxu0 %v1864
        %1868 = vmatprep.subr.bf16.mxu0 0
        %1869 = vmatpush1.bf16.msra.mxu0 0
        %1870 = vmatprep.subr.bf16.mxu0 0
        %1871 = vmatpush1.bf16.msra.mxu0 0
        %1872 = vmatprep.subr.bf16.mxu0 0
        %1873 = vmatpush1.bf16.msra.mxu0 0
        %1874 = vmatprep.subr.bf16.mxu0 0
        %1875 = vmatpush1.bf16.msra.mxu0 0
        %1876 = vmatprep.subr.bf16.mxu0 0
        %1877 = vmatpush1.bf16.msra.mxu0 0
        %1878 = vmatprep.subr.bf16.mxu0 0
        %1879 = vmatpush1.bf16.msra.mxu0 0
        %1880 = vmatprep.subr.bf16.mxu0 0
        %1881 = vmatpush1.bf16.msra.mxu0 0
        %1882 = vmatprep.subr.bf16.mxu0 0
        %1883 = vmatpush1.bf16.msra.mxu0 0
        %1884 = vmatprep.subr.bf16.mxu0 0
        %1885 = vmatpush1.bf16.msra.mxu0 0
        %1886 = vmatprep.subr.bf16.mxu0 0
        %1887 = vmatpush1.bf16.msra.mxu0 0
        %1888 = vmatprep.subr.bf16.mxu0 0
        %1889 = vmatpush1.bf16.msra.mxu0 0
        %1890 = vmatprep.subr.bf16.mxu0 0
        %1891 = vmatpush1.bf16.msra.mxu0 0
        %1892 = vmatprep.subr.bf16.mxu0 0
        %1893 = vmatpush1.bf16.msra.mxu0 0
        %1894 = vmatprep.subr.bf16.mxu0 0
        %1895 = vmatpush1.bf16.msra.mxu0 0
        %1896 = vmatprep.subr.bf16.mxu0 0
        %1897 = vmatpush1.bf16.msra.mxu0 0
        %1898 = vmatprep.mubr.bf16.mxu0 0
        %1899 = vmatmul.mubr.bf16.gmra.mrb[0].mxu0 %v1861
        %v1900 = vpop.f32.mrb[0].mxu0
        %v1901 = vadd.f32 0.0, %v1900
        %v1902 = vpop.f32.mrb[0].mxu0
        %v1903 = vpop.f32.mrb[0].mxu0
        %v1904 = vpop.f32.mrb[0].mxu0
        %1905 = vdwg.mxu0
        %1906 = vrot.lane.b32.xlu0 %v760, 64
        %v1907 = vpop.permute.xlu0 %1906
        %v1909 = vsel %vm1810, %v1794, 0
        %v1912 = vsel %vm1814, %v1907, 0
        %1914 = vmatprep.subr.bf16.mxu0 0
        %1915 = vmatpush1.bf16.msra.mxu0 %v1912
        %1916 = vmatprep.subr.bf16.mxu0 0
        %1917 = vmatpush1.bf16.msra.mxu0 0
        %1918 = vmatprep.subr.bf16.mxu0 0
        %1919 = vmatpush1.bf16.msra.mxu0 0
        %1920 = vmatprep.subr.bf16.mxu0 0
        %1921 = vmatpush1.bf16.msra.mxu0 0
        %1922 = vmatprep.subr.bf16.mxu0 0
        %1923 = vmatpush1.bf16.msra.mxu0 0
        %1924 = vmatprep.subr.bf16.mxu0 0
        %1925 = vmatpush1.bf16.msra.mxu0 0
        %1926 = vmatprep.subr.bf16.mxu0 0
        %1927 = vmatpush1.bf16.msra.mxu0 0
        %1928 = vmatprep.subr.bf16.mxu0 0
        %1929 = vmatpush1.bf16.msra.mxu0 0
        %1930 = vmatprep.subr.bf16.mxu0 0
        %1931 = vmatpush1.bf16.msra.mxu0 0
        %1932 = vmatprep.subr.bf16.mxu0 0
        %1933 = vmatpush1.bf16.msra.mxu0 0
        %1934 = vmatprep.subr.bf16.mxu0 0
        %1935 = vmatpush1.bf16.msra.mxu0 0
        %1936 = vmatprep.subr.bf16.mxu0 0
        %1937 = vmatpush1.bf16.msra.mxu0 0
        %1938 = vmatprep.subr.bf16.mxu0 0
        %1939 = vmatpush1.bf16.msra.mxu0 0
        %1940 = vmatprep.subr.bf16.mxu0 0
        %1941 = vmatpush1.bf16.msra.mxu0 0
        %1942 = vmatprep.subr.bf16.mxu0 0
        %1943 = vmatpush1.bf16.msra.mxu0 0
        %1944 = vmatprep.subr.bf16.mxu0 0
        %1945 = vmatpush1.bf16.msra.mxu0 0
        %1946 = vmatprep.mubr.bf16.mxu0 0
        %1947 = vmatmul.mubr.bf16.gmra.mrb[0].mxu0 %v1909
        %v1948 = vpop.f32.mrb[0].mxu0
        %v1949 = vadd.f32 0.0, %v1948
        %v1950 = vpop.f32.mrb[0].mxu0
        %v1951 = vpop.f32.mrb[0].mxu0
        %v1952 = vpop.f32.mrb[0].mxu0
        %1953 = vdwg.mxu0
        %1954 = vrot.lane.b32.xlu0 %v822, 64
        %v1955 = vpop.permute.xlu0 %1954
        %v1957 = vsel %vm1810, %v1795, 0
        %v1960 = vsel %vm1814, %v1955, 0
        %1962 = vmatprep.subr.bf16.mxu0 0
        %1963 = vmatpush1.bf16.msra.mxu0 %v1960
        %1964 = vmatprep.subr.bf16.mxu0 0
        %1965 = vmatpush1.bf16.msra.mxu0 0
        %1966 = vmatprep.subr.bf16.mxu0 0
        %1967 = vmatpush1.bf16.msra.mxu0 0
        %1968 = vmatprep.subr.bf16.mxu0 0
        %1969 = vmatpush1.bf16.msra.mxu0 0
        %1970 = vmatprep.subr.bf16.mxu0 0
        %1971 = vmatpush1.bf16.msra.mxu0 0
        %1972 = vmatprep.subr.bf16.mxu0 0
        %1973 = vmatpush1.bf16.msra.mxu0 0
        %1974 = vmatprep.subr.bf16.mxu0 0
        %1975 = vmatpush1.bf16.msra.mxu0 0
        %1976 = vmatprep.subr.bf16.mxu0 0
        %1977 = vmatpush1.bf16.msra.mxu0 0
        %1978 = vmatprep.subr.bf16.mxu0 0
        %1979 = vmatpush1.bf16.msra.mxu0 0
        %1980 = vmatprep.subr.bf16.mxu0 0
        %1981 = vmatpush1.bf16.msra.mxu0 0
        %1982 = vmatprep.subr.bf16.mxu0 0
        %1983 = vmatpush1.bf16.msra.mxu0 0
        %1984 = vmatprep.subr.bf16.mxu0 0
        %1985 = vmatpush1.bf16.msra.mxu0 0
        %1986 = vmatprep.subr.bf16.mxu0 0
        %1987 = vmatpush1.bf16.msra.mxu0 0
        %1988 = vmatprep.subr.bf16.mxu0 0
        %1989 = vmatpush1.bf16.msra.mxu0 0
        %1990 = vmatprep.subr.bf16.mxu0 0
        %1991 = vmatpush1.bf16.msra.mxu0 0
        %1992 = vmatprep.subr.bf16.mxu0 0
        %1993 = vmatpush1.bf16.msra.mxu0 0
        %1994 = vmatprep.mubr.bf16.mxu0 0
        %1995 = vmatmul.mubr.bf16.gmra.mrb[0].mxu0 %v1957
        %v1996 = vpop.f32.mrb[0].mxu0
        %v1997 = vadd.f32 0.0, %v1996
        %v1998 = vpop.f32.mrb[0].mxu0
        %v1999 = vpop.f32.mrb[0].mxu0
        %v2000 = vpop.f32.mrb[0].mxu0
        %2001 = vdwg.mxu0
        %2002 = vrot.lane.b32.xlu0 %v884, 64
        %v2003 = vpop.permute.xlu0 %2002
        %v2005 = vsel %vm1810, %v1796, 0
        %v2008 = vsel %vm1814, %v2003, 0
        %2010 = vmatprep.subr.bf16.mxu0 0
        %2011 = vmatpush1.bf16.msra.mxu0 %v2008
        %2012 = vmatprep.subr.bf16.mxu0 0
        %2013 = vmatpush1.bf16.msra.mxu0 0
        %2014 = vmatprep.subr.bf16.mxu0 0
        %2015 = vmatpush1.bf16.msra.mxu0 0
        %2016 = vmatprep.subr.bf16.mxu0 0
        %2017 = vmatpush1.bf16.msra.mxu0 0
        %2018 = vmatprep.subr.bf16.mxu0 0
        %2019 = vmatpush1.bf16.msra.mxu0 0
        %2020 = vmatprep.subr.bf16.mxu0 0
        %2021 = vmatpush1.bf16.msra.mxu0 0
        %2022 = vmatprep.subr.bf16.mxu0 0
        %2023 = vmatpush1.bf16.msra.mxu0 0
        %2024 = vmatprep.subr.bf16.mxu0 0
        %2025 = vmatpush1.bf16.msra.mxu0 0
        %2026 = vmatprep.subr.bf16.mxu0 0
        %2027 = vmatpush1.bf16.msra.mxu0 0
        %2028 = vmatprep.subr.bf16.mxu0 0
        %2029 = vmatpush1.bf16.msra.mxu0 0
        %2030 = vmatprep.subr.bf16.mxu0 0
        %2031 = vmatpush1.bf16.msra.mxu0 0
        %2032 = vmatprep.subr.bf16.mxu0 0
        %2033 = vmatpush1.bf16.msra.mxu0 0
        %2034 = vmatprep.subr.bf16.mxu0 0
        %2035 = vmatpush1.bf16.msra.mxu0 0
        %2036 = vmatprep.subr.bf16.mxu0 0
        %2037 = vmatpush1.bf16.msra.mxu0 0
        %2038 = vmatprep.subr.bf16.mxu0 0
        %2039 = vmatpush1.bf16.msra.mxu0 0
        %2040 = vmatprep.subr.bf16.mxu0 0
        %2041 = vmatpush1.bf16.msra.mxu0 0
        %2042 = vmatprep.mubr.bf16.mxu0 0
        %2043 = vmatmul.mubr.bf16.gmra.mrb[0].mxu0 %v2005
        %v2044 = vpop.f32.mrb[0].mxu0
        %v2045 = vadd.f32 0.0, %v2044
        %v2046 = vpop.f32.mrb[0].mxu0
        %v2047 = vpop.f32.mrb[0].mxu0
        %v2048 = vpop.f32.mrb[0].mxu0
        %2049 = vdwg.mxu0
        %2050 = vrot.lane.b32.xlu0 %v946, 64
        %v2051 = vpop.permute.xlu0 %2050
        %v2053 = vsel %vm1810, %v1797, 0
        %v2056 = vsel %vm1814, %v2051, 0
        %2058 = vmatprep.subr.bf16.mxu0 0
        %2059 = vmatpush1.bf16.msra.mxu0 %v2056
        %2060 = vmatprep.subr.bf16.mxu0 0
        %2061 = vmatpush1.bf16.msra.mxu0 0
        %2062 = vmatprep.subr.bf16.mxu0 0
        %2063 = vmatpush1.bf16.msra.mxu0 0
        %2064 = vmatprep.subr.bf16.mxu0 0
        %2065 = vmatpush1.bf16.msra.mxu0 0
        %2066 = vmatprep.subr.bf16.mxu0 0
        %2067 = vmatpush1.bf16.msra.mxu0 0
        %2068 = vmatprep.subr.bf16.mxu0 0
        %2069 = vmatpush1.bf16.msra.mxu0 0
        %2070 = vmatprep.subr.bf16.mxu0 0
        %2071 = vmatpush1.bf16.msra.mxu0 0
        %2072 = vmatprep.subr.bf16.mxu0 0
        %2073 = vmatpush1.bf16.msra.mxu0 0
        %2074 = vmatprep.subr.bf16.mxu0 0
        %2075 = vmatpush1.bf16.msra.mxu0 0
        %2076 = vmatprep.subr.bf16.mxu0 0
        %2077 = vmatpush1.bf16.msra.mxu0 0
        %2078 = vmatprep.subr.bf16.mxu0 0
        %2079 = vmatpush1.bf16.msra.mxu0 0
        %2080 = vmatprep.subr.bf16.mxu0 0
        %2081 = vmatpush1.bf16.msra.mxu0 0
        %2082 = vmatprep.subr.bf16.mxu0 0
        %2083 = vmatpush1.bf16.msra.mxu0 0
        %2084 = vmatprep.subr.bf16.mxu0 0
        %2085 = vmatpush1.bf16.msra.mxu0 0
        %2086 = vmatprep.subr.bf16.mxu0 0
        %2087 = vmatpush1.bf16.msra.mxu0 0
        %2088 = vmatprep.subr.bf16.mxu0 0
        %2089 = vmatpush1.bf16.msra.mxu0 0
        %2090 = vmatprep.mubr.bf16.mxu0 0
        %2091 = vmatmul.mubr.bf16.gmra.mrb[0].mxu0 %v2053
        %v2092 = vpop.f32.mrb[0].mxu0
        %v2093 = vadd.f32 0.0, %v2092
        %v2094 = vpop.f32.mrb[0].mxu0
        %v2095 = vpop.f32.mrb[0].mxu0
        %v2096 = vpop.f32.mrb[0].mxu0
        %2097 = vdwg.mxu0
        %2098 = vrot.lane.b32.xlu0 %v1008, 64
        %v2099 = vpop.permute.xlu0 %2098
        %v2101 = vsel %vm1810, %v1798, 0
        %v2104 = vsel %vm1814, %v2099, 0
        %2106 = vmatprep.subr.bf16.mxu0 0
        %2107 = vmatpush1.bf16.msra.mxu0 %v2104
        %2108 = vmatprep.subr.bf16.mxu0 0
        %2109 = vmatpush1.bf16.msra.mxu0 0
        %2110 = vmatprep.subr.bf16.mxu0 0
        %2111 = vmatpush1.bf16.msra.mxu0 0
        %2112 = vmatprep.subr.bf16.mxu0 0
        %2113 = vmatpush1.bf16.msra.mxu0 0
        %2114 = vmatprep.subr.bf16.mxu0 0
        %2115 = vmatpush1.bf16.msra.mxu0 0
        %2116 = vmatprep.subr.bf16.mxu0 0
        %2117 = vmatpush1.bf16.msra.mxu0 0
        %2118 = vmatprep.subr.bf16.mxu0 0
        %2119 = vmatpush1.bf16.msra.mxu0 0
        %2120 = vmatprep.subr.bf16.mxu0 0
        %2121 = vmatpush1.bf16.msra.mxu0 0
        %2122 = vmatprep.subr.bf16.mxu0 0
        %2123 = vmatpush1.bf16.msra.mxu0 0
        %2124 = vmatprep.subr.bf16.mxu0 0
        %2125 = vmatpush1.bf16.msra.mxu0 0
        %2126 = vmatprep.subr.bf16.mxu0 0
        %2127 = vmatpush1.bf16.msra.mxu0 0
        %2128 = vmatprep.subr.bf16.mxu0 0
        %2129 = vmatpush1.bf16.msra.mxu0 0
        %2130 = vmatprep.subr.bf16.mxu0 0
        %2131 = vmatpush1.bf16.msra.mxu0 0
        %2132 = vmatprep.subr.bf16.mxu0 0
        %2133 = vmatpush1.bf16.msra.mxu0 0
        %2134 = vmatprep.subr.bf16.mxu0 0
        %2135 = vmatpush1.bf16.msra.mxu0 0
        %2136 = vmatprep.subr.bf16.mxu0 0
        %2137 = vmatpush1.bf16.msra.mxu0 0
        %2138 = vmatprep.mubr.bf16.mxu0 0
        %2139 = vmatmul.mubr.bf16.gmra.mrb[0].mxu0 %v2101
        %v2140 = vpop.f32.mrb[0].mxu0
        %v2141 = vadd.f32 0.0, %v2140
        %v2142 = vpop.f32.mrb[0].mxu0
        %v2143 = vpop.f32.mrb[0].mxu0
        %v2144 = vpop.f32.mrb[0].mxu0
        %2145 = vdwg.mxu0
        %2146 = vrot.lane.b32.xlu0 %v1070, 64
        %v2147 = vpop.permute.xlu0 %2146
        %v2149 = vsel %vm1810, %v1799, 0
        %v2152 = vsel %vm1814, %v2147, 0
        %2154 = vmatprep.subr.bf16.mxu0 0
        %2155 = vmatpush1.bf16.msra.mxu0 %v2152
        %2156 = vmatprep.subr.bf16.mxu0 0
        %2157 = vmatpush1.bf16.msra.mxu0 0
        %2158 = vmatprep.subr.bf16.mxu0 0
        %2159 = vmatpush1.bf16.msra.mxu0 0
        %2160 = vmatprep.subr.bf16.mxu0 0
        %2161 = vmatpush1.bf16.msra.mxu0 0
        %2162 = vmatprep.subr.bf16.mxu0 0
        %2163 = vmatpush1.bf16.msra.mxu0 0
        %2164 = vmatprep.subr.bf16.mxu0 0
        %2165 = vmatpush1.bf16.msra.mxu0 0
        %2166 = vmatprep.subr.bf16.mxu0 0
        %2167 = vmatpush1.bf16.msra.mxu0 0
        %2168 = vmatprep.subr.bf16.mxu0 0
        %2169 = vmatpush1.bf16.msra.mxu0 0
        %2170 = vmatprep.subr.bf16.mxu0 0
        %2171 = vmatpush1.bf16.msra.mxu0 0
        %2172 = vmatprep.subr.bf16.mxu0 0
        %2173 = vmatpush1.bf16.msra.mxu0 0
        %2174 = vmatprep.subr.bf16.mxu0 0
        %2175 = vmatpush1.bf16.msra.mxu0 0
        %2176 = vmatprep.subr.bf16.mxu0 0
        %2177 = vmatpush1.bf16.msra.mxu0 0
        %2178 = vmatprep.subr.bf16.mxu0 0
        %2179 = vmatpush1.bf16.msra.mxu0 0
        %2180 = vmatprep.subr.bf16.mxu0 0
        %2181 = vmatpush1.bf16.msra.mxu0 0
        %2182 = vmatprep.subr.bf16.mxu0 0
        %2183 = vmatpush1.bf16.msra.mxu0 0
        %2184 = vmatprep.subr.bf16.mxu0 0
        %2185 = vmatpush1.bf16.msra.mxu0 0
        %2186 = vmatprep.mubr.bf16.mxu0 0
        %2187 = vmatmul.mubr.bf16.gmra.mrb[0].mxu0 %v2149
        %v2188 = vpop.f32.mrb[0].mxu0
        %v2189 = vadd.f32 0.0, %v2188
        %v2190 = vpop.f32.mrb[0].mxu0
        %v2191 = vpop.f32.mrb[0].mxu0
        %v2192 = vpop.f32.mrb[0].mxu0
        %2193 = vdwg.mxu0
        %2194 = vrot.lane.b32.xlu0 %v1132, 64
        %v2195 = vpop.permute.xlu0 %2194
        %v2197 = vsel %vm1810, %v1800, 0
        %v2200 = vsel %vm1814, %v2195, 0
        %2202 = vmatprep.subr.bf16.mxu0 0
        %2203 = vmatpush1.bf16.msra.mxu0 %v2200
        %2204 = vmatprep.subr.bf16.mxu0 0
        %2205 = vmatpush1.bf16.msra.mxu0 0
        %2206 = vmatprep.subr.bf16.mxu0 0
        %2207 = vmatpush1.bf16.msra.mxu0 0
        %2208 = vmatprep.subr.bf16.mxu0 0
        %2209 = vmatpush1.bf16.msra.mxu0 0
        %2210 = vmatprep.subr.bf16.mxu0 0
        %2211 = vmatpush1.bf16.msra.mxu0 0
        %2212 = vmatprep.subr.bf16.mxu0 0
        %2213 = vmatpush1.bf16.msra.mxu0 0
        %2214 = vmatprep.subr.bf16.mxu0 0
        %2215 = vmatpush1.bf16.msra.mxu0 0
        %2216 = vmatprep.subr.bf16.mxu0 0
        %2217 = vmatpush1.bf16.msra.mxu0 0
        %2218 = vmatprep.subr.bf16.mxu0 0
        %2219 = vmatpush1.bf16.msra.mxu0 0
        %2220 = vmatprep.subr.bf16.mxu0 0
        %2221 = vmatpush1.bf16.msra.mxu0 0
        %2222 = vmatprep.subr.bf16.mxu0 0
        %2223 = vmatpush1.bf16.msra.mxu0 0
        %2224 = vmatprep.subr.bf16.mxu0 0
        %2225 = vmatpush1.bf16.msra.mxu0 0
        %2226 = vmatprep.subr.bf16.mxu0 0
        %2227 = vmatpush1.bf16.msra.mxu0 0
        %2228 = vmatprep.subr.bf16.mxu0 0
        %2229 = vmatpush1.bf16.msra.mxu0 0
        %2230 = vmatprep.subr.bf16.mxu0 0
        %2231 = vmatpush1.bf16.msra.mxu0 0
        %2232 = vmatprep.subr.bf16.mxu0 0
        %2233 = vmatpush1.bf16.msra.mxu0 0
        %2234 = vmatprep.mubr.bf16.mxu0 0
        %2235 = vmatmul.mubr.bf16.gmra.mrb[0].mxu0 %v2197
        %v2236 = vpop.f32.mrb[0].mxu0
        %v2237 = vadd.f32 0.0, %v2236
        %v2238 = vpop.f32.mrb[0].mxu0
        %v2239 = vpop.f32.mrb[0].mxu0
        %v2240 = vpop.f32.mrb[0].mxu0
        %2241 = vdwg.mxu0
        %2242 = vrot.lane.b32.xlu0 %v1194, 64
        %v2243 = vpop.permute.xlu0 %2242
        %v2245 = vsel %vm1810, %v1801, 0
        %v2248 = vsel %vm1814, %v2243, 0
        %2250 = vmatprep.subr.bf16.mxu0 0
        %2251 = vmatpush1.bf16.msra.mxu0 %v2248
        %2252 = vmatprep.subr.bf16.mxu0 0
        %2253 = vmatpush1.bf16.msra.mxu0 0
        %2254 = vmatprep.subr.bf16.mxu0 0
        %2255 = vmatpush1.bf16.msra.mxu0 0
        %2256 = vmatprep.subr.bf16.mxu0 0
        %2257 = vmatpush1.bf16.msra.mxu0 0
        %2258 = vmatprep.subr.bf16.mxu0 0
        %2259 = vmatpush1.bf16.msra.mxu0 0
        %2260 = vmatprep.subr.bf16.mxu0 0
        %2261 = vmatpush1.bf16.msra.mxu0 0
        %2262 = vmatprep.subr.bf16.mxu0 0
        %2263 = vmatpush1.bf16.msra.mxu0 0
        %2264 = vmatprep.subr.bf16.mxu0 0
        %2265 = vmatpush1.bf16.msra.mxu0 0
        %2266 = vmatprep.subr.bf16.mxu0 0
        %2267 = vmatpush1.bf16.msra.mxu0 0
        %2268 = vmatprep.subr.bf16.mxu0 0
        %2269 = vmatpush1.bf16.msra.mxu0 0
        %2270 = vmatprep.subr.bf16.mxu0 0
        %2271 = vmatpush1.bf16.msra.mxu0 0
        %2272 = vmatprep.subr.bf16.mxu0 0
        %2273 = vmatpush1.bf16.msra.mxu0 0
        %2274 = vmatprep.subr.bf16.mxu0 0
        %2275 = vmatpush1.bf16.msra.mxu0 0
        %2276 = vmatprep.subr.bf16.mxu0 0
        %2277 = vmatpush1.bf16.msra.mxu0 0
        %2278 = vmatprep.subr.bf16.mxu0 0
        %2279 = vmatpush1.bf16.msra.mxu0 0
        %2280 = vmatprep.subr.bf16.mxu0 0
        %2281 = vmatpush1.bf16.msra.mxu0 0
        %2282 = vmatprep.mubr.bf16.mxu0 0
        %2283 = vmatmul.mubr.bf16.gmra.mrb[0].mxu0 %v2245
        %v2284 = vpop.f32.mrb[0].mxu0
        %v2285 = vadd.f32 0.0, %v2284
        %v2286 = vpop.f32.mrb[0].mxu0
        %v2287 = vpop.f32.mrb[0].mxu0
        %v2288 = vpop.f32.mrb[0].mxu0
        %2289 = vdwg.mxu0
        %2290 = vrot.lane.b32.xlu0 %v1256, 64
        %v2291 = vpop.permute.xlu0 %2290
        %v2293 = vsel %vm1810, %v1802, 0
        %v2296 = vsel %vm1814, %v2291, 0
        %2298 = vmatprep.subr.bf16.mxu0 0
        %2299 = vmatpush1.bf16.msra.mxu0 %v2296
        %2300 = vmatprep.subr.bf16.mxu0 0
        %2301 = vmatpush1.bf16.msra.mxu0 0
        %2302 = vmatprep.subr.bf16.mxu0 0
        %2303 = vmatpush1.bf16.msra.mxu0 0
        %2304 = vmatprep.subr.bf16.mxu0 0
        %2305 = vmatpush1.bf16.msra.mxu0 0
        %2306 = vmatprep.subr.bf16.mxu0 0
        %2307 = vmatpush1.bf16.msra.mxu0 0
        %2308 = vmatprep.subr.bf16.mxu0 0
        %2309 = vmatpush1.bf16.msra.mxu0 0
        %2310 = vmatprep.subr.bf16.mxu0 0
        %2311 = vmatpush1.bf16.msra.mxu0 0
        %2312 = vmatprep.subr.bf16.mxu0 0
        %2313 = vmatpush1.bf16.msra.mxu0 0
        %2314 = vmatprep.subr.bf16.mxu0 0
        %2315 = vmatpush1.bf16.msra.mxu0 0
        %2316 = vmatprep.subr.bf16.mxu0 0
        %2317 = vmatpush1.bf16.msra.mxu0 0
        %2318 = vmatprep.subr.bf16.mxu0 0
        %2319 = vmatpush1.bf16.msra.mxu0 0
        %2320 = vmatprep.subr.bf16.mxu0 0
        %2321 = vmatpush1.bf16.msra.mxu0 0
        %2322 = vmatprep.subr.bf16.mxu0 0
        %2323 = vmatpush1.bf16.msra.mxu0 0
        %2324 = vmatprep.subr.bf16.mxu0 0
        %2325 = vmatpush1.bf16.msra.mxu0 0
        %2326 = vmatprep.subr.bf16.mxu0 0
        %2327 = vmatpush1.bf16.msra.mxu0 0
        %2328 = vmatprep.subr.bf16.mxu0 0
        %2329 = vmatpush1.bf16.msra.mxu0 0
        %2330 = vmatprep.mubr.bf16.mxu0 0
        %2331 = vmatmul.mubr.bf16.gmra.mrb[0].mxu0 %v2293
        %v2332 = vpop.f32.mrb[0].mxu0
        %v2333 = vadd.f32 0.0, %v2332
        %v2334 = vpop.f32.mrb[0].mxu0
        %v2335 = vpop.f32.mrb[0].mxu0
        %v2336 = vpop.f32.mrb[0].mxu0
        %2337 = vdwg.mxu0
        %2338 = vrot.lane.b32.xlu0 %v1318, 64
        %v2339 = vpop.permute.xlu0 %2338
        %v2341 = vsel %vm1810, %v1803, 0
        %v2344 = vsel %vm1814, %v2339, 0
        %2346 = vmatprep.subr.bf16.mxu0 0
        %2347 = vmatpush1.bf16.msra.mxu0 %v2344
        %2348 = vmatprep.subr.bf16.mxu0 0
        %2349 = vmatpush1.bf16.msra.mxu0 0
        %2350 = vmatprep.subr.bf16.mxu0 0
        %2351 = vmatpush1.bf16.msra.mxu0 0
        %2352 = vmatprep.subr.bf16.mxu0 0
        %2353 = vmatpush1.bf16.msra.mxu0 0
        %2354 = vmatprep.subr.bf16.mxu0 0
        %2355 = vmatpush1.bf16.msra.mxu0 0
        %2356 = vmatprep.subr.bf16.mxu0 0
        %2357 = vmatpush1.bf16.msra.mxu0 0
        %2358 = vmatprep.subr.bf16.mxu0 0
        %2359 = vmatpush1.bf16.msra.mxu0 0
        %2360 = vmatprep.subr.bf16.mxu0 0
        %2361 = vmatpush1.bf16.msra.mxu0 0
        %2362 = vmatprep.subr.bf16.mxu0 0
        %2363 = vmatpush1.bf16.msra.mxu0 0
        %2364 = vmatprep.subr.bf16.mxu0 0
        %2365 = vmatpush1.bf16.msra.mxu0 0
        %2366 = vmatprep.subr.bf16.mxu0 0
        %2367 = vmatpush1.bf16.msra.mxu0 0
        %2368 = vmatprep.subr.bf16.mxu0 0
        %2369 = vmatpush1.bf16.msra.mxu0 0
        %2370 = vmatprep.subr.bf16.mxu0 0
        %2371 = vmatpush1.bf16.msra.mxu0 0
        %2372 = vmatprep.subr.bf16.mxu0 0
        %2373 = vmatpush1.bf16.msra.mxu0 0
        %2374 = vmatprep.subr.bf16.mxu0 0
        %2375 = vmatpush1.bf16.msra.mxu0 0
        %2376 = vmatprep.subr.bf16.mxu0 0
        %2377 = vmatpush1.bf16.msra.mxu0 0
        %2378 = vmatprep.mubr.bf16.mxu0 0
        %2379 = vmatmul.mubr.bf16.gmra.mrb[0].mxu0 %v2341
        %v2380 = vpop.f32.mrb[0].mxu0
        %v2381 = vadd.f32 0.0, %v2380
        %v2382 = vpop.f32.mrb[0].mxu0
        %v2383 = vpop.f32.mrb[0].mxu0
        %v2384 = vpop.f32.mrb[0].mxu0
        %2385 = vdwg.mxu0
        %2386 = vrot.lane.b32.xlu0 %v1380, 64
        %v2387 = vpop.permute.xlu0 %2386
        %v2389 = vsel %vm1810, %v1804, 0
        %v2392 = vsel %vm1814, %v2387, 0
        %2394 = vmatprep.subr.bf16.mxu0 0
        %2395 = vmatpush1.bf16.msra.mxu0 %v2392
        %2396 = vmatprep.subr.bf16.mxu0 0
        %2397 = vmatpush1.bf16.msra.mxu0 0
        %2398 = vmatprep.subr.bf16.mxu0 0
        %2399 = vmatpush1.bf16.msra.mxu0 0
        %2400 = vmatprep.subr.bf16.mxu0 0
        %2401 = vmatpush1.bf16.msra.mxu0 0
        %2402 = vmatprep.subr.bf16.mxu0 0
        %2403 = vmatpush1.bf16.msra.mxu0 0
        %2404 = vmatprep.subr.bf16.mxu0 0
        %2405 = vmatpush1.bf16.msra.mxu0 0
        %2406 = vmatprep.subr.bf16.mxu0 0
        %2407 = vmatpush1.bf16.msra.mxu0 0
        %2408 = vmatprep.subr.bf16.mxu0 0
        %2409 = vmatpush1.bf16.msra.mxu0 0
        %2410 = vmatprep.subr.bf16.mxu0 0
        %2411 = vmatpush1.bf16.msra.mxu0 0
        %2412 = vmatprep.subr.bf16.mxu0 0
        %2413 = vmatpush1.bf16.msra.mxu0 0
        %2414 = vmatprep.subr.bf16.mxu0 0
        %2415 = vmatpush1.bf16.msra.mxu0 0
        %2416 = vmatprep.subr.bf16.mxu0 0
        %2417 = vmatpush1.bf16.msra.mxu0 0
        %2418 = vmatprep.subr.bf16.mxu0 0
        %2419 = vmatpush1.bf16.msra.mxu0 0
        %2420 = vmatprep.subr.bf16.mxu0 0
        %2421 = vmatpush1.bf16.msra.mxu0 0
        %2422 = vmatprep.subr.bf16.mxu0 0
        %2423 = vmatpush1.bf16.msra.mxu0 0
        %2424 = vmatprep.subr.bf16.mxu0 0
        %2425 = vmatpush1.bf16.msra.mxu0 0
        %2426 = vmatprep.mubr.bf16.mxu0 0
        %2427 = vmatmul.mubr.bf16.gmra.mrb[0].mxu0 %v2389
        %v2428 = vpop.f32.mrb[0].mxu0
        %v2429 = vadd.f32 0.0, %v2428
        %v2430 = vpop.f32.mrb[0].mxu0
        %v2431 = vpop.f32.mrb[0].mxu0
        %v2432 = vpop.f32.mrb[0].mxu0
        %2433 = vdwg.mxu0
        %2434 = vrot.lane.b32.xlu0 %v1442, 64
        %v2435 = vpop.permute.xlu0 %2434
        %v2437 = vsel %vm1810, %v1805, 0
        %v2440 = vsel %vm1814, %v2435, 0
        %2442 = vmatprep.subr.bf16.mxu0 0
        %2443 = vmatpush1.bf16.msra.mxu0 %v2440
        %2444 = vmatprep.subr.bf16.mxu0 0
        %2445 = vmatpush1.bf16.msra.mxu0 0
        %2446 = vmatprep.subr.bf16.mxu0 0
        %2447 = vmatpush1.bf16.msra.mxu0 0
        %2448 = vmatprep.subr.bf16.mxu0 0
        %2449 = vmatpush1.bf16.msra.mxu0 0
        %2450 = vmatprep.subr.bf16.mxu0 0
        %2451 = vmatpush1.bf16.msra.mxu0 0
        %2452 = vmatprep.subr.bf16.mxu0 0
        %2453 = vmatpush1.bf16.msra.mxu0 0
        %2454 = vmatprep.subr.bf16.mxu0 0
        %2455 = vmatpush1.bf16.msra.mxu0 0
        %2456 = vmatprep.subr.bf16.mxu0 0
        %2457 = vmatpush1.bf16.msra.mxu0 0
        %2458 = vmatprep.subr.bf16.mxu0 0
        %2459 = vmatpush1.bf16.msra.mxu0 0
        %2460 = vmatprep.subr.bf16.mxu0 0
        %2461 = vmatpush1.bf16.msra.mxu0 0
        %2462 = vmatprep.subr.bf16.mxu0 0
        %2463 = vmatpush1.bf16.msra.mxu0 0
        %2464 = vmatprep.subr.bf16.mxu0 0
        %2465 = vmatpush1.bf16.msra.mxu0 0
        %2466 = vmatprep.subr.bf16.mxu0 0
        %2467 = vmatpush1.bf16.msra.mxu0 0
        %2468 = vmatprep.subr.bf16.mxu0 0
        %2469 = vmatpush1.bf16.msra.mxu0 0
        %2470 = vmatprep.subr.bf16.mxu0 0
        %2471 = vmatpush1.bf16.msra.mxu0 0
        %2472 = vmatprep.subr.bf16.mxu0 0
        %2473 = vmatpush1.bf16.msra.mxu0 0
        %2474 = vmatprep.mubr.bf16.mxu0 0
        %2475 = vmatmul.mubr.bf16.gmra.mrb[0].mxu0 %v2437
        %v2476 = vpop.f32.mrb[0].mxu0
        %v2477 = vadd.f32 0.0, %v2476
        %v2478 = vpop.f32.mrb[0].mxu0
        %v2479 = vpop.f32.mrb[0].mxu0
        %v2480 = vpop.f32.mrb[0].mxu0
        %2481 = vdwg.mxu0
        %2482 = vrot.lane.b32.xlu0 %v1504, 64
        %v2483 = vpop.permute.xlu0 %2482
        %v2485 = vsel %vm1810, %v1806, 0
        %v2488 = vsel %vm1814, %v2483, 0
        %2490 = vmatprep.subr.bf16.mxu0 0
        %2491 = vmatpush1.bf16.msra.mxu0 %v2488
        %2492 = vmatprep.subr.bf16.mxu0 0
        %2493 = vmatpush1.bf16.msra.mxu0 0
        %2494 = vmatprep.subr.bf16.mxu0 0
        %2495 = vmatpush1.bf16.msra.mxu0 0
        %2496 = vmatprep.subr.bf16.mxu0 0
        %2497 = vmatpush1.bf16.msra.mxu0 0
        %2498 = vmatprep.subr.bf16.mxu0 0
        %2499 = vmatpush1.bf16.msra.mxu0 0
        %2500 = vmatprep.subr.bf16.mxu0 0
        %2501 = vmatpush1.bf16.msra.mxu0 0
        %2502 = vmatprep.subr.bf16.mxu0 0
        %2503 = vmatpush1.bf16.msra.mxu0 0
        %2504 = vmatprep.subr.bf16.mxu0 0
        %2505 = vmatpush1.bf16.msra.mxu0 0
        %2506 = vmatprep.subr.bf16.mxu0 0
        %2507 = vmatpush1.bf16.msra.mxu0 0
        %2508 = vmatprep.subr.bf16.mxu0 0
        %2509 = vmatpush1.bf16.msra.mxu0 0
        %2510 = vmatprep.subr.bf16.mxu0 0
        %2511 = vmatpush1.bf16.msra.mxu0 0
        %2512 = vmatprep.subr.bf16.mxu0 0
        %2513 = vmatpush1.bf16.msra.mxu0 0
        %2514 = vmatprep.subr.bf16.mxu0 0
        %2515 = vmatpush1.bf16.msra.mxu0 0
        %2516 = vmatprep.subr.bf16.mxu0 0
        %2517 = vmatpush1.bf16.msra.mxu0 0
        %2518 = vmatprep.subr.bf16.mxu0 0
        %2519 = vmatpush1.bf16.msra.mxu0 0
        %2520 = vmatprep.subr.bf16.mxu0 0
        %2521 = vmatpush1.bf16.msra.mxu0 0
        %2522 = vmatprep.mubr.bf16.mxu0 0
        %2523 = vmatmul.mubr.bf16.gmra.mrb[0].mxu0 %v2485
        %v2524 = vpop.f32.mrb[0].mxu0
        %v2525 = vadd.f32 0.0, %v2524
        %v2526 = vpop.f32.mrb[0].mxu0
        %v2527 = vpop.f32.mrb[0].mxu0
        %v2528 = vpop.f32.mrb[0].mxu0
        %2529 = vdwg.mxu0
        %2530 = vrot.lane.b32.xlu0 %v1566, 64
        %v2531 = vpop.permute.xlu0 %2530
        %v2533 = vsel %vm1810, %v1807, 0
        %v2536 = vsel %vm1814, %v2531, 0
        %2538 = vmatprep.subr.bf16.mxu0 0
        %2539 = vmatpush1.bf16.msra.mxu0 %v2536
        %2540 = vmatprep.subr.bf16.mxu0 0
        %2541 = vmatpush1.bf16.msra.mxu0 0
        %2542 = vmatprep.subr.bf16.mxu0 0
        %2543 = vmatpush1.bf16.msra.mxu0 0
        %2544 = vmatprep.subr.bf16.mxu0 0
        %2545 = vmatpush1.bf16.msra.mxu0 0
        %2546 = vmatprep.subr.bf16.mxu0 0
        %2547 = vmatpush1.bf16.msra.mxu0 0
        %2548 = vmatprep.subr.bf16.mxu0 0
        %2549 = vmatpush1.bf16.msra.mxu0 0
        %2550 = vmatprep.subr.bf16.mxu0 0
        %2551 = vmatpush1.bf16.msra.mxu0 0
        %2552 = vmatprep.subr.bf16.mxu0 0
        %2553 = vmatpush1.bf16.msra.mxu0 0
        %2554 = vmatprep.subr.bf16.mxu0 0
        %2555 = vmatpush1.bf16.msra.mxu0 0
        %2556 = vmatprep.subr.bf16.mxu0 0
        %2557 = vmatpush1.bf16.msra.mxu0 0
        %2558 = vmatprep.subr.bf16.mxu0 0
        %2559 = vmatpush1.bf16.msra.mxu0 0
        %2560 = vmatprep.subr.bf16.mxu0 0
        %2561 = vmatpush1.bf16.msra.mxu0 0
        %2562 = vmatprep.subr.bf16.mxu0 0
        %2563 = vmatpush1.bf16.msra.mxu0 0
        %2564 = vmatprep.subr.bf16.mxu0 0
        %2565 = vmatpush1.bf16.msra.mxu0 0
        %2566 = vmatprep.subr.bf16.mxu0 0
        %2567 = vmatpush1.bf16.msra.mxu0 0
        %2568 = vmatprep.subr.bf16.mxu0 0
        %2569 = vmatpush1.bf16.msra.mxu0 0
        %2570 = vmatprep.mubr.bf16.mxu0 0
        %2571 = vmatmul.mubr.bf16.gmra.mrb[0].mxu0 %v2533
        %v2572 = vpop.f32.mrb[0].mxu0
        %v2573 = vadd.f32 0.0, %v2572
        %v2574 = vpop.f32.mrb[0].mxu0
        %v2575 = vpop.f32.mrb[0].mxu0
        %v2576 = vpop.f32.mrb[0].mxu0
        %2577 = vdwg.mxu0
        %2582 = vrot.lane.b32.xlu0 %v2045, 8
        %v2583 = vpop.permute.xlu0 %2582
        %2584 = vrot.lane.b32.xlu0 %v2093, 8
        %v2585 = vpop.permute.xlu0 %2584
        %2586 = vrot.lane.b32.xlu0 %v2141, 8
        %v2587 = vpop.permute.xlu0 %2586
        %2588 = vrot.lane.b32.xlu0 %v2189, 8
        %v2589 = vpop.permute.xlu0 %2588
        %2598 = vrot.lane.b32.xlu0 %v2237, 16
        %v2599 = vpop.permute.xlu0 %2598
        %2600 = vrot.lane.b32.xlu0 %v2285, 16
        %v2601 = vpop.permute.xlu0 %2600
        %2602 = vrot.lane.b32.xlu0 %v2333, 16
        %v2603 = vpop.permute.xlu0 %2602
        %2604 = vrot.lane.b32.xlu0 %v2381, 16
        %v2605 = vpop.permute.xlu0 %2604
        %2614 = vrot.lane.b32.xlu0 %v2429, 24
        %v2615 = vpop.permute.xlu0 %2614
        %2616 = vrot.lane.b32.xlu0 %v2477, 24
        %v2617 = vpop.permute.xlu0 %2616
        %2618 = vrot.lane.b32.xlu0 %v2525, 24
        %v2619 = vpop.permute.xlu0 %2618
        %2620 = vrot.lane.b32.xlu0 %v2573, 24
        %v2621 = vpop.permute.xlu0 %2620
        %v2626 = vsel %vm638, %v1853, %v2583
        %v2627 = vsel %vm638, %v1901, %v2585
        %v2628 = vsel %vm638, %v1949, %v2587
        %v2629 = vsel %vm638, %v1997, %v2589
        %vm2630 = vcmask 130048
        %v2631 = vsel %vm2630, %v2626, %v2599
        %v2632 = vsel %vm2630, %v2627, %v2601
        %v2633 = vsel %vm2630, %v2628, %v2603
        %v2634 = vsel %vm2630, %v2629, %v2605
        %vm2635 = vcmask 195584
        %v2636 = vsel %vm2635, %v2631, %v2615
        %v2637 = vsel %vm2635, %v2632, %v2617
        %v2638 = vsel %vm2635, %v2633, %v2619
        %v2639 = vsel %vm2635, %v2634, %v2621
        %v2644 = vcombine.low %v2636, %v2637
        %v2645 = vcombine.low %v2638, %v2639
        %v2647 = vunpack.c.l.s4 1983009808
        %v2648 = vunpack.c.0.s8 %v2647
        %v2649 = vlaneseq
        %v2650 = vshrl.u32 %v2649, 7
        %v2651 = vsub.s32 %v2648, %v2650
        %v2652 = vrot.slane %v2644, %v2651
        %v2654 = vunpack.c.l.s4 1983009808
        %v2655 = vunpack.c.0.s8 %v2654
        %v2656 = vlaneseq
        %v2657 = vshrl.u32 %v2656, 7
        %v2658 = vsub.s32 %v2655, %v2657
        %v2659 = vrot.slane %v2645, %v2658
        %v2660 = vcombine.low %v2652, %v2659
        %v2662 = vpack.c.bf16 %v2660, %v2660
        %v2663 = vld [vmem:[%s3] sm:$0xf]
        %v2664 = vld [vmem:[%s3 + $0x4] sm:$0xf]
        %v2665 = vld [vmem:[%s3 + $0x8] sm:$0xf]
        %v2666 = vld [vmem:[%s3 + $0xc] sm:$0xf]
        %v2667 = vld [vmem:[%s4] sm:$0x1]
        %v2669 = vlaneseq
        %v2670 = vshrl.u32 %v2669, 7
        %v2671 = vsub.s32 0, %v2670
        %v2672 = vrot.slane %v2667, %v2671
        %v2678 = vunpack.c.l.b16 %v2663
        %v2679 = vunpack.c.l.b16 %v2664
        %v2680 = vunpack.c.l.b16 %v2665
        %v2681 = vunpack.c.l.b16 %v2666
        %v2682 = vpack.c.b16 %v2679, %v2678
        %v2683 = vpack.c.b16 %v2681, %v2680
        %v2687 = vsel %vm477, %v2662, 0
        %2689 = vmatprep.subr.bf16.mxu0 0
        %2690 = vmatpush1.bf16.msra.mxu0 %v2682
        %2691 = vmatprep.subr.bf16.mxu0 0
        %2692 = vmatpush1.bf16.msra.mxu0 %v2683
        %2693 = vmatprep.subr.bf16.mxu0 0
        %2694 = vmatpush1.bf16.msra.mxu0 0
        %2695 = vmatprep.subr.bf16.mxu0 0
        %2696 = vmatpush1.bf16.msra.mxu0 0
        %2697 = vmatprep.subr.bf16.mxu0 0
        %2698 = vmatpush1.bf16.msra.mxu0 0
        %2699 = vmatprep.subr.bf16.mxu0 0
        %2700 = vmatpush1.bf16.msra.mxu0 0
        %2701 = vmatprep.subr.bf16.mxu0 0
        %2702 = vmatpush1.bf16.msra.mxu0 0
        %2703 = vmatprep.subr.bf16.mxu0 0
        %2704 = vmatpush1.bf16.msra.mxu0 0
        %2705 = vmatprep.subr.bf16.mxu0 0
        %2706 = vmatpush1.bf16.msra.mxu0 0
        %2707 = vmatprep.subr.bf16.mxu0 0
        %2708 = vmatpush1.bf16.msra.mxu0 0
        %2709 = vmatprep.subr.bf16.mxu0 0
        %2710 = vmatpush1.bf16.msra.mxu0 0
        %2711 = vmatprep.subr.bf16.mxu0 0
        %2712 = vmatpush1.bf16.msra.mxu0 0
        %2713 = vmatprep.subr.bf16.mxu0 0
        %2714 = vmatpush1.bf16.msra.mxu0 0
        %2715 = vmatprep.subr.bf16.mxu0 0
        %2716 = vmatpush1.bf16.msra.mxu0 0
        %2717 = vmatprep.subr.bf16.mxu0 0
        %2718 = vmatpush1.bf16.msra.mxu0 0
        %2719 = vmatprep.subr.bf16.mxu0 0
        %2720 = vmatpush1.bf16.msra.mxu0 0
        %2721 = vmatprep.mubr.bf16.mxu0 0
        %2722 = vmatmul.mubr.bf16.gmra.mrb[0].mxu0 %v2687
        %v2723 = vpop.f32.mrb[0].mxu0
        %v2724 = vadd.f32 %v2672, %v2723
        %v2725 = vpop.f32.mrb[0].mxu0
        %v2726 = vpop.f32.mrb[0].mxu0
        %v2727 = vpop.f32.mrb[0].mxu0
        %2728 = vdwg.mxu0
        %v2729 = vadd.f32 %v453, %v2724
        %v2730 = vld [vmem:[%s5] sm:$0x1]
        %v2731 = vld [vmem:[%s6] sm:$0x1]
        %v2732 = vsel %vm477, %v2729, 0.0
        %2733 = vadd.xlane.f32.xlu0 %v2732
        %v2734 = vpop.xlane.xlu0 %2733
        %v2735 = vrcp.pop 32.0
        %v2736 = vmul.f32 %v2734, %v2735
        %v2737 = vsub.f32 %v2729, %v2736
        %v2738 = vmul.f32 %v2737, %v2737
        %v2739 = vsel %vm477, %v2738, 0.0
        %2740 = vadd.xlane.f32.xlu0 %v2739
        %v2741 = vpop.xlane.xlu0 %2740
        %v2742 = vmul.f32 %v2741, %v2735
        %v2743 = vadd.f32 %v2742, 1e-05
        %v2744 = vrsqrt.pop %v2743
        %v2745 = vmul.f32 %v2737, %v2744
        %v2747 = vlaneseq
        %v2748 = vshrl.u32 %v2747, 7
        %v2749 = vsub.s32 0, %v2748
        %v2750 = vrot.slane %v2730, %v2749
        %v2752 = vmul.f32 %v2745, %v2750
        %v2754 = vlaneseq
        %v2755 = vshrl.u32 %v2754, 7
        %v2756 = vsub.s32 0, %v2755
        %v2757 = vrot.slane %v2731, %v2756
        %v2759 = vadd.f32 %v2752, %v2757
        %v2760 = vpack.c.bf16 %v2759, %v2759
        %v2761 = vld [vmem:[%s7] sm:$0xff]
        %v2762 = vld [vmem:[%s7 + $0x8] sm:$0xff]
        %v2763 = vld [vmem:[%s7 + $0x10] sm:$0xff]
        %v2764 = vld [vmem:[%s7 + $0x18] sm:$0xff]
        %v2765 = vld [vmem:[%s7 + $0x20] sm:$0xff]
        %v2766 = vld [vmem:[%s7 + $0x28] sm:$0xff]
        %v2767 = vld [vmem:[%s7 + $0x30] sm:$0xff]
        %v2768 = vld [vmem:[%s7 + $0x38] sm:$0xff]
        %v2769 = vld [vmem:[%s7 + $0x40] sm:$0xff]
        %v2770 = vld [vmem:[%s7 + $0x48] sm:$0xff]
        %v2771 = vld [vmem:[%s7 + $0x50] sm:$0xff]
        %v2772 = vld [vmem:[%s7 + $0x58] sm:$0xff]
        %v2773 = vld [vmem:[%s7 + $0x60] sm:$0xff]
        %v2774 = vld [vmem:[%s7 + $0x68] sm:$0xff]
        %v2775 = vld [vmem:[%s7 + $0x70] sm:$0xff]
        %v2776 = vld [vmem:[%s7 + $0x78] sm:$0xff]
        %v2777 = vld [vmem:[%s7 + $0x80] sm:$0xff]
        %v2778 = vld [vmem:[%s7 + $0x88] sm:$0xff]
        %v2779 = vld [vmem:[%s7 + $0x90] sm:$0xff]
        %v2780 = vld [vmem:[%s7 + $0x98] sm:$0xff]
        %v2781 = vld [vmem:[%s7 + $0xa0] sm:$0xff]
        %v2782 = vld [vmem:[%s7 + $0xa8] sm:$0xff]
        %v2783 = vld [vmem:[%s7 + $0xb0] sm:$0xff]
        %v2784 = vld [vmem:[%s7 + $0xb8] sm:$0xff]
        %v2785 = vld [vmem:[%s7 + $0xc0] sm:$0xff]
        %v2786 = vld [vmem:[%s7 + $0xc8] sm:$0xff]
        %v2787 = vld [vmem:[%s7 + $0xd0] sm:$0xff]
        %v2788 = vld [vmem:[%s7 + $0xd8] sm:$0xff]
        %v2789 = vld [vmem:[%s7 + $0xe0] sm:$0xff]
        %v2790 = vld [vmem:[%s7 + $0xe8] sm:$0xff]
        %v2791 = vld [vmem:[%s7 + $0xf0] sm:$0xff]
        %v2792 = vld [vmem:[%s7 + $0xf8] sm:$0xff]
        %v2793 = vld [vmem:[%s8] sm:$0xff]
        %v2794 = vld [vmem:[%s8 + $0x8] sm:$0xff]
        %v2797 = vlaneseq
        %v2798 = vshrl.u32 %v2797, 7
        %v2799 = vsub.s32 0, %v2798
        %v2800 = vrot.slane %v2793, %v2799
        %v2801 = vlaneseq
        %v2802 = vshrl.u32 %v2801, 7
        %v2803 = vsub.s32 1, %v2802
        %v2804 = vrot.slane %v2793, %v2803
        %v2805 = vlaneseq
        %v2806 = vshrl.u32 %v2805, 7
        %v2807 = vsub.s32 2, %v2806
        %v2808 = vrot.slane %v2793, %v2807
        %v2809 = vlaneseq
        %v2810 = vshrl.u32 %v2809, 7
        %v2811 = vsub.s32 3, %v2810
        %v2812 = vrot.slane %v2793, %v2811
        %v2813 = vlaneseq
        %v2814 = vshrl.u32 %v2813, 7
        %v2815 = vsub.s32 4, %v2814
        %v2816 = vrot.slane %v2793, %v2815
        %v2817 = vlaneseq
        %v2818 = vshrl.u32 %v2817, 7
        %v2819 = vsub.s32 5, %v2818
        %v2820 = vrot.slane %v2793, %v2819
        %v2821 = vlaneseq
        %v2822 = vshrl.u32 %v2821, 7
        %v2823 = vsub.s32 6, %v2822
        %v2824 = vrot.slane %v2793, %v2823
        %v2825 = vlaneseq
        %v2826 = vshrl.u32 %v2825, 7
        %v2827 = vsub.s32 7, %v2826
        %v2828 = vrot.slane %v2793, %v2827
        %v2829 = vlaneseq
        %v2830 = vshrl.u32 %v2829, 7
        %v2831 = vsub.s32 0, %v2830
        %v2832 = vrot.slane %v2794, %v2831
        %v2833 = vlaneseq
        %v2834 = vshrl.u32 %v2833, 7
        %v2835 = vsub.s32 1, %v2834
        %v2836 = vrot.slane %v2794, %v2835
        %v2837 = vlaneseq
        %v2838 = vshrl.u32 %v2837, 7
        %v2839 = vsub.s32 2, %v2838
        %v2840 = vrot.slane %v2794, %v2839
        %v2841 = vlaneseq
        %v2842 = vshrl.u32 %v2841, 7
        %v2843 = vsub.s32 3, %v2842
        %v2844 = vrot.slane %v2794, %v2843
        %v2845 = vlaneseq
        %v2846 = vshrl.u32 %v2845, 7
        %v2847 = vsub.s32 4, %v2846
        %v2848 = vrot.slane %v2794, %v2847
        %v2849 = vlaneseq
        %v2850 = vshrl.u32 %v2849, 7
        %v2851 = vsub.s32 5, %v2850
        %v2852 = vrot.slane %v2794, %v2851
        %v2853 = vlaneseq
        %v2854 = vshrl.u32 %v2853, 7
        %v2855 = vsub.s32 6, %v2854
        %v2856 = vrot.slane %v2794, %v2855
        %v2857 = vlaneseq
        %v2858 = vshrl.u32 %v2857, 7
        %v2859 = vsub.s32 7, %v2858
        %v2860 = vrot.slane %v2794, %v2859
        %v2909 = vunpack.c.l.b16 %v2761
        %v2910 = vunpack.c.h.b16 %v2761
        %v2911 = vunpack.c.l.b16 %v2762
        %v2912 = vunpack.c.h.b16 %v2762
        %v2913 = vunpack.c.l.b16 %v2763
        %v2914 = vunpack.c.h.b16 %v2763
        %v2915 = vunpack.c.l.b16 %v2764
        %v2916 = vunpack.c.h.b16 %v2764
        %v2917 = vunpack.c.l.b16 %v2765
        %v2918 = vunpack.c.h.b16 %v2765
        %v2919 = vunpack.c.l.b16 %v2766
        %v2920 = vunpack.c.h.b16 %v2766
        %v2921 = vunpack.c.l.b16 %v2767
        %v2922 = vunpack.c.h.b16 %v2767
        %v2923 = vunpack.c.l.b16 %v2768
        %v2924 = vunpack.c.h.b16 %v2768
        %v2925 = vunpack.c.l.b16 %v2769
        %v2926 = vunpack.c.h.b16 %v2769
        %v2927 = vunpack.c.l.b16 %v2770
        %v2928 = vunpack.c.h.b16 %v2770
        %v2929 = vunpack.c.l.b16 %v2771
        %v2930 = vunpack.c.h.b16 %v2771
        %v2931 = vunpack.c.l.b16 %v2772
        %v2932 = vunpack.c.h.b16 %v2772
        %v2933 = vunpack.c.l.b16 %v2773
        %v2934 = vunpack.c.h.b16 %v2773
        %v2935 = vunpack.c.l.b16 %v2774
        %v2936 = vunpack.c.h.b16 %v2774
        %v2937 = vunpack.c.l.b16 %v2775
        %v2938 = vunpack.c.h.b16 %v2775
        %v2939 = vunpack.c.l.b16 %v2776
        %v2940 = vunpack.c.h.b16 %v2776
        %v2941 = vunpack.c.l.b16 %v2777
        %v2942 = vunpack.c.h.b16 %v2777
        %v2943 = vunpack.c.l.b16 %v2778
        %v2944 = vunpack.c.h.b16 %v2778
        %v2945 = vunpack.c.l.b16 %v2779
        %v2946 = vunpack.c.h.b16 %v2779
        %v2947 = vunpack.c.l.b16 %v2780
        %v2948 = vunpack.c.h.b16 %v2780
        %v2949 = vunpack.c.l.b16 %v2781
        %v2950 = vunpack.c.h.b16 %v2781
        %v2951 = vunpack.c.l.b16 %v2782
        %v2952 = vunpack.c.h.b16 %v2782
        %v2953 = vunpack.c.l.b16 %v2783
        %v2954 = vunpack.c.h.b16 %v2783
        %v2955 = vunpack.c.l.b16 %v2784
        %v2956 = vunpack.c.h.b16 %v2784
        %v2957 = vunpack.c.l.b16 %v2785
        %v2958 = vunpack.c.h.b16 %v2785
        %v2959 = vunpack.c.l.b16 %v2786
        %v2960 = vunpack.c.h.b16 %v2786
        %v2961 = vunpack.c.l.b16 %v2787
        %v2962 = vunpack.c.h.b16 %v2787
        %v2963 = vunpack.c.l.b16 %v2788
        %v2964 = vunpack.c.h.b16 %v2788
        %v2965 = vunpack.c.l.b16 %v2789
        %v2966 = vunpack.c.h.b16 %v2789
        %v2967 = vunpack.c.l.b16 %v2790
        %v2968 = vunpack.c.h.b16 %v2790
        %v2969 = vunpack.c.l.b16 %v2791
        %v2970 = vunpack.c.h.b16 %v2791
        %v2971 = vunpack.c.l.b16 %v2792
        %v2972 = vunpack.c.h.b16 %v2792
        %v2973 = vpack.c.b16 %v2925, %v2909
        %v2974 = vpack.c.b16 %v2926, %v2910
        %v2975 = vpack.c.b16 %v2927, %v2911
        %v2976 = vpack.c.b16 %v2928, %v2912
        %v2977 = vpack.c.b16 %v2929, %v2913
        %v2978 = vpack.c.b16 %v2930, %v2914
        %v2979 = vpack.c.b16 %v2931, %v2915
        %v2980 = vpack.c.b16 %v2932, %v2916
        %v2981 = vpack.c.b16 %v2933, %v2917
        %v2982 = vpack.c.b16 %v2934, %v2918
        %v2983 = vpack.c.b16 %v2935, %v2919
        %v2984 = vpack.c.b16 %v2936, %v2920
        %v2985 = vpack.c.b16 %v2937, %v2921
        %v2986 = vpack.c.b16 %v2938, %v2922
        %v2987 = vpack.c.b16 %v2939, %v2923
        %v2988 = vpack.c.b16 %v2940, %v2924
        %v2989 = vpack.c.b16 %v2957, %v2941
        %v2990 = vpack.c.b16 %v2958, %v2942
        %v2991 = vpack.c.b16 %v2959, %v2943
        %v2992 = vpack.c.b16 %v2960, %v2944
        %v2993 = vpack.c.b16 %v2961, %v2945
        %v2994 = vpack.c.b16 %v2962, %v2946
        %v2995 = vpack.c.b16 %v2963, %v2947
        %v2996 = vpack.c.b16 %v2964, %v2948
        %v2997 = vpack.c.b16 %v2965, %v2949
        %v2998 = vpack.c.b16 %v2966, %v2950
        %v2999 = vpack.c.b16 %v2967, %v2951
        %v3000 = vpack.c.b16 %v2968, %v2952
        %v3001 = vpack.c.b16 %v2969, %v2953
        %v3002 = vpack.c.b16 %v2970, %v2954
        %v3003 = vpack.c.b16 %v2971, %v2955
        %v3004 = vpack.c.b16 %v2972, %v2956
        %v3038 = vsel %vm477, %v2760, 0
        %3040 = vmatprep.subr.bf16.mxu0 %v2974
        %3041 = vmatpush1.bf16.msra.mxu0 %v2973
        %3042 = vmatprep.subr.bf16.mxu0 %v2990
        %3043 = vmatpush1.bf16.msra.mxu0 %v2989
        %3044 = vmatprep.subr.bf16.mxu0 0
        %3045 = vmatpush1.bf16.msra.mxu0 0
        %3046 = vmatprep.subr.bf16.mxu0 0
        %3047 = vmatpush1.bf16.msra.mxu0 0
        %3048 = vmatprep.subr.bf16.mxu0 0
        %3049 = vmatpush1.bf16.msra.mxu0 0
        %3050 = vmatprep.subr.bf16.mxu0 0
        %3051 = vmatpush1.bf16.msra.mxu0 0
        %3052 = vmatprep.subr.bf16.mxu0 0
        %3053 = vmatpush1.bf16.msra.mxu0 0
        %3054 = vmatprep.subr.bf16.mxu0 0
        %3055 = vmatpush1.bf16.msra.mxu0 0
        %3056 = vmatprep.subr.bf16.mxu0 0
        %3057 = vmatpush1.bf16.msra.mxu0 0
        %3058 = vmatprep.subr.bf16.mxu0 0
        %3059 = vmatpush1.bf16.msra.mxu0 0
        %3060 = vmatprep.subr.bf16.mxu0 0
        %3061 = vmatpush1.bf16.msra.mxu0 0
        %3062 = vmatprep.subr.bf16.mxu0 0
        %3063 = vmatpush1.bf16.msra.mxu0 0
        %3064 = vmatprep.subr.bf16.mxu0 0
        %3065 = vmatpush1.bf16.msra.mxu0 0
        %3066 = vmatprep.subr.bf16.mxu0 0
        %3067 = vmatpush1.bf16.msra.mxu0 0
        %3068 = vmatprep.subr.bf16.mxu0 0
        %3069 = vmatpush1.bf16.msra.mxu0 0
        %3070 = vmatprep.subr.bf16.mxu0 0
        %3071 = vmatpush1.bf16.msra.mxu0 0
        %3072 = vmatprep.mubr.bf16.mxu0 0
        %3073 = vmatmul.mubr.bf16.gmra.mrb[0].mxu0 %v3038
        %v3074 = vpop.f32.mrb[0].mxu0
        %v3075 = vadd.f32 %v2800, %v3074
        %v3076 = vpop.f32.mrb[0].mxu0
        %v3077 = vadd.f32 %v2804, %v3076
        %v3078 = vpop.f32.mrb[0].mxu0
        %v3079 = vpop.f32.mrb[0].mxu0
        %3080 = vdwg.mxu0
        %3081 = vmatprep.subr.bf16.mxu0 %v2976
        %3082 = vmatpush1.bf16.msra.mxu0 %v2975
        %3083 = vmatprep.subr.bf16.mxu0 %v2992
        %3084 = vmatpush1.bf16.msra.mxu0 %v2991
        %3085 = vmatprep.subr.bf16.mxu0 0
        %3086 = vmatpush1.bf16.msra.mxu0 0
        %3087 = vmatprep.subr.bf16.mxu0 0
        %3088 = vmatpush1.bf16.msra.mxu0 0
        %3089 = vmatprep.subr.bf16.mxu0 0
        %3090 = vmatpush1.bf16.msra.mxu0 0
        %3091 = vmatprep.subr.bf16.mxu0 0
        %3092 = vmatpush1.bf16.msra.mxu0 0
        %3093 = vmatprep.subr.bf16.mxu0 0
        %3094 = vmatpush1.bf16.msra.mxu0 0
        %3095 = vmatprep.subr.bf16.mxu0 0
        %3096 = vmatpush1.bf16.msra.mxu0 0
        %3097 = vmatprep.subr.bf16.mxu0 0
        %3098 = vmatpush1.bf16.msra.mxu0 0
        %3099 = vmatprep.subr.bf16.mxu0 0
        %3100 = vmatpush1.bf16.msra.mxu0 0
        %3101 = vmatprep.subr.bf16.mxu0 0
        %3102 = vmatpush1.bf16.msra.mxu0 0
        %3103 = vmatprep.subr.bf16.mxu0 0
        %3104 = vmatpush1.bf16.msra.mxu0 0
        %3105 = vmatprep.subr.bf16.mxu0 0
        %3106 = vmatpush1.bf16.msra.mxu0 0
        %3107 = vmatprep.subr.bf16.mxu0 0
        %3108 = vmatpush1.bf16.msra.mxu0 0
        %3109 = vmatprep.subr.bf16.mxu0 0
        %3110 = vmatpush1.bf16.msra.mxu0 0
        %3111 = vmatprep.subr.bf16.mxu0 0
        %3112 = vmatpush1.bf16.msra.mxu0 0
        %3113 = vmatprep.mubr.bf16.mxu0 0
        %3114 = vmatmul.mubr.bf16.gmra.mrb[0].mxu0 %v3038
        %v3115 = vpop.f32.mrb[0].mxu0
        %v3116 = vadd.f32 %v2808, %v3115
        %v3117 = vpop.f32.mrb[0].mxu0
        %v3118 = vadd.f32 %v2812, %v3117
        %v3119 = vpop.f32.mrb[0].mxu0
        %v3120 = vpop.f32.mrb[0].mxu0
        %3121 = vdwg.mxu0
        %3122 = vmatprep.subr.bf16.mxu0 %v2978
        %3123 = vmatpush1.bf16.msra.mxu0 %v2977
        %3124 = vmatprep.subr.bf16.mxu0 %v2994
        %3125 = vmatpush1.bf16.msra.mxu0 %v2993
        %3126 = vmatprep.subr.bf16.mxu0 0
        %3127 = vmatpush1.bf16.msra.mxu0 0
        %3128 = vmatprep.subr.bf16.mxu0 0
        %3129 = vmatpush1.bf16.msra.mxu0 0
        %3130 = vmatprep.subr.bf16.mxu0 0
        %3131 = vmatpush1.bf16.msra.mxu0 0
        %3132 = vmatprep.subr.bf16.mxu0 0
        %3133 = vmatpush1.bf16.msra.mxu0 0
        %3134 = vmatprep.subr.bf16.mxu0 0
        %3135 = vmatpush1.bf16.msra.mxu0 0
        %3136 = vmatprep.subr.bf16.mxu0 0
        %3137 = vmatpush1.bf16.msra.mxu0 0
        %3138 = vmatprep.subr.bf16.mxu0 0
        %3139 = vmatpush1.bf16.msra.mxu0 0
        %3140 = vmatprep.subr.bf16.mxu0 0
        %3141 = vmatpush1.bf16.msra.mxu0 0
        %3142 = vmatprep.subr.bf16.mxu0 0
        %3143 = vmatpush1.bf16.msra.mxu0 0
        %3144 = vmatprep.subr.bf16.mxu0 0
        %3145 = vmatpush1.bf16.msra.mxu0 0
        %3146 = vmatprep.subr.bf16.mxu0 0
        %3147 = vmatpush1.bf16.msra.mxu0 0
        %3148 = vmatprep.subr.bf16.mxu0 0
        %3149 = vmatpush1.bf16.msra.mxu0 0
        %3150 = vmatprep.subr.bf16.mxu0 0
        %3151 = vmatpush1.bf16.msra.mxu0 0
        %3152 = vmatprep.subr.bf16.mxu0 0
        %3153 = vmatpush1.bf16.msra.mxu0 0
        %3154 = vmatprep.mubr.bf16.mxu0 0
        %3155 = vmatmul.mubr.bf16.gmra.mrb[0].mxu0 %v3038
        %v3156 = vpop.f32.mrb[0].mxu0
        %v3157 = vadd.f32 %v2816, %v3156
        %v3158 = vpop.f32.mrb[0].mxu0
        %v3159 = vadd.f32 %v2820, %v3158
        %v3160 = vpop.f32.mrb[0].mxu0
        %v3161 = vpop.f32.mrb[0].mxu0
        %3162 = vdwg.mxu0
        %3163 = vmatprep.subr.bf16.mxu0 %v2980
        %3164 = vmatpush1.bf16.msra.mxu0 %v2979
        %3165 = vmatprep.subr.bf16.mxu0 %v2996
        %3166 = vmatpush1.bf16.msra.mxu0 %v2995
        %3167 = vmatprep.subr.bf16.mxu0 0
        %3168 = vmatpush1.bf16.msra.mxu0 0
        %3169 = vmatprep.subr.bf16.mxu0 0
        %3170 = vmatpush1.bf16.msra.mxu0 0
        %3171 = vmatprep.subr.bf16.mxu0 0
        %3172 = vmatpush1.bf16.msra.mxu0 0
        %3173 = vmatprep.subr.bf16.mxu0 0
        %3174 = vmatpush1.bf16.msra.mxu0 0
        %3175 = vmatprep.subr.bf16.mxu0 0
        %3176 = vmatpush1.bf16.msra.mxu0 0
        %3177 = vmatprep.subr.bf16.mxu0 0
        %3178 = vmatpush1.bf16.msra.mxu0 0
        %3179 = vmatprep.subr.bf16.mxu0 0
        %3180 = vmatpush1.bf16.msra.mxu0 0
        %3181 = vmatprep.subr.bf16.mxu0 0
        %3182 = vmatpush1.bf16.msra.mxu0 0
        %3183 = vmatprep.subr.bf16.mxu0 0
        %3184 = vmatpush1.bf16.msra.mxu0 0
        %3185 = vmatprep.subr.bf16.mxu0 0
        %3186 = vmatpush1.bf16.msra.mxu0 0
        %3187 = vmatprep.subr.bf16.mxu0 0
        %3188 = vmatpush1.bf16.msra.mxu0 0
        %3189 = vmatprep.subr.bf16.mxu0 0
        %3190 = vmatpush1.bf16.msra.mxu0 0
        %3191 = vmatprep.subr.bf16.mxu0 0
        %3192 = vmatpush1.bf16.msra.mxu0 0
        %3193 = vmatprep.subr.bf16.mxu0 0
        %3194 = vmatpush1.bf16.msra.mxu0 0
        %3195 = vmatprep.mubr.bf16.mxu0 0
        %3196 = vmatmul.mubr.bf16.gmra.mrb[0].mxu0 %v3038
        %v3197 = vpop.f32.mrb[0].mxu0
        %v3198 = vadd.f32 %v2824, %v3197
        %v3199 = vpop.f32.mrb[0].mxu0
        %v3200 = vadd.f32 %v2828, %v3199
        %v3201 = vpop.f32.mrb[0].mxu0
        %v3202 = vpop.f32.mrb[0].mxu0
        %3203 = vdwg.mxu0
        %3204 = vmatprep.subr.bf16.mxu0 %v2982
        %3205 = vmatpush1.bf16.msra.mxu0 %v2981
        %3206 = vmatprep.subr.bf16.mxu0 %v2998
        %3207 = vmatpush1.bf16.msra.mxu0 %v2997
        %3208 = vmatprep.subr.bf16.mxu0 0
        %3209 = vmatpush1.bf16.msra.mxu0 0
        %3210 = vmatprep.subr.bf16.mxu0 0
        %3211 = vmatpush1.bf16.msra.mxu0 0
        %3212 = vmatprep.subr.bf16.mxu0 0
        %3213 = vmatpush1.bf16.msra.mxu0 0
        %3214 = vmatprep.subr.bf16.mxu0 0
        %3215 = vmatpush1.bf16.msra.mxu0 0
        %3216 = vmatprep.subr.bf16.mxu0 0
        %3217 = vmatpush1.bf16.msra.mxu0 0
        %3218 = vmatprep.subr.bf16.mxu0 0
        %3219 = vmatpush1.bf16.msra.mxu0 0
        %3220 = vmatprep.subr.bf16.mxu0 0
        %3221 = vmatpush1.bf16.msra.mxu0 0
        %3222 = vmatprep.subr.bf16.mxu0 0
        %3223 = vmatpush1.bf16.msra.mxu0 0
        %3224 = vmatprep.subr.bf16.mxu0 0
        %3225 = vmatpush1.bf16.msra.mxu0 0
        %3226 = vmatprep.subr.bf16.mxu0 0
        %3227 = vmatpush1.bf16.msra.mxu0 0
        %3228 = vmatprep.subr.bf16.mxu0 0
        %3229 = vmatpush1.bf16.msra.mxu0 0
        %3230 = vmatprep.subr.bf16.mxu0 0
        %3231 = vmatpush1.bf16.msra.mxu0 0
        %3232 = vmatprep.subr.bf16.mxu0 0
        %3233 = vmatpush1.bf16.msra.mxu0 0
        %3234 = vmatprep.subr.bf16.mxu0 0
        %3235 = vmatpush1.bf16.msra.mxu0 0
        %3236 = vmatprep.mubr.bf16.mxu0 0
        %3237 = vmatmul.mubr.bf16.gmra.mrb[0].mxu0 %v3038
        %v3238 = vpop.f32.mrb[0].mxu0
        %v3239 = vadd.f32 %v2832, %v3238
        %v3240 = vpop.f32.mrb[0].mxu0
        %v3241 = vadd.f32 %v2836, %v3240
        %v3242 = vpop.f32.mrb[0].mxu0
        %v3243 = vpop.f32.mrb[0].mxu0
        %3244 = vdwg.mxu0
        %3245 = vmatprep.subr.bf16.mxu0 %v2984
        %3246 = vmatpush1.bf16.msra.mxu0 %v2983
        %3247 = vmatprep.subr.bf16.mxu0 %v3000
        %3248 = vmatpush1.bf16.msra.mxu0 %v2999
        %3249 = vmatprep.subr.bf16.mxu0 0
        %3250 = vmatpush1.bf16.msra.mxu0 0
        %3251 = vmatprep.subr.bf16.mxu0 0
        %3252 = vmatpush1.bf16.msra.mxu0 0
        %3253 = vmatprep.subr.bf16.mxu0 0
        %3254 = vmatpush1.bf16.msra.mxu0 0
        %3255 = vmatprep.subr.bf16.mxu0 0
        %3256 = vmatpush1.bf16.msra.mxu0 0
        %3257 = vmatprep.subr.bf16.mxu0 0
        %3258 = vmatpush1.bf16.msra.mxu0 0
        %3259 = vmatprep.subr.bf16.mxu0 0
        %3260 = vmatpush1.bf16.msra.mxu0 0
        %3261 = vmatprep.subr.bf16.mxu0 0
        %3262 = vmatpush1.bf16.msra.mxu0 0
        %3263 = vmatprep.subr.bf16.mxu0 0
        %3264 = vmatpush1.bf16.msra.mxu0 0
        %3265 = vmatprep.subr.bf16.mxu0 0
        %3266 = vmatpush1.bf16.msra.mxu0 0
        %3267 = vmatprep.subr.bf16.mxu0 0
        %3268 = vmatpush1.bf16.msra.mxu0 0
        %3269 = vmatprep.subr.bf16.mxu0 0
        %3270 = vmatpush1.bf16.msra.mxu0 0
        %3271 = vmatprep.subr.bf16.mxu0 0
        %3272 = vmatpush1.bf16.msra.mxu0 0
        %3273 = vmatprep.subr.bf16.mxu0 0
        %3274 = vmatpush1.bf16.msra.mxu0 0
        %3275 = vmatprep.subr.bf16.mxu0 0
        %3276 = vmatpush1.bf16.msra.mxu0 0
        %3277 = vmatprep.mubr.bf16.mxu0 0
        %3278 = vmatmul.mubr.bf16.gmra.mrb[0].mxu0 %v3038
        %v3279 = vpop.f32.mrb[0].mxu0
        %v3280 = vadd.f32 %v2840, %v3279
        %v3281 = vpop.f32.mrb[0].mxu0
        %v3282 = vadd.f32 %v2844, %v3281
        %v3283 = vpop.f32.mrb[0].mxu0
        %v3284 = vpop.f32.mrb[0].mxu0
        %3285 = vdwg.mxu0
        %3286 = vmatprep.subr.bf16.mxu0 %v2986
        %3287 = vmatpush1.bf16.msra.mxu0 %v2985
        %3288 = vmatprep.subr.bf16.mxu0 %v3002
        %3289 = vmatpush1.bf16.msra.mxu0 %v3001
        %3290 = vmatprep.subr.bf16.mxu0 0
        %3291 = vmatpush1.bf16.msra.mxu0 0
        %3292 = vmatprep.subr.bf16.mxu0 0
        %3293 = vmatpush1.bf16.msra.mxu0 0
        %3294 = vmatprep.subr.bf16.mxu0 0
        %3295 = vmatpush1.bf16.msra.mxu0 0
        %3296 = vmatprep.subr.bf16.mxu0 0
        %3297 = vmatpush1.bf16.msra.mxu0 0
        %3298 = vmatprep.subr.bf16.mxu0 0
        %3299 = vmatpush1.bf16.msra.mxu0 0
        %3300 = vmatprep.subr.bf16.mxu0 0
        %3301 = vmatpush1.bf16.msra.mxu0 0
        %3302 = vmatprep.subr.bf16.mxu0 0
        %3303 = vmatpush1.bf16.msra.mxu0 0
        %3304 = vmatprep.subr.bf16.mxu0 0
        %3305 = vmatpush1.bf16.msra.mxu0 0
        %3306 = vmatprep.subr.bf16.mxu0 0
        %3307 = vmatpush1.bf16.msra.mxu0 0
        %3308 = vmatprep.subr.bf16.mxu0 0
        %3309 = vmatpush1.bf16.msra.mxu0 0
        %3310 = vmatprep.subr.bf16.mxu0 0
        %3311 = vmatpush1.bf16.msra.mxu0 0
        %3312 = vmatprep.subr.bf16.mxu0 0
        %3313 = vmatpush1.bf16.msra.mxu0 0
        %3314 = vmatprep.subr.bf16.mxu0 0
        %3315 = vmatpush1.bf16.msra.mxu0 0
        %3316 = vmatprep.subr.bf16.mxu0 0
        %3317 = vmatpush1.bf16.msra.mxu0 0
        %3318 = vmatprep.mubr.bf16.mxu0 0
        %3319 = vmatmul.mubr.bf16.gmra.mrb[0].mxu0 %v3038
        %v3320 = vpop.f32.mrb[0].mxu0
        %v3321 = vadd.f32 %v2848, %v3320
        %v3322 = vpop.f32.mrb[0].mxu0
        %v3323 = vadd.f32 %v2852, %v3322
        %v3324 = vpop.f32.mrb[0].mxu0
        %v3325 = vpop.f32.mrb[0].mxu0
        %3326 = vdwg.mxu0
        %3327 = vmatprep.subr.bf16.mxu0 %v2988
        %3328 = vmatpush1.bf16.msra.mxu0 %v2987
        %3329 = vmatprep.subr.bf16.mxu0 %v3004
        %3330 = vmatpush1.bf16.msra.mxu0 %v3003
        %3331 = vmatprep.subr.bf16.mxu0 0
        %3332 = vmatpush1.bf16.msra.mxu0 0
        %3333 = vmatprep.subr.bf16.mxu0 0
        %3334 = vmatpush1.bf16.msra.mxu0 0
        %3335 = vmatprep.subr.bf16.mxu0 0
        %3336 = vmatpush1.bf16.msra.mxu0 0
        %3337 = vmatprep.subr.bf16.mxu0 0
        %3338 = vmatpush1.bf16.msra.mxu0 0
        %3339 = vmatprep.subr.bf16.mxu0 0
        %3340 = vmatpush1.bf16.msra.mxu0 0
        %3341 = vmatprep.subr.bf16.mxu0 0
        %3342 = vmatpush1.bf16.msra.mxu0 0
        %3343 = vmatprep.subr.bf16.mxu0 0
        %3344 = vmatpush1.bf16.msra.mxu0 0
        %3345 = vmatprep.subr.bf16.mxu0 0
        %3346 = vmatpush1.bf16.msra.mxu0 0
        %3347 = vmatprep.subr.bf16.mxu0 0
        %3348 = vmatpush1.bf16.msra.mxu0 0
        %3349 = vmatprep.subr.bf16.mxu0 0
        %3350 = vmatpush1.bf16.msra.mxu0 0
        %3351 = vmatprep.subr.bf16.mxu0 0
        %3352 = vmatpush1.bf16.msra.mxu0 0
        %3353 = vmatprep.subr.bf16.mxu0 0
        %3354 = vmatpush1.bf16.msra.mxu0 0
        %3355 = vmatprep.subr.bf16.mxu0 0
        %3356 = vmatpush1.bf16.msra.mxu0 0
        %3357 = vmatprep.subr.bf16.mxu0 0
        %3358 = vmatpush1.bf16.msra.mxu0 0
        %3359 = vmatprep.mubr.bf16.mxu0 0
        %3360 = vmatmul.mubr.bf16.gmra.mrb[0].mxu0 %v3038
        %v3361 = vpop.f32.mrb[0].mxu0
        %v3362 = vadd.f32 %v2856, %v3361
        %v3363 = vpop.f32.mrb[0].mxu0
        %v3364 = vadd.f32 %v2860, %v3363
        %v3365 = vpop.f32.mrb[0].mxu0
        %v3366 = vpop.f32.mrb[0].mxu0
        %3367 = vdwg.mxu0
        %v3368 = vmax.f32 %v3075, 0.0
        %v3369 = vmax.f32 %v3077, 0.0
        %v3370 = vmax.f32 %v3116, 0.0
        %v3371 = vmax.f32 %v3118, 0.0
        %v3372 = vmax.f32 %v3157, 0.0
        %v3373 = vmax.f32 %v3159, 0.0
        %v3374 = vmax.f32 %v3198, 0.0
        %v3375 = vmax.f32 %v3200, 0.0
        %v3376 = vmax.f32 %v3239, 0.0
        %v3377 = vmax.f32 %v3241, 0.0
        %v3378 = vmax.f32 %v3280, 0.0
        %v3379 = vmax.f32 %v3282, 0.0
        %v3380 = vmax.f32 %v3321, 0.0
        %v3381 = vmax.f32 %v3323, 0.0
        %v3382 = vmax.f32 %v3362, 0.0
        %v3383 = vmax.f32 %v3364, 0.0
        %v3384 = vpack.c.bf16 %v3368, %v3368
        %v3385 = vpack.c.bf16 %v3369, %v3369
        %v3386 = vpack.c.bf16 %v3370, %v3370
        %v3387 = vpack.c.bf16 %v3371, %v3371
        %v3388 = vpack.c.bf16 %v3372, %v3372
        %v3389 = vpack.c.bf16 %v3373, %v3373
        %v3390 = vpack.c.bf16 %v3374, %v3374
        %v3391 = vpack.c.bf16 %v3375, %v3375
        %v3392 = vpack.c.bf16 %v3376, %v3376
        %v3393 = vpack.c.bf16 %v3377, %v3377
        %v3394 = vpack.c.bf16 %v3378, %v3378
        %v3395 = vpack.c.bf16 %v3379, %v3379
        %v3396 = vpack.c.bf16 %v3380, %v3380
        %v3397 = vpack.c.bf16 %v3381, %v3381
        %v3398 = vpack.c.bf16 %v3382, %v3382
        %v3399 = vpack.c.bf16 %v3383, %v3383
        %v3400 = vld [vmem:[#allocation2] sm:$0xf]
        %v3401 = vld [vmem:[#allocation2 + $0x4] sm:$0xf]
        %v3402 = vld [vmem:[#allocation2 + $0x8] sm:$0xf]
        %v3403 = vld [vmem:[#allocation2 + $0xc] sm:$0xf]
        %v3404 = vld [vmem:[#allocation2 + $0x10] sm:$0xf]
        %v3405 = vld [vmem:[#allocation2 + $0x14] sm:$0xf]
        %v3406 = vld [vmem:[#allocation2 + $0x18] sm:$0xf]
        %v3407 = vld [vmem:[#allocation2 + $0x1c] sm:$0xf]
        %v3408 = vld [vmem:[#allocation2 + $0x20] sm:$0xf]
        %v3409 = vld [vmem:[#allocation2 + $0x24] sm:$0xf]
        %v3410 = vld [vmem:[#allocation2 + $0x28] sm:$0xf]
        %v3411 = vld [vmem:[#allocation2 + $0x2c] sm:$0xf]
        %v3412 = vld [vmem:[#allocation2 + $0x30] sm:$0xf]
        %v3413 = vld [vmem:[#allocation2 + $0x34] sm:$0xf]
        %v3414 = vld [vmem:[#allocation2 + $0x38] sm:$0xf]
        %v3415 = vld [vmem:[#allocation2 + $0x3c] sm:$0xf]
        %v3416 = vld [vmem:[#allocation2 + $0x40] sm:$0xf]
        %v3417 = vld [vmem:[#allocation2 + $0x44] sm:$0xf]
        %v3418 = vld [vmem:[#allocation2 + $0x48] sm:$0xf]
        %v3419 = vld [vmem:[#allocation2 + $0x4c] sm:$0xf]
        %v3420 = vld [vmem:[#allocation2 + $0x50] sm:$0xf]
        %v3421 = vld [vmem:[#allocation2 + $0x54] sm:$0xf]
        %v3422 = vld [vmem:[#allocation2 + $0x58] sm:$0xf]
        %v3423 = vld [vmem:[#allocation2 + $0x5c] sm:$0xf]
        %v3424 = vld [vmem:[#allocation2 + $0x60] sm:$0xf]
        %v3425 = vld [vmem:[#allocation2 + $0x64] sm:$0xf]
        %v3426 = vld [vmem:[#allocation2 + $0x68] sm:$0xf]
        %v3427 = vld [vmem:[#allocation2 + $0x6c] sm:$0xf]
        %v3428 = vld [vmem:[#allocation2 + $0x70] sm:$0xf]
        %v3429 = vld [vmem:[#allocation2 + $0x74] sm:$0xf]
        %v3430 = vld [vmem:[#allocation2 + $0x78] sm:$0xf]
        %v3431 = vld [vmem:[#allocation2 + $0x7c] sm:$0xf]
        %v3432 = vld [vmem:[#allocation2 + $0x80] sm:$0xf]
        %v3433 = vld [vmem:[#allocation2 + $0x84] sm:$0xf]
        %v3434 = vld [vmem:[#allocation2 + $0x88] sm:$0xf]
        %v3435 = vld [vmem:[#allocation2 + $0x8c] sm:$0xf]
        %v3436 = vld [vmem:[#allocation2 + $0x90] sm:$0xf]
        %v3437 = vld [vmem:[#allocation2 + $0x94] sm:$0xf]
        %v3438 = vld [vmem:[#allocation2 + $0x98] sm:$0xf]
        %v3439 = vld [vmem:[#allocation2 + $0x9c] sm:$0xf]
        %v3440 = vld [vmem:[#allocation2 + $0xa0] sm:$0xf]
        %v3441 = vld [vmem:[#allocation2 + $0xa4] sm:$0xf]
        %v3442 = vld [vmem:[#allocation2 + $0xa8] sm:$0xf]
        %v3443 = vld [vmem:[#allocation2 + $0xac] sm:$0xf]
        %v3444 = vld [vmem:[#allocation2 + $0xb0] sm:$0xf]
        %v3445 = vld [vmem:[#allocation2 + $0xb4] sm:$0xf]
        %v3446 = vld [vmem:[#allocation2 + $0xb8] sm:$0xf]
        %v3447 = vld [vmem:[#allocation2 + $0xbc] sm:$0xf]
        %v3448 = vld [vmem:[#allocation2 + $0xc0] sm:$0xf]
        %v3449 = vld [vmem:[#allocation2 + $0xc4] sm:$0xf]
        %v3450 = vld [vmem:[#allocation2 + $0xc8] sm:$0xf]
        %v3451 = vld [vmem:[#allocation2 + $0xcc] sm:$0xf]
        %v3452 = vld [vmem:[#allocation2 + $0xd0] sm:$0xf]
        %v3453 = vld [vmem:[#allocation2 + $0xd4] sm:$0xf]
        %v3454 = vld [vmem:[#allocation2 + $0xd8] sm:$0xf]
        %v3455 = vld [vmem:[#allocation2 + $0xdc] sm:$0xf]
        %v3456 = vld [vmem:[#allocation2 + $0xe0] sm:$0xf]
        %v3457 = vld [vmem:[#allocation2 + $0xe4] sm:$0xf]
        %v3458 = vld [vmem:[#allocation2 + $0xe8] sm:$0xf]
        %v3459 = vld [vmem:[#allocation2 + $0xec] sm:$0xf]
        %v3460 = vld [vmem:[#allocation2 + $0xf0] sm:$0xf]
        %v3461 = vld [vmem:[#allocation2 + $0xf4] sm:$0xf]
        %v3462 = vld [vmem:[#allocation2 + $0xf8] sm:$0xf]
        %v3463 = vld [vmem:[#allocation2 + $0xfc] sm:$0xf]
        %v3464 = vld [vmem:[#allocation2 + $0x100] sm:$0xf]
        %v3465 = vld [vmem:[#allocation2 + $0x104] sm:$0xf]
        %v3466 = vld [vmem:[#allocation2 + $0x108] sm:$0xf]
        %v3467 = vld [vmem:[#allocation2 + $0x10c] sm:$0xf]
        %v3468 = vld [vmem:[#allocation2 + $0x110] sm:$0xf]
        %v3469 = vld [vmem:[#allocation2 + $0x114] sm:$0xf]
        %v3470 = vld [vmem:[#allocation2 + $0x118] sm:$0xf]
        %v3471 = vld [vmem:[#allocation2 + $0x11c] sm:$0xf]
        %v3472 = vld [vmem:[#allocation2 + $0x120] sm:$0xf]
        %v3473 = vld [vmem:[#allocation2 + $0x124] sm:$0xf]
        %v3474 = vld [vmem:[#allocation2 + $0x128] sm:$0xf]
        %v3475 = vld [vmem:[#allocation2 + $0x12c] sm:$0xf]
        %v3476 = vld [vmem:[#allocation2 + $0x130] sm:$0xf]
        %v3477 = vld [vmem:[#allocation2 + $0x134] sm:$0xf]
        %v3478 = vld [vmem:[#allocation2 + $0x138] sm:$0xf]
        %v3479 = vld [vmem:[#allocation2 + $0x13c] sm:$0xf]
        %v3480 = vld [vmem:[#allocation2 + $0x140] sm:$0xf]
        %v3481 = vld [vmem:[#allocation2 + $0x144] sm:$0xf]
        %v3482 = vld [vmem:[#allocation2 + $0x148] sm:$0xf]
        %v3483 = vld [vmem:[#allocation2 + $0x14c] sm:$0xf]
        %v3484 = vld [vmem:[#allocation2 + $0x150] sm:$0xf]
        %v3485 = vld [vmem:[#allocation2 + $0x154] sm:$0xf]
        %v3486 = vld [vmem:[#allocation2 + $0x158] sm:$0xf]
        %v3487 = vld [vmem:[#allocation2 + $0x15c] sm:$0xf]
        %v3488 = vld [vmem:[#allocation2 + $0x160] sm:$0xf]
        %v3489 = vld [vmem:[#allocation2 + $0x164] sm:$0xf]
        %v3490 = vld [vmem:[#allocation2 + $0x168] sm:$0xf]
        %v3491 = vld [vmem:[#allocation2 + $0x16c] sm:$0xf]
        %v3492 = vld [vmem:[#allocation2 + $0x170] sm:$0xf]
        %v3493 = vld [vmem:[#allocation2 + $0x174] sm:$0xf]
        %v3494 = vld [vmem:[#allocation2 + $0x178] sm:$0xf]
        %v3495 = vld [vmem:[#allocation2 + $0x17c] sm:$0xf]
        %v3496 = vld [vmem:[#allocation2 + $0x180] sm:$0xf]
        %v3497 = vld [vmem:[#allocation2 + $0x184] sm:$0xf]
        %v3498 = vld [vmem:[#allocation2 + $0x188] sm:$0xf]
        %v3499 = vld [vmem:[#allocation2 + $0x18c] sm:$0xf]
        %v3500 = vld [vmem:[#allocation2 + $0x190] sm:$0xf]
        %v3501 = vld [vmem:[#allocation2 + $0x194] sm:$0xf]
        %v3502 = vld [vmem:[#allocation2 + $0x198] sm:$0xf]
        %v3503 = vld [vmem:[#allocation2 + $0x19c] sm:$0xf]
        %v3504 = vld [vmem:[#allocation2 + $0x1a0] sm:$0xf]
        %v3505 = vld [vmem:[#allocation2 + $0x1a4] sm:$0xf]
        %v3506 = vld [vmem:[#allocation2 + $0x1a8] sm:$0xf]
        %v3507 = vld [vmem:[#allocation2 + $0x1ac] sm:$0xf]
        %v3508 = vld [vmem:[#allocation2 + $0x1b0] sm:$0xf]
        %v3509 = vld [vmem:[#allocation2 + $0x1b4] sm:$0xf]
        %v3510 = vld [vmem:[#allocation2 + $0x1b8] sm:$0xf]
        %v3511 = vld [vmem:[#allocation2 + $0x1bc] sm:$0xf]
        %v3512 = vld [vmem:[#allocation2 + $0x1c0] sm:$0xf]
        %v3513 = vld [vmem:[#allocation2 + $0x1c4] sm:$0xf]
        %v3514 = vld [vmem:[#allocation2 + $0x1c8] sm:$0xf]
        %v3515 = vld [vmem:[#allocation2 + $0x1cc] sm:$0xf]
        %v3516 = vld [vmem:[#allocation2 + $0x1d0] sm:$0xf]
        %v3517 = vld [vmem:[#allocation2 + $0x1d4] sm:$0xf]
        %v3518 = vld [vmem:[#allocation2 + $0x1d8] sm:$0xf]
        %v3519 = vld [vmem:[#allocation2 + $0x1dc] sm:$0xf]
        %v3520 = vld [vmem:[#allocation2 + $0x1e0] sm:$0xf]
        %v3521 = vld [vmem:[#allocation2 + $0x1e4] sm:$0xf]
        %v3522 = vld [vmem:[#allocation2 + $0x1e8] sm:$0xf]
        %v3523 = vld [vmem:[#allocation2 + $0x1ec] sm:$0xf]
        %v3524 = vld [vmem:[#allocation2 + $0x1f0] sm:$0xf]
        %v3525 = vld [vmem:[#allocation2 + $0x1f4] sm:$0xf]
        %v3526 = vld [vmem:[#allocation2 + $0x1f8] sm:$0xf]
        %v3527 = vld [vmem:[#allocation2 + $0x1fc] sm:$0xf]
        %v3528 = vld [vmem:[#allocation2 + $0x200] sm:$0xf]
        %v3529 = vld [vmem:[#allocation2 + $0x204] sm:$0xf]
        %v3530 = vld [vmem:[#allocation2 + $0x208] sm:$0xf]
        %v3531 = vld [vmem:[#allocation2 + $0x20c] sm:$0xf]
        %v3532 = vld [vmem:[#allocation2 + $0x210] sm:$0xf]
        %v3533 = vld [vmem:[#allocation2 + $0x214] sm:$0xf]
        %v3534 = vld [vmem:[#allocation2 + $0x218] sm:$0xf]
        %v3535 = vld [vmem:[#allocation2 + $0x21c] sm:$0xf]
        %v3536 = vld [vmem:[#allocation2 + $0x220] sm:$0xf]
        %v3537 = vld [vmem:[#allocation2 + $0x224] sm:$0xf]
        %v3538 = vld [vmem:[#allocation2 + $0x228] sm:$0xf]
        %v3539 = vld [vmem:[#allocation2 + $0x22c] sm:$0xf]
        %v3540 = vld [vmem:[#allocation2 + $0x230] sm:$0xf]
        %v3541 = vld [vmem:[#allocation2 + $0x234] sm:$0xf]
        %v3542 = vld [vmem:[#allocation2 + $0x238] sm:$0xf]
        %v3543 = vld [vmem:[#allocation2 + $0x23c] sm:$0xf]
        %v3544 = vld [vmem:[#allocation2 + $0x240] sm:$0xf]
        %v3545 = vld [vmem:[#allocation2 + $0x244] sm:$0xf]
        %v3546 = vld [vmem:[#allocation2 + $0x248] sm:$0xf]
        %v3547 = vld [vmem:[#allocation2 + $0x24c] sm:$0xf]
        %v3548 = vld [vmem:[#allocation2 + $0x250] sm:$0xf]
        %v3549 = vld [vmem:[#allocation2 + $0x254] sm:$0xf]
        %v3550 = vld [vmem:[#allocation2 + $0x258] sm:$0xf]
        %v3551 = vld [vmem:[#allocation2 + $0x25c] sm:$0xf]
        %v3552 = vld [vmem:[#allocation2 + $0x260] sm:$0xf]
        %v3553 = vld [vmem:[#allocation2 + $0x264] sm:$0xf]
        %v3554 = vld [vmem:[#allocation2 + $0x268] sm:$0xf]
        %v3555 = vld [vmem:[#allocation2 + $0x26c] sm:$0xf]
        %v3556 = vld [vmem:[#allocation2 + $0x270] sm:$0xf]
        %v3557 = vld [vmem:[#allocation2 + $0x274] sm:$0xf]
        %v3558 = vld [vmem:[#allocation2 + $0x278] sm:$0xf]
        %v3559 = vld [vmem:[#allocation2 + $0x27c] sm:$0xf]
        %v3560 = vld [vmem:[#allocation2 + $0x280] sm:$0xf]
        %v3561 = vld [vmem:[#allocation2 + $0x284] sm:$0xf]
        %v3562 = vld [vmem:[#allocation2 + $0x288] sm:$0xf]
        %v3563 = vld [vmem:[#allocation2 + $0x28c] sm:$0xf]
        %v3564 = vld [vmem:[#allocation2 + $0x290] sm:$0xf]
        %v3565 = vld [vmem:[#allocation2 + $0x294] sm:$0xf]
        %v3566 = vld [vmem:[#allocation2 + $0x298] sm:$0xf]
        %v3567 = vld [vmem:[#allocation2 + $0x29c] sm:$0xf]
        %v3568 = vld [vmem:[#allocation2 + $0x2a0] sm:$0xf]
        %v3569 = vld [vmem:[#allocation2 + $0x2a4] sm:$0xf]
        %v3570 = vld [vmem:[#allocation2 + $0x2a8] sm:$0xf]
        %v3571 = vld [vmem:[#allocation2 + $0x2ac] sm:$0xf]
        %v3572 = vld [vmem:[#allocation2 + $0x2b0] sm:$0xf]
        %v3573 = vld [vmem:[#allocation2 + $0x2b4] sm:$0xf]
        %v3574 = vld [vmem:[#allocation2 + $0x2b8] sm:$0xf]
        %v3575 = vld [vmem:[#allocation2 + $0x2bc] sm:$0xf]
        %v3576 = vld [vmem:[#allocation2 + $0x2c0] sm:$0xf]
        %v3577 = vld [vmem:[#allocation2 + $0x2c4] sm:$0xf]
        %v3578 = vld [vmem:[#allocation2 + $0x2c8] sm:$0xf]
        %v3579 = vld [vmem:[#allocation2 + $0x2cc] sm:$0xf]
        %v3580 = vld [vmem:[#allocation2 + $0x2d0] sm:$0xf]
        %v3581 = vld [vmem:[#allocation2 + $0x2d4] sm:$0xf]
        %v3582 = vld [vmem:[#allocation2 + $0x2d8] sm:$0xf]
        %v3583 = vld [vmem:[#allocation2 + $0x2dc] sm:$0xf]
        %v3584 = vld [vmem:[#allocation2 + $0x2e0] sm:$0xf]
        %v3585 = vld [vmem:[#allocation2 + $0x2e4] sm:$0xf]
        %v3586 = vld [vmem:[#allocation2 + $0x2e8] sm:$0xf]
        %v3587 = vld [vmem:[#allocation2 + $0x2ec] sm:$0xf]
        %v3588 = vld [vmem:[#allocation2 + $0x2f0] sm:$0xf]
        %v3589 = vld [vmem:[#allocation2 + $0x2f4] sm:$0xf]
        %v3590 = vld [vmem:[#allocation2 + $0x2f8] sm:$0xf]
        %v3591 = vld [vmem:[#allocation2 + $0x2fc] sm:$0xf]
        %v3592 = vld [vmem:[#allocation2 + $0x300] sm:$0xf]
        %v3593 = vld [vmem:[#allocation2 + $0x304] sm:$0xf]
        %v3594 = vld [vmem:[#allocation2 + $0x308] sm:$0xf]
        %v3595 = vld [vmem:[#allocation2 + $0x30c] sm:$0xf]
        %v3596 = vld [vmem:[#allocation2 + $0x310] sm:$0xf]
        %v3597 = vld [vmem:[#allocation2 + $0x314] sm:$0xf]
        %v3598 = vld [vmem:[#allocation2 + $0x318] sm:$0xf]
        %v3599 = vld [vmem:[#allocation2 + $0x31c] sm:$0xf]
        %v3600 = vld [vmem:[#allocation2 + $0x320] sm:$0xf]
        %v3601 = vld [vmem:[#allocation2 + $0x324] sm:$0xf]
        %v3602 = vld [vmem:[#allocation2 + $0x328] sm:$0xf]
        %v3603 = vld [vmem:[#allocation2 + $0x32c] sm:$0xf]
        %v3604 = vld [vmem:[#allocation2 + $0x330] sm:$0xf]
        %v3605 = vld [vmem:[#allocation2 + $0x334] sm:$0xf]
        %v3606 = vld [vmem:[#allocation2 + $0x338] sm:$0xf]
        %v3607 = vld [vmem:[#allocation2 + $0x33c] sm:$0xf]
        %v3608 = vld [vmem:[#allocation2 + $0x340] sm:$0xf]
        %v3609 = vld [vmem:[#allocation2 + $0x344] sm:$0xf]
        %v3610 = vld [vmem:[#allocation2 + $0x348] sm:$0xf]
        %v3611 = vld [vmem:[#allocation2 + $0x34c] sm:$0xf]
        %v3612 = vld [vmem:[#allocation2 + $0x350] sm:$0xf]
        %v3613 = vld [vmem:[#allocation2 + $0x354] sm:$0xf]
        %v3614 = vld [vmem:[#allocation2 + $0x358] sm:$0xf]
        %v3615 = vld [vmem:[#allocation2 + $0x35c] sm:$0xf]
        %v3616 = vld [vmem:[#allocation2 + $0x360] sm:$0xf]
        %v3617 = vld [vmem:[#allocation2 + $0x364] sm:$0xf]
        %v3618 = vld [vmem:[#allocation2 + $0x368] sm:$0xf]
        %v3619 = vld [vmem:[#allocation2 + $0x36c] sm:$0xf]
        %v3620 = vld [vmem:[#allocation2 + $0x370] sm:$0xf]
        %v3621 = vld [vmem:[#allocation2 + $0x374] sm:$0xf]
        %v3622 = vld [vmem:[#allocation2 + $0x378] sm:$0xf]
        %v3623 = vld [vmem:[#allocation2 + $0x37c] sm:$0xf]
        %v3624 = vld [vmem:[#allocation2 + $0x380] sm:$0xf]
        %v3625 = vld [vmem:[#allocation2 + $0x384] sm:$0xf]
        %v3626 = vld [vmem:[#allocation2 + $0x388] sm:$0xf]
        %v3627 = vld [vmem:[#allocation2 + $0x38c] sm:$0xf]
        %v3628 = vld [vmem:[#allocation2 + $0x390] sm:$0xf]
        %v3629 = vld [vmem:[#allocation2 + $0x394] sm:$0xf]
        %v3630 = vld [vmem:[#allocation2 + $0x398] sm:$0xf]
        %v3631 = vld [vmem:[#allocation2 + $0x39c] sm:$0xf]
        %v3632 = vld [vmem:[#allocation2 + $0x3a0] sm:$0xf]
        %v3633 = vld [vmem:[#allocation2 + $0x3a4] sm:$0xf]
        %v3634 = vld [vmem:[#allocation2 + $0x3a8] sm:$0xf]
        %v3635 = vld [vmem:[#allocation2 + $0x3ac] sm:$0xf]
        %v3636 = vld [vmem:[#allocation2 + $0x3b0] sm:$0xf]
        %v3637 = vld [vmem:[#allocation2 + $0x3b4] sm:$0xf]
        %v3638 = vld [vmem:[#allocation2 + $0x3b8] sm:$0xf]
        %v3639 = vld [vmem:[#allocation2 + $0x3bc] sm:$0xf]
        %v3640 = vld [vmem:[#allocation2 + $0x3c0] sm:$0xf]
        %v3641 = vld [vmem:[#allocation2 + $0x3c4] sm:$0xf]
        %v3642 = vld [vmem:[#allocation2 + $0x3c8] sm:$0xf]
        %v3643 = vld [vmem:[#allocation2 + $0x3cc] sm:$0xf]
        %v3644 = vld [vmem:[#allocation2 + $0x3d0] sm:$0xf]
        %v3645 = vld [vmem:[#allocation2 + $0x3d4] sm:$0xf]
        %v3646 = vld [vmem:[#allocation2 + $0x3d8] sm:$0xf]
        %v3647 = vld [vmem:[#allocation2 + $0x3dc] sm:$0xf]
        %v3648 = vld [vmem:[#allocation2 + $0x3e0] sm:$0xf]
        %v3649 = vld [vmem:[#allocation2 + $0x3e4] sm:$0xf]
        %v3650 = vld [vmem:[#allocation2 + $0x3e8] sm:$0xf]
        %v3651 = vld [vmem:[#allocation2 + $0x3ec] sm:$0xf]
        %v3652 = vld [vmem:[#allocation2 + $0x3f0] sm:$0xf]
        %v3653 = vld [vmem:[#allocation2 + $0x3f4] sm:$0xf]
        %v3654 = vld [vmem:[#allocation2 + $0x3f8] sm:$0xf]
        %v3655 = vld [vmem:[#allocation2 + $0x3fc] sm:$0xf]
        %v3656 = vld [vmem:[%s10] sm:$0x1]
        %v3658 = vlaneseq
        %v3659 = vshrl.u32 %v3658, 7
        %v3660 = vsub.s32 0, %v3659
        %v3661 = vrot.slane %v3656, %v3660
        %v3919 = vunpack.c.l.b16 %v3400
        %v3920 = vunpack.c.l.b16 %v3401
        %v3921 = vunpack.c.l.b16 %v3402
        %v3922 = vunpack.c.l.b16 %v3403
        %v3923 = vunpack.c.l.b16 %v3404
        %v3924 = vunpack.c.l.b16 %v3405
        %v3925 = vunpack.c.l.b16 %v3406
        %v3926 = vunpack.c.l.b16 %v3407
        %v3927 = vunpack.c.l.b16 %v3408
        %v3928 = vunpack.c.l.b16 %v3409
        %v3929 = vunpack.c.l.b16 %v3410
        %v3930 = vunpack.c.l.b16 %v3411
        %v3931 = vunpack.c.l.b16 %v3412
        %v3932 = vunpack.c.l.b16 %v3413
        %v3933 = vunpack.c.l.b16 %v3414
        %v3934 = vunpack.c.l.b16 %v3415
        %v3935 = vunpack.c.l.b16 %v3416
        %v3936 = vunpack.c.l.b16 %v3417
        %v3937 = vunpack.c.l.b16 %v3418
        %v3938 = vunpack.c.l.b16 %v3419
        %v3939 = vunpack.c.l.b16 %v3420
        %v3940 = vunpack.c.l.b16 %v3421
        %v3941 = vunpack.c.l.b16 %v3422
        %v3942 = vunpack.c.l.b16 %v3423
        %v3943 = vunpack.c.l.b16 %v3424
        %v3944 = vunpack.c.l.b16 %v3425
        %v3945 = vunpack.c.l.b16 %v3426
        %v3946 = vunpack.c.l.b16 %v3427
        %v3947 = vunpack.c.l.b16 %v3428
        %v3948 = vunpack.c.l.b16 %v3429
        %v3949 = vunpack.c.l.b16 %v3430
        %v3950 = vunpack.c.l.b16 %v3431
        %v3951 = vunpack.c.l.b16 %v3432
        %v3952 = vunpack.c.l.b16 %v3433
        %v3953 = vunpack.c.l.b16 %v3434
        %v3954 = vunpack.c.l.b16 %v3435
        %v3955 = vunpack.c.l.b16 %v3436
        %v3956 = vunpack.c.l.b16 %v3437
        %v3957 = vunpack.c.l.b16 %v3438
        %v3958 = vunpack.c.l.b16 %v3439
        %v3959 = vunpack.c.l.b16 %v3440
        %v3960 = vunpack.c.l.b16 %v3441
        %v3961 = vunpack.c.l.b16 %v3442
        %v3962 = vunpack.c.l.b16 %v3443
        %v3963 = vunpack.c.l.b16 %v3444
        %v3964 = vunpack.c.l.b16 %v3445
        %v3965 = vunpack.c.l.b16 %v3446
        %v3966 = vunpack.c.l.b16 %v3447
        %v3967 = vunpack.c.l.b16 %v3448
        %v3968 = vunpack.c.l.b16 %v3449
        %v3969 = vunpack.c.l.b16 %v3450
        %v3970 = vunpack.c.l.b16 %v3451
        %v3971 = vunpack.c.l.b16 %v3452
        %v3972 = vunpack.c.l.b16 %v3453
        %v3973 = vunpack.c.l.b16 %v3454
        %v3974 = vunpack.c.l.b16 %v3455
        %v3975 = vunpack.c.l.b16 %v3456
        %v3976 = vunpack.c.l.b16 %v3457
        %v3977 = vunpack.c.l.b16 %v3458
        %v3978 = vunpack.c.l.b16 %v3459
        %v3979 = vunpack.c.l.b16 %v3460
        %v3980 = vunpack.c.l.b16 %v3461
        %v3981 = vunpack.c.l.b16 %v3462
        %v3982 = vunpack.c.l.b16 %v3463
        %v3983 = vunpack.c.l.b16 %v3464
        %v3984 = vunpack.c.l.b16 %v3465
        %v3985 = vunpack.c.l.b16 %v3466
        %v3986 = vunpack.c.l.b16 %v3467
        %v3987 = vunpack.c.l.b16 %v3468
        %v3988 = vunpack.c.l.b16 %v3469
        %v3989 = vunpack.c.l.b16 %v3470
        %v3990 = vunpack.c.l.b16 %v3471
        %v3991 = vunpack.c.l.b16 %v3472
        %v3992 = vunpack.c.l.b16 %v3473
        %v3993 = vunpack.c.l.b16 %v3474
        %v3994 = vunpack.c.l.b16 %v3475
        %v3995 = vunpack.c.l.b16 %v3476
        %v3996 = vunpack.c.l.b16 %v3477
        %v3997 = vunpack.c.l.b16 %v3478
        %v3998 = vunpack.c.l.b16 %v3479
        %v3999 = vunpack.c.l.b16 %v3480
        %v4000 = vunpack.c.l.b16 %v3481
        %v4001 = vunpack.c.l.b16 %v3482
        %v4002 = vunpack.c.l.b16 %v3483
        %v4003 = vunpack.c.l.b16 %v3484
        %v4004 = vunpack.c.l.b16 %v3485
        %v4005 = vunpack.c.l.b16 %v3486
        %v4006 = vunpack.c.l.b16 %v3487
        %v4007 = vunpack.c.l.b16 %v3488
        %v4008 = vunpack.c.l.b16 %v3489
        %v4009 = vunpack.c.l.b16 %v3490
        %v4010 = vunpack.c.l.b16 %v3491
        %v4011 = vunpack.c.l.b16 %v3492
        %v4012 = vunpack.c.l.b16 %v3493
        %v4013 = vunpack.c.l.b16 %v3494
        %v4014 = vunpack.c.l.b16 %v3495
        %v4015 = vunpack.c.l.b16 %v3496
        %v4016 = vunpack.c.l.b16 %v3497
        %v4017 = vunpack.c.l.b16 %v3498
        %v4018 = vunpack.c.l.b16 %v3499
        %v4019 = vunpack.c.l.b16 %v3500
        %v4020 = vunpack.c.l.b16 %v3501
        %v4021 = vunpack.c.l.b16 %v3502
        %v4022 = vunpack.c.l.b16 %v3503
        %v4023 = vunpack.c.l.b16 %v3504
        %v4024 = vunpack.c.l.b16 %v3505
        %v4025 = vunpack.c.l.b16 %v3506
        %v4026 = vunpack.c.l.b16 %v3507
        %v4027 = vunpack.c.l.b16 %v3508
        %v4028 = vunpack.c.l.b16 %v3509
        %v4029 = vunpack.c.l.b16 %v3510
        %v4030 = vunpack.c.l.b16 %v3511
        %v4031 = vunpack.c.l.b16 %v3512
        %v4032 = vunpack.c.l.b16 %v3513
        %v4033 = vunpack.c.l.b16 %v3514
        %v4034 = vunpack.c.l.b16 %v3515
        %v4035 = vunpack.c.l.b16 %v3516
        %v4036 = vunpack.c.l.b16 %v3517
        %v4037 = vunpack.c.l.b16 %v3518
        %v4038 = vunpack.c.l.b16 %v3519
        %v4039 = vunpack.c.l.b16 %v3520
        %v4040 = vunpack.c.l.b16 %v3521
        %v4041 = vunpack.c.l.b16 %v3522
        %v4042 = vunpack.c.l.b16 %v3523
        %v4043 = vunpack.c.l.b16 %v3524
        %v4044 = vunpack.c.l.b16 %v3525
        %v4045 = vunpack.c.l.b16 %v3526
        %v4046 = vunpack.c.l.b16 %v3527
        %v4047 = vunpack.c.l.b16 %v3528
        %v4048 = vunpack.c.l.b16 %v3529
        %v4049 = vunpack.c.l.b16 %v3530
        %v4050 = vunpack.c.l.b16 %v3531
        %v4051 = vunpack.c.l.b16 %v3532
        %v4052 = vunpack.c.l.b16 %v3533
        %v4053 = vunpack.c.l.b16 %v3534
        %v4054 = vunpack.c.l.b16 %v3535
        %v4055 = vunpack.c.l.b16 %v3536
        %v4056 = vunpack.c.l.b16 %v3537
        %v4057 = vunpack.c.l.b16 %v3538
        %v4058 = vunpack.c.l.b16 %v3539
        %v4059 = vunpack.c.l.b16 %v3540
        %v4060 = vunpack.c.l.b16 %v3541
        %v4061 = vunpack.c.l.b16 %v3542
        %v4062 = vunpack.c.l.b16 %v3543
        %v4063 = vunpack.c.l.b16 %v3544
        %v4064 = vunpack.c.l.b16 %v3545
        %v4065 = vunpack.c.l.b16 %v3546
        %v4066 = vunpack.c.l.b16 %v3547
        %v4067 = vunpack.c.l.b16 %v3548
        %v4068 = vunpack.c.l.b16 %v3549
        %v4069 = vunpack.c.l.b16 %v3550
        %v4070 = vunpack.c.l.b16 %v3551
        %v4071 = vunpack.c.l.b16 %v3552
        %v4072 = vunpack.c.l.b16 %v3553
        %v4073 = vunpack.c.l.b16 %v3554
        %v4074 = vunpack.c.l.b16 %v3555
        %v4075 = vunpack.c.l.b16 %v3556
        %v4076 = vunpack.c.l.b16 %v3557
        %v4077 = vunpack.c.l.b16 %v3558
        %v4078 = vunpack.c.l.b16 %v3559
        %v4079 = vunpack.c.l.b16 %v3560
        %v4080 = vunpack.c.l.b16 %v3561
        %v4081 = vunpack.c.l.b16 %v3562
        %v4082 = vunpack.c.l.b16 %v3563
        %v4083 = vunpack.c.l.b16 %v3564
        %v4084 = vunpack.c.l.b16 %v3565
        %v4085 = vunpack.c.l.b16 %v3566
        %v4086 = vunpack.c.l.b16 %v3567
        %v4087 = vunpack.c.l.b16 %v3568
        %v4088 = vunpack.c.l.b16 %v3569
        %v4089 = vunpack.c.l.b16 %v3570
        %v4090 = vunpack.c.l.b16 %v3571
        %v4091 = vunpack.c.l.b16 %v3572
        %v4092 = vunpack.c.l.b16 %v3573
        %v4093 = vunpack.c.l.b16 %v3574
        %v4094 = vunpack.c.l.b16 %v3575
        %v4095 = vunpack.c.l.b16 %v3576
        %v4096 = vunpack.c.l.b16 %v3577
        %v4097 = vunpack.c.l.b16 %v3578
        %v4098 = vunpack.c.l.b16 %v3579
        %v4099 = vunpack.c.l.b16 %v3580
        %v4100 = vunpack.c.l.b16 %v3581
        %v4101 = vunpack.c.l.b16 %v3582
        %v4102 = vunpack.c.l.b16 %v3583
        %v4103 = vunpack.c.l.b16 %v3584
        %v4104 = vunpack.c.l.b16 %v3585
        %v4105 = vunpack.c.l.b16 %v3586
        %v4106 = vunpack.c.l.b16 %v3587
        %v4107 = vunpack.c.l.b16 %v3588
        %v4108 = vunpack.c.l.b16 %v3589
        %v4109 = vunpack.c.l.b16 %v3590
        %v4110 = vunpack.c.l.b16 %v3591
        %v4111 = vunpack.c.l.b16 %v3592
        %v4112 = vunpack.c.l.b16 %v3593
        %v4113 = vunpack.c.l.b16 %v3594
        %v4114 = vunpack.c.l.b16 %v3595
        %v4115 = vunpack.c.l.b16 %v3596
        %v4116 = vunpack.c.l.b16 %v3597
        %v4117 = vunpack.c.l.b16 %v3598
        %v4118 = vunpack.c.l.b16 %v3599
        %v4119 = vunpack.c.l.b16 %v3600
        %v4120 = vunpack.c.l.b16 %v3601
        %v4121 = vunpack.c.l.b16 %v3602
        %v4122 = vunpack.c.l.b16 %v3603
        %v4123 = vunpack.c.l.b16 %v3604
        %v4124 = vunpack.c.l.b16 %v3605
        %v4125 = vunpack.c.l.b16 %v3606
        %v4126 = vunpack.c.l.b16 %v3607
        %v4127 = vunpack.c.l.b16 %v3608
        %v4128 = vunpack.c.l.b16 %v3609
        %v4129 = vunpack.c.l.b16 %v3610
        %v4130 = vunpack.c.l.b16 %v3611
        %v4131 = vunpack.c.l.b16 %v3612
        %v4132 = vunpack.c.l.b16 %v3613
        %v4133 = vunpack.c.l.b16 %v3614
        %v4134 = vunpack.c.l.b16 %v3615
        %v4135 = vunpack.c.l.b16 %v3616
        %v4136 = vunpack.c.l.b16 %v3617
        %v4137 = vunpack.c.l.b16 %v3618
        %v4138 = vunpack.c.l.b16 %v3619
        %v4139 = vunpack.c.l.b16 %v3620
        %v4140 = vunpack.c.l.b16 %v3621
        %v4141 = vunpack.c.l.b16 %v3622
        %v4142 = vunpack.c.l.b16 %v3623
        %v4143 = vunpack.c.l.b16 %v3624
        %v4144 = vunpack.c.l.b16 %v3625
        %v4145 = vunpack.c.l.b16 %v3626
        %v4146 = vunpack.c.l.b16 %v3627
        %v4147 = vunpack.c.l.b16 %v3628
        %v4148 = vunpack.c.l.b16 %v3629
        %v4149 = vunpack.c.l.b16 %v3630
        %v4150 = vunpack.c.l.b16 %v3631
        %v4151 = vunpack.c.l.b16 %v3632
        %v4152 = vunpack.c.l.b16 %v3633
        %v4153 = vunpack.c.l.b16 %v3634
        %v4154 = vunpack.c.l.b16 %v3635
        %v4155 = vunpack.c.l.b16 %v3636
        %v4156 = vunpack.c.l.b16 %v3637
        %v4157 = vunpack.c.l.b16 %v3638
        %v4158 = vunpack.c.l.b16 %v3639
        %v4159 = vunpack.c.l.b16 %v3640
        %v4160 = vunpack.c.l.b16 %v3641
        %v4161 = vunpack.c.l.b16 %v3642
        %v4162 = vunpack.c.l.b16 %v3643
        %v4163 = vunpack.c.l.b16 %v3644
        %v4164 = vunpack.c.l.b16 %v3645
        %v4165 = vunpack.c.l.b16 %v3646
        %v4166 = vunpack.c.l.b16 %v3647
        %v4167 = vunpack.c.l.b16 %v3648
        %v4168 = vunpack.c.l.b16 %v3649
        %v4169 = vunpack.c.l.b16 %v3650
        %v4170 = vunpack.c.l.b16 %v3651
        %v4171 = vunpack.c.l.b16 %v3652
        %v4172 = vunpack.c.l.b16 %v3653
        %v4173 = vunpack.c.l.b16 %v3654
        %v4174 = vunpack.c.l.b16 %v3655
        %v4175 = vpack.c.b16 %v3920, %v3919
        %v4176 = vpack.c.b16 %v3922, %v3921
        %v4177 = vpack.c.b16 %v3924, %v3923
        %v4178 = vpack.c.b16 %v3926, %v3925
        %v4179 = vpack.c.b16 %v3928, %v3927
        %v4180 = vpack.c.b16 %v3930, %v3929
        %v4181 = vpack.c.b16 %v3932, %v3931
        %v4182 = vpack.c.b16 %v3934, %v3933
        %v4183 = vpack.c.b16 %v3936, %v3935
        %v4184 = vpack.c.b16 %v3938, %v3937
        %v4185 = vpack.c.b16 %v3940, %v3939
        %v4186 = vpack.c.b16 %v3942, %v3941
        %v4187 = vpack.c.b16 %v3944, %v3943
        %v4188 = vpack.c.b16 %v3946, %v3945
        %v4189 = vpack.c.b16 %v3948, %v3947
        %v4190 = vpack.c.b16 %v3950, %v3949
        %v4191 = vpack.c.b16 %v3952, %v3951
        %v4192 = vpack.c.b16 %v3954, %v3953
        %v4193 = vpack.c.b16 %v3956, %v3955
        %v4194 = vpack.c.b16 %v3958, %v3957
        %v4195 = vpack.c.b16 %v3960, %v3959
        %v4196 = vpack.c.b16 %v3962, %v3961
        %v4197 = vpack.c.b16 %v3964, %v3963
        %v4198 = vpack.c.b16 %v3966, %v3965
        %v4199 = vpack.c.b16 %v3968, %v3967
        %v4200 = vpack.c.b16 %v3970, %v3969
        %v4201 = vpack.c.b16 %v3972, %v3971
        %v4202 = vpack.c.b16 %v3974, %v3973
        %v4203 = vpack.c.b16 %v3976, %v3975
        %v4204 = vpack.c.b16 %v3978, %v3977
        %v4205 = vpack.c.b16 %v3980, %v3979
        %v4206 = vpack.c.b16 %v3982, %v3981
        %v4207 = vpack.c.b16 %v3984, %v3983
        %v4208 = vpack.c.b16 %v3986, %v3985
        %v4209 = vpack.c.b16 %v3988, %v3987
        %v4210 = vpack.c.b16 %v3990, %v3989
        %v4211 = vpack.c.b16 %v3992, %v3991
        %v4212 = vpack.c.b16 %v3994, %v3993
        %v4213 = vpack.c.b16 %v3996, %v3995
        %v4214 = vpack.c.b16 %v3998, %v3997
        %v4215 = vpack.c.b16 %v4000, %v3999
        %v4216 = vpack.c.b16 %v4002, %v4001
        %v4217 = vpack.c.b16 %v4004, %v4003
        %v4218 = vpack.c.b16 %v4006, %v4005
        %v4219 = vpack.c.b16 %v4008, %v4007
        %v4220 = vpack.c.b16 %v4010, %v4009
        %v4221 = vpack.c.b16 %v4012, %v4011
        %v4222 = vpack.c.b16 %v4014, %v4013
        %v4223 = vpack.c.b16 %v4016, %v4015
        %v4224 = vpack.c.b16 %v4018, %v4017
        %v4225 = vpack.c.b16 %v4020, %v4019
        %v4226 = vpack.c.b16 %v4022, %v4021
        %v4227 = vpack.c.b16 %v4024, %v4023
        %v4228 = vpack.c.b16 %v4026, %v4025
        %v4229 = vpack.c.b16 %v4028, %v4027
        %v4230 = vpack.c.b16 %v4030, %v4029
        %v4231 = vpack.c.b16 %v4032, %v4031
        %v4232 = vpack.c.b16 %v4034, %v4033
        %v4233 = vpack.c.b16 %v4036, %v4035
        %v4234 = vpack.c.b16 %v4038, %v4037
        %v4235 = vpack.c.b16 %v4040, %v4039
        %v4236 = vpack.c.b16 %v4042, %v4041
        %v4237 = vpack.c.b16 %v4044, %v4043
        %v4238 = vpack.c.b16 %v4046, %v4045
        %v4239 = vpack.c.b16 %v4048, %v4047
        %v4240 = vpack.c.b16 %v4050, %v4049
        %v4241 = vpack.c.b16 %v4052, %v4051
        %v4242 = vpack.c.b16 %v4054, %v4053
        %v4243 = vpack.c.b16 %v4056, %v4055
        %v4244 = vpack.c.b16 %v4058, %v4057
        %v4245 = vpack.c.b16 %v4060, %v4059
        %v4246 = vpack.c.b16 %v4062, %v4061
        %v4247 = vpack.c.b16 %v4064, %v4063
        %v4248 = vpack.c.b16 %v4066, %v4065
        %v4249 = vpack.c.b16 %v4068, %v4067
        %v4250 = vpack.c.b16 %v4070, %v4069
        %v4251 = vpack.c.b16 %v4072, %v4071
        %v4252 = vpack.c.b16 %v4074, %v4073
        %v4253 = vpack.c.b16 %v4076, %v4075
        %v4254 = vpack.c.b16 %v4078, %v4077
        %v4255 = vpack.c.b16 %v4080, %v4079
        %v4256 = vpack.c.b16 %v4082, %v4081
        %v4257 = vpack.c.b16 %v4084, %v4083
        %v4258 = vpack.c.b16 %v4086, %v4085
        %v4259 = vpack.c.b16 %v4088, %v4087
        %v4260 = vpack.c.b16 %v4090, %v4089
        %v4261 = vpack.c.b16 %v4092, %v4091
        %v4262 = vpack.c.b16 %v4094, %v4093
        %v4263 = vpack.c.b16 %v4096, %v4095
        %v4264 = vpack.c.b16 %v4098, %v4097
        %v4265 = vpack.c.b16 %v4100, %v4099
        %v4266 = vpack.c.b16 %v4102, %v4101
        %v4267 = vpack.c.b16 %v4104, %v4103
        %v4268 = vpack.c.b16 %v4106, %v4105
        %v4269 = vpack.c.b16 %v4108, %v4107
        %v4270 = vpack.c.b16 %v4110, %v4109
        %v4271 = vpack.c.b16 %v4112, %v4111
        %v4272 = vpack.c.b16 %v4114, %v4113
        %v4273 = vpack.c.b16 %v4116, %v4115
        %v4274 = vpack.c.b16 %v4118, %v4117
        %v4275 = vpack.c.b16 %v4120, %v4119
        %v4276 = vpack.c.b16 %v4122, %v4121
        %v4277 = vpack.c.b16 %v4124, %v4123
        %v4278 = vpack.c.b16 %v4126, %v4125
        %v4279 = vpack.c.b16 %v4128, %v4127
        %v4280 = vpack.c.b16 %v4130, %v4129
        %v4281 = vpack.c.b16 %v4132, %v4131
        %v4282 = vpack.c.b16 %v4134, %v4133
        %v4283 = vpack.c.b16 %v4136, %v4135
        %v4284 = vpack.c.b16 %v4138, %v4137
        %v4285 = vpack.c.b16 %v4140, %v4139
        %v4286 = vpack.c.b16 %v4142, %v4141
        %v4287 = vpack.c.b16 %v4144, %v4143
        %v4288 = vpack.c.b16 %v4146, %v4145
        %v4289 = vpack.c.b16 %v4148, %v4147
        %v4290 = vpack.c.b16 %v4150, %v4149
        %v4291 = vpack.c.b16 %v4152, %v4151
        %v4292 = vpack.c.b16 %v4154, %v4153
        %v4293 = vpack.c.b16 %v4156, %v4155
        %v4294 = vpack.c.b16 %v4158, %v4157
        %v4295 = vpack.c.b16 %v4160, %v4159
        %v4296 = vpack.c.b16 %v4162, %v4161
        %v4297 = vpack.c.b16 %v4164, %v4163
        %v4298 = vpack.c.b16 %v4166, %v4165
        %v4299 = vpack.c.b16 %v4168, %v4167
        %v4300 = vpack.c.b16 %v4170, %v4169
        %v4301 = vpack.c.b16 %v4172, %v4171
        %v4302 = vpack.c.b16 %v4174, %v4173
        %4431 = vmatprep.subr.bf16.mxu0 0
        %4432 = vmatpush1.bf16.msra.mxu0 %v4175
        %4433 = vmatprep.subr.bf16.mxu0 0
        %4434 = vmatpush1.bf16.msra.mxu0 %v4176
        %4435 = vmatprep.subr.bf16.mxu0 0
        %4436 = vmatpush1.bf16.msra.mxu0 %v4177
        %4437 = vmatprep.subr.bf16.mxu0 0
        %4438 = vmatpush1.bf16.msra.mxu0 %v4178
        %4439 = vmatprep.subr.bf16.mxu0 0
        %4440 = vmatpush1.bf16.msra.mxu0 %v4179
        %4441 = vmatprep.subr.bf16.mxu0 0
        %4442 = vmatpush1.bf16.msra.mxu0 %v4180
        %4443 = vmatprep.subr.bf16.mxu0 0
        %4444 = vmatpush1.bf16.msra.mxu0 %v4181
        %4445 = vmatprep.subr.bf16.mxu0 0
        %4446 = vmatpush1.bf16.msra.mxu0 %v4182
        %4447 = vmatprep.subr.bf16.mxu0 0
        %4448 = vmatpush1.bf16.msra.mxu0 %v4183
        %4449 = vmatprep.subr.bf16.mxu0 0
        %4450 = vmatpush1.bf16.msra.mxu0 %v4184
        %4451 = vmatprep.subr.bf16.mxu0 0
        %4452 = vmatpush1.bf16.msra.mxu0 %v4185
        %4453 = vmatprep.subr.bf16.mxu0 0
        %4454 = vmatpush1.bf16.msra.mxu0 %v4186
        %4455 = vmatprep.subr.bf16.mxu0 0
        %4456 = vmatpush1.bf16.msra.mxu0 %v4187
        %4457 = vmatprep.subr.bf16.mxu0 0
        %4458 = vmatpush1.bf16.msra.mxu0 %v4188
        %4459 = vmatprep.subr.bf16.mxu0 0
        %4460 = vmatpush1.bf16.msra.mxu0 %v4189
        %4461 = vmatprep.subr.bf16.mxu0 0
        %4462 = vmatpush1.bf16.msra.mxu0 %v4190
        %4463 = vmatprep.mubr.bf16.mxu0 %v3385
        %4464 = vmatmul.mubr.bf16.gmra.mrb[0].mxu0 %v3384
        %v4465 = vpop.f32.mrb[0].mxu0
        %v4466 = vadd.f32 %v3661, %v4465
        %v4467 = vpop.f32.mrb[0].mxu0
        %v4468 = vpop.f32.mrb[0].mxu0
        %v4469 = vpop.f32.mrb[0].mxu0
        %4470 = vdwg.mxu0
        %4471 = vmatprep.subr.bf16.mxu0 0
        %4472 = vmatpush1.bf16.msra.mxu0 %v4191
        %4473 = vmatprep.subr.bf16.mxu0 0
        %4474 = vmatpush1.bf16.msra.mxu0 %v4192
        %4475 = vmatprep.subr.bf16.mxu0 0
        %4476 = vmatpush1.bf16.msra.mxu0 %v4193
        %4477 = vmatprep.subr.bf16.mxu0 0
        %4478 = vmatpush1.bf16.msra.mxu0 %v4194
        %4479 = vmatprep.subr.bf16.mxu0 0
        %4480 = vmatpush1.bf16.msra.mxu0 %v4195
        %4481 = vmatprep.subr.bf16.mxu0 0
        %4482 = vmatpush1.bf16.msra.mxu0 %v4196
        %4483 = vmatprep.subr.bf16.mxu0 0
        %4484 = vmatpush1.bf16.msra.mxu0 %v4197
        %4485 = vmatprep.subr.bf16.mxu0 0
        %4486 = vmatpush1.bf16.msra.mxu0 %v4198
        %4487 = vmatprep.subr.bf16.mxu0 0
        %4488 = vmatpush1.bf16.msra.mxu0 %v4199
        %4489 = vmatprep.subr.bf16.mxu0 0
        %4490 = vmatpush1.bf16.msra.mxu0 %v4200
        %4491 = vmatprep.subr.bf16.mxu0 0
        %4492 = vmatpush1.bf16.msra.mxu0 %v4201
        %4493 = vmatprep.subr.bf16.mxu0 0
        %4494 = vmatpush1.bf16.msra.mxu0 %v4202
        %4495 = vmatprep.subr.bf16.mxu0 0
        %4496 = vmatpush1.bf16.msra.mxu0 %v4203
        %4497 = vmatprep.subr.bf16.mxu0 0
        %4498 = vmatpush1.bf16.msra.mxu0 %v4204
        %4499 = vmatprep.subr.bf16.mxu0 0
        %4500 = vmatpush1.bf16.msra.mxu0 %v4205
        %4501 = vmatprep.subr.bf16.mxu0 0
        %4502 = vmatpush1.bf16.msra.mxu0 %v4206
        %4503 = vmatprep.mubr.bf16.mxu0 %v3387
        %4504 = vmatmul.mubr.bf16.gmra.mrb[0].mxu0 %v3386
        %v4505 = vpop.f32.mrb[0].mxu0
        %v4506 = vadd.f32 %v4466, %v4505
        %v4507 = vpop.f32.mrb[0].mxu0
        %v4508 = vpop.f32.mrb[0].mxu0
        %v4509 = vpop.f32.mrb[0].mxu0
        %4510 = vdwg.mxu0
        %4511 = vmatprep.subr.bf16.mxu0 0
        %4512 = vmatpush1.bf16.msra.mxu0 %v4207
        %4513 = vmatprep.subr.bf16.mxu0 0
        %4514 = vmatpush1.bf16.msra.mxu0 %v4208
        %4515 = vmatprep.subr.bf16.mxu0 0
        %4516 = vmatpush1.bf16.msra.mxu0 %v4209
        %4517 = vmatprep.subr.bf16.mxu0 0
        %4518 = vmatpush1.bf16.msra.mxu0 %v4210
        %4519 = vmatprep.subr.bf16.mxu0 0
        %4520 = vmatpush1.bf16.msra.mxu0 %v4211
        %4521 = vmatprep.subr.bf16.mxu0 0
        %4522 = vmatpush1.bf16.msra.mxu0 %v4212
        %4523 = vmatprep.subr.bf16.mxu0 0
        %4524 = vmatpush1.bf16.msra.mxu0 %v4213
        %4525 = vmatprep.subr.bf16.mxu0 0
        %4526 = vmatpush1.bf16.msra.mxu0 %v4214
        %4527 = vmatprep.subr.bf16.mxu0 0
        %4528 = vmatpush1.bf16.msra.mxu0 %v4215
        %4529 = vmatprep.subr.bf16.mxu0 0
        %4530 = vmatpush1.bf16.msra.mxu0 %v4216
        %4531 = vmatprep.subr.bf16.mxu0 0
        %4532 = vmatpush1.bf16.msra.mxu0 %v4217
        %4533 = vmatprep.subr.bf16.mxu0 0
        %4534 = vmatpush1.bf16.msra.mxu0 %v4218
        %4535 = vmatprep.subr.bf16.mxu0 0
        %4536 = vmatpush1.bf16.msra.mxu0 %v4219
        %4537 = vmatprep.subr.bf16.mxu0 0
        %4538 = vmatpush1.bf16.msra.mxu0 %v4220
        %4539 = vmatprep.subr.bf16.mxu0 0
        %4540 = vmatpush1.bf16.msra.mxu0 %v4221
        %4541 = vmatprep.subr.bf16.mxu0 0
        %4542 = vmatpush1.bf16.msra.mxu0 %v4222
        %4543 = vmatprep.mubr.bf16.mxu0 %v3389
        %4544 = vmatmul.mubr.bf16.gmra.mrb[0].mxu0 %v3388
        %v4545 = vpop.f32.mrb[0].mxu0
        %v4546 = vadd.f32 %v4506, %v4545
        %v4547 = vpop.f32.mrb[0].mxu0
        %v4548 = vpop.f32.mrb[0].mxu0
        %v4549 = vpop.f32.mrb[0].mxu0
        %4550 = vdwg.mxu0
        %4551 = vmatprep.subr.bf16.mxu0 0
        %4552 = vmatpush1.bf16.msra.mxu0 %v4223
        %4553 = vmatprep.subr.bf16.mxu0 0
        %4554 = vmatpush1.bf16.msra.mxu0 %v4224
        %4555 = vmatprep.subr.bf16.mxu0 0
        %4556 = vmatpush1.bf16.msra.mxu0 %v4225
        %4557 = vmatprep.subr.bf16.mxu0 0
        %4558 = vmatpush1.bf16.msra.mxu0 %v4226
        %4559 = vmatprep.subr.bf16.mxu0 0
        %4560 = vmatpush1.bf16.msra.mxu0 %v4227
        %4561 = vmatprep.subr.bf16.mxu0 0
        %4562 = vmatpush1.bf16.msra.mxu0 %v4228
        %4563 = vmatprep.subr.bf16.mxu0 0
        %4564 = vmatpush1.bf16.msra.mxu0 %v4229
        %4565 = vmatprep.subr.bf16.mxu0 0
        %4566 = vmatpush1.bf16.msra.mxu0 %v4230
        %4567 = vmatprep.subr.bf16.mxu0 0
        %4568 = vmatpush1.bf16.msra.mxu0 %v4231
        %4569 = vmatprep.subr.bf16.mxu0 0
        %4570 = vmatpush1.bf16.msra.mxu0 %v4232
        %4571 = vmatprep.subr.bf16.mxu0 0
        %4572 = vmatpush1.bf16.msra.mxu0 %v4233
        %4573 = vmatprep.subr.bf16.mxu0 0
        %4574 = vmatpush1.bf16.msra.mxu0 %v4234
        %4575 = vmatprep.subr.bf16.mxu0 0
        %4576 = vmatpush1.bf16.msra.mxu0 %v4235
        %4577 = vmatprep.subr.bf16.mxu0 0
        %4578 = vmatpush1.bf16.msra.mxu0 %v4236
        %4579 = vmatprep.subr.bf16.mxu0 0
        %4580 = vmatpush1.bf16.msra.mxu0 %v4237
        %4581 = vmatprep.subr.bf16.mxu0 0
        %4582 = vmatpush1.bf16.msra.mxu0 %v4238
        %4583 = vmatprep.mubr.bf16.mxu0 %v3391
        %4584 = vmatmul.mubr.bf16.gmra.mrb[0].mxu0 %v3390
        %v4585 = vpop.f32.mrb[0].mxu0
        %v4586 = vadd.f32 %v4546, %v4585
        %v4587 = vpop.f32.mrb[0].mxu0
        %v4588 = vpop.f32.mrb[0].mxu0
        %v4589 = vpop.f32.mrb[0].mxu0
        %4590 = vdwg.mxu0
        %4591 = vmatprep.subr.bf16.mxu0 0
        %4592 = vmatpush1.bf16.msra.mxu0 %v4239
        %4593 = vmatprep.subr.bf16.mxu0 0
        %4594 = vmatpush1.bf16.msra.mxu0 %v4240
        %4595 = vmatprep.subr.bf16.mxu0 0
        %4596 = vmatpush1.bf16.msra.mxu0 %v4241
        %4597 = vmatprep.subr.bf16.mxu0 0
        %4598 = vmatpush1.bf16.msra.mxu0 %v4242
        %4599 = vmatprep.subr.bf16.mxu0 0
        %4600 = vmatpush1.bf16.msra.mxu0 %v4243
        %4601 = vmatprep.subr.bf16.mxu0 0
        %4602 = vmatpush1.bf16.msra.mxu0 %v4244
        %4603 = vmatprep.subr.bf16.mxu0 0
        %4604 = vmatpush1.bf16.msra.mxu0 %v4245
        %4605 = vmatprep.subr.bf16.mxu0 0
        %4606 = vmatpush1.bf16.msra.mxu0 %v4246
        %4607 = vmatprep.subr.bf16.mxu0 0
        %4608 = vmatpush1.bf16.msra.mxu0 %v4247
        %4609 = vmatprep.subr.bf16.mxu0 0
        %4610 = vmatpush1.bf16.msra.mxu0 %v4248
        %4611 = vmatprep.subr.bf16.mxu0 0
        %4612 = vmatpush1.bf16.msra.mxu0 %v4249
        %4613 = vmatprep.subr.bf16.mxu0 0
        %4614 = vmatpush1.bf16.msra.mxu0 %v4250
        %4615 = vmatprep.subr.bf16.mxu0 0
        %4616 = vmatpush1.bf16.msra.mxu0 %v4251
        %4617 = vmatprep.subr.bf16.mxu0 0
        %4618 = vmatpush1.bf16.msra.mxu0 %v4252
        %4619 = vmatprep.subr.bf16.mxu0 0
        %4620 = vmatpush1.bf16.msra.mxu0 %v4253
        %4621 = vmatprep.subr.bf16.mxu0 0
        %4622 = vmatpush1.bf16.msra.mxu0 %v4254
        %4623 = vmatprep.mubr.bf16.mxu0 %v3393
        %4624 = vmatmul.mubr.bf16.gmra.mrb[0].mxu0 %v3392
        %v4625 = vpop.f32.mrb[0].mxu0
        %v4626 = vadd.f32 %v4586, %v4625
        %v4627 = vpop.f32.mrb[0].mxu0
        %v4628 = vpop.f32.mrb[0].mxu0
        %v4629 = vpop.f32.mrb[0].mxu0
        %4630 = vdwg.mxu0
        %4631 = vmatprep.subr.bf16.mxu0 0
        %4632 = vmatpush1.bf16.msra.mxu0 %v4255
        %4633 = vmatprep.subr.bf16.mxu0 0
        %4634 = vmatpush1.bf16.msra.mxu0 %v4256
        %4635 = vmatprep.subr.bf16.mxu0 0
        %4636 = vmatpush1.bf16.msra.mxu0 %v4257
        %4637 = vmatprep.subr.bf16.mxu0 0
        %4638 = vmatpush1.bf16.msra.mxu0 %v4258
        %4639 = vmatprep.subr.bf16.mxu0 0
        %4640 = vmatpush1.bf16.msra.mxu0 %v4259
        %4641 = vmatprep.subr.bf16.mxu0 0
        %4642 = vmatpush1.bf16.msra.mxu0 %v4260
        %4643 = vmatprep.subr.bf16.mxu0 0
        %4644 = vmatpush1.bf16.msra.mxu0 %v4261
        %4645 = vmatprep.subr.bf16.mxu0 0
        %4646 = vmatpush1.bf16.msra.mxu0 %v4262
        %4647 = vmatprep.subr.bf16.mxu0 0
        %4648 = vmatpush1.bf16.msra.mxu0 %v4263
        %4649 = vmatprep.subr.bf16.mxu0 0
        %4650 = vmatpush1.bf16.msra.mxu0 %v4264
        %4651 = vmatprep.subr.bf16.mxu0 0
        %4652 = vmatpush1.bf16.msra.mxu0 %v4265
        %4653 = vmatprep.subr.bf16.mxu0 0
        %4654 = vmatpush1.bf16.msra.mxu0 %v4266
        %4655 = vmatprep.subr.bf16.mxu0 0
        %4656 = vmatpush1.bf16.msra.mxu0 %v4267
        %4657 = vmatprep.subr.bf16.mxu0 0
        %4658 = vmatpush1.bf16.msra.mxu0 %v4268
        %4659 = vmatprep.subr.bf16.mxu0 0
        %4660 = vmatpush1.bf16.msra.mxu0 %v4269
        %4661 = vmatprep.subr.bf16.mxu0 0
        %4662 = vmatpush1.bf16.msra.mxu0 %v4270
        %4663 = vmatprep.mubr.bf16.mxu0 %v3395
        %4664 = vmatmul.mubr.bf16.gmra.mrb[0].mxu0 %v3394
        %v4665 = vpop.f32.mrb[0].mxu0
        %v4666 = vadd.f32 %v4626, %v4665
        %v4667 = vpop.f32.mrb[0].mxu0
        %v4668 = vpop.f32.mrb[0].mxu0
        %v4669 = vpop.f32.mrb[0].mxu0
        %4670 = vdwg.mxu0
        %4671 = vmatprep.subr.bf16.mxu0 0
        %4672 = vmatpush1.bf16.msra.mxu0 %v4271
        %4673 = vmatprep.subr.bf16.mxu0 0
        %4674 = vmatpush1.bf16.msra.mxu0 %v4272
        %4675 = vmatprep.subr.bf16.mxu0 0
        %4676 = vmatpush1.bf16.msra.mxu0 %v4273
        %4677 = vmatprep.subr.bf16.mxu0 0
        %4678 = vmatpush1.bf16.msra.mxu0 %v4274
        %4679 = vmatprep.subr.bf16.mxu0 0
        %4680 = vmatpush1.bf16.msra.mxu0 %v4275
        %4681 = vmatprep.subr.bf16.mxu0 0
        %4682 = vmatpush1.bf16.msra.mxu0 %v4276
        %4683 = vmatprep.subr.bf16.mxu0 0
        %4684 = vmatpush1.bf16.msra.mxu0 %v4277
        %4685 = vmatprep.subr.bf16.mxu0 0
        %4686 = vmatpush1.bf16.msra.mxu0 %v4278
        %4687 = vmatprep.subr.bf16.mxu0 0
        %4688 = vmatpush1.bf16.msra.mxu0 %v4279
        %4689 = vmatprep.subr.bf16.mxu0 0
        %4690 = vmatpush1.bf16.msra.mxu0 %v4280
        %4691 = vmatprep.subr.bf16.mxu0 0
        %4692 = vmatpush1.bf16.msra.mxu0 %v4281
        %4693 = vmatprep.subr.bf16.mxu0 0
        %4694 = vmatpush1.bf16.msra.mxu0 %v4282
        %4695 = vmatprep.subr.bf16.mxu0 0
        %4696 = vmatpush1.bf16.msra.mxu0 %v4283
        %4697 = vmatprep.subr.bf16.mxu0 0
        %4698 = vmatpush1.bf16.msra.mxu0 %v4284
        %4699 = vmatprep.subr.bf16.mxu0 0
        %4700 = vmatpush1.bf16.msra.mxu0 %v4285
        %4701 = vmatprep.subr.bf16.mxu0 0
        %4702 = vmatpush1.bf16.msra.mxu0 %v4286
        %4703 = vmatprep.mubr.bf16.mxu0 %v3397
        %4704 = vmatmul.mubr.bf16.gmra.mrb[0].mxu0 %v3396
        %v4705 = vpop.f32.mrb[0].mxu0
        %v4706 = vadd.f32 %v4666, %v4705
        %v4707 = vpop.f32.mrb[0].mxu0
        %v4708 = vpop.f32.mrb[0].mxu0
        %v4709 = vpop.f32.mrb[0].mxu0
        %4710 = vdwg.mxu0
        %4711 = vmatprep.subr.bf16.mxu0 0
        %4712 = vmatpush1.bf16.msra.mxu0 %v4287
        %4713 = vmatprep.subr.bf16.mxu0 0
        %4714 = vmatpush1.bf16.msra.mxu0 %v4288
        %4715 = vmatprep.subr.bf16.mxu0 0
        %4716 = vmatpush1.bf16.msra.mxu0 %v4289
        %4717 = vmatprep.subr.bf16.mxu0 0
        %4718 = vmatpush1.bf16.msra.mxu0 %v4290
        %4719 = vmatprep.subr.bf16.mxu0 0
        %4720 = vmatpush1.bf16.msra.mxu0 %v4291
        %4721 = vmatprep.subr.bf16.mxu0 0
        %4722 = vmatpush1.bf16.msra.mxu0 %v4292
        %4723 = vmatprep.subr.bf16.mxu0 0
        %4724 = vmatpush1.bf16.msra.mxu0 %v4293
        %4725 = vmatprep.subr.bf16.mxu0 0
        %4726 = vmatpush1.bf16.msra.mxu0 %v4294
        %4727 = vmatprep.subr.bf16.mxu0 0
        %4728 = vmatpush1.bf16.msra.mxu0 %v4295
        %4729 = vmatprep.subr.bf16.mxu0 0
        %4730 = vmatpush1.bf16.msra.mxu0 %v4296
        %4731 = vmatprep.subr.bf16.mxu0 0
        %4732 = vmatpush1.bf16.msra.mxu0 %v4297
        %4733 = vmatprep.subr.bf16.mxu0 0
        %4734 = vmatpush1.bf16.msra.mxu0 %v4298
        %4735 = vmatprep.subr.bf16.mxu0 0
        %4736 = vmatpush1.bf16.msra.mxu0 %v4299
        %4737 = vmatprep.subr.bf16.mxu0 0
        %4738 = vmatpush1.bf16.msra.mxu0 %v4300
        %4739 = vmatprep.subr.bf16.mxu0 0
        %4740 = vmatpush1.bf16.msra.mxu0 %v4301
        %4741 = vmatprep.subr.bf16.mxu0 0
        %4742 = vmatpush1.bf16.msra.mxu0 %v4302
        %4743 = vmatprep.mubr.bf16.mxu0 %v3399
        %4744 = vmatmul.mubr.bf16.gmra.mrb[0].mxu0 %v3398
        %v4745 = vpop.f32.mrb[0].mxu0
        %v4746 = vadd.f32 %v4706, %v4745
        %v4747 = vpop.f32.mrb[0].mxu0
        %v4748 = vpop.f32.mrb[0].mxu0
        %v4749 = vpop.f32.mrb[0].mxu0
        %4750 = vdwg.mxu0
        %v4751 = vadd.f32 %v2759, %v4746
        %v4752 = vld [vmem:[%s11] sm:$0x1]
        %v4753 = vld [vmem:[%s12] sm:$0x1]
        %v4754 = vsel %vm477, %v4751, 0.0
        %4755 = vadd.xlane.f32.xlu0 %v4754
        %v4756 = vpop.xlane.xlu0 %4755
        %v4757 = vmul.f32 %v4756, %v2735
        %v4758 = vsub.f32 %v4751, %v4757
        %v4759 = vmul.f32 %v4758, %v4758
        %v4760 = vsel %vm477, %v4759, 0.0
        %4761 = vadd.xlane.f32.xlu0 %v4760
        %v4762 = vpop.xlane.xlu0 %4761
        %v4763 = vmul.f32 %v4762, %v2735
        %v4764 = vadd.f32 %v4763, 1e-05
        %v4765 = vrsqrt.pop %v4764
        %v4766 = vmul.f32 %v4758, %v4765
        %v4768 = vlaneseq
        %v4769 = vshrl.u32 %v4768, 7
        %v4770 = vsub.s32 0, %v4769
        %v4771 = vrot.slane %v4752, %v4770
        %v4773 = vmul.f32 %v4766, %v4771
        %v4775 = vlaneseq
        %v4776 = vshrl.u32 %v4775, 7
        %v4777 = vsub.s32 0, %v4776
        %v4778 = vrot.slane %v4753, %v4777
        %v4780 = vadd.f32 %v4773, %v4778
        %v4781 = vpack.c.bf16 %v4780, %v4780
        %vm4782 = vcmask 257024
        %4783 = vst.msk [vmem:[%s450] sm:$0xf] %vm4782, %v4781
        %p4784 = scmp.lt.s32.totalorder %s25, 3
        %s4785 = scalar_select %p4784, %s25, 3
        %s4786 = smul.addr %s4785, 4
        %s4787 = scalar_lea.vmem %s13, %s4786
        // Predicated region
        $region77: #{siamese_forward.3} parent=71 // pred_check
          %p4788 = pneg %p321
        $region78: #{siamese_forward.3} parent=71 // pred_check_branch
          %4790 = sbr.rel (%p4788) target = $region80
        $region79: #{siamese_forward.3} parent=71 // pred_region
          _
        $region80: #{siamese_forward.3} parent=71 // pred_fallthru
          _
      $region72: #{siamese_forward.3} parent=5 // pred_fallthru
        _
      %p4791 = scmp.le.s32.totalorder 2, %s20
      // Predicated region
      $region81: #{siamese_forward.3} parent=5 // pred_check
        %p4792 = pneg %p4791
      $region82: #{siamese_forward.3} parent=5 // pred_check_branch
        %4794 = sbr.rel (%p4792) target = $region84
      $region83: #{siamese_forward.3} parent=5 // pred_region
        %s4795 = ssub.s32 %s20, 2
        // Predicated region
        $region85: #{siamese_forward.3} parent=83 // pred_check
          %p4796 = pneg %p327
        $region86: #{siamese_forward.3} parent=83 // pred_check_branch
          %4798 = sbr.rel (%p4796) target = $region88
        $region87: #{siamese_forward.3} parent=83 // pred_region
          %p4799 = scmp.lt.s32.totalorder %s26, 3
          %s4800 = scalar_select %p4799, %s26, 3
          %s4801 = smul.addr %s4800, 4
          %s4802 = scalar_lea.vmem %s13, %s4801
        $region88: #{siamese_forward.3} parent=83 // pred_fallthru
          _
      $region84: #{siamese_forward.3} parent=5 // pred_fallthru
        _
    $region6: #{siamese_forward.3} parent=1 // loop_footer
      %s24 = sadd.s32 1, %s20
    $region7: #{siamese_forward.3} parent=1 // loop_footer_branch
      %19 = sbr.rel target = $region3
    $region8: #{siamese_forward.3} parent=1 // loop_exit
      _
    %4803 = vsyncpa [#allocation3], 1
    %s4804 = scalar_lea.sflag [#allocation3], 1
    %4805 = vsyncpa %s4804, 1

</llo_original>
